<compile_context>
chip_gen: v7x
topology: tpu7x:2x2x1
jax: 0.10.0
libtpu: 0.0.40
codegen_flags: <defaults>
</compile_context>

<pallas_src>
import jax
import jax.numpy as jnp
from jax.experimental import pallas as pl
from jax.experimental.pallas import tpu as pltpu

KSIZE = 3              # conv_kernel_size in the module
STRIDE = 2             # all convs use stride=2
CPAD = 128             # lane-dense channel padding
BN_EPS = 1e-5          # nn.BatchNorm2d default eps
LRELU_SLOPE = 0.01     # nn.LeakyReLU default negative_slope
NUM_LAYERS = 4


def _out_size(s):
    return (s - KSIZE) // STRIDE + 1


def _encoder_kernel(p1_ref, w1_ref, w2_ref, w3_ref, w4_ref, gamma_ref, beta_ref,
                    o_ref, a1_ref, a2_ref, a3_ref):
    """Fused 4x (conv -> BN(train) -> LeakyReLU).

    p1_ref:        [M1, 128]     bf16  layer-1 im2col patches (K zero-padded to 128)
    w1_ref:        [128, 128]    bf16  layer-1 weight as a GEMM matrix (zero-padded)
    w2..w4_ref:    [9, 128, 128] bf16  per-tap weight matrices (zero-padded)
    gamma/beta:    [4, 128]      f32   BN scale/shift per layer (zero-padded)
    o_ref:         [M4, 128]     f32   final activation rows in (h, w, n) order
    a1..a3_ref:    [H, W, N, 128] f32  VMEM scratch activations (channels zero-padded)
    """

    def bn_lrelu(acc, layer):
        # Training-mode BatchNorm2d over all (n, h, w) rows of this layer, one pass
        # (sum & sum-of-squares), biased variance; then LeakyReLU.
        m_rows = acc.shape[0]
        inv_m = 1.0 / m_rows
        mean = jnp.sum(acc, axis=0, keepdims=True) * inv_m
        ex2 = jnp.sum(acc * acc, axis=0, keepdims=True) * inv_m
        var = jnp.maximum(ex2 - mean * mean, 0.0)
        g = gamma_ref[layer:layer + 1, :]
        b = beta_ref[layer:layer + 1, :]
        y = (acc - mean) * jax.lax.rsqrt(var + BN_EPS) * g + b
        return jnp.where(y >= 0, y, LRELU_SLOPE * y)

    def conv_layer(src_ref, w_taps_ref, layer):
        # src_ref: [H, W, N, 128] f32 activation from the previous layer (in VMEM).
        h, w, n, _ = src_ref.shape
        ho = (h - KSIZE) // STRIDE + 1
        wo = (w - KSIZE) // STRIDE + 1
        m_rows = ho * wo * n
        acc = jnp.zeros((m_rows, CPAD), jnp.float32)
        for dh in range(KSIZE):
            for dw in range(KSIZE):
                # In-kernel im2col: strided window read (strides only on the two
                # leading / untiled dims; last two dims are unit-stride, 32-bit).
                tap = src_ref[pl.ds(dh, ho, stride=STRIDE),
                              pl.ds(dw, wo, stride=STRIDE), :, :]
                tap = tap.reshape(m_rows, CPAD).astype(jnp.bfloat16)
                acc = acc + jnp.dot(tap, w_taps_ref[dh * KSIZE + dw],
                                    preferred_element_type=jnp.float32)
        return bn_lrelu(acc, layer)

    # Layer 1: host pre-im2col'ed patches -> one lane-dense bf16 GEMM.
    acc1 = jnp.dot(p1_ref[...], w1_ref[...], preferred_element_type=jnp.float32)
    a1_ref[...] = bn_lrelu(acc1, 0).reshape(a1_ref.shape)

    # Layers 2-4: im2col from VMEM scratch, GEMM, BN, LeakyReLU — all in VMEM.
    a2_ref[...] = conv_layer(a1_ref, w2_ref, 1).reshape(a2_ref.shape)
    a3_ref[...] = conv_layer(a2_ref, w3_ref, 2).reshape(a3_ref.shape)
    o_ref[...] = conv_layer(a3_ref, w4_ref, 3)


def _forward_impl(params, x_nchw):
    """Fused encoder forward. x_nchw: [N, Cin, H, W] float32 (PyTorch layout)."""
    n, cin, h0, w0 = x_nchw.shape
    (cw1, _b1, g1, be1), (cw2, _b2, g2, be2), \
        (cw3, _b3, g3, be3), (cw4, _b4, g4, be4) = params
    k = cw1.shape[2]
    assert k == KSIZE and cw1.shape[1] == cin
    # TODO(synk): generalize layer-1 patch packing for in_channels > 14 (k*k*Cin > 128).
    assert k * k * cin <= CPAD

    h1, wd1 = _out_size(h0), _out_size(w0)
    h2, wd2 = _out_size(h1), _out_size(wd1)
    h3, wd3 = _out_size(h2), _out_size(wd2)
    h4, wd4 = _out_size(h3), _out_size(wd3)
    assert h4 >= 1 and wd4 >= 1, "input spatial size too small for 4 stride-2 convs"
    c1, c2, c3, c4 = cw1.shape[0], cw2.shape[0], cw3.shape[0], cw4.shape[0]

    # ---- host-side (tiny, one-time) prep: layer-1 im2col + weight / BN-param packing.
    x_nhwc = jnp.transpose(x_nchw, (0, 2, 3, 1))                   # [N, H, W, Cin]
    cols = []
    for dh in range(k):
        for dw in range(k):
            cols.append(x_nhwc[:, dh:dh + STRIDE * h1:STRIDE,
                               dw:dw + STRIDE * wd1:STRIDE, :])    # [N, h1, wd1, Cin]
    p1 = jnp.stack(cols, axis=3)                                   # [N, h1, wd1, 9, Cin]
    p1 = jnp.transpose(p1, (1, 2, 0, 3, 4)).reshape(h1 * wd1 * n, k * k * cin)
    p1 = jnp.pad(p1, ((0, 0), (0, CPAD - k * k * cin))).astype(jnp.bfloat16)

    # Layer-1 weight as a single [128, 128] GEMM matrix (rows ordered (dh, dw, cin)).
    w1_mat = jnp.transpose(cw1, (2, 3, 1, 0)).reshape(k * k * cin, c1)
    w1_mat = jnp.pad(w1_mat, ((0, CPAD - k * k * cin), (0, CPAD - c1))).astype(jnp.bfloat16)

    def pack_taps(wgt):
        co, ci, kh, kw = wgt.shape
        t = jnp.transpose(wgt, (2, 3, 1, 0)).reshape(kh * kw, ci, co)   # [9, Cin, Cout]
        t = jnp.pad(t, ((0, 0), (0, CPAD - ci), (0, CPAD - co)))
        return t.astype(jnp.bfloat16)

    w2_t, w3_t, w4_t = pack_taps(cw2), pack_taps(cw3), pack_taps(cw4)

    def pack_vec(v):
        return jnp.pad(v.astype(jnp.float32), (0, CPAD - v.shape[0]))

    gamma = jnp.stack([pack_vec(g1), pack_vec(g2), pack_vec(g3), pack_vec(g4)])
    beta = jnp.stack([pack_vec(be1), pack_vec(be2), pack_vec(be3), pack_vec(be4)])

    m1 = h1 * wd1 * n
    m4 = h4 * wd4 * n

    out = pl.pallas_call(
        _encoder_kernel,
        out_shape=jax.ShapeDtypeStruct((m4, CPAD), jnp.float32),
        in_specs=[
            pl.BlockSpec((m1, CPAD), lambda: (0, 0)),
            pl.BlockSpec((CPAD, CPAD), lambda: (0, 0)),
            pl.BlockSpec((k * k, CPAD, CPAD), lambda: (0, 0, 0)),
            pl.BlockSpec((k * k, CPAD, CPAD), lambda: (0, 0, 0)),
            pl.BlockSpec((k * k, CPAD, CPAD), lambda: (0, 0, 0)),
            pl.BlockSpec((NUM_LAYERS, CPAD), lambda: (0, 0)),
            pl.BlockSpec((NUM_LAYERS, CPAD), lambda: (0, 0)),
        ],
        out_specs=pl.BlockSpec((m4, CPAD), lambda: (0, 0)),
        scratch_shapes=[
            pltpu.VMEM((h1, wd1, n, CPAD), jnp.float32),
            pltpu.VMEM((h2, wd2, n, CPAD), jnp.float32),
            pltpu.VMEM((h3, wd3, n, CPAD), jnp.float32),
        ],
        compiler_params=pltpu.CompilerParams(vmem_limit_bytes=32 * 1024 * 1024),
    )(p1, w1_mat, w2_t, w3_t, w4_t, gamma, beta)

    # Rows of `out` are in (h, w, n) order; channels are zero-padded to 128.
    feat = out.reshape(h4, wd4, n, CPAD)[..., :c4]
    feat = jnp.transpose(feat, (2, 3, 0, 1))          # -> NCHW, matching x.view(N, -1)
    return feat.reshape(n, -1)


_forward_jit = jax.jit(_forward_impl)


def cnn_encoder_forward(params, state_nchw, next_state_nchw=None):
    """Reproduces cnn_Encoder.forward (inputs are NCHW, like PyTorch)."""
    if next_state_nchw is not None:
        x = jnp.concatenate([state_nchw, next_state_nchw], axis=1)
    else:
        x = state_nchw
    return _forward_jit(params, x)


def init_params(key, conv_layers=32, conv_kernel_size=3, in_channels=4):
    """Deterministic init mimicking the module: xavier_uniform conv weights,
    PyTorch-default uniform conv biases (kept for parity but unused: training-mode BN
    cancels them exactly), BN gamma=1 / beta=0."""
    k = conv_kernel_size
    chans = [
        (in_channels, conv_layers),
        (conv_layers, conv_layers),
        (conv_layers, conv_layers * 2),
        (conv_layers * 2, conv_layers * 2),
    ]
    params = []
    for cin, cout in chans:
        key, wk, bk = jax.random.split(key, 3)
        fan_in, fan_out = cin * k * k, cout * k * k
        bound = (6.0 / (fan_in + fan_out)) ** 0.5            # xavier_uniform_
        w = jax.random.uniform(wk, (cout, cin, k, k), jnp.float32, -bound, bound)
        bb = 1.0 / (fan_in ** 0.5)                           # default conv bias init
        b = jax.random.uniform(bk, (cout,), jnp.float32, -bb, bb)
        gamma = jnp.ones((cout,), jnp.float32)
        beta = jnp.zeros((cout,), jnp.float32)
        params.append((w, b, gamma, beta))
    return params


if __name__ == "__main__":
    key = jax.random.PRNGKey(0)
    pkey, xkey = jax.random.split(key)

    # Spatial chain through four stride-2, kernel-3, valid convs: 36 -> 17 -> 8 -> 3 -> 1.
    # Final feature dim = 64 * 1 * 1 = 64.
    N, C_in, HW = 2, 4, 36
    params = init_params(pkey, conv_layers=32, conv_kernel_size=3, in_channels=C_in)
    x = jax.random.normal(xkey, (N, C_in, HW, HW), dtype=jnp.float32)

    out = cnn_encoder_forward(params, x)
    out = jax.block_until_ready(out)
    assert out.shape == (N, 64), out.shape
    assert bool(jnp.all(jnp.isfinite(out)))
    print("KERNEL_OK")
</pallas_src>

<mosaic_0001>
module attributes {stable_mosaic.version = 11 : i64} {
  func.func @_encoder_kernel(%arg0: memref<578x128xbf16, #tpu.memory_space<vmem>>, %arg1: memref<128x128xbf16, #tpu.memory_space<vmem>>, %arg2: memref<9x128x128xbf16, #tpu.memory_space<vmem>>, %arg3: memref<9x128x128xbf16, #tpu.memory_space<vmem>>, %arg4: memref<9x128x128xbf16, #tpu.memory_space<vmem>>, %arg5: memref<4x128xf32, #tpu.memory_space<vmem>>, %arg6: memref<4x128xf32, #tpu.memory_space<vmem>>, %arg7: memref<2x128xf32, #tpu.memory_space<vmem>>, %arg8: memref<17x17x2x128xf32, #tpu.memory_space<vmem>>, %arg9: memref<8x8x2x128xf32, #tpu.memory_space<vmem>>, %arg10: memref<3x3x2x128xf32, #tpu.memory_space<vmem>>) attributes {dimension_semantics = [], scalar_prefetch = 0 : i64, scratch_operands = 3 : i64, tpu.core_type = #tpu.core_type<tc>} {
    %c0 = arith.constant 0 : index
    %c0_0 = arith.constant 0 : index
    %0 = vector.load %arg0[%c0, %c0_0] : memref<578x128xbf16, #tpu.memory_space<vmem>>, vector<578x128xbf16>
    %c0_1 = arith.constant 0 : index
    %c0_2 = arith.constant 0 : index
    %1 = vector.load %arg1[%c0_1, %c0_2] : memref<128x128xbf16, #tpu.memory_space<vmem>>, vector<128x128xbf16>
    %cst = arith.constant dense<0.000000e+00> : vector<578x128xf32>
    %2 = tpu.matmul %0, %1, %cst {dimension_numbers = #tpu.dot_dimension_numbers<[1], [0], [0], [1], [0, 0, 1, 1], [], []>} : vector<578x128xbf16>, vector<128x128xbf16>, vector<578x128xf32> -> vector<578x128xf32>
    %cst_3 = arith.constant dense<0.000000e+00> : vector<128xf32>
    %3 = vector.multi_reduction <add>, %2, %cst_3 [0] : vector<578x128xf32> to vector<128xf32>
    %4 = vector.shape_cast %3 : vector<128xf32> to vector<1x128xf32>
    %cst_4 = arith.constant 0.00173010386 : f32
    %5 = vector.broadcast %cst_4 : f32 to vector<1x128xf32>
    %6 = arith.mulf %4, %5 : vector<1x128xf32>
    %7 = arith.mulf %2, %2 : vector<578x128xf32>
    %cst_5 = arith.constant dense<0.000000e+00> : vector<128xf32>
    %8 = vector.multi_reduction <add>, %7, %cst_5 [0] : vector<578x128xf32> to vector<128xf32>
    %9 = vector.shape_cast %8 : vector<128xf32> to vector<1x128xf32>
    %cst_6 = arith.constant 0.00173010386 : f32
    %10 = vector.broadcast %cst_6 : f32 to vector<1x128xf32>
    %11 = arith.mulf %9, %10 : vector<1x128xf32>
    %12 = arith.mulf %6, %6 : vector<1x128xf32>
    %13 = arith.subf %11, %12 : vector<1x128xf32>
    %cst_7 = arith.constant 0.000000e+00 : f32
    %14 = vector.broadcast %cst_7 : f32 to vector<1x128xf32>
    %15 = arith.maximumf %13, %14 : vector<1x128xf32>
    %c0_8 = arith.constant 0 : index
    %c0_9 = arith.constant 0 : index
    %16 = vector.load %arg5[%c0_8, %c0_9] : memref<4x128xf32, #tpu.memory_space<vmem>>, vector<1x128xf32>
    %c0_10 = arith.constant 0 : index
    %c0_11 = arith.constant 0 : index
    %17 = vector.load %arg6[%c0_10, %c0_11] : memref<4x128xf32, #tpu.memory_space<vmem>>, vector<1x128xf32>
    %18 = vector.broadcast %6 : vector<1x128xf32> to vector<578x128xf32>
    %19 = arith.subf %2, %18 : vector<578x128xf32>
    %cst_12 = arith.constant 9.99999974E-6 : f32
    %20 = vector.broadcast %cst_12 : f32 to vector<1x128xf32>
    %21 = arith.addf %15, %20 : vector<1x128xf32>
    %22 = math.rsqrt %21 : vector<1x128xf32>
    %23 = vector.broadcast %22 : vector<1x128xf32> to vector<578x128xf32>
    %24 = arith.mulf %19, %23 : vector<578x128xf32>
    %25 = vector.broadcast %16 : vector<1x128xf32> to vector<578x128xf32>
    %26 = arith.mulf %24, %25 : vector<578x128xf32>
    %27 = vector.broadcast %17 : vector<1x128xf32> to vector<578x128xf32>
    %28 = arith.addf %26, %27 : vector<578x128xf32>
    %cst_13 = arith.constant 0.000000e+00 : f32
    %29 = vector.broadcast %cst_13 : f32 to vector<578x128xf32>
    %30 = arith.cmpf oge, %28, %29 : vector<578x128xf32>
    %cst_14 = arith.constant 0.00999999977 : f32
    %31 = vector.broadcast %cst_14 : f32 to vector<578x128xf32>
    %32 = arith.mulf %31, %28 : vector<578x128xf32>
    %33 = arith.select %30, %28, %32 : vector<578x128xi1>, vector<578x128xf32>
    %34 = vector.shape_cast %33 : vector<578x128xf32> to vector<17x17x2x128xf32>
    %c0_15 = arith.constant 0 : index
    %c0_16 = arith.constant 0 : index
    %c0_17 = arith.constant 0 : index
    %c0_18 = arith.constant 0 : index
    %35 = vector.load %arg8[%c0_15, %c0_16, %c0_17, %c0_18] : memref<17x17x2x128xf32, #tpu.memory_space<vmem>>, vector<17x17x2x128xf32>
    tpu.vector_store %arg8[%c0_15, %c0_16, %c0_17, %c0_18], %34 {strides = array<i32>} : memref<17x17x2x128xf32, #tpu.memory_space<vmem>>, vector<17x17x2x128xf32>,
    %cst_19 = arith.constant 0.000000e+00 : f32
    %36 = vector.broadcast %cst_19 : f32 to vector<128x128xf32>
    %c0_20 = arith.constant 0 : index
    %c0_21 = arith.constant 0 : index
    %c0_22 = arith.constant 0 : index
    %c0_23 = arith.constant 0 : index
    %37 = tpu.strided_load %arg8[%c0_20, %c0_21, %c0_22, %c0_23] {strides = array<i32: 2, 2, 1, 1>} : memref<17x17x2x128xf32, #tpu.memory_space<vmem>>, vector<8x8x2x128xf32>
    %38 = vector.shape_cast %37 : vector<8x8x2x128xf32> to vector<128x128xf32>
    %39 = arith.truncf %38 : vector<128x128xf32> to vector<128x128xbf16>
    %c0_24 = arith.constant 0 : index
    %c0_25 = arith.constant 0 : index
    %c0_26 = arith.constant 0 : index
    %40 = vector.load %arg2[%c0_24, %c0_25, %c0_26] : memref<9x128x128xbf16, #tpu.memory_space<vmem>>, vector<1x128x128xbf16>
    %41 = vector.shape_cast %40 : vector<1x128x128xbf16> to vector<128x128xbf16>
    %cst_27 = arith.constant dense<0.000000e+00> : vector<128x128xf32>
    %42 = tpu.matmul %39, %41, %cst_27 {dimension_numbers = #tpu.dot_dimension_numbers<[1], [0], [0], [1], [0, 0, 1, 1], [], []>} : vector<128x128xbf16>, vector<128x128xbf16>, vector<128x128xf32> -> vector<128x128xf32>
    %43 = arith.addf %36, %42 : vector<128x128xf32>
    %c0_28 = arith.constant 0 : index
    %c1 = arith.constant 1 : index
    %c0_29 = arith.constant 0 : index
    %c0_30 = arith.constant 0 : index
    %44 = tpu.strided_load %arg8[%c0_28, %c1, %c0_29, %c0_30] {strides = array<i32: 2, 2, 1, 1>} : memref<17x17x2x128xf32, #tpu.memory_space<vmem>>, vector<8x8x2x128xf32>
    %45 = vector.shape_cast %44 : vector<8x8x2x128xf32> to vector<128x128xf32>
    %46 = arith.truncf %45 : vector<128x128xf32> to vector<128x128xbf16>
    %c1_31 = arith.constant 1 : index
    %c0_32 = arith.constant 0 : index
    %c0_33 = arith.constant 0 : index
    %47 = vector.load %arg2[%c1_31, %c0_32, %c0_33] : memref<9x128x128xbf16, #tpu.memory_space<vmem>>, vector<1x128x128xbf16>
    %48 = vector.shape_cast %47 : vector<1x128x128xbf16> to vector<128x128xbf16>
    %cst_34 = arith.constant dense<0.000000e+00> : vector<128x128xf32>
    %49 = tpu.matmul %46, %48, %cst_34 {dimension_numbers = #tpu.dot_dimension_numbers<[1], [0], [0], [1], [0, 0, 1, 1], [], []>} : vector<128x128xbf16>, vector<128x128xbf16>, vector<128x128xf32> -> vector<128x128xf32>
    %50 = arith.addf %43, %49 : vector<128x128xf32>
    %c0_35 = arith.constant 0 : index
    %c2 = arith.constant 2 : index
    %c0_36 = arith.constant 0 : index
    %c0_37 = arith.constant 0 : index
    %51 = tpu.strided_load %arg8[%c0_35, %c2, %c0_36, %c0_37] {strides = array<i32: 2, 2, 1, 1>} : memref<17x17x2x128xf32, #tpu.memory_space<vmem>>, vector<8x8x2x128xf32>
    %52 = vector.shape_cast %51 : vector<8x8x2x128xf32> to vector<128x128xf32>
    %53 = arith.truncf %52 : vector<128x128xf32> to vector<128x128xbf16>
    %c2_38 = arith.constant 2 : index
    %c0_39 = arith.constant 0 : index
    %c0_40 = arith.constant 0 : index
    %54 = vector.load %arg2[%c2_38, %c0_39, %c0_40] : memref<9x128x128xbf16, #tpu.memory_space<vmem>>, vector<1x128x128xbf16>
    %55 = vector.shape_cast %54 : vector<1x128x128xbf16> to vector<128x128xbf16>
    %cst_41 = arith.constant dense<0.000000e+00> : vector<128x128xf32>
    %56 = tpu.matmul %53, %55, %cst_41 {dimension_numbers = #tpu.dot_dimension_numbers<[1], [0], [0], [1], [0, 0, 1, 1], [], []>} : vector<128x128xbf16>, vector<128x128xbf16>, vector<128x128xf32> -> vector<128x128xf32>
    %57 = arith.addf %50, %56 : vector<128x128xf32>
    %c1_42 = arith.constant 1 : index
    %c0_43 = arith.constant 0 : index
    %c0_44 = arith.constant 0 : index
    %c0_45 = arith.constant 0 : index
    %58 = tpu.strided_load %arg8[%c1_42, %c0_43, %c0_44, %c0_45] {strides = array<i32: 2, 2, 1, 1>} : memref<17x17x2x128xf32, #tpu.memory_space<vmem>>, vector<8x8x2x128xf32>
    %59 = vector.shape_cast %58 : vector<8x8x2x128xf32> to vector<128x128xf32>
    %60 = arith.truncf %59 : vector<128x128xf32> to vector<128x128xbf16>
    %c3 = arith.constant 3 : index
    %c0_46 = arith.constant 0 : index
    %c0_47 = arith.constant 0 : index
    %61 = vector.load %arg2[%c3, %c0_46, %c0_47] : memref<9x128x128xbf16, #tpu.memory_space<vmem>>, vector<1x128x128xbf16>
    %62 = vector.shape_cast %61 : vector<1x128x128xbf16> to vector<128x128xbf16>
    %cst_48 = arith.constant dense<0.000000e+00> : vector<128x128xf32>
    %63 = tpu.matmul %60, %62, %cst_48 {dimension_numbers = #tpu.dot_dimension_numbers<[1], [0], [0], [1], [0, 0, 1, 1], [], []>} : vector<128x128xbf16>, vector<128x128xbf16>, vector<128x128xf32> -> vector<128x128xf32>
    %64 = arith.addf %57, %63 : vector<128x128xf32>
    %c1_49 = arith.constant 1 : index
    %c1_50 = arith.constant 1 : index
    %c0_51 = arith.constant 0 : index
    %c0_52 = arith.constant 0 : index
    %65 = tpu.strided_load %arg8[%c1_49, %c1_50, %c0_51, %c0_52] {strides = array<i32: 2, 2, 1, 1>} : memref<17x17x2x128xf32, #tpu.memory_space<vmem>>, vector<8x8x2x128xf32>
    %66 = vector.shape_cast %65 : vector<8x8x2x128xf32> to vector<128x128xf32>
    %67 = arith.truncf %66 : vector<128x128xf32> to vector<128x128xbf16>
    %c4 = arith.constant 4 : index
    %c0_53 = arith.constant 0 : index
    %c0_54 = arith.constant 0 : index
    %68 = vector.load %arg2[%c4, %c0_53, %c0_54] : memref<9x128x128xbf16, #tpu.memory_space<vmem>>, vector<1x128x128xbf16>
    %69 = vector.shape_cast %68 : vector<1x128x128xbf16> to vector<128x128xbf16>
    %cst_55 = arith.constant dense<0.000000e+00> : vector<128x128xf32>
    %70 = tpu.matmul %67, %69, %cst_55 {dimension_numbers = #tpu.dot_dimension_numbers<[1], [0], [0], [1], [0, 0, 1, 1], [], []>} : vector<128x128xbf16>, vector<128x128xbf16>, vector<128x128xf32> -> vector<128x128xf32>
    %71 = arith.addf %64, %70 : vector<128x128xf32>
    %c1_56 = arith.constant 1 : index
    %c2_57 = arith.constant 2 : index
    %c0_58 = arith.constant 0 : index
    %c0_59 = arith.constant 0 : index
    %72 = tpu.strided_load %arg8[%c1_56, %c2_57, %c0_58, %c0_59] {strides = array<i32: 2, 2, 1, 1>} : memref<17x17x2x128xf32, #tpu.memory_space<vmem>>, vector<8x8x2x128xf32>
    %73 = vector.shape_cast %72 : vector<8x8x2x128xf32> to vector<128x128xf32>
    %74 = arith.truncf %73 : vector<128x128xf32> to vector<128x128xbf16>
    %c5 = arith.constant 5 : index
    %c0_60 = arith.constant 0 : index
    %c0_61 = arith.constant 0 : index
    %75 = vector.load %arg2[%c5, %c0_60, %c0_61] : memref<9x128x128xbf16, #tpu.memory_space<vmem>>, vector<1x128x128xbf16>
    %76 = vector.shape_cast %75 : vector<1x128x128xbf16> to vector<128x128xbf16>
    %cst_62 = arith.constant dense<0.000000e+00> : vector<128x128xf32>
    %77 = tpu.matmul %74, %76, %cst_62 {dimension_numbers = #tpu.dot_dimension_numbers<[1], [0], [0], [1], [0, 0, 1, 1], [], []>} : vector<128x128xbf16>, vector<128x128xbf16>, vector<128x128xf32> -> vector<128x128xf32>
    %78 = arith.addf %71, %77 : vector<128x128xf32>
    %c2_63 = arith.constant 2 : index
    %c0_64 = arith.constant 0 : index
    %c0_65 = arith.constant 0 : index
    %c0_66 = arith.constant 0 : index
    %79 = tpu.strided_load %arg8[%c2_63, %c0_64, %c0_65, %c0_66] {strides = array<i32: 2, 2, 1, 1>} : memref<17x17x2x128xf32, #tpu.memory_space<vmem>>, vector<8x8x2x128xf32>
    %80 = vector.shape_cast %79 : vector<8x8x2x128xf32> to vector<128x128xf32>
    %81 = arith.truncf %80 : vector<128x128xf32> to vector<128x128xbf16>
    %c6 = arith.constant 6 : index
    %c0_67 = arith.constant 0 : index
    %c0_68 = arith.constant 0 : index
    %82 = vector.load %arg2[%c6, %c0_67, %c0_68] : memref<9x128x128xbf16, #tpu.memory_space<vmem>>, vector<1x128x128xbf16>
    %83 = vector.shape_cast %82 : vector<1x128x128xbf16> to vector<128x128xbf16>
    %cst_69 = arith.constant dense<0.000000e+00> : vector<128x128xf32>
    %84 = tpu.matmul %81, %83, %cst_69 {dimension_numbers = #tpu.dot_dimension_numbers<[1], [0], [0], [1], [0, 0, 1, 1], [], []>} : vector<128x128xbf16>, vector<128x128xbf16>, vector<128x128xf32> -> vector<128x128xf32>
    %85 = arith.addf %78, %84 : vector<128x128xf32>
    %c2_70 = arith.constant 2 : index
    %c1_71 = arith.constant 1 : index
    %c0_72 = arith.constant 0 : index
    %c0_73 = arith.constant 0 : index
    %86 = tpu.strided_load %arg8[%c2_70, %c1_71, %c0_72, %c0_73] {strides = array<i32: 2, 2, 1, 1>} : memref<17x17x2x128xf32, #tpu.memory_space<vmem>>, vector<8x8x2x128xf32>
    %87 = vector.shape_cast %86 : vector<8x8x2x128xf32> to vector<128x128xf32>
    %88 = arith.truncf %87 : vector<128x128xf32> to vector<128x128xbf16>
    %c7 = arith.constant 7 : index
    %c0_74 = arith.constant 0 : index
    %c0_75 = arith.constant 0 : index
    %89 = vector.load %arg2[%c7, %c0_74, %c0_75] : memref<9x128x128xbf16, #tpu.memory_space<vmem>>, vector<1x128x128xbf16>
    %90 = vector.shape_cast %89 : vector<1x128x128xbf16> to vector<128x128xbf16>
    %cst_76 = arith.constant dense<0.000000e+00> : vector<128x128xf32>
    %91 = tpu.matmul %88, %90, %cst_76 {dimension_numbers = #tpu.dot_dimension_numbers<[1], [0], [0], [1], [0, 0, 1, 1], [], []>} : vector<128x128xbf16>, vector<128x128xbf16>, vector<128x128xf32> -> vector<128x128xf32>
    %92 = arith.addf %85, %91 : vector<128x128xf32>
    %c2_77 = arith.constant 2 : index
    %c2_78 = arith.constant 2 : index
    %c0_79 = arith.constant 0 : index
    %c0_80 = arith.constant 0 : index
    %93 = tpu.strided_load %arg8[%c2_77, %c2_78, %c0_79, %c0_80] {strides = array<i32: 2, 2, 1, 1>} : memref<17x17x2x128xf32, #tpu.memory_space<vmem>>, vector<8x8x2x128xf32>
    %94 = vector.shape_cast %93 : vector<8x8x2x128xf32> to vector<128x128xf32>
    %95 = arith.truncf %94 : vector<128x128xf32> to vector<128x128xbf16>
    %c8 = arith.constant 8 : index
    %c0_81 = arith.constant 0 : index
    %c0_82 = arith.constant 0 : index
    %96 = vector.load %arg2[%c8, %c0_81, %c0_82] : memref<9x128x128xbf16, #tpu.memory_space<vmem>>, vector<1x128x128xbf16>
    %97 = vector.shape_cast %96 : vector<1x128x128xbf16> to vector<128x128xbf16>
    %cst_83 = arith.constant dense<0.000000e+00> : vector<128x128xf32>
    %98 = tpu.matmul %95, %97, %cst_83 {dimension_numbers = #tpu.dot_dimension_numbers<[1], [0], [0], [1], [0, 0, 1, 1], [], []>} : vector<128x128xbf16>, vector<128x128xbf16>, vector<128x128xf32> -> vector<128x128xf32>
    %99 = arith.addf %92, %98 : vector<128x128xf32>
    %cst_84 = arith.constant dense<0.000000e+00> : vector<128xf32>
    %100 = vector.multi_reduction <add>, %99, %cst_84 [0] : vector<128x128xf32> to vector<128xf32>
    %101 = vector.shape_cast %100 : vector<128xf32> to vector<1x128xf32>
    %cst_85 = arith.constant 7.812500e-03 : f32
    %102 = vector.broadcast %cst_85 : f32 to vector<1x128xf32>
    %103 = arith.mulf %101, %102 : vector<1x128xf32>
    %104 = arith.mulf %99, %99 : vector<128x128xf32>
    %cst_86 = arith.constant dense<0.000000e+00> : vector<128xf32>
    %105 = vector.multi_reduction <add>, %104, %cst_86 [0] : vector<128x128xf32> to vector<128xf32>
    %106 = vector.shape_cast %105 : vector<128xf32> to vector<1x128xf32>
    %cst_87 = arith.constant 7.812500e-03 : f32
    %107 = vector.broadcast %cst_87 : f32 to vector<1x128xf32>
    %108 = arith.mulf %106, %107 : vector<1x128xf32>
    %109 = arith.mulf %103, %103 : vector<1x128xf32>
    %110 = arith.subf %108, %109 : vector<1x128xf32>
    %cst_88 = arith.constant 0.000000e+00 : f32
    %111 = vector.broadcast %cst_88 : f32 to vector<1x128xf32>
    %112 = arith.maximumf %110, %111 : vector<1x128xf32>
    %c1_89 = arith.constant 1 : index
    %c0_90 = arith.constant 0 : index
    %113 = vector.load %arg5[%c1_89, %c0_90] : memref<4x128xf32, #tpu.memory_space<vmem>>, vector<1x128xf32>
    %c1_91 = arith.constant 1 : index
    %c0_92 = arith.constant 0 : index
    %114 = vector.load %arg6[%c1_91, %c0_92] : memref<4x128xf32, #tpu.memory_space<vmem>>, vector<1x128xf32>
    %115 = vector.broadcast %103 : vector<1x128xf32> to vector<128x128xf32>
    %116 = arith.subf %99, %115 : vector<128x128xf32>
    %cst_93 = arith.constant 9.99999974E-6 : f32
    %117 = vector.broadcast %cst_93 : f32 to vector<1x128xf32>
    %118 = arith.addf %112, %117 : vector<1x128xf32>
    %119 = math.rsqrt %118 : vector<1x128xf32>
    %120 = vector.broadcast %119 : vector<1x128xf32> to vector<128x128xf32>
    %121 = arith.mulf %116, %120 : vector<128x128xf32>
    %122 = vector.broadcast %113 : vector<1x128xf32> to vector<128x128xf32>
    %123 = arith.mulf %121, %122 : vector<128x128xf32>
    %124 = vector.broadcast %114 : vector<1x128xf32> to vector<128x128xf32>
    %125 = arith.addf %123, %124 : vector<128x128xf32>
    %cst_94 = arith.constant 0.000000e+00 : f32
    %126 = vector.broadcast %cst_94 : f32 to vector<128x128xf32>
    %127 = arith.cmpf oge, %125, %126 : vector<128x128xf32>
    %cst_95 = arith.constant 0.00999999977 : f32
    %128 = vector.broadcast %cst_95 : f32 to vector<128x128xf32>
    %129 = arith.mulf %128, %125 : vector<128x128xf32>
    %130 = arith.select %127, %125, %129 : vector<128x128xi1>, vector<128x128xf32>
    %131 = vector.shape_cast %130 : vector<128x128xf32> to vector<8x8x2x128xf32>
    %c0_96 = arith.constant 0 : index
    %c0_97 = arith.constant 0 : index
    %c0_98 = arith.constant 0 : index
    %c0_99 = arith.constant 0 : index
    %132 = vector.load %arg9[%c0_96, %c0_97, %c0_98, %c0_99] : memref<8x8x2x128xf32, #tpu.memory_space<vmem>>, vector<8x8x2x128xf32>
    tpu.vector_store %arg9[%c0_96, %c0_97, %c0_98, %c0_99], %131 {strides = array<i32>} : memref<8x8x2x128xf32, #tpu.memory_space<vmem>>, vector<8x8x2x128xf32>,
    %cst_100 = arith.constant 0.000000e+00 : f32
    %133 = vector.broadcast %cst_100 : f32 to vector<18x128xf32>
    %c0_101 = arith.constant 0 : index
    %c0_102 = arith.constant 0 : index
    %c0_103 = arith.constant 0 : index
    %c0_104 = arith.constant 0 : index
    %134 = tpu.strided_load %arg9[%c0_101, %c0_102, %c0_103, %c0_104] {strides = array<i32: 2, 2, 1, 1>} : memref<8x8x2x128xf32, #tpu.memory_space<vmem>>, vector<3x3x2x128xf32>
    %135 = vector.shape_cast %134 : vector<3x3x2x128xf32> to vector<18x128xf32>
    %136 = arith.truncf %135 : vector<18x128xf32> to vector<18x128xbf16>
    %c0_105 = arith.constant 0 : index
    %c0_106 = arith.constant 0 : index
    %c0_107 = arith.constant 0 : index
    %137 = vector.load %arg3[%c0_105, %c0_106, %c0_107] : memref<9x128x128xbf16, #tpu.memory_space<vmem>>, vector<1x128x128xbf16>
    %138 = vector.shape_cast %137 : vector<1x128x128xbf16> to vector<128x128xbf16>
    %cst_108 = arith.constant dense<0.000000e+00> : vector<18x128xf32>
    %139 = tpu.matmul %136, %138, %cst_108 {dimension_numbers = #tpu.dot_dimension_numbers<[1], [0], [0], [1], [0, 0, 1, 1], [], []>} : vector<18x128xbf16>, vector<128x128xbf16>, vector<18x128xf32> -> vector<18x128xf32>
    %140 = arith.addf %133, %139 : vector<18x128xf32>
    %c0_109 = arith.constant 0 : index
    %c1_110 = arith.constant 1 : index
    %c0_111 = arith.constant 0 : index
    %c0_112 = arith.constant 0 : index
    %141 = tpu.strided_load %arg9[%c0_109, %c1_110, %c0_111, %c0_112] {strides = array<i32: 2, 2, 1, 1>} : memref<8x8x2x128xf32, #tpu.memory_space<vmem>>, vector<3x3x2x128xf32>
    %142 = vector.shape_cast %141 : vector<3x3x2x128xf32> to vector<18x128xf32>
    %143 = arith.truncf %142 : vector<18x128xf32> to vector<18x128xbf16>
    %c1_113 = arith.constant 1 : index
    %c0_114 = arith.constant 0 : index
    %c0_115 = arith.constant 0 : index
    %144 = vector.load %arg3[%c1_113, %c0_114, %c0_115] : memref<9x128x128xbf16, #tpu.memory_space<vmem>>, vector<1x128x128xbf16>
    %145 = vector.shape_cast %144 : vector<1x128x128xbf16> to vector<128x128xbf16>
    %cst_116 = arith.constant dense<0.000000e+00> : vector<18x128xf32>
    %146 = tpu.matmul %143, %145, %cst_116 {dimension_numbers = #tpu.dot_dimension_numbers<[1], [0], [0], [1], [0, 0, 1, 1], [], []>} : vector<18x128xbf16>, vector<128x128xbf16>, vector<18x128xf32> -> vector<18x128xf32>
    %147 = arith.addf %140, %146 : vector<18x128xf32>
    %c0_117 = arith.constant 0 : index
    %c2_118 = arith.constant 2 : index
    %c0_119 = arith.constant 0 : index
    %c0_120 = arith.constant 0 : index
    %148 = tpu.strided_load %arg9[%c0_117, %c2_118, %c0_119, %c0_120] {strides = array<i32: 2, 2, 1, 1>} : memref<8x8x2x128xf32, #tpu.memory_space<vmem>>, vector<3x3x2x128xf32>
    %149 = vector.shape_cast %148 : vector<3x3x2x128xf32> to vector<18x128xf32>
    %150 = arith.truncf %149 : vector<18x128xf32> to vector<18x128xbf16>
    %c2_121 = arith.constant 2 : index
    %c0_122 = arith.constant 0 : index
    %c0_123 = arith.constant 0 : index
    %151 = vector.load %arg3[%c2_121, %c0_122, %c0_123] : memref<9x128x128xbf16, #tpu.memory_space<vmem>>, vector<1x128x128xbf16>
    %152 = vector.shape_cast %151 : vector<1x128x128xbf16> to vector<128x128xbf16>
    %cst_124 = arith.constant dense<0.000000e+00> : vector<18x128xf32>
    %153 = tpu.matmul %150, %152, %cst_124 {dimension_numbers = #tpu.dot_dimension_numbers<[1], [0], [0], [1], [0, 0, 1, 1], [], []>} : vector<18x128xbf16>, vector<128x128xbf16>, vector<18x128xf32> -> vector<18x128xf32>
    %154 = arith.addf %147, %153 : vector<18x128xf32>
    %c1_125 = arith.constant 1 : index
    %c0_126 = arith.constant 0 : index
    %c0_127 = arith.constant 0 : index
    %c0_128 = arith.constant 0 : index
    %155 = tpu.strided_load %arg9[%c1_125, %c0_126, %c0_127, %c0_128] {strides = array<i32: 2, 2, 1, 1>} : memref<8x8x2x128xf32, #tpu.memory_space<vmem>>, vector<3x3x2x128xf32>
    %156 = vector.shape_cast %155 : vector<3x3x2x128xf32> to vector<18x128xf32>
    %157 = arith.truncf %156 : vector<18x128xf32> to vector<18x128xbf16>
    %c3_129 = arith.constant 3 : index
    %c0_130 = arith.constant 0 : index
    %c0_131 = arith.constant 0 : index
    %158 = vector.load %arg3[%c3_129, %c0_130, %c0_131] : memref<9x128x128xbf16, #tpu.memory_space<vmem>>, vector<1x128x128xbf16>
    %159 = vector.shape_cast %158 : vector<1x128x128xbf16> to vector<128x128xbf16>
    %cst_132 = arith.constant dense<0.000000e+00> : vector<18x128xf32>
    %160 = tpu.matmul %157, %159, %cst_132 {dimension_numbers = #tpu.dot_dimension_numbers<[1], [0], [0], [1], [0, 0, 1, 1], [], []>} : vector<18x128xbf16>, vector<128x128xbf16>, vector<18x128xf32> -> vector<18x128xf32>
    %161 = arith.addf %154, %160 : vector<18x128xf32>
    %c1_133 = arith.constant 1 : index
    %c1_134 = arith.constant 1 : index
    %c0_135 = arith.constant 0 : index
    %c0_136 = arith.constant 0 : index
    %162 = tpu.strided_load %arg9[%c1_133, %c1_134, %c0_135, %c0_136] {strides = array<i32: 2, 2, 1, 1>} : memref<8x8x2x128xf32, #tpu.memory_space<vmem>>, vector<3x3x2x128xf32>
    %163 = vector.shape_cast %162 : vector<3x3x2x128xf32> to vector<18x128xf32>
    %164 = arith.truncf %163 : vector<18x128xf32> to vector<18x128xbf16>
    %c4_137 = arith.constant 4 : index
    %c0_138 = arith.constant 0 : index
    %c0_139 = arith.constant 0 : index
    %165 = vector.load %arg3[%c4_137, %c0_138, %c0_139] : memref<9x128x128xbf16, #tpu.memory_space<vmem>>, vector<1x128x128xbf16>
    %166 = vector.shape_cast %165 : vector<1x128x128xbf16> to vector<128x128xbf16>
    %cst_140 = arith.constant dense<0.000000e+00> : vector<18x128xf32>
    %167 = tpu.matmul %164, %166, %cst_140 {dimension_numbers = #tpu.dot_dimension_numbers<[1], [0], [0], [1], [0, 0, 1, 1], [], []>} : vector<18x128xbf16>, vector<128x128xbf16>, vector<18x128xf32> -> vector<18x128xf32>
    %168 = arith.addf %161, %167 : vector<18x128xf32>
    %c1_141 = arith.constant 1 : index
    %c2_142 = arith.constant 2 : index
    %c0_143 = arith.constant 0 : index
    %c0_144 = arith.constant 0 : index
    %169 = tpu.strided_load %arg9[%c1_141, %c2_142, %c0_143, %c0_144] {strides = array<i32: 2, 2, 1, 1>} : memref<8x8x2x128xf32, #tpu.memory_space<vmem>>, vector<3x3x2x128xf32>
    %170 = vector.shape_cast %169 : vector<3x3x2x128xf32> to vector<18x128xf32>
    %171 = arith.truncf %170 : vector<18x128xf32> to vector<18x128xbf16>
    %c5_145 = arith.constant 5 : index
    %c0_146 = arith.constant 0 : index
    %c0_147 = arith.constant 0 : index
    %172 = vector.load %arg3[%c5_145, %c0_146, %c0_147] : memref<9x128x128xbf16, #tpu.memory_space<vmem>>, vector<1x128x128xbf16>
    %173 = vector.shape_cast %172 : vector<1x128x128xbf16> to vector<128x128xbf16>
    %cst_148 = arith.constant dense<0.000000e+00> : vector<18x128xf32>
    %174 = tpu.matmul %171, %173, %cst_148 {dimension_numbers = #tpu.dot_dimension_numbers<[1], [0], [0], [1], [0, 0, 1, 1], [], []>} : vector<18x128xbf16>, vector<128x128xbf16>, vector<18x128xf32> -> vector<18x128xf32>
    %175 = arith.addf %168, %174 : vector<18x128xf32>
    %c2_149 = arith.constant 2 : index
    %c0_150 = arith.constant 0 : index
    %c0_151 = arith.constant 0 : index
    %c0_152 = arith.constant 0 : index
    %176 = tpu.strided_load %arg9[%c2_149, %c0_150, %c0_151, %c0_152] {strides = array<i32: 2, 2, 1, 1>} : memref<8x8x2x128xf32, #tpu.memory_space<vmem>>, vector<3x3x2x128xf32>
    %177 = vector.shape_cast %176 : vector<3x3x2x128xf32> to vector<18x128xf32>
    %178 = arith.truncf %177 : vector<18x128xf32> to vector<18x128xbf16>
    %c6_153 = arith.constant 6 : index
    %c0_154 = arith.constant 0 : index
    %c0_155 = arith.constant 0 : index
    %179 = vector.load %arg3[%c6_153, %c0_154, %c0_155] : memref<9x128x128xbf16, #tpu.memory_space<vmem>>, vector<1x128x128xbf16>
    %180 = vector.shape_cast %179 : vector<1x128x128xbf16> to vector<128x128xbf16>
    %cst_156 = arith.constant dense<0.000000e+00> : vector<18x128xf32>
    %181 = tpu.matmul %178, %180, %cst_156 {dimension_numbers = #tpu.dot_dimension_numbers<[1], [0], [0], [1], [0, 0, 1, 1], [], []>} : vector<18x128xbf16>, vector<128x128xbf16>, vector<18x128xf32> -> vector<18x128xf32>
    %182 = arith.addf %175, %181 : vector<18x128xf32>
    %c2_157 = arith.constant 2 : index
    %c1_158 = arith.constant 1 : index
    %c0_159 = arith.constant 0 : index
    %c0_160 = arith.constant 0 : index
    %183 = tpu.strided_load %arg9[%c2_157, %c1_158, %c0_159, %c0_160] {strides = array<i32: 2, 2, 1, 1>} : memref<8x8x2x128xf32, #tpu.memory_space<vmem>>, vector<3x3x2x128xf32>
    %184 = vector.shape_cast %183 : vector<3x3x2x128xf32> to vector<18x128xf32>
    %185 = arith.truncf %184 : vector<18x128xf32> to vector<18x128xbf16>
    %c7_161 = arith.constant 7 : index
    %c0_162 = arith.constant 0 : index
    %c0_163 = arith.constant 0 : index
    %186 = vector.load %arg3[%c7_161, %c0_162, %c0_163] : memref<9x128x128xbf16, #tpu.memory_space<vmem>>, vector<1x128x128xbf16>
    %187 = vector.shape_cast %186 : vector<1x128x128xbf16> to vector<128x128xbf16>
    %cst_164 = arith.constant dense<0.000000e+00> : vector<18x128xf32>
    %188 = tpu.matmul %185, %187, %cst_164 {dimension_numbers = #tpu.dot_dimension_numbers<[1], [0], [0], [1], [0, 0, 1, 1], [], []>} : vector<18x128xbf16>, vector<128x128xbf16>, vector<18x128xf32> -> vector<18x128xf32>
    %189 = arith.addf %182, %188 : vector<18x128xf32>
    %c2_165 = arith.constant 2 : index
    %c2_166 = arith.constant 2 : index
    %c0_167 = arith.constant 0 : index
    %c0_168 = arith.constant 0 : index
    %190 = tpu.strided_load %arg9[%c2_165, %c2_166, %c0_167, %c0_168] {strides = array<i32: 2, 2, 1, 1>} : memref<8x8x2x128xf32, #tpu.memory_space<vmem>>, vector<3x3x2x128xf32>
    %191 = vector.shape_cast %190 : vector<3x3x2x128xf32> to vector<18x128xf32>
    %192 = arith.truncf %191 : vector<18x128xf32> to vector<18x128xbf16>
    %c8_169 = arith.constant 8 : index
    %c0_170 = arith.constant 0 : index
    %c0_171 = arith.constant 0 : index
    %193 = vector.load %arg3[%c8_169, %c0_170, %c0_171] : memref<9x128x128xbf16, #tpu.memory_space<vmem>>, vector<1x128x128xbf16>
    %194 = vector.shape_cast %193 : vector<1x128x128xbf16> to vector<128x128xbf16>
    %cst_172 = arith.constant dense<0.000000e+00> : vector<18x128xf32>
    %195 = tpu.matmul %192, %194, %cst_172 {dimension_numbers = #tpu.dot_dimension_numbers<[1], [0], [0], [1], [0, 0, 1, 1], [], []>} : vector<18x128xbf16>, vector<128x128xbf16>, vector<18x128xf32> -> vector<18x128xf32>
    %196 = arith.addf %189, %195 : vector<18x128xf32>
    %cst_173 = arith.constant dense<0.000000e+00> : vector<128xf32>
    %197 = vector.multi_reduction <add>, %196, %cst_173 [0] : vector<18x128xf32> to vector<128xf32>
    %198 = vector.shape_cast %197 : vector<128xf32> to vector<1x128xf32>
    %cst_174 = arith.constant 0.055555556 : f32
    %199 = vector.broadcast %cst_174 : f32 to vector<1x128xf32>
    %200 = arith.mulf %198, %199 : vector<1x128xf32>
    %201 = arith.mulf %196, %196 : vector<18x128xf32>
    %cst_175 = arith.constant dense<0.000000e+00> : vector<128xf32>
    %202 = vector.multi_reduction <add>, %201, %cst_175 [0] : vector<18x128xf32> to vector<128xf32>
    %203 = vector.shape_cast %202 : vector<128xf32> to vector<1x128xf32>
    %cst_176 = arith.constant 0.055555556 : f32
    %204 = vector.broadcast %cst_176 : f32 to vector<1x128xf32>
    %205 = arith.mulf %203, %204 : vector<1x128xf32>
    %206 = arith.mulf %200, %200 : vector<1x128xf32>
    %207 = arith.subf %205, %206 : vector<1x128xf32>
    %cst_177 = arith.constant 0.000000e+00 : f32
    %208 = vector.broadcast %cst_177 : f32 to vector<1x128xf32>
    %209 = arith.maximumf %207, %208 : vector<1x128xf32>
    %c2_178 = arith.constant 2 : index
    %c0_179 = arith.constant 0 : index
    %210 = vector.load %arg5[%c2_178, %c0_179] : memref<4x128xf32, #tpu.memory_space<vmem>>, vector<1x128xf32>
    %c2_180 = arith.constant 2 : index
    %c0_181 = arith.constant 0 : index
    %211 = vector.load %arg6[%c2_180, %c0_181] : memref<4x128xf32, #tpu.memory_space<vmem>>, vector<1x128xf32>
    %212 = vector.broadcast %200 : vector<1x128xf32> to vector<18x128xf32>
    %213 = arith.subf %196, %212 : vector<18x128xf32>
    %cst_182 = arith.constant 9.99999974E-6 : f32
    %214 = vector.broadcast %cst_182 : f32 to vector<1x128xf32>
    %215 = arith.addf %209, %214 : vector<1x128xf32>
    %216 = math.rsqrt %215 : vector<1x128xf32>
    %217 = vector.broadcast %216 : vector<1x128xf32> to vector<18x128xf32>
    %218 = arith.mulf %213, %217 : vector<18x128xf32>
    %219 = vector.broadcast %210 : vector<1x128xf32> to vector<18x128xf32>
    %220 = arith.mulf %218, %219 : vector<18x128xf32>
    %221 = vector.broadcast %211 : vector<1x128xf32> to vector<18x128xf32>
    %222 = arith.addf %220, %221 : vector<18x128xf32>
    %cst_183 = arith.constant 0.000000e+00 : f32
    %223 = vector.broadcast %cst_183 : f32 to vector<18x128xf32>
    %224 = arith.cmpf oge, %222, %223 : vector<18x128xf32>
    %cst_184 = arith.constant 0.00999999977 : f32
    %225 = vector.broadcast %cst_184 : f32 to vector<18x128xf32>
    %226 = arith.mulf %225, %222 : vector<18x128xf32>
    %227 = arith.select %224, %222, %226 : vector<18x128xi1>, vector<18x128xf32>
    %228 = vector.shape_cast %227 : vector<18x128xf32> to vector<3x3x2x128xf32>
    %c0_185 = arith.constant 0 : index
    %c0_186 = arith.constant 0 : index
    %c0_187 = arith.constant 0 : index
    %c0_188 = arith.constant 0 : index
    %229 = vector.load %arg10[%c0_185, %c0_186, %c0_187, %c0_188] : memref<3x3x2x128xf32, #tpu.memory_space<vmem>>, vector<3x3x2x128xf32>
    tpu.vector_store %arg10[%c0_185, %c0_186, %c0_187, %c0_188], %228 {strides = array<i32>} : memref<3x3x2x128xf32, #tpu.memory_space<vmem>>, vector<3x3x2x128xf32>,
    %cst_189 = arith.constant 0.000000e+00 : f32
    %230 = vector.broadcast %cst_189 : f32 to vector<2x128xf32>
    %c0_190 = arith.constant 0 : index
    %c0_191 = arith.constant 0 : index
    %c0_192 = arith.constant 0 : index
    %c0_193 = arith.constant 0 : index
    %231 = tpu.strided_load %arg10[%c0_190, %c0_191, %c0_192, %c0_193] {strides = array<i32: 2, 2, 1, 1>} : memref<3x3x2x128xf32, #tpu.memory_space<vmem>>, vector<1x1x2x128xf32>
    %232 = vector.shape_cast %231 : vector<1x1x2x128xf32> to vector<2x128xf32>
    %233 = arith.truncf %232 : vector<2x128xf32> to vector<2x128xbf16>
    %c0_194 = arith.constant 0 : index
    %c0_195 = arith.constant 0 : index
    %c0_196 = arith.constant 0 : index
    %234 = vector.load %arg4[%c0_194, %c0_195, %c0_196] : memref<9x128x128xbf16, #tpu.memory_space<vmem>>, vector<1x128x128xbf16>
    %235 = vector.shape_cast %234 : vector<1x128x128xbf16> to vector<128x128xbf16>
    %cst_197 = arith.constant dense<0.000000e+00> : vector<2x128xf32>
    %236 = tpu.matmul %233, %235, %cst_197 {dimension_numbers = #tpu.dot_dimension_numbers<[1], [0], [0], [1], [0, 0, 1, 1], [], []>} : vector<2x128xbf16>, vector<128x128xbf16>, vector<2x128xf32> -> vector<2x128xf32>
    %237 = arith.addf %230, %236 : vector<2x128xf32>
    %c0_198 = arith.constant 0 : index
    %c1_199 = arith.constant 1 : index
    %c0_200 = arith.constant 0 : index
    %c0_201 = arith.constant 0 : index
    %238 = tpu.strided_load %arg10[%c0_198, %c1_199, %c0_200, %c0_201] {strides = array<i32: 2, 2, 1, 1>} : memref<3x3x2x128xf32, #tpu.memory_space<vmem>>, vector<1x1x2x128xf32>
    %239 = vector.shape_cast %238 : vector<1x1x2x128xf32> to vector<2x128xf32>
    %240 = arith.truncf %239 : vector<2x128xf32> to vector<2x128xbf16>
    %c1_202 = arith.constant 1 : index
    %c0_203 = arith.constant 0 : index
    %c0_204 = arith.constant 0 : index
    %241 = vector.load %arg4[%c1_202, %c0_203, %c0_204] : memref<9x128x128xbf16, #tpu.memory_space<vmem>>, vector<1x128x128xbf16>
    %242 = vector.shape_cast %241 : vector<1x128x128xbf16> to vector<128x128xbf16>
    %cst_205 = arith.constant dense<0.000000e+00> : vector<2x128xf32>
    %243 = tpu.matmul %240, %242, %cst_205 {dimension_numbers = #tpu.dot_dimension_numbers<[1], [0], [0], [1], [0, 0, 1, 1], [], []>} : vector<2x128xbf16>, vector<128x128xbf16>, vector<2x128xf32> -> vector<2x128xf32>
    %244 = arith.addf %237, %243 : vector<2x128xf32>
    %c0_206 = arith.constant 0 : index
    %c2_207 = arith.constant 2 : index
    %c0_208 = arith.constant 0 : index
    %c0_209 = arith.constant 0 : index
    %245 = tpu.strided_load %arg10[%c0_206, %c2_207, %c0_208, %c0_209] {strides = array<i32: 2, 2, 1, 1>} : memref<3x3x2x128xf32, #tpu.memory_space<vmem>>, vector<1x1x2x128xf32>
    %246 = vector.shape_cast %245 : vector<1x1x2x128xf32> to vector<2x128xf32>
    %247 = arith.truncf %246 : vector<2x128xf32> to vector<2x128xbf16>
    %c2_210 = arith.constant 2 : index
    %c0_211 = arith.constant 0 : index
    %c0_212 = arith.constant 0 : index
    %248 = vector.load %arg4[%c2_210, %c0_211, %c0_212] : memref<9x128x128xbf16, #tpu.memory_space<vmem>>, vector<1x128x128xbf16>
    %249 = vector.shape_cast %248 : vector<1x128x128xbf16> to vector<128x128xbf16>
    %cst_213 = arith.constant dense<0.000000e+00> : vector<2x128xf32>
    %250 = tpu.matmul %247, %249, %cst_213 {dimension_numbers = #tpu.dot_dimension_numbers<[1], [0], [0], [1], [0, 0, 1, 1], [], []>} : vector<2x128xbf16>, vector<128x128xbf16>, vector<2x128xf32> -> vector<2x128xf32>
    %251 = arith.addf %244, %250 : vector<2x128xf32>
    %c1_214 = arith.constant 1 : index
    %c0_215 = arith.constant 0 : index
    %c0_216 = arith.constant 0 : index
    %c0_217 = arith.constant 0 : index
    %252 = tpu.strided_load %arg10[%c1_214, %c0_215, %c0_216, %c0_217] {strides = array<i32: 2, 2, 1, 1>} : memref<3x3x2x128xf32, #tpu.memory_space<vmem>>, vector<1x1x2x128xf32>
    %253 = vector.shape_cast %252 : vector<1x1x2x128xf32> to vector<2x128xf32>
    %254 = arith.truncf %253 : vector<2x128xf32> to vector<2x128xbf16>
    %c3_218 = arith.constant 3 : index
    %c0_219 = arith.constant 0 : index
    %c0_220 = arith.constant 0 : index
    %255 = vector.load %arg4[%c3_218, %c0_219, %c0_220] : memref<9x128x128xbf16, #tpu.memory_space<vmem>>, vector<1x128x128xbf16>
    %256 = vector.shape_cast %255 : vector<1x128x128xbf16> to vector<128x128xbf16>
    %cst_221 = arith.constant dense<0.000000e+00> : vector<2x128xf32>
    %257 = tpu.matmul %254, %256, %cst_221 {dimension_numbers = #tpu.dot_dimension_numbers<[1], [0], [0], [1], [0, 0, 1, 1], [], []>} : vector<2x128xbf16>, vector<128x128xbf16>, vector<2x128xf32> -> vector<2x128xf32>
    %258 = arith.addf %251, %257 : vector<2x128xf32>
    %c1_222 = arith.constant 1 : index
    %c1_223 = arith.constant 1 : index
    %c0_224 = arith.constant 0 : index
    %c0_225 = arith.constant 0 : index
    %259 = tpu.strided_load %arg10[%c1_222, %c1_223, %c0_224, %c0_225] {strides = array<i32: 2, 2, 1, 1>} : memref<3x3x2x128xf32, #tpu.memory_space<vmem>>, vector<1x1x2x128xf32>
    %260 = vector.shape_cast %259 : vector<1x1x2x128xf32> to vector<2x128xf32>
    %261 = arith.truncf %260 : vector<2x128xf32> to vector<2x128xbf16>
    %c4_226 = arith.constant 4 : index
    %c0_227 = arith.constant 0 : index
    %c0_228 = arith.constant 0 : index
    %262 = vector.load %arg4[%c4_226, %c0_227, %c0_228] : memref<9x128x128xbf16, #tpu.memory_space<vmem>>, vector<1x128x128xbf16>
    %263 = vector.shape_cast %262 : vector<1x128x128xbf16> to vector<128x128xbf16>
    %cst_229 = arith.constant dense<0.000000e+00> : vector<2x128xf32>
    %264 = tpu.matmul %261, %263, %cst_229 {dimension_numbers = #tpu.dot_dimension_numbers<[1], [0], [0], [1], [0, 0, 1, 1], [], []>} : vector<2x128xbf16>, vector<128x128xbf16>, vector<2x128xf32> -> vector<2x128xf32>
    %265 = arith.addf %258, %264 : vector<2x128xf32>
    %c1_230 = arith.constant 1 : index
    %c2_231 = arith.constant 2 : index
    %c0_232 = arith.constant 0 : index
    %c0_233 = arith.constant 0 : index
    %266 = tpu.strided_load %arg10[%c1_230, %c2_231, %c0_232, %c0_233] {strides = array<i32: 2, 2, 1, 1>} : memref<3x3x2x128xf32, #tpu.memory_space<vmem>>, vector<1x1x2x128xf32>
    %267 = vector.shape_cast %266 : vector<1x1x2x128xf32> to vector<2x128xf32>
    %268 = arith.truncf %267 : vector<2x128xf32> to vector<2x128xbf16>
    %c5_234 = arith.constant 5 : index
    %c0_235 = arith.constant 0 : index
    %c0_236 = arith.constant 0 : index
    %269 = vector.load %arg4[%c5_234, %c0_235, %c0_236] : memref<9x128x128xbf16, #tpu.memory_space<vmem>>, vector<1x128x128xbf16>
    %270 = vector.shape_cast %269 : vector<1x128x128xbf16> to vector<128x128xbf16>
    %cst_237 = arith.constant dense<0.000000e+00> : vector<2x128xf32>
    %271 = tpu.matmul %268, %270, %cst_237 {dimension_numbers = #tpu.dot_dimension_numbers<[1], [0], [0], [1], [0, 0, 1, 1], [], []>} : vector<2x128xbf16>, vector<128x128xbf16>, vector<2x128xf32> -> vector<2x128xf32>
    %272 = arith.addf %265, %271 : vector<2x128xf32>
    %c2_238 = arith.constant 2 : index
    %c0_239 = arith.constant 0 : index
    %c0_240 = arith.constant 0 : index
    %c0_241 = arith.constant 0 : index
    %273 = tpu.strided_load %arg10[%c2_238, %c0_239, %c0_240, %c0_241] {strides = array<i32: 2, 2, 1, 1>} : memref<3x3x2x128xf32, #tpu.memory_space<vmem>>, vector<1x1x2x128xf32>
    %274 = vector.shape_cast %273 : vector<1x1x2x128xf32> to vector<2x128xf32>
    %275 = arith.truncf %274 : vector<2x128xf32> to vector<2x128xbf16>
    %c6_242 = arith.constant 6 : index
    %c0_243 = arith.constant 0 : index
    %c0_244 = arith.constant 0 : index
    %276 = vector.load %arg4[%c6_242, %c0_243, %c0_244] : memref<9x128x128xbf16, #tpu.memory_space<vmem>>, vector<1x128x128xbf16>
    %277 = vector.shape_cast %276 : vector<1x128x128xbf16> to vector<128x128xbf16>
    %cst_245 = arith.constant dense<0.000000e+00> : vector<2x128xf32>
    %278 = tpu.matmul %275, %277, %cst_245 {dimension_numbers = #tpu.dot_dimension_numbers<[1], [0], [0], [1], [0, 0, 1, 1], [], []>} : vector<2x128xbf16>, vector<128x128xbf16>, vector<2x128xf32> -> vector<2x128xf32>
    %279 = arith.addf %272, %278 : vector<2x128xf32>
    %c2_246 = arith.constant 2 : index
    %c1_247 = arith.constant 1 : index
    %c0_248 = arith.constant 0 : index
    %c0_249 = arith.constant 0 : index
    %280 = tpu.strided_load %arg10[%c2_246, %c1_247, %c0_248, %c0_249] {strides = array<i32: 2, 2, 1, 1>} : memref<3x3x2x128xf32, #tpu.memory_space<vmem>>, vector<1x1x2x128xf32>
    %281 = vector.shape_cast %280 : vector<1x1x2x128xf32> to vector<2x128xf32>
    %282 = arith.truncf %281 : vector<2x128xf32> to vector<2x128xbf16>
    %c7_250 = arith.constant 7 : index
    %c0_251 = arith.constant 0 : index
    %c0_252 = arith.constant 0 : index
    %283 = vector.load %arg4[%c7_250, %c0_251, %c0_252] : memref<9x128x128xbf16, #tpu.memory_space<vmem>>, vector<1x128x128xbf16>
    %284 = vector.shape_cast %283 : vector<1x128x128xbf16> to vector<128x128xbf16>
    %cst_253 = arith.constant dense<0.000000e+00> : vector<2x128xf32>
    %285 = tpu.matmul %282, %284, %cst_253 {dimension_numbers = #tpu.dot_dimension_numbers<[1], [0], [0], [1], [0, 0, 1, 1], [], []>} : vector<2x128xbf16>, vector<128x128xbf16>, vector<2x128xf32> -> vector<2x128xf32>
    %286 = arith.addf %279, %285 : vector<2x128xf32>
    %c2_254 = arith.constant 2 : index
    %c2_255 = arith.constant 2 : index
    %c0_256 = arith.constant 0 : index
    %c0_257 = arith.constant 0 : index
    %287 = tpu.strided_load %arg10[%c2_254, %c2_255, %c0_256, %c0_257] {strides = array<i32: 2, 2, 1, 1>} : memref<3x3x2x128xf32, #tpu.memory_space<vmem>>, vector<1x1x2x128xf32>
    %288 = vector.shape_cast %287 : vector<1x1x2x128xf32> to vector<2x128xf32>
    %289 = arith.truncf %288 : vector<2x128xf32> to vector<2x128xbf16>
    %c8_258 = arith.constant 8 : index
    %c0_259 = arith.constant 0 : index
    %c0_260 = arith.constant 0 : index
    %290 = vector.load %arg4[%c8_258, %c0_259, %c0_260] : memref<9x128x128xbf16, #tpu.memory_space<vmem>>, vector<1x128x128xbf16>
    %291 = vector.shape_cast %290 : vector<1x128x128xbf16> to vector<128x128xbf16>
    %cst_261 = arith.constant dense<0.000000e+00> : vector<2x128xf32>
    %292 = tpu.matmul %289, %291, %cst_261 {dimension_numbers = #tpu.dot_dimension_numbers<[1], [0], [0], [1], [0, 0, 1, 1], [], []>} : vector<2x128xbf16>, vector<128x128xbf16>, vector<2x128xf32> -> vector<2x128xf32>
    %293 = arith.addf %286, %292 : vector<2x128xf32>
    %cst_262 = arith.constant dense<0.000000e+00> : vector<128xf32>
    %294 = vector.multi_reduction <add>, %293, %cst_262 [0] : vector<2x128xf32> to vector<128xf32>
    %295 = vector.shape_cast %294 : vector<128xf32> to vector<1x128xf32>
    %cst_263 = arith.constant 5.000000e-01 : f32
    %296 = vector.broadcast %cst_263 : f32 to vector<1x128xf32>
    %297 = arith.mulf %295, %296 : vector<1x128xf32>
    %298 = arith.mulf %293, %293 : vector<2x128xf32>
    %cst_264 = arith.constant dense<0.000000e+00> : vector<128xf32>
    %299 = vector.multi_reduction <add>, %298, %cst_264 [0] : vector<2x128xf32> to vector<128xf32>
    %300 = vector.shape_cast %299 : vector<128xf32> to vector<1x128xf32>
    %cst_265 = arith.constant 5.000000e-01 : f32
    %301 = vector.broadcast %cst_265 : f32 to vector<1x128xf32>
    %302 = arith.mulf %300, %301 : vector<1x128xf32>
    %303 = arith.mulf %297, %297 : vector<1x128xf32>
    %304 = arith.subf %302, %303 : vector<1x128xf32>
    %cst_266 = arith.constant 0.000000e+00 : f32
    %305 = vector.broadcast %cst_266 : f32 to vector<1x128xf32>
    %306 = arith.maximumf %304, %305 : vector<1x128xf32>
    %c3_267 = arith.constant 3 : index
    %c0_268 = arith.constant 0 : index
    %307 = vector.load %arg5[%c3_267, %c0_268] : memref<4x128xf32, #tpu.memory_space<vmem>>, vector<1x128xf32>
    %c3_269 = arith.constant 3 : index
    %c0_270 = arith.constant 0 : index
    %308 = vector.load %arg6[%c3_269, %c0_270] : memref<4x128xf32, #tpu.memory_space<vmem>>, vector<1x128xf32>
    %309 = vector.broadcast %297 : vector<1x128xf32> to vector<2x128xf32>
    %310 = arith.subf %293, %309 : vector<2x128xf32>
    %cst_271 = arith.constant 9.99999974E-6 : f32
    %311 = vector.broadcast %cst_271 : f32 to vector<1x128xf32>
    %312 = arith.addf %306, %311 : vector<1x128xf32>
    %313 = math.rsqrt %312 : vector<1x128xf32>
    %314 = vector.broadcast %313 : vector<1x128xf32> to vector<2x128xf32>
    %315 = arith.mulf %310, %314 : vector<2x128xf32>
    %316 = vector.broadcast %307 : vector<1x128xf32> to vector<2x128xf32>
    %317 = arith.mulf %315, %316 : vector<2x128xf32>
    %318 = vector.broadcast %308 : vector<1x128xf32> to vector<2x128xf32>
    %319 = arith.addf %317, %318 : vector<2x128xf32>
    %cst_272 = arith.constant 0.000000e+00 : f32
    %320 = vector.broadcast %cst_272 : f32 to vector<2x128xf32>
    %321 = arith.cmpf oge, %319, %320 : vector<2x128xf32>
    %cst_273 = arith.constant 0.00999999977 : f32
    %322 = vector.broadcast %cst_273 : f32 to vector<2x128xf32>
    %323 = arith.mulf %322, %319 : vector<2x128xf32>
    %324 = arith.select %321, %319, %323 : vector<2x128xi1>, vector<2x128xf32>
    %c0_274 = arith.constant 0 : index
    %c0_275 = arith.constant 0 : index
    %325 = vector.load %arg7[%c0_274, %c0_275] : memref<2x128xf32, #tpu.memory_space<vmem>>, vector<2x128xf32>
    tpu.vector_store %arg7[%c0_274, %c0_275], %324 {strides = array<i32>} : memref<2x128xf32, #tpu.memory_space<vmem>>, vector<2x128xf32>,
    return
  }
}

</mosaic_0001>

<llo_original>
// kernel: _forward_impl.1
$region0: #{_forward_impl.1}
  #allocation0 [shape = 'u32[]', space=smem, size = 0x4, offset = 0x4, fixed_abs, tag = 'smem constant byte address 0x4 - core index']
  #allocation1 [shape = 'u32[144,128]{1,0:T(1,128)}', space=vmem, size = 0x12000, scoped, tag = 'internal scratch']
  #allocation2 [shape = 'f32[17,17,2,128]{3,2,1,0:T(2,128)}', space=vmem, size = 0x48400, scoped, tag = 'scratch operand']
  #allocation3 [shape = 'f32[8,8,2,128]{3,2,1,0:T(2,128)}', space=vmem, size = 0x10000, scoped, tag = 'scratch operand']
  #allocation4 [shape = 'f32[3,3,2,128]{3,2,1,0:T(2,128)}', space=vmem, size = 0x2400, scoped, tag = 'scratch operand']
  %s0 = inlined_call_operand.vmem [shape: bf16[578,128], index: 0, kind: input, shape index: {}]
  %s1 = inlined_call_operand.vmem [shape: bf16[128,128], index: 1, kind: input, shape index: {}]
  %s2 = inlined_call_operand.vmem [shape: bf16[9,128,128], index: 2, kind: input, shape index: {}]
  %s3 = inlined_call_operand.vmem [shape: bf16[9,128,128], index: 3, kind: input, shape index: {}]
  %s4 = inlined_call_operand.vmem [shape: bf16[9,128,128], index: 4, kind: input, shape index: {}]
  %s5 = inlined_call_operand.vmem [shape: f32[4,128], index: 5, kind: input, shape index: {}]
  %s6 = inlined_call_operand.vmem [shape: f32[4,128], index: 6, kind: input, shape index: {}]
  %s7 = inlined_call_operand.vmem [shape: f32[2,128], index: 7, kind: output, shape index: {}]
  %s8 = sld [smem:[#allocation0]]
  $region38: #{_forward_impl.1} parent=0
    _
  %s10 = ssub.s32 1, %s8
  %s11 = scalar_select 0, %s10, %s8
  // Predicated region
  $region2: #{_forward_impl.1} parent=0 // pred_check
    _
  $region3: #{_forward_impl.1} parent=0 // pred_check_branch
    %13 = sbr.rel (0) target = $region5
  $region4: #{_forward_impl.1} parent=0 // pred_region
    _
  $region5: #{_forward_impl.1} parent=0 // pred_fallthru
    _
  // Predicated region
  $region6: #{_forward_impl.1} parent=0 // pred_check
    _
  $region7: #{_forward_impl.1} parent=0 // pred_check_branch
    %15 = sbr.rel (0) target = $region9
  $region8: #{_forward_impl.1} parent=0 // pred_region
    _
  $region9: #{_forward_impl.1} parent=0 // pred_fallthru
    _
  // Predicated region
  $region10: #{_forward_impl.1} parent=0 // pred_check
    _
  $region11: #{_forward_impl.1} parent=0 // pred_check_branch
    %17 = sbr.rel (0) target = $region13
  $region12: #{_forward_impl.1} parent=0 // pred_region
    _
  $region13: #{_forward_impl.1} parent=0 // pred_fallthru
    _
  // Predicated region
  $region14: #{_forward_impl.1} parent=0 // pred_check
    _
  $region15: #{_forward_impl.1} parent=0 // pred_check_branch
    %19 = sbr.rel (0) target = $region17
  $region16: #{_forward_impl.1} parent=0 // pred_region
    _
  $region17: #{_forward_impl.1} parent=0 // pred_fallthru
    _
  // Predicated region
  $region18: #{_forward_impl.1} parent=0 // pred_check
    _
  $region19: #{_forward_impl.1} parent=0 // pred_check_branch
    %21 = sbr.rel (0) target = $region21
  $region20: #{_forward_impl.1} parent=0 // pred_region
    _
  $region21: #{_forward_impl.1} parent=0 // pred_fallthru
    _
  // Predicated region
  $region22: #{_forward_impl.1} parent=0 // pred_check
    _
  $region23: #{_forward_impl.1} parent=0 // pred_check_branch
    %23 = sbr.rel (0) target = $region25
  $region24: #{_forward_impl.1} parent=0 // pred_region
    _
  $region25: #{_forward_impl.1} parent=0 // pred_fallthru
    _
  // Predicated region
  $region26: #{_forward_impl.1} parent=0 // pred_check
    _
  $region27: #{_forward_impl.1} parent=0 // pred_check_branch
    %25 = sbr.rel (0) target = $region29
  $region28: #{_forward_impl.1} parent=0 // pred_region
    _
  $region29: #{_forward_impl.1} parent=0 // pred_fallthru
    _
  %v27 = vld [vmem:[%s0] sm:$0xf]
  %v28 = vld [vmem:[%s0 + $0x4] sm:$0xf]
  %v29 = vld [vmem:[%s0 + $0x8] sm:$0xf]
  %v30 = vld [vmem:[%s0 + $0xc] sm:$0xf]
  %v31 = vld [vmem:[%s0 + $0x10] sm:$0xf]
  %v32 = vld [vmem:[%s0 + $0x14] sm:$0xf]
  %v33 = vld [vmem:[%s0 + $0x18] sm:$0xf]
  %v34 = vld [vmem:[%s0 + $0x1c] sm:$0xf]
  %v35 = vld [vmem:[%s0 + $0x20] sm:$0xf]
  %v36 = vld [vmem:[%s0 + $0x24] sm:$0xf]
  %v37 = vld [vmem:[%s0 + $0x28] sm:$0xf]
  %v38 = vld [vmem:[%s0 + $0x2c] sm:$0xf]
  %v39 = vld [vmem:[%s0 + $0x30] sm:$0xf]
  %v40 = vld [vmem:[%s0 + $0x34] sm:$0xf]
  %v41 = vld [vmem:[%s0 + $0x38] sm:$0xf]
  %v42 = vld [vmem:[%s0 + $0x3c] sm:$0xf]
  %v43 = vld [vmem:[%s0 + $0x40] sm:$0xf]
  %v44 = vld [vmem:[%s0 + $0x44] sm:$0xf]
  %v45 = vld [vmem:[%s0 + $0x48] sm:$0xf]
  %v46 = vld [vmem:[%s0 + $0x4c] sm:$0xf]
  %v47 = vld [vmem:[%s0 + $0x50] sm:$0xf]
  %v48 = vld [vmem:[%s0 + $0x54] sm:$0xf]
  %v49 = vld [vmem:[%s0 + $0x58] sm:$0xf]
  %v50 = vld [vmem:[%s0 + $0x5c] sm:$0xf]
  %v51 = vld [vmem:[%s0 + $0x60] sm:$0xf]
  %v52 = vld [vmem:[%s0 + $0x64] sm:$0xf]
  %v53 = vld [vmem:[%s0 + $0x68] sm:$0xf]
  %v54 = vld [vmem:[%s0 + $0x6c] sm:$0xf]
  %v55 = vld [vmem:[%s0 + $0x70] sm:$0xf]
  %v56 = vld [vmem:[%s0 + $0x74] sm:$0xf]
  %v57 = vld [vmem:[%s0 + $0x78] sm:$0xf]
  %v58 = vld [vmem:[%s0 + $0x7c] sm:$0xf]
  %v59 = vld [vmem:[%s0 + $0x80] sm:$0xf]
  %v60 = vld [vmem:[%s0 + $0x84] sm:$0xf]
  %v61 = vld [vmem:[%s0 + $0x88] sm:$0xf]
  %v62 = vld [vmem:[%s0 + $0x8c] sm:$0xf]
  %v63 = vld [vmem:[%s0 + $0x90] sm:$0xf]
  %v64 = vld [vmem:[%s0 + $0x94] sm:$0xf]
  %v65 = vld [vmem:[%s0 + $0x98] sm:$0xf]
  %v66 = vld [vmem:[%s0 + $0x9c] sm:$0xf]
  %v67 = vld [vmem:[%s0 + $0xa0] sm:$0xf]
  %v68 = vld [vmem:[%s0 + $0xa4] sm:$0xf]
  %v69 = vld [vmem:[%s0 + $0xa8] sm:$0xf]
  %v70 = vld [vmem:[%s0 + $0xac] sm:$0xf]
  %v71 = vld [vmem:[%s0 + $0xb0] sm:$0xf]
  %v72 = vld [vmem:[%s0 + $0xb4] sm:$0xf]
  %v73 = vld [vmem:[%s0 + $0xb8] sm:$0xf]
  %v74 = vld [vmem:[%s0 + $0xbc] sm:$0xf]
  %v75 = vld [vmem:[%s0 + $0xc0] sm:$0xf]
  %v76 = vld [vmem:[%s0 + $0xc4] sm:$0xf]
  %v77 = vld [vmem:[%s0 + $0xc8] sm:$0xf]
  %v78 = vld [vmem:[%s0 + $0xcc] sm:$0xf]
  %v79 = vld [vmem:[%s0 + $0xd0] sm:$0xf]
  %v80 = vld [vmem:[%s0 + $0xd4] sm:$0xf]
  %v81 = vld [vmem:[%s0 + $0xd8] sm:$0xf]
  %v82 = vld [vmem:[%s0 + $0xdc] sm:$0xf]
  %v83 = vld [vmem:[%s0 + $0xe0] sm:$0xf]
  %v84 = vld [vmem:[%s0 + $0xe4] sm:$0xf]
  %v85 = vld [vmem:[%s0 + $0xe8] sm:$0xf]
  %v86 = vld [vmem:[%s0 + $0xec] sm:$0xf]
  %v87 = vld [vmem:[%s0 + $0xf0] sm:$0xf]
  %v88 = vld [vmem:[%s0 + $0xf4] sm:$0xf]
  %v89 = vld [vmem:[%s0 + $0xf8] sm:$0xf]
  %v90 = vld [vmem:[%s0 + $0xfc] sm:$0xf]
  %v91 = vld [vmem:[%s0 + $0x100] sm:$0xf]
  %v92 = vld [vmem:[%s0 + $0x104] sm:$0xf]
  %v93 = vld [vmem:[%s0 + $0x108] sm:$0xf]
  %v94 = vld [vmem:[%s0 + $0x10c] sm:$0xf]
  %v95 = vld [vmem:[%s0 + $0x110] sm:$0xf]
  %v96 = vld [vmem:[%s0 + $0x114] sm:$0xf]
  %v97 = vld [vmem:[%s0 + $0x118] sm:$0xf]
  %v98 = vld [vmem:[%s0 + $0x11c] sm:$0xf]
  %v99 = vld [vmem:[%s0 + $0x120] sm:$0x1]
  %v100 = vld [vmem:[%s1] sm:$0xf]
  %v101 = vld [vmem:[%s1 + $0x4] sm:$0xf]
  %v102 = vld [vmem:[%s1 + $0x8] sm:$0xf]
  %v103 = vld [vmem:[%s1 + $0xc] sm:$0xf]
  %v104 = vld [vmem:[%s1 + $0x10] sm:$0xf]
  %v105 = vld [vmem:[%s1 + $0x14] sm:$0xf]
  %v106 = vld [vmem:[%s1 + $0x18] sm:$0xf]
  %v107 = vld [vmem:[%s1 + $0x1c] sm:$0xf]
  %v108 = vld [vmem:[%s1 + $0x20] sm:$0xf]
  %v109 = vld [vmem:[%s1 + $0x24] sm:$0xf]
  %v110 = vld [vmem:[%s1 + $0x28] sm:$0xf]
  %v111 = vld [vmem:[%s1 + $0x2c] sm:$0xf]
  %v112 = vld [vmem:[%s1 + $0x30] sm:$0xf]
  %v113 = vld [vmem:[%s1 + $0x34] sm:$0xf]
  %v114 = vld [vmem:[%s1 + $0x38] sm:$0xf]
  %v115 = vld [vmem:[%s1 + $0x3c] sm:$0xf]
  %v189 = vunpack.c.l.b16 %v27
  %v190 = vunpack.c.l.b16 %v28
  %v191 = vunpack.c.l.b16 %v29
  %v192 = vunpack.c.l.b16 %v30
  %v193 = vunpack.c.l.b16 %v31
  %v194 = vunpack.c.l.b16 %v32
  %v195 = vunpack.c.l.b16 %v33
  %v196 = vunpack.c.l.b16 %v34
  %v197 = vunpack.c.l.b16 %v35
  %v198 = vunpack.c.l.b16 %v36
  %v199 = vunpack.c.l.b16 %v37
  %v200 = vunpack.c.l.b16 %v38
  %v201 = vunpack.c.l.b16 %v39
  %v202 = vunpack.c.l.b16 %v40
  %v203 = vunpack.c.l.b16 %v41
  %v204 = vunpack.c.l.b16 %v42
  %v205 = vunpack.c.l.b16 %v43
  %v206 = vunpack.c.l.b16 %v44
  %v207 = vunpack.c.l.b16 %v45
  %v208 = vunpack.c.l.b16 %v46
  %v209 = vunpack.c.l.b16 %v47
  %v210 = vunpack.c.l.b16 %v48
  %v211 = vunpack.c.l.b16 %v49
  %v212 = vunpack.c.l.b16 %v50
  %v213 = vunpack.c.l.b16 %v51
  %v214 = vunpack.c.l.b16 %v52
  %v215 = vunpack.c.l.b16 %v53
  %v216 = vunpack.c.l.b16 %v54
  %v217 = vunpack.c.l.b16 %v55
  %v218 = vunpack.c.l.b16 %v56
  %v219 = vunpack.c.l.b16 %v57
  %v220 = vunpack.c.l.b16 %v58
  %v221 = vunpack.c.l.b16 %v59
  %v222 = vunpack.c.l.b16 %v60
  %v223 = vunpack.c.l.b16 %v61
  %v224 = vunpack.c.l.b16 %v62
  %v225 = vunpack.c.l.b16 %v63
  %v226 = vunpack.c.l.b16 %v64
  %v227 = vunpack.c.l.b16 %v65
  %v228 = vunpack.c.l.b16 %v66
  %v229 = vunpack.c.l.b16 %v67
  %v230 = vunpack.c.l.b16 %v68
  %v231 = vunpack.c.l.b16 %v69
  %v232 = vunpack.c.l.b16 %v70
  %v233 = vunpack.c.l.b16 %v71
  %v234 = vunpack.c.l.b16 %v72
  %v235 = vunpack.c.l.b16 %v73
  %v236 = vunpack.c.l.b16 %v74
  %v237 = vunpack.c.l.b16 %v75
  %v238 = vunpack.c.l.b16 %v76
  %v239 = vunpack.c.l.b16 %v77
  %v240 = vunpack.c.l.b16 %v78
  %v241 = vunpack.c.l.b16 %v79
  %v242 = vunpack.c.l.b16 %v80
  %v243 = vunpack.c.l.b16 %v81
  %v244 = vunpack.c.l.b16 %v82
  %v245 = vunpack.c.l.b16 %v83
  %v246 = vunpack.c.l.b16 %v84
  %v247 = vunpack.c.l.b16 %v85
  %v248 = vunpack.c.l.b16 %v86
  %v249 = vunpack.c.l.b16 %v87
  %v250 = vunpack.c.l.b16 %v88
  %v251 = vunpack.c.l.b16 %v89
  %v252 = vunpack.c.l.b16 %v90
  %v253 = vunpack.c.l.b16 %v91
  %v254 = vunpack.c.l.b16 %v92
  %v255 = vunpack.c.l.b16 %v93
  %v256 = vunpack.c.l.b16 %v94
  %v257 = vunpack.c.l.b16 %v95
  %v258 = vunpack.c.l.b16 %v96
  %v259 = vunpack.c.l.b16 %v97
  %v260 = vunpack.c.l.b16 %v98
  %v261 = vunpack.c.l.b16 %v99
  %v262 = vpack.c.b16 %v190, %v189
  %v263 = vpack.c.b16 %v192, %v191
  %v264 = vpack.c.b16 %v194, %v193
  %v265 = vpack.c.b16 %v196, %v195
  %v266 = vpack.c.b16 %v198, %v197
  %v267 = vpack.c.b16 %v200, %v199
  %v268 = vpack.c.b16 %v202, %v201
  %v269 = vpack.c.b16 %v204, %v203
  %v270 = vpack.c.b16 %v206, %v205
  %v271 = vpack.c.b16 %v208, %v207
  %v272 = vpack.c.b16 %v210, %v209
  %v273 = vpack.c.b16 %v212, %v211
  %v274 = vpack.c.b16 %v214, %v213
  %v275 = vpack.c.b16 %v216, %v215
  %v276 = vpack.c.b16 %v218, %v217
  %v277 = vpack.c.b16 %v220, %v219
  %v278 = vpack.c.b16 %v222, %v221
  %v279 = vpack.c.b16 %v224, %v223
  %v280 = vpack.c.b16 %v226, %v225
  %v281 = vpack.c.b16 %v228, %v227
  %v282 = vpack.c.b16 %v230, %v229
  %v283 = vpack.c.b16 %v232, %v231
  %v284 = vpack.c.b16 %v234, %v233
  %v285 = vpack.c.b16 %v236, %v235
  %v286 = vpack.c.b16 %v238, %v237
  %v287 = vpack.c.b16 %v240, %v239
  %v288 = vpack.c.b16 %v242, %v241
  %v289 = vpack.c.b16 %v244, %v243
  %v290 = vpack.c.b16 %v246, %v245
  %v291 = vpack.c.b16 %v248, %v247
  %v292 = vpack.c.b16 %v250, %v249
  %v293 = vpack.c.b16 %v252, %v251
  %v294 = vpack.c.b16 %v254, %v253
  %v295 = vpack.c.b16 %v256, %v255
  %v296 = vpack.c.b16 %v258, %v257
  %v297 = vpack.c.b16 %v260, %v259
  %v298 = vpack.c.b16 %v261, %v261
  %v352 = vunpack.c.l.b16 %v100
  %v353 = vunpack.c.l.b16 %v101
  %v354 = vunpack.c.l.b16 %v102
  %v355 = vunpack.c.l.b16 %v103
  %v356 = vunpack.c.l.b16 %v104
  %v357 = vunpack.c.l.b16 %v105
  %v358 = vunpack.c.l.b16 %v106
  %v359 = vunpack.c.l.b16 %v107
  %v360 = vunpack.c.l.b16 %v108
  %v361 = vunpack.c.l.b16 %v109
  %v362 = vunpack.c.l.b16 %v110
  %v363 = vunpack.c.l.b16 %v111
  %v364 = vunpack.c.l.b16 %v112
  %v365 = vunpack.c.l.b16 %v113
  %v366 = vunpack.c.l.b16 %v114
  %v367 = vunpack.c.l.b16 %v115
  %v368 = vpack.c.b16 %v353, %v352
  %v369 = vpack.c.b16 %v355, %v354
  %v370 = vpack.c.b16 %v357, %v356
  %v371 = vpack.c.b16 %v359, %v358
  %v372 = vpack.c.b16 %v361, %v360
  %v373 = vpack.c.b16 %v363, %v362
  %v374 = vpack.c.b16 %v365, %v364
  %v375 = vpack.c.b16 %v367, %v366
  %384 = vmatprep.subr.bf16.mxu0 0
  %385 = vmatpush1.bf16.msra.mxu0 %v368
  %386 = vmatprep.subr.bf16.mxu0 0
  %387 = vmatpush1.bf16.msra.mxu0 %v369
  %388 = vmatprep.subr.bf16.mxu0 0
  %389 = vmatpush1.bf16.msra.mxu0 %v370
  %390 = vmatprep.subr.bf16.mxu0 0
  %391 = vmatpush1.bf16.msra.mxu0 %v371
  %392 = vmatprep.subr.bf16.mxu0 0
  %393 = vmatpush1.bf16.msra.mxu0 %v372
  %394 = vmatprep.subr.bf16.mxu0 0
  %395 = vmatpush1.bf16.msra.mxu0 %v373
  %396 = vmatprep.subr.bf16.mxu0 0
  %397 = vmatpush1.bf16.msra.mxu0 %v374
  %398 = vmatprep.subr.bf16.mxu0 0
  %399 = vmatpush1.bf16.msra.mxu0 %v375
  %400 = vmatprep.subr.bf16.mxu0 0
  %401 = vmatpush1.bf16.msra.mxu0 0
  %402 = vmatprep.subr.bf16.mxu0 0
  %403 = vmatpush1.bf16.msra.mxu0 0
  %404 = vmatprep.subr.bf16.mxu0 0
  %405 = vmatpush1.bf16.msra.mxu0 0
  %406 = vmatprep.subr.bf16.mxu0 0
  %407 = vmatpush1.bf16.msra.mxu0 0
  %408 = vmatprep.subr.bf16.mxu0 0
  %409 = vmatpush1.bf16.msra.mxu0 0
  %410 = vmatprep.subr.bf16.mxu0 0
  %411 = vmatpush1.bf16.msra.mxu0 0
  %412 = vmatprep.subr.bf16.mxu0 0
  %413 = vmatpush1.bf16.msra.mxu0 0
  %414 = vmatprep.subr.bf16.mxu0 0
  %415 = vmatpush1.bf16.msra.mxu0 0
  %416 = vmatprep.mubr.bf16.mxu0 0
  %417 = vmatmul.mubr.bf16.gmra.mrb[0].mxu0 %v262
  %v418 = vpop.f32.mrb[0].mxu0
  %v419 = vadd.f32 0.0, %v418
  %v420 = vpop.f32.mrb[0].mxu0
  %v421 = vpop.f32.mrb[0].mxu0
  %v422 = vadd.f32 0.0, %v421
  %v423 = vpop.f32.mrb[0].mxu0
  %424 = vmatprep.mubr.bf16.mxu0 0
  %425 = vmatmul.mubr.bf16.gmra.mrb[0].mxu0 %v263
  %v426 = vpop.f32.mrb[0].mxu0
  %v427 = vadd.f32 0.0, %v426
  %v428 = vpop.f32.mrb[0].mxu0
  %v429 = vpop.f32.mrb[0].mxu0
  %v430 = vadd.f32 0.0, %v429
  %v431 = vpop.f32.mrb[0].mxu0
  %432 = vmatprep.mubr.bf16.mxu0 0
  %433 = vmatmul.mubr.bf16.gmra.mrb[0].mxu0 %v264
  %v434 = vpop.f32.mrb[0].mxu0
  %v435 = vadd.f32 0.0, %v434
  %v436 = vpop.f32.mrb[0].mxu0
  %v437 = vpop.f32.mrb[0].mxu0
  %v438 = vadd.f32 0.0, %v437
  %v439 = vpop.f32.mrb[0].mxu0
  %440 = vmatprep.mubr.bf16.mxu0 0
  %441 = vmatmul.mubr.bf16.gmra.mrb[0].mxu0 %v265
  %v442 = vpop.f32.mrb[0].mxu0
  %v443 = vadd.f32 0.0, %v442
  %v444 = vpop.f32.mrb[0].mxu0
  %v445 = vpop.f32.mrb[0].mxu0
  %v446 = vadd.f32 0.0, %v445
  %v447 = vpop.f32.mrb[0].mxu0
  %448 = vmatprep.mubr.bf16.mxu0 0
  %449 = vmatmul.mubr.bf16.gmra.mrb[0].mxu0 %v266
  %v450 = vpop.f32.mrb[0].mxu0
  %v451 = vadd.f32 0.0, %v450
  %v452 = vpop.f32.mrb[0].mxu0
  %v453 = vpop.f32.mrb[0].mxu0
  %v454 = vadd.f32 0.0, %v453
  %v455 = vpop.f32.mrb[0].mxu0
  %456 = vmatprep.mubr.bf16.mxu0 0
  %457 = vmatmul.mubr.bf16.gmra.mrb[0].mxu0 %v267
  %v458 = vpop.f32.mrb[0].mxu0
  %v459 = vadd.f32 0.0, %v458
  %v460 = vpop.f32.mrb[0].mxu0
  %v461 = vpop.f32.mrb[0].mxu0
  %v462 = vadd.f32 0.0, %v461
  %v463 = vpop.f32.mrb[0].mxu0
  %464 = vmatprep.mubr.bf16.mxu0 0
  %465 = vmatmul.mubr.bf16.gmra.mrb[0].mxu0 %v268
  %v466 = vpop.f32.mrb[0].mxu0
  %v467 = vadd.f32 0.0, %v466
  %v468 = vpop.f32.mrb[0].mxu0
  %v469 = vpop.f32.mrb[0].mxu0
  %v470 = vadd.f32 0.0, %v469
  %v471 = vpop.f32.mrb[0].mxu0
  %472 = vmatprep.mubr.bf16.mxu0 0
  %473 = vmatmul.mubr.bf16.gmra.mrb[0].mxu0 %v269
  %v474 = vpop.f32.mrb[0].mxu0
  %v475 = vadd.f32 0.0, %v474
  %v476 = vpop.f32.mrb[0].mxu0
  %v477 = vpop.f32.mrb[0].mxu0
  %v478 = vadd.f32 0.0, %v477
  %v479 = vpop.f32.mrb[0].mxu0
  %480 = vmatprep.mubr.bf16.mxu0 0
  %481 = vmatmul.mubr.bf16.gmra.mrb[0].mxu0 %v270
  %v482 = vpop.f32.mrb[0].mxu0
  %v483 = vadd.f32 0.0, %v482
  %v484 = vpop.f32.mrb[0].mxu0
  %v485 = vpop.f32.mrb[0].mxu0
  %v486 = vadd.f32 0.0, %v485
  %v487 = vpop.f32.mrb[0].mxu0
  %488 = vmatprep.mubr.bf16.mxu0 0
  %489 = vmatmul.mubr.bf16.gmra.mrb[0].mxu0 %v271
  %v490 = vpop.f32.mrb[0].mxu0
  %v491 = vadd.f32 0.0, %v490
  %v492 = vpop.f32.mrb[0].mxu0
  %v493 = vpop.f32.mrb[0].mxu0
  %v494 = vadd.f32 0.0, %v493
  %v495 = vpop.f32.mrb[0].mxu0
  %496 = vmatprep.mubr.bf16.mxu0 0
  %497 = vmatmul.mubr.bf16.gmra.mrb[0].mxu0 %v272
  %v498 = vpop.f32.mrb[0].mxu0
  %v499 = vadd.f32 0.0, %v498
  %v500 = vpop.f32.mrb[0].mxu0
  %v501 = vpop.f32.mrb[0].mxu0
  %v502 = vadd.f32 0.0, %v501
  %v503 = vpop.f32.mrb[0].mxu0
  %504 = vmatprep.mubr.bf16.mxu0 0
  %505 = vmatmul.mubr.bf16.gmra.mrb[0].mxu0 %v273
  %v506 = vpop.f32.mrb[0].mxu0
  %v507 = vadd.f32 0.0, %v506
  %v508 = vpop.f32.mrb[0].mxu0
  %v509 = vpop.f32.mrb[0].mxu0
  %v510 = vadd.f32 0.0, %v509
  %v511 = vpop.f32.mrb[0].mxu0
  %512 = vmatprep.mubr.bf16.mxu0 0
  %513 = vmatmul.mubr.bf16.gmra.mrb[0].mxu0 %v274
  %v514 = vpop.f32.mrb[0].mxu0
  %v515 = vadd.f32 0.0, %v514
  %v516 = vpop.f32.mrb[0].mxu0
  %v517 = vpop.f32.mrb[0].mxu0
  %v518 = vadd.f32 0.0, %v517
  %v519 = vpop.f32.mrb[0].mxu0
  %520 = vmatprep.mubr.bf16.mxu0 0
  %521 = vmatmul.mubr.bf16.gmra.mrb[0].mxu0 %v275
  %v522 = vpop.f32.mrb[0].mxu0
  %v523 = vadd.f32 0.0, %v522
  %v524 = vpop.f32.mrb[0].mxu0
  %v525 = vpop.f32.mrb[0].mxu0
  %v526 = vadd.f32 0.0, %v525
  %v527 = vpop.f32.mrb[0].mxu0
  %528 = vmatprep.mubr.bf16.mxu0 0
  %529 = vmatmul.mubr.bf16.gmra.mrb[0].mxu0 %v276
  %v530 = vpop.f32.mrb[0].mxu0
  %v531 = vadd.f32 0.0, %v530
  %v532 = vpop.f32.mrb[0].mxu0
  %v533 = vpop.f32.mrb[0].mxu0
  %v534 = vadd.f32 0.0, %v533
  %v535 = vpop.f32.mrb[0].mxu0
  %536 = vmatprep.mubr.bf16.mxu0 0
  %537 = vmatmul.mubr.bf16.gmra.mrb[0].mxu0 %v277
  %v538 = vpop.f32.mrb[0].mxu0
  %v539 = vadd.f32 0.0, %v538
  %v540 = vpop.f32.mrb[0].mxu0
  %v541 = vpop.f32.mrb[0].mxu0
  %v542 = vadd.f32 0.0, %v541
  %v543 = vpop.f32.mrb[0].mxu0
  %544 = vmatprep.mubr.bf16.mxu0 0
  %545 = vmatmul.mubr.bf16.gmra.mrb[0].mxu0 %v278
  %v546 = vpop.f32.mrb[0].mxu0
  %v547 = vadd.f32 0.0, %v546
  %v548 = vpop.f32.mrb[0].mxu0
  %v549 = vpop.f32.mrb[0].mxu0
  %v550 = vadd.f32 0.0, %v549
  %v551 = vpop.f32.mrb[0].mxu0
  %552 = vmatprep.mubr.bf16.mxu0 0
  %553 = vmatmul.mubr.bf16.gmra.mrb[0].mxu0 %v279
  %v554 = vpop.f32.mrb[0].mxu0
  %v555 = vadd.f32 0.0, %v554
  %v556 = vpop.f32.mrb[0].mxu0
  %v557 = vpop.f32.mrb[0].mxu0
  %v558 = vadd.f32 0.0, %v557
  %v559 = vpop.f32.mrb[0].mxu0
  %560 = vmatprep.mubr.bf16.mxu0 0
  %561 = vmatmul.mubr.bf16.gmra.mrb[0].mxu0 %v280
  %v562 = vpop.f32.mrb[0].mxu0
  %v563 = vadd.f32 0.0, %v562
  %v564 = vpop.f32.mrb[0].mxu0
  %v565 = vpop.f32.mrb[0].mxu0
  %v566 = vadd.f32 0.0, %v565
  %v567 = vpop.f32.mrb[0].mxu0
  %568 = vmatprep.mubr.bf16.mxu0 0
  %569 = vmatmul.mubr.bf16.gmra.mrb[0].mxu0 %v281
  %v570 = vpop.f32.mrb[0].mxu0
  %v571 = vadd.f32 0.0, %v570
  %v572 = vpop.f32.mrb[0].mxu0
  %v573 = vpop.f32.mrb[0].mxu0
  %v574 = vadd.f32 0.0, %v573
  %v575 = vpop.f32.mrb[0].mxu0
  %576 = vmatprep.mubr.bf16.mxu0 0
  %577 = vmatmul.mubr.bf16.gmra.mrb[0].mxu0 %v282
  %v578 = vpop.f32.mrb[0].mxu0
  %v579 = vadd.f32 0.0, %v578
  %v580 = vpop.f32.mrb[0].mxu0
  %v581 = vpop.f32.mrb[0].mxu0
  %v582 = vadd.f32 0.0, %v581
  %v583 = vpop.f32.mrb[0].mxu0
  %584 = vmatprep.mubr.bf16.mxu0 0
  %585 = vmatmul.mubr.bf16.gmra.mrb[0].mxu0 %v283
  %v586 = vpop.f32.mrb[0].mxu0
  %v587 = vadd.f32 0.0, %v586
  %v588 = vpop.f32.mrb[0].mxu0
  %v589 = vpop.f32.mrb[0].mxu0
  %v590 = vadd.f32 0.0, %v589
  %v591 = vpop.f32.mrb[0].mxu0
  %592 = vmatprep.mubr.bf16.mxu0 0
  %593 = vmatmul.mubr.bf16.gmra.mrb[0].mxu0 %v284
  %v594 = vpop.f32.mrb[0].mxu0
  %v595 = vadd.f32 0.0, %v594
  %v596 = vpop.f32.mrb[0].mxu0
  %v597 = vpop.f32.mrb[0].mxu0
  %v598 = vadd.f32 0.0, %v597
  %v599 = vpop.f32.mrb[0].mxu0
  %600 = vmatprep.mubr.bf16.mxu0 0
  %601 = vmatmul.mubr.bf16.gmra.mrb[0].mxu0 %v285
  %v602 = vpop.f32.mrb[0].mxu0
  %v603 = vadd.f32 0.0, %v602
  %v604 = vpop.f32.mrb[0].mxu0
  %v605 = vpop.f32.mrb[0].mxu0
  %v606 = vadd.f32 0.0, %v605
  %v607 = vpop.f32.mrb[0].mxu0
  %608 = vmatprep.mubr.bf16.mxu0 0
  %609 = vmatmul.mubr.bf16.gmra.mrb[0].mxu0 %v286
  %v610 = vpop.f32.mrb[0].mxu0
  %v611 = vadd.f32 0.0, %v610
  %v612 = vpop.f32.mrb[0].mxu0
  %v613 = vpop.f32.mrb[0].mxu0
  %v614 = vadd.f32 0.0, %v613
  %v615 = vpop.f32.mrb[0].mxu0
  %616 = vmatprep.mubr.bf16.mxu0 0
  %617 = vmatmul.mubr.bf16.gmra.mrb[0].mxu0 %v287
  %v618 = vpop.f32.mrb[0].mxu0
  %v619 = vadd.f32 0.0, %v618
  %v620 = vpop.f32.mrb[0].mxu0
  %v621 = vpop.f32.mrb[0].mxu0
  %v622 = vadd.f32 0.0, %v621
  %v623 = vpop.f32.mrb[0].mxu0
  %624 = vmatprep.mubr.bf16.mxu0 0
  %625 = vmatmul.mubr.bf16.gmra.mrb[0].mxu0 %v288
  %v626 = vpop.f32.mrb[0].mxu0
  %v627 = vadd.f32 0.0, %v626
  %v628 = vpop.f32.mrb[0].mxu0
  %v629 = vpop.f32.mrb[0].mxu0
  %v630 = vadd.f32 0.0, %v629
  %v631 = vpop.f32.mrb[0].mxu0
  %632 = vmatprep.mubr.bf16.mxu0 0
  %633 = vmatmul.mubr.bf16.gmra.mrb[0].mxu0 %v289
  %v634 = vpop.f32.mrb[0].mxu0
  %v635 = vadd.f32 0.0, %v634
  %v636 = vpop.f32.mrb[0].mxu0
  %v637 = vpop.f32.mrb[0].mxu0
  %v638 = vadd.f32 0.0, %v637
  %v639 = vpop.f32.mrb[0].mxu0
  %640 = vmatprep.mubr.bf16.mxu0 0
  %641 = vmatmul.mubr.bf16.gmra.mrb[0].mxu0 %v290
  %v642 = vpop.f32.mrb[0].mxu0
  %v643 = vadd.f32 0.0, %v642
  %v644 = vpop.f32.mrb[0].mxu0
  %v645 = vpop.f32.mrb[0].mxu0
  %v646 = vadd.f32 0.0, %v645
  %v647 = vpop.f32.mrb[0].mxu0
  %648 = vmatprep.mubr.bf16.mxu0 0
  %649 = vmatmul.mubr.bf16.gmra.mrb[0].mxu0 %v291
  %v650 = vpop.f32.mrb[0].mxu0
  %v651 = vadd.f32 0.0, %v650
  %v652 = vpop.f32.mrb[0].mxu0
  %v653 = vpop.f32.mrb[0].mxu0
  %v654 = vadd.f32 0.0, %v653
  %v655 = vpop.f32.mrb[0].mxu0
  %656 = vmatprep.mubr.bf16.mxu0 0
  %657 = vmatmul.mubr.bf16.gmra.mrb[0].mxu0 %v292
  %v658 = vpop.f32.mrb[0].mxu0
  %v659 = vadd.f32 0.0, %v658
  %v660 = vpop.f32.mrb[0].mxu0
  %v661 = vpop.f32.mrb[0].mxu0
  %v662 = vadd.f32 0.0, %v661
  %v663 = vpop.f32.mrb[0].mxu0
  %664 = vmatprep.mubr.bf16.mxu0 0
  %665 = vmatmul.mubr.bf16.gmra.mrb[0].mxu0 %v293
  %v666 = vpop.f32.mrb[0].mxu0
  %v667 = vadd.f32 0.0, %v666
  %v668 = vpop.f32.mrb[0].mxu0
  %v669 = vpop.f32.mrb[0].mxu0
  %v670 = vadd.f32 0.0, %v669
  %v671 = vpop.f32.mrb[0].mxu0
  %672 = vmatprep.mubr.bf16.mxu0 0
  %673 = vmatmul.mubr.bf16.gmra.mrb[0].mxu0 %v294
  %v674 = vpop.f32.mrb[0].mxu0
  %v675 = vadd.f32 0.0, %v674
  %v676 = vpop.f32.mrb[0].mxu0
  %v677 = vpop.f32.mrb[0].mxu0
  %v678 = vadd.f32 0.0, %v677
  %v679 = vpop.f32.mrb[0].mxu0
  %680 = vmatprep.mubr.bf16.mxu0 0
  %681 = vmatmul.mubr.bf16.gmra.mrb[0].mxu0 %v295
  %v682 = vpop.f32.mrb[0].mxu0
  %v683 = vadd.f32 0.0, %v682
  %v684 = vpop.f32.mrb[0].mxu0
  %v685 = vpop.f32.mrb[0].mxu0
  %v686 = vadd.f32 0.0, %v685
  %v687 = vpop.f32.mrb[0].mxu0
  %688 = vmatprep.mubr.bf16.mxu0 0
  %689 = vmatmul.mubr.bf16.gmra.mrb[0].mxu0 %v296
  %v690 = vpop.f32.mrb[0].mxu0
  %v691 = vadd.f32 0.0, %v690
  %v692 = vpop.f32.mrb[0].mxu0
  %v693 = vpop.f32.mrb[0].mxu0
  %v694 = vadd.f32 0.0, %v693
  %v695 = vpop.f32.mrb[0].mxu0
  %696 = vmatprep.mubr.bf16.mxu0 0
  %697 = vmatmul.mubr.bf16.gmra.mrb[0].mxu0 %v297
  %v698 = vpop.f32.mrb[0].mxu0
  %v699 = vadd.f32 0.0, %v698
  %v700 = vpop.f32.mrb[0].mxu0
  %v701 = vpop.f32.mrb[0].mxu0
  %v702 = vadd.f32 0.0, %v701
  %v703 = vpop.f32.mrb[0].mxu0
  %704 = vmatprep.mubr.bf16.mxu0 0
  %705 = vmatmul.mubr.bf16.gmra.mrb[0].mxu0 %v298
  %v706 = vpop.f32.mrb[0].mxu0
  %v707 = vadd.f32 0.0, %v706
  %v708 = vpop.f32.mrb[0].mxu0
  %v709 = vpop.f32.mrb[0].mxu0
  %v710 = vpop.f32.mrb[0].mxu0
  %711 = vdwg.mxu0
  %v712 = vadd.f32 %v419, %v422
  %v713 = vadd.f32 %v712, %v427
  %v714 = vadd.f32 %v713, %v430
  %v715 = vadd.f32 %v714, %v435
  %v716 = vadd.f32 %v715, %v438
  %v717 = vadd.f32 %v716, %v443
  %v718 = vadd.f32 %v717, %v446
  %v719 = vadd.f32 %v718, %v451
  %v720 = vadd.f32 %v719, %v454
  %v721 = vadd.f32 %v720, %v459
  %v722 = vadd.f32 %v721, %v462
  %v723 = vadd.f32 %v722, %v467
  %v724 = vadd.f32 %v723, %v470
  %v725 = vadd.f32 %v724, %v475
  %v726 = vadd.f32 %v725, %v478
  %v727 = vadd.f32 %v726, %v483
  %v728 = vadd.f32 %v727, %v486
  %v729 = vadd.f32 %v728, %v491
  %v730 = vadd.f32 %v729, %v494
  %v731 = vadd.f32 %v730, %v499
  %v732 = vadd.f32 %v731, %v502
  %v733 = vadd.f32 %v732, %v507
  %v734 = vadd.f32 %v733, %v510
  %v735 = vadd.f32 %v734, %v515
  %v736 = vadd.f32 %v735, %v518
  %v737 = vadd.f32 %v736, %v523
  %v738 = vadd.f32 %v737, %v526
  %v739 = vadd.f32 %v738, %v531
  %v740 = vadd.f32 %v739, %v534
  %v741 = vadd.f32 %v740, %v539
  %v742 = vadd.f32 %v741, %v542
  %v743 = vadd.f32 %v742, %v547
  %v744 = vadd.f32 %v743, %v550
  %v745 = vadd.f32 %v744, %v555
  %v746 = vadd.f32 %v745, %v558
  %v747 = vadd.f32 %v746, %v563
  %v748 = vadd.f32 %v747, %v566
  %v749 = vadd.f32 %v748, %v571
  %v750 = vadd.f32 %v749, %v574
  %v751 = vadd.f32 %v750, %v579
  %v752 = vadd.f32 %v751, %v582
  %v753 = vadd.f32 %v752, %v587
  %v754 = vadd.f32 %v753, %v590
  %v755 = vadd.f32 %v754, %v595
  %v756 = vadd.f32 %v755, %v598
  %v757 = vadd.f32 %v756, %v603
  %v758 = vadd.f32 %v757, %v606
  %v759 = vadd.f32 %v758, %v611
  %v760 = vadd.f32 %v759, %v614
  %v761 = vadd.f32 %v760, %v619
  %v762 = vadd.f32 %v761, %v622
  %v763 = vadd.f32 %v762, %v627
  %v764 = vadd.f32 %v763, %v630
  %v765 = vadd.f32 %v764, %v635
  %v766 = vadd.f32 %v765, %v638
  %v767 = vadd.f32 %v766, %v643
  %v768 = vadd.f32 %v767, %v646
  %v769 = vadd.f32 %v768, %v651
  %v770 = vadd.f32 %v769, %v654
  %v771 = vadd.f32 %v770, %v659
  %v772 = vadd.f32 %v771, %v662
  %v773 = vadd.f32 %v772, %v667
  %v774 = vadd.f32 %v773, %v670
  %v775 = vadd.f32 %v774, %v675
  %v776 = vadd.f32 %v775, %v678
  %v777 = vadd.f32 %v776, %v683
  %v778 = vadd.f32 %v777, %v686
  %v779 = vadd.f32 %v778, %v691
  %v780 = vadd.f32 %v779, %v694
  %v781 = vadd.f32 %v780, %v699
  %v782 = vadd.f32 %v781, %v702
  %vm783 = vcmask 1041408
  %v784 = vsel %vm783, %v707, 0.0
  %v785 = vadd.f32 %v782, %v784
  %v786 = vrot.slane %v785, 4
  %v787 = vadd.f32 %v785, %v786
  %v788 = vrot.slane %v787, 2
  %v789 = vadd.f32 %v787, %v788
  %v790 = vrot.slane %v789, 1
  %v791 = vadd.f32 %v789, %v790
  %v792 = vmul.f32 %v791, 0.0017301039
  %v793 = vmul.f32 %v419, %v419
  %v794 = vmul.f32 %v422, %v422
  %v795 = vmul.f32 %v427, %v427
  %v796 = vmul.f32 %v430, %v430
  %v797 = vmul.f32 %v435, %v435
  %v798 = vmul.f32 %v438, %v438
  %v799 = vmul.f32 %v443, %v443
  %v800 = vmul.f32 %v446, %v446
  %v801 = vmul.f32 %v451, %v451
  %v802 = vmul.f32 %v454, %v454
  %v803 = vmul.f32 %v459, %v459
  %v804 = vmul.f32 %v462, %v462
  %v805 = vmul.f32 %v467, %v467
  %v806 = vmul.f32 %v470, %v470
  %v807 = vmul.f32 %v475, %v475
  %v808 = vmul.f32 %v478, %v478
  %v809 = vmul.f32 %v483, %v483
  %v810 = vmul.f32 %v486, %v486
  %v811 = vmul.f32 %v491, %v491
  %v812 = vmul.f32 %v494, %v494
  %v813 = vmul.f32 %v499, %v499
  %v814 = vmul.f32 %v502, %v502
  %v815 = vmul.f32 %v507, %v507
  %v816 = vmul.f32 %v510, %v510
  %v817 = vmul.f32 %v515, %v515
  %v818 = vmul.f32 %v518, %v518
  %v819 = vmul.f32 %v523, %v523
  %v820 = vmul.f32 %v526, %v526
  %v821 = vmul.f32 %v531, %v531
  %v822 = vmul.f32 %v534, %v534
  %v823 = vmul.f32 %v539, %v539
  %v824 = vmul.f32 %v542, %v542
  %v825 = vmul.f32 %v547, %v547
  %v826 = vmul.f32 %v550, %v550
  %v827 = vmul.f32 %v555, %v555
  %v828 = vmul.f32 %v558, %v558
  %v829 = vmul.f32 %v563, %v563
  %v830 = vmul.f32 %v566, %v566
  %v831 = vmul.f32 %v571, %v571
  %v832 = vmul.f32 %v574, %v574
  %v833 = vmul.f32 %v579, %v579
  %v834 = vmul.f32 %v582, %v582
  %v835 = vmul.f32 %v587, %v587
  %v836 = vmul.f32 %v590, %v590
  %v837 = vmul.f32 %v595, %v595
  %v838 = vmul.f32 %v598, %v598
  %v839 = vmul.f32 %v603, %v603
  %v840 = vmul.f32 %v606, %v606
  %v841 = vmul.f32 %v611, %v611
  %v842 = vmul.f32 %v614, %v614
  %v843 = vmul.f32 %v619, %v619
  %v844 = vmul.f32 %v622, %v622
  %v845 = vmul.f32 %v627, %v627
  %v846 = vmul.f32 %v630, %v630
  %v847 = vmul.f32 %v635, %v635
  %v848 = vmul.f32 %v638, %v638
  %v849 = vmul.f32 %v643, %v643
  %v850 = vmul.f32 %v646, %v646
  %v851 = vmul.f32 %v651, %v651
  %v852 = vmul.f32 %v654, %v654
  %v853 = vmul.f32 %v659, %v659
  %v854 = vmul.f32 %v662, %v662
  %v855 = vmul.f32 %v667, %v667
  %v856 = vmul.f32 %v670, %v670
  %v857 = vmul.f32 %v675, %v675
  %v858 = vmul.f32 %v678, %v678
  %v859 = vmul.f32 %v683, %v683
  %v860 = vmul.f32 %v686, %v686
  %v861 = vmul.f32 %v691, %v691
  %v862 = vmul.f32 %v694, %v694
  %v863 = vmul.f32 %v699, %v699
  %v864 = vmul.f32 %v702, %v702
  %v865 = vmul.f32 %v707, %v707
  %v866 = vadd.f32 %v793, %v794
  %v867 = vadd.f32 %v866, %v795
  %v868 = vadd.f32 %v867, %v796
  %v869 = vadd.f32 %v868, %v797
  %v870 = vadd.f32 %v869, %v798
  %v871 = vadd.f32 %v870, %v799
  %v872 = vadd.f32 %v871, %v800
  %v873 = vadd.f32 %v872, %v801
  %v874 = vadd.f32 %v873, %v802
  %v875 = vadd.f32 %v874, %v803
  %v876 = vadd.f32 %v875, %v804
  %v877 = vadd.f32 %v876, %v805
  %v878 = vadd.f32 %v877, %v806
  %v879 = vadd.f32 %v878, %v807
  %v880 = vadd.f32 %v879, %v808
  %v881 = vadd.f32 %v880, %v809
  %v882 = vadd.f32 %v881, %v810
  %v883 = vadd.f32 %v882, %v811
  %v884 = vadd.f32 %v883, %v812
  %v885 = vadd.f32 %v884, %v813
  %v886 = vadd.f32 %v885, %v814
  %v887 = vadd.f32 %v886, %v815
  %v888 = vadd.f32 %v887, %v816
  %v889 = vadd.f32 %v888, %v817
  %v890 = vadd.f32 %v889, %v818
  %v891 = vadd.f32 %v890, %v819
  %v892 = vadd.f32 %v891, %v820
  %v893 = vadd.f32 %v892, %v821
  %v894 = vadd.f32 %v893, %v822
  %v895 = vadd.f32 %v894, %v823
  %v896 = vadd.f32 %v895, %v824
  %v897 = vadd.f32 %v896, %v825
  %v898 = vadd.f32 %v897, %v826
  %v899 = vadd.f32 %v898, %v827
  %v900 = vadd.f32 %v899, %v828
  %v901 = vadd.f32 %v900, %v829
  %v902 = vadd.f32 %v901, %v830
  %v903 = vadd.f32 %v902, %v831
  %v904 = vadd.f32 %v903, %v832
  %v905 = vadd.f32 %v904, %v833
  %v906 = vadd.f32 %v905, %v834
  %v907 = vadd.f32 %v906, %v835
  %v908 = vadd.f32 %v907, %v836
  %v909 = vadd.f32 %v908, %v837
  %v910 = vadd.f32 %v909, %v838
  %v911 = vadd.f32 %v910, %v839
  %v912 = vadd.f32 %v911, %v840
  %v913 = vadd.f32 %v912, %v841
  %v914 = vadd.f32 %v913, %v842
  %v915 = vadd.f32 %v914, %v843
  %v916 = vadd.f32 %v915, %v844
  %v917 = vadd.f32 %v916, %v845
  %v918 = vadd.f32 %v917, %v846
  %v919 = vadd.f32 %v918, %v847
  %v920 = vadd.f32 %v919, %v848
  %v921 = vadd.f32 %v920, %v849
  %v922 = vadd.f32 %v921, %v850
  %v923 = vadd.f32 %v922, %v851
  %v924 = vadd.f32 %v923, %v852
  %v925 = vadd.f32 %v924, %v853
  %v926 = vadd.f32 %v925, %v854
  %v927 = vadd.f32 %v926, %v855
  %v928 = vadd.f32 %v927, %v856
  %v929 = vadd.f32 %v928, %v857
  %v930 = vadd.f32 %v929, %v858
  %v931 = vadd.f32 %v930, %v859
  %v932 = vadd.f32 %v931, %v860
  %v933 = vadd.f32 %v932, %v861
  %v934 = vadd.f32 %v933, %v862
  %v935 = vadd.f32 %v934, %v863
  %v936 = vadd.f32 %v935, %v864
  %v937 = vsel %vm783, %v865, 0.0
  %v938 = vadd.f32 %v936, %v937
  %v939 = vrot.slane %v938, 4
  %v940 = vadd.f32 %v938, %v939
  %v941 = vrot.slane %v940, 2
  %v942 = vadd.f32 %v940, %v941
  %v943 = vrot.slane %v942, 1
  %v944 = vadd.f32 %v942, %v943
  %v945 = vmul.f32 %v944, 0.0017301039
  %v946 = vmul.f32 %v792, %v792
  %v947 = vsub.f32 %v945, %v946
  %v948 = vmax.f32 %v947, 0.0
  %v949 = vld [vmem:[%s5] sm:$0x1]
  %v950 = vld [vmem:[%s6] sm:$0x1]
  %v951 = vsub.f32 %v419, %v792
  %v952 = vsub.f32 %v422, %v792
  %v953 = vsub.f32 %v427, %v792
  %v954 = vsub.f32 %v430, %v792
  %v955 = vsub.f32 %v435, %v792
  %v956 = vsub.f32 %v438, %v792
  %v957 = vsub.f32 %v443, %v792
  %v958 = vsub.f32 %v446, %v792
  %v959 = vsub.f32 %v451, %v792
  %v960 = vsub.f32 %v454, %v792
  %v961 = vsub.f32 %v459, %v792
  %v962 = vsub.f32 %v462, %v792
  %v963 = vsub.f32 %v467, %v792
  %v964 = vsub.f32 %v470, %v792
  %v965 = vsub.f32 %v475, %v792
  %v966 = vsub.f32 %v478, %v792
  %v967 = vsub.f32 %v483, %v792
  %v968 = vsub.f32 %v486, %v792
  %v969 = vsub.f32 %v491, %v792
  %v970 = vsub.f32 %v494, %v792
  %v971 = vsub.f32 %v499, %v792
  %v972 = vsub.f32 %v502, %v792
  %v973 = vsub.f32 %v507, %v792
  %v974 = vsub.f32 %v510, %v792
  %v975 = vsub.f32 %v515, %v792
  %v976 = vsub.f32 %v518, %v792
  %v977 = vsub.f32 %v523, %v792
  %v978 = vsub.f32 %v526, %v792
  %v979 = vsub.f32 %v531, %v792
  %v980 = vsub.f32 %v534, %v792
  %v981 = vsub.f32 %v539, %v792
  %v982 = vsub.f32 %v542, %v792
  %v983 = vsub.f32 %v547, %v792
  %v984 = vsub.f32 %v550, %v792
  %v985 = vsub.f32 %v555, %v792
  %v986 = vsub.f32 %v558, %v792
  %v987 = vsub.f32 %v563, %v792
  %v988 = vsub.f32 %v566, %v792
  %v989 = vsub.f32 %v571, %v792
  %v990 = vsub.f32 %v574, %v792
  %v991 = vsub.f32 %v579, %v792
  %v992 = vsub.f32 %v582, %v792
  %v993 = vsub.f32 %v587, %v792
  %v994 = vsub.f32 %v590, %v792
  %v995 = vsub.f32 %v595, %v792
  %v996 = vsub.f32 %v598, %v792
  %v997 = vsub.f32 %v603, %v792
  %v998 = vsub.f32 %v606, %v792
  %v999 = vsub.f32 %v611, %v792
  %v1000 = vsub.f32 %v614, %v792
  %v1001 = vsub.f32 %v619, %v792
  %v1002 = vsub.f32 %v622, %v792
  %v1003 = vsub.f32 %v627, %v792
  %v1004 = vsub.f32 %v630, %v792
  %v1005 = vsub.f32 %v635, %v792
  %v1006 = vsub.f32 %v638, %v792
  %v1007 = vsub.f32 %v643, %v792
  %v1008 = vsub.f32 %v646, %v792
  %v1009 = vsub.f32 %v651, %v792
  %v1010 = vsub.f32 %v654, %v792
  %v1011 = vsub.f32 %v659, %v792
  %v1012 = vsub.f32 %v662, %v792
  %v1013 = vsub.f32 %v667, %v792
  %v1014 = vsub.f32 %v670, %v792
  %v1015 = vsub.f32 %v675, %v792
  %v1016 = vsub.f32 %v678, %v792
  %v1017 = vsub.f32 %v683, %v792
  %v1018 = vsub.f32 %v686, %v792
  %v1019 = vsub.f32 %v691, %v792
  %v1020 = vsub.f32 %v694, %v792
  %v1021 = vsub.f32 %v699, %v792
  %v1022 = vsub.f32 %v702, %v792
  %v1023 = vsub.f32 %v707, %v792
  %v1024 = vadd.f32 %v948, 1e-05
  %v1025 = vrsqrt.pop %v1024
  %v1026 = vmul.f32 %v951, %v1025
  %v1027 = vmul.f32 %v952, %v1025
  %v1028 = vmul.f32 %v953, %v1025
  %v1029 = vmul.f32 %v954, %v1025
  %v1030 = vmul.f32 %v955, %v1025
  %v1031 = vmul.f32 %v956, %v1025
  %v1032 = vmul.f32 %v957, %v1025
  %v1033 = vmul.f32 %v958, %v1025
  %v1034 = vmul.f32 %v959, %v1025
  %v1035 = vmul.f32 %v960, %v1025
  %v1036 = vmul.f32 %v961, %v1025
  %v1037 = vmul.f32 %v962, %v1025
  %v1038 = vmul.f32 %v963, %v1025
  %v1039 = vmul.f32 %v964, %v1025
  %v1040 = vmul.f32 %v965, %v1025
  %v1041 = vmul.f32 %v966, %v1025
  %v1042 = vmul.f32 %v967, %v1025
  %v1043 = vmul.f32 %v968, %v1025
  %v1044 = vmul.f32 %v969, %v1025
  %v1045 = vmul.f32 %v970, %v1025
  %v1046 = vmul.f32 %v971, %v1025
  %v1047 = vmul.f32 %v972, %v1025
  %v1048 = vmul.f32 %v973, %v1025
  %v1049 = vmul.f32 %v974, %v1025
  %v1050 = vmul.f32 %v975, %v1025
  %v1051 = vmul.f32 %v976, %v1025
  %v1052 = vmul.f32 %v977, %v1025
  %v1053 = vmul.f32 %v978, %v1025
  %v1054 = vmul.f32 %v979, %v1025
  %v1055 = vmul.f32 %v980, %v1025
  %v1056 = vmul.f32 %v981, %v1025
  %v1057 = vmul.f32 %v982, %v1025
  %v1058 = vmul.f32 %v983, %v1025
  %v1059 = vmul.f32 %v984, %v1025
  %v1060 = vmul.f32 %v985, %v1025
  %v1061 = vmul.f32 %v986, %v1025
  %v1062 = vmul.f32 %v987, %v1025
  %v1063 = vmul.f32 %v988, %v1025
  %v1064 = vmul.f32 %v989, %v1025
  %v1065 = vmul.f32 %v990, %v1025
  %v1066 = vmul.f32 %v991, %v1025
  %v1067 = vmul.f32 %v992, %v1025
  %v1068 = vmul.f32 %v993, %v1025
  %v1069 = vmul.f32 %v994, %v1025
  %v1070 = vmul.f32 %v995, %v1025
  %v1071 = vmul.f32 %v996, %v1025
  %v1072 = vmul.f32 %v997, %v1025
  %v1073 = vmul.f32 %v998, %v1025
  %v1074 = vmul.f32 %v999, %v1025
  %v1075 = vmul.f32 %v1000, %v1025
  %v1076 = vmul.f32 %v1001, %v1025
  %v1077 = vmul.f32 %v1002, %v1025
  %v1078 = vmul.f32 %v1003, %v1025
  %v1079 = vmul.f32 %v1004, %v1025
  %v1080 = vmul.f32 %v1005, %v1025
  %v1081 = vmul.f32 %v1006, %v1025
  %v1082 = vmul.f32 %v1007, %v1025
  %v1083 = vmul.f32 %v1008, %v1025
  %v1084 = vmul.f32 %v1009, %v1025
  %v1085 = vmul.f32 %v1010, %v1025
  %v1086 = vmul.f32 %v1011, %v1025
  %v1087 = vmul.f32 %v1012, %v1025
  %v1088 = vmul.f32 %v1013, %v1025
  %v1089 = vmul.f32 %v1014, %v1025
  %v1090 = vmul.f32 %v1015, %v1025
  %v1091 = vmul.f32 %v1016, %v1025
  %v1092 = vmul.f32 %v1017, %v1025
  %v1093 = vmul.f32 %v1018, %v1025
  %v1094 = vmul.f32 %v1019, %v1025
  %v1095 = vmul.f32 %v1020, %v1025
  %v1096 = vmul.f32 %v1021, %v1025
  %v1097 = vmul.f32 %v1022, %v1025
  %v1098 = vmul.f32 %v1023, %v1025
  %v1099 = vlaneseq
  %v1100 = vshrl.u32 %v1099, 7
  %v1101 = vsub.s32 0, %v1100
  %v1102 = vrot.slane %v949, %v1101
  %v1103 = vmul.f32 %v1026, %v1102
  %v1104 = vmul.f32 %v1027, %v1102
  %v1105 = vmul.f32 %v1028, %v1102
  %v1106 = vmul.f32 %v1029, %v1102
  %v1107 = vmul.f32 %v1030, %v1102
  %v1108 = vmul.f32 %v1031, %v1102
  %v1109 = vmul.f32 %v1032, %v1102
  %v1110 = vmul.f32 %v1033, %v1102
  %v1111 = vmul.f32 %v1034, %v1102
  %v1112 = vmul.f32 %v1035, %v1102
  %v1113 = vmul.f32 %v1036, %v1102
  %v1114 = vmul.f32 %v1037, %v1102
  %v1115 = vmul.f32 %v1038, %v1102
  %v1116 = vmul.f32 %v1039, %v1102
  %v1117 = vmul.f32 %v1040, %v1102
  %v1118 = vmul.f32 %v1041, %v1102
  %v1119 = vmul.f32 %v1042, %v1102
  %v1120 = vmul.f32 %v1043, %v1102
  %v1121 = vmul.f32 %v1044, %v1102
  %v1122 = vmul.f32 %v1045, %v1102
  %v1123 = vmul.f32 %v1046, %v1102
  %v1124 = vmul.f32 %v1047, %v1102
  %v1125 = vmul.f32 %v1048, %v1102
  %v1126 = vmul.f32 %v1049, %v1102
  %v1127 = vmul.f32 %v1050, %v1102
  %v1128 = vmul.f32 %v1051, %v1102
  %v1129 = vmul.f32 %v1052, %v1102
  %v1130 = vmul.f32 %v1053, %v1102
  %v1131 = vmul.f32 %v1054, %v1102
  %v1132 = vmul.f32 %v1055, %v1102
  %v1133 = vmul.f32 %v1056, %v1102
  %v1134 = vmul.f32 %v1057, %v1102
  %v1135 = vmul.f32 %v1058, %v1102
  %v1136 = vmul.f32 %v1059, %v1102
  %v1137 = vmul.f32 %v1060, %v1102
  %v1138 = vmul.f32 %v1061, %v1102
  %v1139 = vmul.f32 %v1062, %v1102
  %v1140 = vmul.f32 %v1063, %v1102
  %v1141 = vmul.f32 %v1064, %v1102
  %v1142 = vmul.f32 %v1065, %v1102
  %v1143 = vmul.f32 %v1066, %v1102
  %v1144 = vmul.f32 %v1067, %v1102
  %v1145 = vmul.f32 %v1068, %v1102
  %v1146 = vmul.f32 %v1069, %v1102
  %v1147 = vmul.f32 %v1070, %v1102
  %v1148 = vmul.f32 %v1071, %v1102
  %v1149 = vmul.f32 %v1072, %v1102
  %v1150 = vmul.f32 %v1073, %v1102
  %v1151 = vmul.f32 %v1074, %v1102
  %v1152 = vmul.f32 %v1075, %v1102
  %v1153 = vmul.f32 %v1076, %v1102
  %v1154 = vmul.f32 %v1077, %v1102
  %v1155 = vmul.f32 %v1078, %v1102
  %v1156 = vmul.f32 %v1079, %v1102
  %v1157 = vmul.f32 %v1080, %v1102
  %v1158 = vmul.f32 %v1081, %v1102
  %v1159 = vmul.f32 %v1082, %v1102
  %v1160 = vmul.f32 %v1083, %v1102
  %v1161 = vmul.f32 %v1084, %v1102
  %v1162 = vmul.f32 %v1085, %v1102
  %v1163 = vmul.f32 %v1086, %v1102
  %v1164 = vmul.f32 %v1087, %v1102
  %v1165 = vmul.f32 %v1088, %v1102
  %v1166 = vmul.f32 %v1089, %v1102
  %v1167 = vmul.f32 %v1090, %v1102
  %v1168 = vmul.f32 %v1091, %v1102
  %v1169 = vmul.f32 %v1092, %v1102
  %v1170 = vmul.f32 %v1093, %v1102
  %v1171 = vmul.f32 %v1094, %v1102
  %v1172 = vmul.f32 %v1095, %v1102
  %v1173 = vmul.f32 %v1096, %v1102
  %v1174 = vmul.f32 %v1097, %v1102
  %v1175 = vmul.f32 %v1098, %v1102
  %v1176 = vlaneseq
  %v1177 = vshrl.u32 %v1176, 7
  %v1178 = vsub.s32 0, %v1177
  %v1179 = vrot.slane %v950, %v1178
  %v1180 = vadd.f32 %v1103, %v1179
  %v1181 = vadd.f32 %v1104, %v1179
  %v1182 = vadd.f32 %v1105, %v1179
  %v1183 = vadd.f32 %v1106, %v1179
  %v1184 = vadd.f32 %v1107, %v1179
  %v1185 = vadd.f32 %v1108, %v1179
  %v1186 = vadd.f32 %v1109, %v1179
  %v1187 = vadd.f32 %v1110, %v1179
  %v1188 = vadd.f32 %v1111, %v1179
  %v1189 = vadd.f32 %v1112, %v1179
  %v1190 = vadd.f32 %v1113, %v1179
  %v1191 = vadd.f32 %v1114, %v1179
  %v1192 = vadd.f32 %v1115, %v1179
  %v1193 = vadd.f32 %v1116, %v1179
  %v1194 = vadd.f32 %v1117, %v1179
  %v1195 = vadd.f32 %v1118, %v1179
  %v1196 = vadd.f32 %v1119, %v1179
  %v1197 = vadd.f32 %v1120, %v1179
  %v1198 = vadd.f32 %v1121, %v1179
  %v1199 = vadd.f32 %v1122, %v1179
  %v1200 = vadd.f32 %v1123, %v1179
  %v1201 = vadd.f32 %v1124, %v1179
  %v1202 = vadd.f32 %v1125, %v1179
  %v1203 = vadd.f32 %v1126, %v1179
  %v1204 = vadd.f32 %v1127, %v1179
  %v1205 = vadd.f32 %v1128, %v1179
  %v1206 = vadd.f32 %v1129, %v1179
  %v1207 = vadd.f32 %v1130, %v1179
  %v1208 = vadd.f32 %v1131, %v1179
  %v1209 = vadd.f32 %v1132, %v1179
  %v1210 = vadd.f32 %v1133, %v1179
  %v1211 = vadd.f32 %v1134, %v1179
  %v1212 = vadd.f32 %v1135, %v1179
  %v1213 = vadd.f32 %v1136, %v1179
  %v1214 = vadd.f32 %v1137, %v1179
  %v1215 = vadd.f32 %v1138, %v1179
  %v1216 = vadd.f32 %v1139, %v1179
  %v1217 = vadd.f32 %v1140, %v1179
  %v1218 = vadd.f32 %v1141, %v1179
  %v1219 = vadd.f32 %v1142, %v1179
  %v1220 = vadd.f32 %v1143, %v1179
  %v1221 = vadd.f32 %v1144, %v1179
  %v1222 = vadd.f32 %v1145, %v1179
  %v1223 = vadd.f32 %v1146, %v1179
  %v1224 = vadd.f32 %v1147, %v1179
  %v1225 = vadd.f32 %v1148, %v1179
  %v1226 = vadd.f32 %v1149, %v1179
  %v1227 = vadd.f32 %v1150, %v1179
  %v1228 = vadd.f32 %v1151, %v1179
  %v1229 = vadd.f32 %v1152, %v1179
  %v1230 = vadd.f32 %v1153, %v1179
  %v1231 = vadd.f32 %v1154, %v1179
  %v1232 = vadd.f32 %v1155, %v1179
  %v1233 = vadd.f32 %v1156, %v1179
  %v1234 = vadd.f32 %v1157, %v1179
  %v1235 = vadd.f32 %v1158, %v1179
  %v1236 = vadd.f32 %v1159, %v1179
  %v1237 = vadd.f32 %v1160, %v1179
  %v1238 = vadd.f32 %v1161, %v1179
  %v1239 = vadd.f32 %v1162, %v1179
  %v1240 = vadd.f32 %v1163, %v1179
  %v1241 = vadd.f32 %v1164, %v1179
  %v1242 = vadd.f32 %v1165, %v1179
  %v1243 = vadd.f32 %v1166, %v1179
  %v1244 = vadd.f32 %v1167, %v1179
  %v1245 = vadd.f32 %v1168, %v1179
  %v1246 = vadd.f32 %v1169, %v1179
  %v1247 = vadd.f32 %v1170, %v1179
  %v1248 = vadd.f32 %v1171, %v1179
  %v1249 = vadd.f32 %v1172, %v1179
  %v1250 = vadd.f32 %v1173, %v1179
  %v1251 = vadd.f32 %v1174, %v1179
  %v1252 = vadd.f32 %v1175, %v1179
  %vm1253 = vcmp.ge.f32.partialorder %v1180, 0.0
  %vm1254 = vcmp.ge.f32.partialorder %v1181, 0.0
  %vm1255 = vcmp.ge.f32.partialorder %v1182, 0.0
  %vm1256 = vcmp.ge.f32.partialorder %v1183, 0.0
  %vm1257 = vcmp.ge.f32.partialorder %v1184, 0.0
  %vm1258 = vcmp.ge.f32.partialorder %v1185, 0.0
  %vm1259 = vcmp.ge.f32.partialorder %v1186, 0.0
  %vm1260 = vcmp.ge.f32.partialorder %v1187, 0.0
  %vm1261 = vcmp.ge.f32.partialorder %v1188, 0.0
  %vm1262 = vcmp.ge.f32.partialorder %v1189, 0.0
  %vm1263 = vcmp.ge.f32.partialorder %v1190, 0.0
  %vm1264 = vcmp.ge.f32.partialorder %v1191, 0.0
  %vm1265 = vcmp.ge.f32.partialorder %v1192, 0.0
  %vm1266 = vcmp.ge.f32.partialorder %v1193, 0.0
  %vm1267 = vcmp.ge.f32.partialorder %v1194, 0.0
  %vm1268 = vcmp.ge.f32.partialorder %v1195, 0.0
  %vm1269 = vcmp.ge.f32.partialorder %v1196, 0.0
  %vm1270 = vcmp.ge.f32.partialorder %v1197, 0.0
  %vm1271 = vcmp.ge.f32.partialorder %v1198, 0.0
  %vm1272 = vcmp.ge.f32.partialorder %v1199, 0.0
  %vm1273 = vcmp.ge.f32.partialorder %v1200, 0.0
  %vm1274 = vcmp.ge.f32.partialorder %v1201, 0.0
  %vm1275 = vcmp.ge.f32.partialorder %v1202, 0.0
  %vm1276 = vcmp.ge.f32.partialorder %v1203, 0.0
  %vm1277 = vcmp.ge.f32.partialorder %v1204, 0.0
  %vm1278 = vcmp.ge.f32.partialorder %v1205, 0.0
  %vm1279 = vcmp.ge.f32.partialorder %v1206, 0.0
  %vm1280 = vcmp.ge.f32.partialorder %v1207, 0.0
  %vm1281 = vcmp.ge.f32.partialorder %v1208, 0.0
  %vm1282 = vcmp.ge.f32.partialorder %v1209, 0.0
  %vm1283 = vcmp.ge.f32.partialorder %v1210, 0.0
  %vm1284 = vcmp.ge.f32.partialorder %v1211, 0.0
  %vm1285 = vcmp.ge.f32.partialorder %v1212, 0.0
  %vm1286 = vcmp.ge.f32.partialorder %v1213, 0.0
  %vm1287 = vcmp.ge.f32.partialorder %v1214, 0.0
  %vm1288 = vcmp.ge.f32.partialorder %v1215, 0.0
  %vm1289 = vcmp.ge.f32.partialorder %v1216, 0.0
  %vm1290 = vcmp.ge.f32.partialorder %v1217, 0.0
  %vm1291 = vcmp.ge.f32.partialorder %v1218, 0.0
  %vm1292 = vcmp.ge.f32.partialorder %v1219, 0.0
  %vm1293 = vcmp.ge.f32.partialorder %v1220, 0.0
  %vm1294 = vcmp.ge.f32.partialorder %v1221, 0.0
  %vm1295 = vcmp.ge.f32.partialorder %v1222, 0.0
  %vm1296 = vcmp.ge.f32.partialorder %v1223, 0.0
  %vm1297 = vcmp.ge.f32.partialorder %v1224, 0.0
  %vm1298 = vcmp.ge.f32.partialorder %v1225, 0.0
  %vm1299 = vcmp.ge.f32.partialorder %v1226, 0.0
  %vm1300 = vcmp.ge.f32.partialorder %v1227, 0.0
  %vm1301 = vcmp.ge.f32.partialorder %v1228, 0.0
  %vm1302 = vcmp.ge.f32.partialorder %v1229, 0.0
  %vm1303 = vcmp.ge.f32.partialorder %v1230, 0.0
  %vm1304 = vcmp.ge.f32.partialorder %v1231, 0.0
  %vm1305 = vcmp.ge.f32.partialorder %v1232, 0.0
  %vm1306 = vcmp.ge.f32.partialorder %v1233, 0.0
  %vm1307 = vcmp.ge.f32.partialorder %v1234, 0.0
  %vm1308 = vcmp.ge.f32.partialorder %v1235, 0.0
  %vm1309 = vcmp.ge.f32.partialorder %v1236, 0.0
  %vm1310 = vcmp.ge.f32.partialorder %v1237, 0.0
  %vm1311 = vcmp.ge.f32.partialorder %v1238, 0.0
  %vm1312 = vcmp.ge.f32.partialorder %v1239, 0.0
  %vm1313 = vcmp.ge.f32.partialorder %v1240, 0.0
  %vm1314 = vcmp.ge.f32.partialorder %v1241, 0.0
  %vm1315 = vcmp.ge.f32.partialorder %v1242, 0.0
  %vm1316 = vcmp.ge.f32.partialorder %v1243, 0.0
  %vm1317 = vcmp.ge.f32.partialorder %v1244, 0.0
  %vm1318 = vcmp.ge.f32.partialorder %v1245, 0.0
  %vm1319 = vcmp.ge.f32.partialorder %v1246, 0.0
  %vm1320 = vcmp.ge.f32.partialorder %v1247, 0.0
  %vm1321 = vcmp.ge.f32.partialorder %v1248, 0.0
  %vm1322 = vcmp.ge.f32.partialorder %v1249, 0.0
  %vm1323 = vcmp.ge.f32.partialorder %v1250, 0.0
  %vm1324 = vcmp.ge.f32.partialorder %v1251, 0.0
  %vm1325 = vcmp.ge.f32.partialorder %v1252, 0.0
  %v1326 = vmul.f32 %v1180, 0.01
  %v1327 = vmul.f32 %v1181, 0.01
  %v1328 = vmul.f32 %v1182, 0.01
  %v1329 = vmul.f32 %v1183, 0.01
  %v1330 = vmul.f32 %v1184, 0.01
  %v1331 = vmul.f32 %v1185, 0.01
  %v1332 = vmul.f32 %v1186, 0.01
  %v1333 = vmul.f32 %v1187, 0.01
  %v1334 = vmul.f32 %v1188, 0.01
  %v1335 = vmul.f32 %v1189, 0.01
  %v1336 = vmul.f32 %v1190, 0.01
  %v1337 = vmul.f32 %v1191, 0.01
  %v1338 = vmul.f32 %v1192, 0.01
  %v1339 = vmul.f32 %v1193, 0.01
  %v1340 = vmul.f32 %v1194, 0.01
  %v1341 = vmul.f32 %v1195, 0.01
  %v1342 = vmul.f32 %v1196, 0.01
  %v1343 = vmul.f32 %v1197, 0.01
  %v1344 = vmul.f32 %v1198, 0.01
  %v1345 = vmul.f32 %v1199, 0.01
  %v1346 = vmul.f32 %v1200, 0.01
  %v1347 = vmul.f32 %v1201, 0.01
  %v1348 = vmul.f32 %v1202, 0.01
  %v1349 = vmul.f32 %v1203, 0.01
  %v1350 = vmul.f32 %v1204, 0.01
  %v1351 = vmul.f32 %v1205, 0.01
  %v1352 = vmul.f32 %v1206, 0.01
  %v1353 = vmul.f32 %v1207, 0.01
  %v1354 = vmul.f32 %v1208, 0.01
  %v1355 = vmul.f32 %v1209, 0.01
  %v1356 = vmul.f32 %v1210, 0.01
  %v1357 = vmul.f32 %v1211, 0.01
  %v1358 = vmul.f32 %v1212, 0.01
  %v1359 = vmul.f32 %v1213, 0.01
  %v1360 = vmul.f32 %v1214, 0.01
  %v1361 = vmul.f32 %v1215, 0.01
  %v1362 = vmul.f32 %v1216, 0.01
  %v1363 = vmul.f32 %v1217, 0.01
  %v1364 = vmul.f32 %v1218, 0.01
  %v1365 = vmul.f32 %v1219, 0.01
  %v1366 = vmul.f32 %v1220, 0.01
  %v1367 = vmul.f32 %v1221, 0.01
  %v1368 = vmul.f32 %v1222, 0.01
  %v1369 = vmul.f32 %v1223, 0.01
  %v1370 = vmul.f32 %v1224, 0.01
  %v1371 = vmul.f32 %v1225, 0.01
  %v1372 = vmul.f32 %v1226, 0.01
  %v1373 = vmul.f32 %v1227, 0.01
  %v1374 = vmul.f32 %v1228, 0.01
  %v1375 = vmul.f32 %v1229, 0.01
  %v1376 = vmul.f32 %v1230, 0.01
  %v1377 = vmul.f32 %v1231, 0.01
  %v1378 = vmul.f32 %v1232, 0.01
  %v1379 = vmul.f32 %v1233, 0.01
  %v1380 = vmul.f32 %v1234, 0.01
  %v1381 = vmul.f32 %v1235, 0.01
  %v1382 = vmul.f32 %v1236, 0.01
  %v1383 = vmul.f32 %v1237, 0.01
  %v1384 = vmul.f32 %v1238, 0.01
  %v1385 = vmul.f32 %v1239, 0.01
  %v1386 = vmul.f32 %v1240, 0.01
  %v1387 = vmul.f32 %v1241, 0.01
  %v1388 = vmul.f32 %v1242, 0.01
  %v1389 = vmul.f32 %v1243, 0.01
  %v1390 = vmul.f32 %v1244, 0.01
  %v1391 = vmul.f32 %v1245, 0.01
  %v1392 = vmul.f32 %v1246, 0.01
  %v1393 = vmul.f32 %v1247, 0.01
  %v1394 = vmul.f32 %v1248, 0.01
  %v1395 = vmul.f32 %v1249, 0.01
  %v1396 = vmul.f32 %v1250, 0.01
  %v1397 = vmul.f32 %v1251, 0.01
  %v1398 = vmul.f32 %v1252, 0.01
  %v1399 = vsel %vm1253, %v1180, %v1326
  %v1400 = vsel %vm1254, %v1181, %v1327
  %v1401 = vsel %vm1255, %v1182, %v1328
  %v1402 = vsel %vm1256, %v1183, %v1329
  %v1403 = vsel %vm1257, %v1184, %v1330
  %v1404 = vsel %vm1258, %v1185, %v1331
  %v1405 = vsel %vm1259, %v1186, %v1332
  %v1406 = vsel %vm1260, %v1187, %v1333
  %v1407 = vsel %vm1261, %v1188, %v1334
  %v1408 = vsel %vm1262, %v1189, %v1335
  %v1409 = vsel %vm1263, %v1190, %v1336
  %v1410 = vsel %vm1264, %v1191, %v1337
  %v1411 = vsel %vm1265, %v1192, %v1338
  %v1412 = vsel %vm1266, %v1193, %v1339
  %v1413 = vsel %vm1267, %v1194, %v1340
  %v1414 = vsel %vm1268, %v1195, %v1341
  %v1415 = vsel %vm1269, %v1196, %v1342
  %v1416 = vsel %vm1270, %v1197, %v1343
  %v1417 = vsel %vm1271, %v1198, %v1344
  %v1418 = vsel %vm1272, %v1199, %v1345
  %v1419 = vsel %vm1273, %v1200, %v1346
  %v1420 = vsel %vm1274, %v1201, %v1347
  %v1421 = vsel %vm1275, %v1202, %v1348
  %v1422 = vsel %vm1276, %v1203, %v1349
  %v1423 = vsel %vm1277, %v1204, %v1350
  %v1424 = vsel %vm1278, %v1205, %v1351
  %v1425 = vsel %vm1279, %v1206, %v1352
  %v1426 = vsel %vm1280, %v1207, %v1353
  %v1427 = vsel %vm1281, %v1208, %v1354
  %v1428 = vsel %vm1282, %v1209, %v1355
  %v1429 = vsel %vm1283, %v1210, %v1356
  %v1430 = vsel %vm1284, %v1211, %v1357
  %v1431 = vsel %vm1285, %v1212, %v1358
  %v1432 = vsel %vm1286, %v1213, %v1359
  %v1433 = vsel %vm1287, %v1214, %v1360
  %v1434 = vsel %vm1288, %v1215, %v1361
  %v1435 = vsel %vm1289, %v1216, %v1362
  %v1436 = vsel %vm1290, %v1217, %v1363
  %v1437 = vsel %vm1291, %v1218, %v1364
  %v1438 = vsel %vm1292, %v1219, %v1365
  %v1439 = vsel %vm1293, %v1220, %v1366
  %v1440 = vsel %vm1294, %v1221, %v1367
  %v1441 = vsel %vm1295, %v1222, %v1368
  %v1442 = vsel %vm1296, %v1223, %v1369
  %v1443 = vsel %vm1297, %v1224, %v1370
  %v1444 = vsel %vm1298, %v1225, %v1371
  %v1445 = vsel %vm1299, %v1226, %v1372
  %v1446 = vsel %vm1300, %v1227, %v1373
  %v1447 = vsel %vm1301, %v1228, %v1374
  %v1448 = vsel %vm1302, %v1229, %v1375
  %v1449 = vsel %vm1303, %v1230, %v1376
  %v1450 = vsel %vm1304, %v1231, %v1377
  %v1451 = vsel %vm1305, %v1232, %v1378
  %v1452 = vsel %vm1306, %v1233, %v1379
  %v1453 = vsel %vm1307, %v1234, %v1380
  %v1454 = vsel %vm1308, %v1235, %v1381
  %v1455 = vsel %vm1309, %v1236, %v1382
  %v1456 = vsel %vm1310, %v1237, %v1383
  %v1457 = vsel %vm1311, %v1238, %v1384
  %v1458 = vsel %vm1312, %v1239, %v1385
  %v1459 = vsel %vm1313, %v1240, %v1386
  %v1460 = vsel %vm1314, %v1241, %v1387
  %v1461 = vsel %vm1315, %v1242, %v1388
  %v1462 = vsel %vm1316, %v1243, %v1389
  %v1463 = vsel %vm1317, %v1244, %v1390
  %v1464 = vsel %vm1318, %v1245, %v1391
  %v1465 = vsel %vm1319, %v1246, %v1392
  %v1466 = vsel %vm1320, %v1247, %v1393
  %v1467 = vsel %vm1321, %v1248, %v1394
  %v1468 = vsel %vm1322, %v1249, %v1395
  %v1469 = vsel %vm1323, %v1250, %v1396
  %v1470 = vsel %vm1324, %v1251, %v1397
  %v1471 = vsel %vm1325, %v1252, %v1398
  %v1545 = vcombine.high %v1399, %v1399
  %v1547 = vunpack.c.l.s4 1983009808
  %v1548 = vunpack.c.0.s8 %v1547
  %v1549 = vlaneseq
  %v1550 = vshrl.u32 %v1549, 7
  %v1551 = vsub.s32 %v1548, %v1550
  %v1552 = vrot.slane %v1399, %v1551
  %v1554 = vunpack.c.l.s4 1983009808
  %v1555 = vunpack.c.0.s8 %v1554
  %v1556 = vlaneseq
  %v1557 = vshrl.u32 %v1556, 7
  %v1558 = vsub.s32 %v1555, %v1557
  %v1559 = vrot.slane %v1545, %v1558
  %v1560 = vcombine.high %v1552, %v1552
  %v1561 = vcombine.high %v1559, %v1559
  %v1562 = vcombine.high %v1400, %v1400
  %v1564 = vunpack.c.l.s4 1983009808
  %v1565 = vunpack.c.0.s8 %v1564
  %v1566 = vlaneseq
  %v1567 = vshrl.u32 %v1566, 7
  %v1568 = vsub.s32 %v1565, %v1567
  %v1569 = vrot.slane %v1400, %v1568
  %v1571 = vunpack.c.l.s4 1983009808
  %v1572 = vunpack.c.0.s8 %v1571
  %v1573 = vlaneseq
  %v1574 = vshrl.u32 %v1573, 7
  %v1575 = vsub.s32 %v1572, %v1574
  %v1576 = vrot.slane %v1562, %v1575
  %v1577 = vcombine.high %v1569, %v1569
  %v1578 = vcombine.high %v1576, %v1576
  %v1579 = vcombine.high %v1401, %v1401
  %v1581 = vunpack.c.l.s4 1983009808
  %v1582 = vunpack.c.0.s8 %v1581
  %v1583 = vlaneseq
  %v1584 = vshrl.u32 %v1583, 7
  %v1585 = vsub.s32 %v1582, %v1584
  %v1586 = vrot.slane %v1401, %v1585
  %v1588 = vunpack.c.l.s4 1983009808
  %v1589 = vunpack.c.0.s8 %v1588
  %v1590 = vlaneseq
  %v1591 = vshrl.u32 %v1590, 7
  %v1592 = vsub.s32 %v1589, %v1591
  %v1593 = vrot.slane %v1579, %v1592
  %v1594 = vcombine.high %v1586, %v1586
  %v1595 = vcombine.high %v1593, %v1593
  %v1596 = vcombine.high %v1402, %v1402
  %v1598 = vunpack.c.l.s4 1983009808
  %v1599 = vunpack.c.0.s8 %v1598
  %v1600 = vlaneseq
  %v1601 = vshrl.u32 %v1600, 7
  %v1602 = vsub.s32 %v1599, %v1601
  %v1603 = vrot.slane %v1402, %v1602
  %v1605 = vunpack.c.l.s4 1983009808
  %v1606 = vunpack.c.0.s8 %v1605
  %v1607 = vlaneseq
  %v1608 = vshrl.u32 %v1607, 7
  %v1609 = vsub.s32 %v1606, %v1608
  %v1610 = vrot.slane %v1596, %v1609
  %v1611 = vcombine.high %v1603, %v1603
  %v1612 = vcombine.high %v1610, %v1610
  %v1613 = vcombine.high %v1403, %v1403
  %v1615 = vunpack.c.l.s4 1983009808
  %v1616 = vunpack.c.0.s8 %v1615
  %v1617 = vlaneseq
  %v1618 = vshrl.u32 %v1617, 7
  %v1619 = vsub.s32 %v1616, %v1618
  %v1620 = vrot.slane %v1403, %v1619
  %v1622 = vunpack.c.l.s4 1983009808
  %v1623 = vunpack.c.0.s8 %v1622
  %v1624 = vlaneseq
  %v1625 = vshrl.u32 %v1624, 7
  %v1626 = vsub.s32 %v1623, %v1625
  %v1627 = vrot.slane %v1613, %v1626
  %v1628 = vcombine.high %v1620, %v1620
  %v1629 = vcombine.high %v1627, %v1627
  %v1630 = vcombine.high %v1404, %v1404
  %v1632 = vunpack.c.l.s4 1983009808
  %v1633 = vunpack.c.0.s8 %v1632
  %v1634 = vlaneseq
  %v1635 = vshrl.u32 %v1634, 7
  %v1636 = vsub.s32 %v1633, %v1635
  %v1637 = vrot.slane %v1404, %v1636
  %v1639 = vunpack.c.l.s4 1983009808
  %v1640 = vunpack.c.0.s8 %v1639
  %v1641 = vlaneseq
  %v1642 = vshrl.u32 %v1641, 7
  %v1643 = vsub.s32 %v1640, %v1642
  %v1644 = vrot.slane %v1630, %v1643
  %v1645 = vcombine.high %v1637, %v1637
  %v1646 = vcombine.high %v1644, %v1644
  %v1647 = vcombine.high %v1405, %v1405
  %v1649 = vunpack.c.l.s4 1983009808
  %v1650 = vunpack.c.0.s8 %v1649
  %v1651 = vlaneseq
  %v1652 = vshrl.u32 %v1651, 7
  %v1653 = vsub.s32 %v1650, %v1652
  %v1654 = vrot.slane %v1405, %v1653
  %v1656 = vunpack.c.l.s4 1983009808
  %v1657 = vunpack.c.0.s8 %v1656
  %v1658 = vlaneseq
  %v1659 = vshrl.u32 %v1658, 7
  %v1660 = vsub.s32 %v1657, %v1659
  %v1661 = vrot.slane %v1647, %v1660
  %v1662 = vcombine.high %v1654, %v1654
  %v1663 = vcombine.high %v1661, %v1661
  %v1664 = vcombine.high %v1406, %v1406
  %v1666 = vunpack.c.l.s4 1983009808
  %v1667 = vunpack.c.0.s8 %v1666
  %v1668 = vlaneseq
  %v1669 = vshrl.u32 %v1668, 7
  %v1670 = vsub.s32 %v1667, %v1669
  %v1671 = vrot.slane %v1406, %v1670
  %v1673 = vunpack.c.l.s4 1983009808
  %v1674 = vunpack.c.0.s8 %v1673
  %v1675 = vlaneseq
  %v1676 = vshrl.u32 %v1675, 7
  %v1677 = vsub.s32 %v1674, %v1676
  %v1678 = vrot.slane %v1664, %v1677
  %v1679 = vcombine.high %v1671, %v1671
  %v1680 = vcombine.high %v1678, %v1678
  %v1681 = vcombine.high %v1407, %v1407
  %v1683 = vunpack.c.l.s4 1983009808
  %v1684 = vunpack.c.0.s8 %v1683
  %v1685 = vlaneseq
  %v1686 = vshrl.u32 %v1685, 7
  %v1687 = vsub.s32 %v1684, %v1686
  %v1688 = vrot.slane %v1407, %v1687
  %v1690 = vunpack.c.l.s4 1983009808
  %v1691 = vunpack.c.0.s8 %v1690
  %v1692 = vlaneseq
  %v1693 = vshrl.u32 %v1692, 7
  %v1694 = vsub.s32 %v1691, %v1693
  %v1695 = vrot.slane %v1681, %v1694
  %v1696 = vcombine.high %v1688, %v1688
  %v1697 = vcombine.high %v1695, %v1695
  %v1698 = vcombine.high %v1408, %v1408
  %v1700 = vunpack.c.l.s4 1983009808
  %v1701 = vunpack.c.0.s8 %v1700
  %v1702 = vlaneseq
  %v1703 = vshrl.u32 %v1702, 7
  %v1704 = vsub.s32 %v1701, %v1703
  %v1705 = vrot.slane %v1408, %v1704
  %v1707 = vunpack.c.l.s4 1983009808
  %v1708 = vunpack.c.0.s8 %v1707
  %v1709 = vlaneseq
  %v1710 = vshrl.u32 %v1709, 7
  %v1711 = vsub.s32 %v1708, %v1710
  %v1712 = vrot.slane %v1698, %v1711
  %v1713 = vcombine.high %v1705, %v1705
  %v1714 = vcombine.high %v1712, %v1712
  %v1715 = vcombine.high %v1409, %v1409
  %v1717 = vunpack.c.l.s4 1983009808
  %v1718 = vunpack.c.0.s8 %v1717
  %v1719 = vlaneseq
  %v1720 = vshrl.u32 %v1719, 7
  %v1721 = vsub.s32 %v1718, %v1720
  %v1722 = vrot.slane %v1409, %v1721
  %v1724 = vunpack.c.l.s4 1983009808
  %v1725 = vunpack.c.0.s8 %v1724
  %v1726 = vlaneseq
  %v1727 = vshrl.u32 %v1726, 7
  %v1728 = vsub.s32 %v1725, %v1727
  %v1729 = vrot.slane %v1715, %v1728
  %v1730 = vcombine.high %v1722, %v1722
  %v1731 = vcombine.high %v1729, %v1729
  %v1732 = vcombine.high %v1410, %v1410
  %v1734 = vunpack.c.l.s4 1983009808
  %v1735 = vunpack.c.0.s8 %v1734
  %v1736 = vlaneseq
  %v1737 = vshrl.u32 %v1736, 7
  %v1738 = vsub.s32 %v1735, %v1737
  %v1739 = vrot.slane %v1410, %v1738
  %v1741 = vunpack.c.l.s4 1983009808
  %v1742 = vunpack.c.0.s8 %v1741
  %v1743 = vlaneseq
  %v1744 = vshrl.u32 %v1743, 7
  %v1745 = vsub.s32 %v1742, %v1744
  %v1746 = vrot.slane %v1732, %v1745
  %v1747 = vcombine.high %v1739, %v1739
  %v1748 = vcombine.high %v1746, %v1746
  %v1749 = vcombine.high %v1411, %v1411
  %v1751 = vunpack.c.l.s4 1983009808
  %v1752 = vunpack.c.0.s8 %v1751
  %v1753 = vlaneseq
  %v1754 = vshrl.u32 %v1753, 7
  %v1755 = vsub.s32 %v1752, %v1754
  %v1756 = vrot.slane %v1411, %v1755
  %v1758 = vunpack.c.l.s4 1983009808
  %v1759 = vunpack.c.0.s8 %v1758
  %v1760 = vlaneseq
  %v1761 = vshrl.u32 %v1760, 7
  %v1762 = vsub.s32 %v1759, %v1761
  %v1763 = vrot.slane %v1749, %v1762
  %v1764 = vcombine.high %v1756, %v1756
  %v1765 = vcombine.high %v1763, %v1763
  %v1766 = vcombine.high %v1412, %v1412
  %v1768 = vunpack.c.l.s4 1983009808
  %v1769 = vunpack.c.0.s8 %v1768
  %v1770 = vlaneseq
  %v1771 = vshrl.u32 %v1770, 7
  %v1772 = vsub.s32 %v1769, %v1771
  %v1773 = vrot.slane %v1412, %v1772
  %v1775 = vunpack.c.l.s4 1983009808
  %v1776 = vunpack.c.0.s8 %v1775
  %v1777 = vlaneseq
  %v1778 = vshrl.u32 %v1777, 7
  %v1779 = vsub.s32 %v1776, %v1778
  %v1780 = vrot.slane %v1766, %v1779
  %v1781 = vcombine.high %v1773, %v1773
  %v1782 = vcombine.high %v1780, %v1780
  %v1783 = vcombine.high %v1413, %v1413
  %v1785 = vunpack.c.l.s4 1983009808
  %v1786 = vunpack.c.0.s8 %v1785
  %v1787 = vlaneseq
  %v1788 = vshrl.u32 %v1787, 7
  %v1789 = vsub.s32 %v1786, %v1788
  %v1790 = vrot.slane %v1413, %v1789
  %v1792 = vunpack.c.l.s4 1983009808
  %v1793 = vunpack.c.0.s8 %v1792
  %v1794 = vlaneseq
  %v1795 = vshrl.u32 %v1794, 7
  %v1796 = vsub.s32 %v1793, %v1795
  %v1797 = vrot.slane %v1783, %v1796
  %v1798 = vcombine.high %v1790, %v1790
  %v1799 = vcombine.high %v1797, %v1797
  %v1800 = vcombine.high %v1414, %v1414
  %v1802 = vunpack.c.l.s4 1983009808
  %v1803 = vunpack.c.0.s8 %v1802
  %v1804 = vlaneseq
  %v1805 = vshrl.u32 %v1804, 7
  %v1806 = vsub.s32 %v1803, %v1805
  %v1807 = vrot.slane %v1414, %v1806
  %v1809 = vunpack.c.l.s4 1983009808
  %v1810 = vunpack.c.0.s8 %v1809
  %v1811 = vlaneseq
  %v1812 = vshrl.u32 %v1811, 7
  %v1813 = vsub.s32 %v1810, %v1812
  %v1814 = vrot.slane %v1800, %v1813
  %v1815 = vcombine.high %v1807, %v1807
  %v1816 = vcombine.high %v1814, %v1814
  %v1817 = vcombine.high %v1415, %v1415
  %v1819 = vunpack.c.l.s4 1983009808
  %v1820 = vunpack.c.0.s8 %v1819
  %v1821 = vlaneseq
  %v1822 = vshrl.u32 %v1821, 7
  %v1823 = vsub.s32 %v1820, %v1822
  %v1824 = vrot.slane %v1415, %v1823
  %v1826 = vunpack.c.l.s4 1983009808
  %v1827 = vunpack.c.0.s8 %v1826
  %v1828 = vlaneseq
  %v1829 = vshrl.u32 %v1828, 7
  %v1830 = vsub.s32 %v1827, %v1829
  %v1831 = vrot.slane %v1817, %v1830
  %v1832 = vcombine.high %v1824, %v1824
  %v1833 = vcombine.high %v1831, %v1831
  %v1834 = vcombine.high %v1416, %v1416
  %v1836 = vunpack.c.l.s4 1983009808
  %v1837 = vunpack.c.0.s8 %v1836
  %v1838 = vlaneseq
  %v1839 = vshrl.u32 %v1838, 7
  %v1840 = vsub.s32 %v1837, %v1839
  %v1841 = vrot.slane %v1416, %v1840
  %v1843 = vunpack.c.l.s4 1983009808
  %v1844 = vunpack.c.0.s8 %v1843
  %v1845 = vlaneseq
  %v1846 = vshrl.u32 %v1845, 7
  %v1847 = vsub.s32 %v1844, %v1846
  %v1848 = vrot.slane %v1834, %v1847
  %v1849 = vcombine.high %v1841, %v1841
  %v1850 = vcombine.high %v1848, %v1848
  %v1851 = vcombine.high %v1417, %v1417
  %v1853 = vunpack.c.l.s4 1983009808
  %v1854 = vunpack.c.0.s8 %v1853
  %v1855 = vlaneseq
  %v1856 = vshrl.u32 %v1855, 7
  %v1857 = vsub.s32 %v1854, %v1856
  %v1858 = vrot.slane %v1417, %v1857
  %v1860 = vunpack.c.l.s4 1983009808
  %v1861 = vunpack.c.0.s8 %v1860
  %v1862 = vlaneseq
  %v1863 = vshrl.u32 %v1862, 7
  %v1864 = vsub.s32 %v1861, %v1863
  %v1865 = vrot.slane %v1851, %v1864
  %v1866 = vcombine.high %v1858, %v1858
  %v1867 = vcombine.high %v1865, %v1865
  %v1868 = vcombine.high %v1418, %v1418
  %v1870 = vunpack.c.l.s4 1983009808
  %v1871 = vunpack.c.0.s8 %v1870
  %v1872 = vlaneseq
  %v1873 = vshrl.u32 %v1872, 7
  %v1874 = vsub.s32 %v1871, %v1873
  %v1875 = vrot.slane %v1418, %v1874
  %v1877 = vunpack.c.l.s4 1983009808
  %v1878 = vunpack.c.0.s8 %v1877
  %v1879 = vlaneseq
  %v1880 = vshrl.u32 %v1879, 7
  %v1881 = vsub.s32 %v1878, %v1880
  %v1882 = vrot.slane %v1868, %v1881
  %v1883 = vcombine.high %v1875, %v1875
  %v1884 = vcombine.high %v1882, %v1882
  %v1885 = vcombine.high %v1419, %v1419
  %v1887 = vunpack.c.l.s4 1983009808
  %v1888 = vunpack.c.0.s8 %v1887
  %v1889 = vlaneseq
  %v1890 = vshrl.u32 %v1889, 7
  %v1891 = vsub.s32 %v1888, %v1890
  %v1892 = vrot.slane %v1419, %v1891
  %v1894 = vunpack.c.l.s4 1983009808
  %v1895 = vunpack.c.0.s8 %v1894
  %v1896 = vlaneseq
  %v1897 = vshrl.u32 %v1896, 7
  %v1898 = vsub.s32 %v1895, %v1897
  %v1899 = vrot.slane %v1885, %v1898
  %v1900 = vcombine.high %v1892, %v1892
  %v1901 = vcombine.high %v1899, %v1899
  %v1902 = vcombine.high %v1420, %v1420
  %v1904 = vunpack.c.l.s4 1983009808
  %v1905 = vunpack.c.0.s8 %v1904
  %v1906 = vlaneseq
  %v1907 = vshrl.u32 %v1906, 7
  %v1908 = vsub.s32 %v1905, %v1907
  %v1909 = vrot.slane %v1420, %v1908
  %v1911 = vunpack.c.l.s4 1983009808
  %v1912 = vunpack.c.0.s8 %v1911
  %v1913 = vlaneseq
  %v1914 = vshrl.u32 %v1913, 7
  %v1915 = vsub.s32 %v1912, %v1914
  %v1916 = vrot.slane %v1902, %v1915
  %v1917 = vcombine.high %v1909, %v1909
  %v1918 = vcombine.high %v1916, %v1916
  %v1919 = vcombine.high %v1421, %v1421
  %v1921 = vunpack.c.l.s4 1983009808
  %v1922 = vunpack.c.0.s8 %v1921
  %v1923 = vlaneseq
  %v1924 = vshrl.u32 %v1923, 7
  %v1925 = vsub.s32 %v1922, %v1924
  %v1926 = vrot.slane %v1421, %v1925
  %v1928 = vunpack.c.l.s4 1983009808
  %v1929 = vunpack.c.0.s8 %v1928
  %v1930 = vlaneseq
  %v1931 = vshrl.u32 %v1930, 7
  %v1932 = vsub.s32 %v1929, %v1931
  %v1933 = vrot.slane %v1919, %v1932
  %v1934 = vcombine.high %v1926, %v1926
  %v1935 = vcombine.high %v1933, %v1933
  %v1936 = vcombine.high %v1422, %v1422
  %v1938 = vunpack.c.l.s4 1983009808
  %v1939 = vunpack.c.0.s8 %v1938
  %v1940 = vlaneseq
  %v1941 = vshrl.u32 %v1940, 7
  %v1942 = vsub.s32 %v1939, %v1941
  %v1943 = vrot.slane %v1422, %v1942
  %v1945 = vunpack.c.l.s4 1983009808
  %v1946 = vunpack.c.0.s8 %v1945
  %v1947 = vlaneseq
  %v1948 = vshrl.u32 %v1947, 7
  %v1949 = vsub.s32 %v1946, %v1948
  %v1950 = vrot.slane %v1936, %v1949
  %v1951 = vcombine.high %v1943, %v1943
  %v1952 = vcombine.high %v1950, %v1950
  %v1953 = vcombine.high %v1423, %v1423
  %v1955 = vunpack.c.l.s4 1983009808
  %v1956 = vunpack.c.0.s8 %v1955
  %v1957 = vlaneseq
  %v1958 = vshrl.u32 %v1957, 7
  %v1959 = vsub.s32 %v1956, %v1958
  %v1960 = vrot.slane %v1423, %v1959
  %v1962 = vunpack.c.l.s4 1983009808
  %v1963 = vunpack.c.0.s8 %v1962
  %v1964 = vlaneseq
  %v1965 = vshrl.u32 %v1964, 7
  %v1966 = vsub.s32 %v1963, %v1965
  %v1967 = vrot.slane %v1953, %v1966
  %v1968 = vcombine.high %v1960, %v1960
  %v1969 = vcombine.high %v1967, %v1967
  %v1970 = vcombine.high %v1424, %v1424
  %v1972 = vunpack.c.l.s4 1983009808
  %v1973 = vunpack.c.0.s8 %v1972
  %v1974 = vlaneseq
  %v1975 = vshrl.u32 %v1974, 7
  %v1976 = vsub.s32 %v1973, %v1975
  %v1977 = vrot.slane %v1424, %v1976
  %v1979 = vunpack.c.l.s4 1983009808
  %v1980 = vunpack.c.0.s8 %v1979
  %v1981 = vlaneseq
  %v1982 = vshrl.u32 %v1981, 7
  %v1983 = vsub.s32 %v1980, %v1982
  %v1984 = vrot.slane %v1970, %v1983
  %v1985 = vcombine.high %v1977, %v1977
  %v1986 = vcombine.high %v1984, %v1984
  %v1987 = vcombine.high %v1425, %v1425
  %v1989 = vunpack.c.l.s4 1983009808
  %v1990 = vunpack.c.0.s8 %v1989
  %v1991 = vlaneseq
  %v1992 = vshrl.u32 %v1991, 7
  %v1993 = vsub.s32 %v1990, %v1992
  %v1994 = vrot.slane %v1425, %v1993
  %v1996 = vunpack.c.l.s4 1983009808
  %v1997 = vunpack.c.0.s8 %v1996
  %v1998 = vlaneseq
  %v1999 = vshrl.u32 %v1998, 7
  %v2000 = vsub.s32 %v1997, %v1999
  %v2001 = vrot.slane %v1987, %v2000
  %v2002 = vcombine.high %v1994, %v1994
  %v2003 = vcombine.high %v2001, %v2001
  %v2004 = vcombine.high %v1426, %v1426
  %v2006 = vunpack.c.l.s4 1983009808
  %v2007 = vunpack.c.0.s8 %v2006
  %v2008 = vlaneseq
  %v2009 = vshrl.u32 %v2008, 7
  %v2010 = vsub.s32 %v2007, %v2009
  %v2011 = vrot.slane %v1426, %v2010
  %v2013 = vunpack.c.l.s4 1983009808
  %v2014 = vunpack.c.0.s8 %v2013
  %v2015 = vlaneseq
  %v2016 = vshrl.u32 %v2015, 7
  %v2017 = vsub.s32 %v2014, %v2016
  %v2018 = vrot.slane %v2004, %v2017
  %v2019 = vcombine.high %v2011, %v2011
  %v2020 = vcombine.high %v2018, %v2018
  %v2021 = vcombine.high %v1427, %v1427
  %v2023 = vunpack.c.l.s4 1983009808
  %v2024 = vunpack.c.0.s8 %v2023
  %v2025 = vlaneseq
  %v2026 = vshrl.u32 %v2025, 7
  %v2027 = vsub.s32 %v2024, %v2026
  %v2028 = vrot.slane %v1427, %v2027
  %v2030 = vunpack.c.l.s4 1983009808
  %v2031 = vunpack.c.0.s8 %v2030
  %v2032 = vlaneseq
  %v2033 = vshrl.u32 %v2032, 7
  %v2034 = vsub.s32 %v2031, %v2033
  %v2035 = vrot.slane %v2021, %v2034
  %v2036 = vcombine.high %v2028, %v2028
  %v2037 = vcombine.high %v2035, %v2035
  %v2038 = vcombine.high %v1428, %v1428
  %v2040 = vunpack.c.l.s4 1983009808
  %v2041 = vunpack.c.0.s8 %v2040
  %v2042 = vlaneseq
  %v2043 = vshrl.u32 %v2042, 7
  %v2044 = vsub.s32 %v2041, %v2043
  %v2045 = vrot.slane %v1428, %v2044
  %v2047 = vunpack.c.l.s4 1983009808
  %v2048 = vunpack.c.0.s8 %v2047
  %v2049 = vlaneseq
  %v2050 = vshrl.u32 %v2049, 7
  %v2051 = vsub.s32 %v2048, %v2050
  %v2052 = vrot.slane %v2038, %v2051
  %v2053 = vcombine.high %v2045, %v2045
  %v2054 = vcombine.high %v2052, %v2052
  %v2055 = vcombine.high %v1429, %v1429
  %v2057 = vunpack.c.l.s4 1983009808
  %v2058 = vunpack.c.0.s8 %v2057
  %v2059 = vlaneseq
  %v2060 = vshrl.u32 %v2059, 7
  %v2061 = vsub.s32 %v2058, %v2060
  %v2062 = vrot.slane %v1429, %v2061
  %v2064 = vunpack.c.l.s4 1983009808
  %v2065 = vunpack.c.0.s8 %v2064
  %v2066 = vlaneseq
  %v2067 = vshrl.u32 %v2066, 7
  %v2068 = vsub.s32 %v2065, %v2067
  %v2069 = vrot.slane %v2055, %v2068
  %v2070 = vcombine.high %v2062, %v2062
  %v2071 = vcombine.high %v2069, %v2069
  %v2072 = vcombine.high %v1430, %v1430
  %v2074 = vunpack.c.l.s4 1983009808
  %v2075 = vunpack.c.0.s8 %v2074
  %v2076 = vlaneseq
  %v2077 = vshrl.u32 %v2076, 7
  %v2078 = vsub.s32 %v2075, %v2077
  %v2079 = vrot.slane %v1430, %v2078
  %v2081 = vunpack.c.l.s4 1983009808
  %v2082 = vunpack.c.0.s8 %v2081
  %v2083 = vlaneseq
  %v2084 = vshrl.u32 %v2083, 7
  %v2085 = vsub.s32 %v2082, %v2084
  %v2086 = vrot.slane %v2072, %v2085
  %v2087 = vcombine.high %v2079, %v2079
  %v2088 = vcombine.high %v2086, %v2086
  %v2089 = vcombine.high %v1431, %v1431
  %v2091 = vunpack.c.l.s4 1983009808
  %v2092 = vunpack.c.0.s8 %v2091
  %v2093 = vlaneseq
  %v2094 = vshrl.u32 %v2093, 7
  %v2095 = vsub.s32 %v2092, %v2094
  %v2096 = vrot.slane %v1431, %v2095
  %v2098 = vunpack.c.l.s4 1983009808
  %v2099 = vunpack.c.0.s8 %v2098
  %v2100 = vlaneseq
  %v2101 = vshrl.u32 %v2100, 7
  %v2102 = vsub.s32 %v2099, %v2101
  %v2103 = vrot.slane %v2089, %v2102
  %v2104 = vcombine.high %v2096, %v2096
  %v2105 = vcombine.high %v2103, %v2103
  %v2106 = vcombine.high %v1432, %v1432
  %v2108 = vunpack.c.l.s4 1983009808
  %v2109 = vunpack.c.0.s8 %v2108
  %v2110 = vlaneseq
  %v2111 = vshrl.u32 %v2110, 7
  %v2112 = vsub.s32 %v2109, %v2111
  %v2113 = vrot.slane %v1432, %v2112
  %v2115 = vunpack.c.l.s4 1983009808
  %v2116 = vunpack.c.0.s8 %v2115
  %v2117 = vlaneseq
  %v2118 = vshrl.u32 %v2117, 7
  %v2119 = vsub.s32 %v2116, %v2118
  %v2120 = vrot.slane %v2106, %v2119
  %v2121 = vcombine.high %v2113, %v2113
  %v2122 = vcombine.high %v2120, %v2120
  %v2123 = vcombine.high %v1433, %v1433
  %v2125 = vunpack.c.l.s4 1983009808
  %v2126 = vunpack.c.0.s8 %v2125
  %v2127 = vlaneseq
  %v2128 = vshrl.u32 %v2127, 7
  %v2129 = vsub.s32 %v2126, %v2128
  %v2130 = vrot.slane %v1433, %v2129
  %v2132 = vunpack.c.l.s4 1983009808
  %v2133 = vunpack.c.0.s8 %v2132
  %v2134 = vlaneseq
  %v2135 = vshrl.u32 %v2134, 7
  %v2136 = vsub.s32 %v2133, %v2135
  %v2137 = vrot.slane %v2123, %v2136
  %v2138 = vcombine.high %v2130, %v2130
  %v2139 = vcombine.high %v2137, %v2137
  %v2140 = vcombine.high %v1434, %v1434
  %v2142 = vunpack.c.l.s4 1983009808
  %v2143 = vunpack.c.0.s8 %v2142
  %v2144 = vlaneseq
  %v2145 = vshrl.u32 %v2144, 7
  %v2146 = vsub.s32 %v2143, %v2145
  %v2147 = vrot.slane %v1434, %v2146
  %v2149 = vunpack.c.l.s4 1983009808
  %v2150 = vunpack.c.0.s8 %v2149
  %v2151 = vlaneseq
  %v2152 = vshrl.u32 %v2151, 7
  %v2153 = vsub.s32 %v2150, %v2152
  %v2154 = vrot.slane %v2140, %v2153
  %v2155 = vcombine.high %v2147, %v2147
  %v2156 = vcombine.high %v2154, %v2154
  %v2157 = vcombine.high %v1435, %v1435
  %v2159 = vunpack.c.l.s4 1983009808
  %v2160 = vunpack.c.0.s8 %v2159
  %v2161 = vlaneseq
  %v2162 = vshrl.u32 %v2161, 7
  %v2163 = vsub.s32 %v2160, %v2162
  %v2164 = vrot.slane %v1435, %v2163
  %v2166 = vunpack.c.l.s4 1983009808
  %v2167 = vunpack.c.0.s8 %v2166
  %v2168 = vlaneseq
  %v2169 = vshrl.u32 %v2168, 7
  %v2170 = vsub.s32 %v2167, %v2169
  %v2171 = vrot.slane %v2157, %v2170
  %v2172 = vcombine.high %v2164, %v2164
  %v2173 = vcombine.high %v2171, %v2171
  %v2174 = vcombine.high %v1436, %v1436
  %v2176 = vunpack.c.l.s4 1983009808
  %v2177 = vunpack.c.0.s8 %v2176
  %v2178 = vlaneseq
  %v2179 = vshrl.u32 %v2178, 7
  %v2180 = vsub.s32 %v2177, %v2179
  %v2181 = vrot.slane %v1436, %v2180
  %v2183 = vunpack.c.l.s4 1983009808
  %v2184 = vunpack.c.0.s8 %v2183
  %v2185 = vlaneseq
  %v2186 = vshrl.u32 %v2185, 7
  %v2187 = vsub.s32 %v2184, %v2186
  %v2188 = vrot.slane %v2174, %v2187
  %v2189 = vcombine.high %v2181, %v2181
  %v2190 = vcombine.high %v2188, %v2188
  %v2191 = vcombine.high %v1437, %v1437
  %v2193 = vunpack.c.l.s4 1983009808
  %v2194 = vunpack.c.0.s8 %v2193
  %v2195 = vlaneseq
  %v2196 = vshrl.u32 %v2195, 7
  %v2197 = vsub.s32 %v2194, %v2196
  %v2198 = vrot.slane %v1437, %v2197
  %v2200 = vunpack.c.l.s4 1983009808
  %v2201 = vunpack.c.0.s8 %v2200
  %v2202 = vlaneseq
  %v2203 = vshrl.u32 %v2202, 7
  %v2204 = vsub.s32 %v2201, %v2203
  %v2205 = vrot.slane %v2191, %v2204
  %v2206 = vcombine.high %v2198, %v2198
  %v2207 = vcombine.high %v2205, %v2205
  %v2208 = vcombine.high %v1438, %v1438
  %v2210 = vunpack.c.l.s4 1983009808
  %v2211 = vunpack.c.0.s8 %v2210
  %v2212 = vlaneseq
  %v2213 = vshrl.u32 %v2212, 7
  %v2214 = vsub.s32 %v2211, %v2213
  %v2215 = vrot.slane %v1438, %v2214
  %v2217 = vunpack.c.l.s4 1983009808
  %v2218 = vunpack.c.0.s8 %v2217
  %v2219 = vlaneseq
  %v2220 = vshrl.u32 %v2219, 7
  %v2221 = vsub.s32 %v2218, %v2220
  %v2222 = vrot.slane %v2208, %v2221
  %v2223 = vcombine.high %v2215, %v2215
  %v2224 = vcombine.high %v2222, %v2222
  %v2225 = vcombine.high %v1439, %v1439
  %v2227 = vunpack.c.l.s4 1983009808
  %v2228 = vunpack.c.0.s8 %v2227
  %v2229 = vlaneseq
  %v2230 = vshrl.u32 %v2229, 7
  %v2231 = vsub.s32 %v2228, %v2230
  %v2232 = vrot.slane %v1439, %v2231
  %v2234 = vunpack.c.l.s4 1983009808
  %v2235 = vunpack.c.0.s8 %v2234
  %v2236 = vlaneseq
  %v2237 = vshrl.u32 %v2236, 7
  %v2238 = vsub.s32 %v2235, %v2237
  %v2239 = vrot.slane %v2225, %v2238
  %v2240 = vcombine.high %v2232, %v2232
  %v2241 = vcombine.high %v2239, %v2239
  %v2242 = vcombine.high %v1440, %v1440
  %v2244 = vunpack.c.l.s4 1983009808
  %v2245 = vunpack.c.0.s8 %v2244
  %v2246 = vlaneseq
  %v2247 = vshrl.u32 %v2246, 7
  %v2248 = vsub.s32 %v2245, %v2247
  %v2249 = vrot.slane %v1440, %v2248
  %v2251 = vunpack.c.l.s4 1983009808
  %v2252 = vunpack.c.0.s8 %v2251
  %v2253 = vlaneseq
  %v2254 = vshrl.u32 %v2253, 7
  %v2255 = vsub.s32 %v2252, %v2254
  %v2256 = vrot.slane %v2242, %v2255
  %v2257 = vcombine.high %v2249, %v2249
  %v2258 = vcombine.high %v2256, %v2256
  %v2259 = vcombine.high %v1441, %v1441
  %v2261 = vunpack.c.l.s4 1983009808
  %v2262 = vunpack.c.0.s8 %v2261
  %v2263 = vlaneseq
  %v2264 = vshrl.u32 %v2263, 7
  %v2265 = vsub.s32 %v2262, %v2264
  %v2266 = vrot.slane %v1441, %v2265
  %v2268 = vunpack.c.l.s4 1983009808
  %v2269 = vunpack.c.0.s8 %v2268
  %v2270 = vlaneseq
  %v2271 = vshrl.u32 %v2270, 7
  %v2272 = vsub.s32 %v2269, %v2271
  %v2273 = vrot.slane %v2259, %v2272
  %v2274 = vcombine.high %v2266, %v2266
  %v2275 = vcombine.high %v2273, %v2273
  %v2276 = vcombine.high %v1442, %v1442
  %v2278 = vunpack.c.l.s4 1983009808
  %v2279 = vunpack.c.0.s8 %v2278
  %v2280 = vlaneseq
  %v2281 = vshrl.u32 %v2280, 7
  %v2282 = vsub.s32 %v2279, %v2281
  %v2283 = vrot.slane %v1442, %v2282
  %v2285 = vunpack.c.l.s4 1983009808
  %v2286 = vunpack.c.0.s8 %v2285
  %v2287 = vlaneseq
  %v2288 = vshrl.u32 %v2287, 7
  %v2289 = vsub.s32 %v2286, %v2288
  %v2290 = vrot.slane %v2276, %v2289
  %v2291 = vcombine.high %v2283, %v2283
  %v2292 = vcombine.high %v2290, %v2290
  %v2293 = vcombine.high %v1443, %v1443
  %v2295 = vunpack.c.l.s4 1983009808
  %v2296 = vunpack.c.0.s8 %v2295
  %v2297 = vlaneseq
  %v2298 = vshrl.u32 %v2297, 7
  %v2299 = vsub.s32 %v2296, %v2298
  %v2300 = vrot.slane %v1443, %v2299
  %v2302 = vunpack.c.l.s4 1983009808
  %v2303 = vunpack.c.0.s8 %v2302
  %v2304 = vlaneseq
  %v2305 = vshrl.u32 %v2304, 7
  %v2306 = vsub.s32 %v2303, %v2305
  %v2307 = vrot.slane %v2293, %v2306
  %v2308 = vcombine.high %v2300, %v2300
  %v2309 = vcombine.high %v2307, %v2307
  %v2310 = vcombine.high %v1444, %v1444
  %v2312 = vunpack.c.l.s4 1983009808
  %v2313 = vunpack.c.0.s8 %v2312
  %v2314 = vlaneseq
  %v2315 = vshrl.u32 %v2314, 7
  %v2316 = vsub.s32 %v2313, %v2315
  %v2317 = vrot.slane %v1444, %v2316
  %v2319 = vunpack.c.l.s4 1983009808
  %v2320 = vunpack.c.0.s8 %v2319
  %v2321 = vlaneseq
  %v2322 = vshrl.u32 %v2321, 7
  %v2323 = vsub.s32 %v2320, %v2322
  %v2324 = vrot.slane %v2310, %v2323
  %v2325 = vcombine.high %v2317, %v2317
  %v2326 = vcombine.high %v2324, %v2324
  %v2327 = vcombine.high %v1445, %v1445
  %v2329 = vunpack.c.l.s4 1983009808
  %v2330 = vunpack.c.0.s8 %v2329
  %v2331 = vlaneseq
  %v2332 = vshrl.u32 %v2331, 7
  %v2333 = vsub.s32 %v2330, %v2332
  %v2334 = vrot.slane %v1445, %v2333
  %v2336 = vunpack.c.l.s4 1983009808
  %v2337 = vunpack.c.0.s8 %v2336
  %v2338 = vlaneseq
  %v2339 = vshrl.u32 %v2338, 7
  %v2340 = vsub.s32 %v2337, %v2339
  %v2341 = vrot.slane %v2327, %v2340
  %v2342 = vcombine.high %v2334, %v2334
  %v2343 = vcombine.high %v2341, %v2341
  %v2344 = vcombine.high %v1446, %v1446
  %v2346 = vunpack.c.l.s4 1983009808
  %v2347 = vunpack.c.0.s8 %v2346
  %v2348 = vlaneseq
  %v2349 = vshrl.u32 %v2348, 7
  %v2350 = vsub.s32 %v2347, %v2349
  %v2351 = vrot.slane %v1446, %v2350
  %v2353 = vunpack.c.l.s4 1983009808
  %v2354 = vunpack.c.0.s8 %v2353
  %v2355 = vlaneseq
  %v2356 = vshrl.u32 %v2355, 7
  %v2357 = vsub.s32 %v2354, %v2356
  %v2358 = vrot.slane %v2344, %v2357
  %v2359 = vcombine.high %v2351, %v2351
  %v2360 = vcombine.high %v2358, %v2358
  %v2361 = vcombine.high %v1447, %v1447
  %v2363 = vunpack.c.l.s4 1983009808
  %v2364 = vunpack.c.0.s8 %v2363
  %v2365 = vlaneseq
  %v2366 = vshrl.u32 %v2365, 7
  %v2367 = vsub.s32 %v2364, %v2366
  %v2368 = vrot.slane %v1447, %v2367
  %v2370 = vunpack.c.l.s4 1983009808
  %v2371 = vunpack.c.0.s8 %v2370
  %v2372 = vlaneseq
  %v2373 = vshrl.u32 %v2372, 7
  %v2374 = vsub.s32 %v2371, %v2373
  %v2375 = vrot.slane %v2361, %v2374
  %v2376 = vcombine.high %v2368, %v2368
  %v2377 = vcombine.high %v2375, %v2375
  %v2378 = vcombine.high %v1448, %v1448
  %v2380 = vunpack.c.l.s4 1983009808
  %v2381 = vunpack.c.0.s8 %v2380
  %v2382 = vlaneseq
  %v2383 = vshrl.u32 %v2382, 7
  %v2384 = vsub.s32 %v2381, %v2383
  %v2385 = vrot.slane %v1448, %v2384
  %v2387 = vunpack.c.l.s4 1983009808
  %v2388 = vunpack.c.0.s8 %v2387
  %v2389 = vlaneseq
  %v2390 = vshrl.u32 %v2389, 7
  %v2391 = vsub.s32 %v2388, %v2390
  %v2392 = vrot.slane %v2378, %v2391
  %v2393 = vcombine.high %v2385, %v2385
  %v2394 = vcombine.high %v2392, %v2392
  %v2395 = vcombine.high %v1449, %v1449
  %v2397 = vunpack.c.l.s4 1983009808
  %v2398 = vunpack.c.0.s8 %v2397
  %v2399 = vlaneseq
  %v2400 = vshrl.u32 %v2399, 7
  %v2401 = vsub.s32 %v2398, %v2400
  %v2402 = vrot.slane %v1449, %v2401
  %v2404 = vunpack.c.l.s4 1983009808
  %v2405 = vunpack.c.0.s8 %v2404
  %v2406 = vlaneseq
  %v2407 = vshrl.u32 %v2406, 7
  %v2408 = vsub.s32 %v2405, %v2407
  %v2409 = vrot.slane %v2395, %v2408
  %v2410 = vcombine.high %v2402, %v2402
  %v2411 = vcombine.high %v2409, %v2409
  %v2412 = vcombine.high %v1450, %v1450
  %v2414 = vunpack.c.l.s4 1983009808
  %v2415 = vunpack.c.0.s8 %v2414
  %v2416 = vlaneseq
  %v2417 = vshrl.u32 %v2416, 7
  %v2418 = vsub.s32 %v2415, %v2417
  %v2419 = vrot.slane %v1450, %v2418
  %v2421 = vunpack.c.l.s4 1983009808
  %v2422 = vunpack.c.0.s8 %v2421
  %v2423 = vlaneseq
  %v2424 = vshrl.u32 %v2423, 7
  %v2425 = vsub.s32 %v2422, %v2424
  %v2426 = vrot.slane %v2412, %v2425
  %v2427 = vcombine.high %v2419, %v2419
  %v2428 = vcombine.high %v2426, %v2426
  %v2429 = vcombine.high %v1451, %v1451
  %v2431 = vunpack.c.l.s4 1983009808
  %v2432 = vunpack.c.0.s8 %v2431
  %v2433 = vlaneseq
  %v2434 = vshrl.u32 %v2433, 7
  %v2435 = vsub.s32 %v2432, %v2434
  %v2436 = vrot.slane %v1451, %v2435
  %v2438 = vunpack.c.l.s4 1983009808
  %v2439 = vunpack.c.0.s8 %v2438
  %v2440 = vlaneseq
  %v2441 = vshrl.u32 %v2440, 7
  %v2442 = vsub.s32 %v2439, %v2441
  %v2443 = vrot.slane %v2429, %v2442
  %v2444 = vcombine.high %v2436, %v2436
  %v2445 = vcombine.high %v2443, %v2443
  %v2446 = vcombine.high %v1452, %v1452
  %v2448 = vunpack.c.l.s4 1983009808
  %v2449 = vunpack.c.0.s8 %v2448
  %v2450 = vlaneseq
  %v2451 = vshrl.u32 %v2450, 7
  %v2452 = vsub.s32 %v2449, %v2451
  %v2453 = vrot.slane %v1452, %v2452
  %v2455 = vunpack.c.l.s4 1983009808
  %v2456 = vunpack.c.0.s8 %v2455
  %v2457 = vlaneseq
  %v2458 = vshrl.u32 %v2457, 7
  %v2459 = vsub.s32 %v2456, %v2458
  %v2460 = vrot.slane %v2446, %v2459
  %v2461 = vcombine.high %v2453, %v2453
  %v2462 = vcombine.high %v2460, %v2460
  %v2463 = vcombine.high %v1453, %v1453
  %v2465 = vunpack.c.l.s4 1983009808
  %v2466 = vunpack.c.0.s8 %v2465
  %v2467 = vlaneseq
  %v2468 = vshrl.u32 %v2467, 7
  %v2469 = vsub.s32 %v2466, %v2468
  %v2470 = vrot.slane %v1453, %v2469
  %v2472 = vunpack.c.l.s4 1983009808
  %v2473 = vunpack.c.0.s8 %v2472
  %v2474 = vlaneseq
  %v2475 = vshrl.u32 %v2474, 7
  %v2476 = vsub.s32 %v2473, %v2475
  %v2477 = vrot.slane %v2463, %v2476
  %v2478 = vcombine.high %v2470, %v2470
  %v2479 = vcombine.high %v2477, %v2477
  %v2480 = vcombine.high %v1454, %v1454
  %v2482 = vunpack.c.l.s4 1983009808
  %v2483 = vunpack.c.0.s8 %v2482
  %v2484 = vlaneseq
  %v2485 = vshrl.u32 %v2484, 7
  %v2486 = vsub.s32 %v2483, %v2485
  %v2487 = vrot.slane %v1454, %v2486
  %v2489 = vunpack.c.l.s4 1983009808
  %v2490 = vunpack.c.0.s8 %v2489
  %v2491 = vlaneseq
  %v2492 = vshrl.u32 %v2491, 7
  %v2493 = vsub.s32 %v2490, %v2492
  %v2494 = vrot.slane %v2480, %v2493
  %v2495 = vcombine.high %v2487, %v2487
  %v2496 = vcombine.high %v2494, %v2494
  %v2497 = vcombine.high %v1455, %v1455
  %v2499 = vunpack.c.l.s4 1983009808
  %v2500 = vunpack.c.0.s8 %v2499
  %v2501 = vlaneseq
  %v2502 = vshrl.u32 %v2501, 7
  %v2503 = vsub.s32 %v2500, %v2502
  %v2504 = vrot.slane %v1455, %v2503
  %v2506 = vunpack.c.l.s4 1983009808
  %v2507 = vunpack.c.0.s8 %v2506
  %v2508 = vlaneseq
  %v2509 = vshrl.u32 %v2508, 7
  %v2510 = vsub.s32 %v2507, %v2509
  %v2511 = vrot.slane %v2497, %v2510
  %v2512 = vcombine.high %v2504, %v2504
  %v2513 = vcombine.high %v2511, %v2511
  %v2514 = vcombine.high %v1456, %v1456
  %v2516 = vunpack.c.l.s4 1983009808
  %v2517 = vunpack.c.0.s8 %v2516
  %v2518 = vlaneseq
  %v2519 = vshrl.u32 %v2518, 7
  %v2520 = vsub.s32 %v2517, %v2519
  %v2521 = vrot.slane %v1456, %v2520
  %v2523 = vunpack.c.l.s4 1983009808
  %v2524 = vunpack.c.0.s8 %v2523
  %v2525 = vlaneseq
  %v2526 = vshrl.u32 %v2525, 7
  %v2527 = vsub.s32 %v2524, %v2526
  %v2528 = vrot.slane %v2514, %v2527
  %v2529 = vcombine.high %v2521, %v2521
  %v2530 = vcombine.high %v2528, %v2528
  %v2531 = vcombine.high %v1457, %v1457
  %v2533 = vunpack.c.l.s4 1983009808
  %v2534 = vunpack.c.0.s8 %v2533
  %v2535 = vlaneseq
  %v2536 = vshrl.u32 %v2535, 7
  %v2537 = vsub.s32 %v2534, %v2536
  %v2538 = vrot.slane %v1457, %v2537
  %v2540 = vunpack.c.l.s4 1983009808
  %v2541 = vunpack.c.0.s8 %v2540
  %v2542 = vlaneseq
  %v2543 = vshrl.u32 %v2542, 7
  %v2544 = vsub.s32 %v2541, %v2543
  %v2545 = vrot.slane %v2531, %v2544
  %v2546 = vcombine.high %v2538, %v2538
  %v2547 = vcombine.high %v2545, %v2545
  %v2548 = vcombine.high %v1458, %v1458
  %v2550 = vunpack.c.l.s4 1983009808
  %v2551 = vunpack.c.0.s8 %v2550
  %v2552 = vlaneseq
  %v2553 = vshrl.u32 %v2552, 7
  %v2554 = vsub.s32 %v2551, %v2553
  %v2555 = vrot.slane %v1458, %v2554
  %v2557 = vunpack.c.l.s4 1983009808
  %v2558 = vunpack.c.0.s8 %v2557
  %v2559 = vlaneseq
  %v2560 = vshrl.u32 %v2559, 7
  %v2561 = vsub.s32 %v2558, %v2560
  %v2562 = vrot.slane %v2548, %v2561
  %v2563 = vcombine.high %v2555, %v2555
  %v2564 = vcombine.high %v2562, %v2562
  %v2565 = vcombine.high %v1459, %v1459
  %v2567 = vunpack.c.l.s4 1983009808
  %v2568 = vunpack.c.0.s8 %v2567
  %v2569 = vlaneseq
  %v2570 = vshrl.u32 %v2569, 7
  %v2571 = vsub.s32 %v2568, %v2570
  %v2572 = vrot.slane %v1459, %v2571
  %v2574 = vunpack.c.l.s4 1983009808
  %v2575 = vunpack.c.0.s8 %v2574
  %v2576 = vlaneseq
  %v2577 = vshrl.u32 %v2576, 7
  %v2578 = vsub.s32 %v2575, %v2577
  %v2579 = vrot.slane %v2565, %v2578
  %v2580 = vcombine.high %v2572, %v2572
  %v2581 = vcombine.high %v2579, %v2579
  %v2582 = vcombine.high %v1460, %v1460
  %v2584 = vunpack.c.l.s4 1983009808
  %v2585 = vunpack.c.0.s8 %v2584
  %v2586 = vlaneseq
  %v2587 = vshrl.u32 %v2586, 7
  %v2588 = vsub.s32 %v2585, %v2587
  %v2589 = vrot.slane %v1460, %v2588
  %v2591 = vunpack.c.l.s4 1983009808
  %v2592 = vunpack.c.0.s8 %v2591
  %v2593 = vlaneseq
  %v2594 = vshrl.u32 %v2593, 7
  %v2595 = vsub.s32 %v2592, %v2594
  %v2596 = vrot.slane %v2582, %v2595
  %v2597 = vcombine.high %v2589, %v2589
  %v2598 = vcombine.high %v2596, %v2596
  %v2599 = vcombine.high %v1461, %v1461
  %v2601 = vunpack.c.l.s4 1983009808
  %v2602 = vunpack.c.0.s8 %v2601
  %v2603 = vlaneseq
  %v2604 = vshrl.u32 %v2603, 7
  %v2605 = vsub.s32 %v2602, %v2604
  %v2606 = vrot.slane %v1461, %v2605
  %v2608 = vunpack.c.l.s4 1983009808
  %v2609 = vunpack.c.0.s8 %v2608
  %v2610 = vlaneseq
  %v2611 = vshrl.u32 %v2610, 7
  %v2612 = vsub.s32 %v2609, %v2611
  %v2613 = vrot.slane %v2599, %v2612
  %v2614 = vcombine.high %v2606, %v2606
  %v2615 = vcombine.high %v2613, %v2613
  %v2616 = vcombine.high %v1462, %v1462
  %v2618 = vunpack.c.l.s4 1983009808
  %v2619 = vunpack.c.0.s8 %v2618
  %v2620 = vlaneseq
  %v2621 = vshrl.u32 %v2620, 7
  %v2622 = vsub.s32 %v2619, %v2621
  %v2623 = vrot.slane %v1462, %v2622
  %v2625 = vunpack.c.l.s4 1983009808
  %v2626 = vunpack.c.0.s8 %v2625
  %v2627 = vlaneseq
  %v2628 = vshrl.u32 %v2627, 7
  %v2629 = vsub.s32 %v2626, %v2628
  %v2630 = vrot.slane %v2616, %v2629
  %v2631 = vcombine.high %v2623, %v2623
  %v2632 = vcombine.high %v2630, %v2630
  %v2633 = vcombine.high %v1463, %v1463
  %v2635 = vunpack.c.l.s4 1983009808
  %v2636 = vunpack.c.0.s8 %v2635
  %v2637 = vlaneseq
  %v2638 = vshrl.u32 %v2637, 7
  %v2639 = vsub.s32 %v2636, %v2638
  %v2640 = vrot.slane %v1463, %v2639
  %v2642 = vunpack.c.l.s4 1983009808
  %v2643 = vunpack.c.0.s8 %v2642
  %v2644 = vlaneseq
  %v2645 = vshrl.u32 %v2644, 7
  %v2646 = vsub.s32 %v2643, %v2645
  %v2647 = vrot.slane %v2633, %v2646
  %v2648 = vcombine.high %v2640, %v2640
  %v2649 = vcombine.high %v2647, %v2647
  %v2650 = vcombine.high %v1464, %v1464
  %v2652 = vunpack.c.l.s4 1983009808
  %v2653 = vunpack.c.0.s8 %v2652
  %v2654 = vlaneseq
  %v2655 = vshrl.u32 %v2654, 7
  %v2656 = vsub.s32 %v2653, %v2655
  %v2657 = vrot.slane %v1464, %v2656
  %v2659 = vunpack.c.l.s4 1983009808
  %v2660 = vunpack.c.0.s8 %v2659
  %v2661 = vlaneseq
  %v2662 = vshrl.u32 %v2661, 7
  %v2663 = vsub.s32 %v2660, %v2662
  %v2664 = vrot.slane %v2650, %v2663
  %v2665 = vcombine.high %v2657, %v2657
  %v2666 = vcombine.high %v2664, %v2664
  %v2667 = vcombine.high %v1465, %v1465
  %v2669 = vunpack.c.l.s4 1983009808
  %v2670 = vunpack.c.0.s8 %v2669
  %v2671 = vlaneseq
  %v2672 = vshrl.u32 %v2671, 7
  %v2673 = vsub.s32 %v2670, %v2672
  %v2674 = vrot.slane %v1465, %v2673
  %v2676 = vunpack.c.l.s4 1983009808
  %v2677 = vunpack.c.0.s8 %v2676
  %v2678 = vlaneseq
  %v2679 = vshrl.u32 %v2678, 7
  %v2680 = vsub.s32 %v2677, %v2679
  %v2681 = vrot.slane %v2667, %v2680
  %v2682 = vcombine.high %v2674, %v2674
  %v2683 = vcombine.high %v2681, %v2681
  %v2684 = vcombine.high %v1466, %v1466
  %v2686 = vunpack.c.l.s4 1983009808
  %v2687 = vunpack.c.0.s8 %v2686
  %v2688 = vlaneseq
  %v2689 = vshrl.u32 %v2688, 7
  %v2690 = vsub.s32 %v2687, %v2689
  %v2691 = vrot.slane %v1466, %v2690
  %v2693 = vunpack.c.l.s4 1983009808
  %v2694 = vunpack.c.0.s8 %v2693
  %v2695 = vlaneseq
  %v2696 = vshrl.u32 %v2695, 7
  %v2697 = vsub.s32 %v2694, %v2696
  %v2698 = vrot.slane %v2684, %v2697
  %v2699 = vcombine.high %v2691, %v2691
  %v2700 = vcombine.high %v2698, %v2698
  %v2701 = vcombine.high %v1467, %v1467
  %v2703 = vunpack.c.l.s4 1983009808
  %v2704 = vunpack.c.0.s8 %v2703
  %v2705 = vlaneseq
  %v2706 = vshrl.u32 %v2705, 7
  %v2707 = vsub.s32 %v2704, %v2706
  %v2708 = vrot.slane %v1467, %v2707
  %v2710 = vunpack.c.l.s4 1983009808
  %v2711 = vunpack.c.0.s8 %v2710
  %v2712 = vlaneseq
  %v2713 = vshrl.u32 %v2712, 7
  %v2714 = vsub.s32 %v2711, %v2713
  %v2715 = vrot.slane %v2701, %v2714
  %v2716 = vcombine.high %v2708, %v2708
  %v2717 = vcombine.high %v2715, %v2715
  %v2718 = vcombine.high %v1468, %v1468
  %v2720 = vunpack.c.l.s4 1983009808
  %v2721 = vunpack.c.0.s8 %v2720
  %v2722 = vlaneseq
  %v2723 = vshrl.u32 %v2722, 7
  %v2724 = vsub.s32 %v2721, %v2723
  %v2725 = vrot.slane %v1468, %v2724
  %v2727 = vunpack.c.l.s4 1983009808
  %v2728 = vunpack.c.0.s8 %v2727
  %v2729 = vlaneseq
  %v2730 = vshrl.u32 %v2729, 7
  %v2731 = vsub.s32 %v2728, %v2730
  %v2732 = vrot.slane %v2718, %v2731
  %v2733 = vcombine.high %v2725, %v2725
  %v2734 = vcombine.high %v2732, %v2732
  %v2735 = vcombine.high %v1469, %v1469
  %v2737 = vunpack.c.l.s4 1983009808
  %v2738 = vunpack.c.0.s8 %v2737
  %v2739 = vlaneseq
  %v2740 = vshrl.u32 %v2739, 7
  %v2741 = vsub.s32 %v2738, %v2740
  %v2742 = vrot.slane %v1469, %v2741
  %v2744 = vunpack.c.l.s4 1983009808
  %v2745 = vunpack.c.0.s8 %v2744
  %v2746 = vlaneseq
  %v2747 = vshrl.u32 %v2746, 7
  %v2748 = vsub.s32 %v2745, %v2747
  %v2749 = vrot.slane %v2735, %v2748
  %v2750 = vcombine.high %v2742, %v2742
  %v2751 = vcombine.high %v2749, %v2749
  %v2752 = vcombine.high %v1470, %v1470
  %v2754 = vunpack.c.l.s4 1983009808
  %v2755 = vunpack.c.0.s8 %v2754
  %v2756 = vlaneseq
  %v2757 = vshrl.u32 %v2756, 7
  %v2758 = vsub.s32 %v2755, %v2757
  %v2759 = vrot.slane %v1470, %v2758
  %v2761 = vunpack.c.l.s4 1983009808
  %v2762 = vunpack.c.0.s8 %v2761
  %v2763 = vlaneseq
  %v2764 = vshrl.u32 %v2763, 7
  %v2765 = vsub.s32 %v2762, %v2764
  %v2766 = vrot.slane %v2752, %v2765
  %v2767 = vcombine.high %v2759, %v2759
  %v2768 = vcombine.high %v2766, %v2766
  %v2770 = vunpack.c.l.s4 1983009808
  %v2771 = vunpack.c.0.s8 %v2770
  %v2772 = vlaneseq
  %v2773 = vshrl.u32 %v2772, 7
  %v2774 = vsub.s32 %v2771, %v2773
  %v2775 = vrot.slane %v1471, %v2774
  %3065 = vst [vmem:[#allocation2] sm:$0x3] %v1552
  %3066 = vst [vmem:[#allocation2 + $0x2] sm:$0x3] %v1560
  %3067 = vst [vmem:[#allocation2 + $0x4] sm:$0x3] %v1559
  %3068 = vst [vmem:[#allocation2 + $0x6] sm:$0x3] %v1561
  %3069 = vst [vmem:[#allocation2 + $0x8] sm:$0x3] %v1569
  %3070 = vst [vmem:[#allocation2 + $0xa] sm:$0x3] %v1577
  %3071 = vst [vmem:[#allocation2 + $0xc] sm:$0x3] %v1576
  %3072 = vst [vmem:[#allocation2 + $0xe] sm:$0x3] %v1578
  %3073 = vst [vmem:[#allocation2 + $0x10] sm:$0x3] %v1586
  %3074 = vst [vmem:[#allocation2 + $0x12] sm:$0x3] %v1594
  %3075 = vst [vmem:[#allocation2 + $0x14] sm:$0x3] %v1593
  %3076 = vst [vmem:[#allocation2 + $0x16] sm:$0x3] %v1595
  %3077 = vst [vmem:[#allocation2 + $0x18] sm:$0x3] %v1603
  %3078 = vst [vmem:[#allocation2 + $0x1a] sm:$0x3] %v1611
  %3079 = vst [vmem:[#allocation2 + $0x1c] sm:$0x3] %v1610
  %3080 = vst [vmem:[#allocation2 + $0x1e] sm:$0x3] %v1612
  %3081 = vst [vmem:[#allocation2 + $0x20] sm:$0x3] %v1620
  %3082 = vst [vmem:[#allocation2 + $0x22] sm:$0x3] %v1628
  %3083 = vst [vmem:[#allocation2 + $0x24] sm:$0x3] %v1627
  %3084 = vst [vmem:[#allocation2 + $0x26] sm:$0x3] %v1629
  %3085 = vst [vmem:[#allocation2 + $0x28] sm:$0x3] %v1637
  %3086 = vst [vmem:[#allocation2 + $0x2a] sm:$0x3] %v1645
  %3087 = vst [vmem:[#allocation2 + $0x2c] sm:$0x3] %v1644
  %3088 = vst [vmem:[#allocation2 + $0x2e] sm:$0x3] %v1646
  %3089 = vst [vmem:[#allocation2 + $0x30] sm:$0x3] %v1654
  %3090 = vst [vmem:[#allocation2 + $0x32] sm:$0x3] %v1662
  %3091 = vst [vmem:[#allocation2 + $0x34] sm:$0x3] %v1661
  %3092 = vst [vmem:[#allocation2 + $0x36] sm:$0x3] %v1663
  %3093 = vst [vmem:[#allocation2 + $0x38] sm:$0x3] %v1671
  %3094 = vst [vmem:[#allocation2 + $0x3a] sm:$0x3] %v1679
  %3095 = vst [vmem:[#allocation2 + $0x3c] sm:$0x3] %v1678
  %3096 = vst [vmem:[#allocation2 + $0x3e] sm:$0x3] %v1680
  %3097 = vst [vmem:[#allocation2 + $0x40] sm:$0x3] %v1688
  %3098 = vst [vmem:[#allocation2 + $0x42] sm:$0x3] %v1696
  %3099 = vst [vmem:[#allocation2 + $0x44] sm:$0x3] %v1695
  %3100 = vst [vmem:[#allocation2 + $0x46] sm:$0x3] %v1697
  %3101 = vst [vmem:[#allocation2 + $0x48] sm:$0x3] %v1705
  %3102 = vst [vmem:[#allocation2 + $0x4a] sm:$0x3] %v1713
  %3103 = vst [vmem:[#allocation2 + $0x4c] sm:$0x3] %v1712
  %3104 = vst [vmem:[#allocation2 + $0x4e] sm:$0x3] %v1714
  %3105 = vst [vmem:[#allocation2 + $0x50] sm:$0x3] %v1722
  %3106 = vst [vmem:[#allocation2 + $0x52] sm:$0x3] %v1730
  %3107 = vst [vmem:[#allocation2 + $0x54] sm:$0x3] %v1729
  %3108 = vst [vmem:[#allocation2 + $0x56] sm:$0x3] %v1731
  %3109 = vst [vmem:[#allocation2 + $0x58] sm:$0x3] %v1739
  %3110 = vst [vmem:[#allocation2 + $0x5a] sm:$0x3] %v1747
  %3111 = vst [vmem:[#allocation2 + $0x5c] sm:$0x3] %v1746
  %3112 = vst [vmem:[#allocation2 + $0x5e] sm:$0x3] %v1748
  %3113 = vst [vmem:[#allocation2 + $0x60] sm:$0x3] %v1756
  %3114 = vst [vmem:[#allocation2 + $0x62] sm:$0x3] %v1764
  %3115 = vst [vmem:[#allocation2 + $0x64] sm:$0x3] %v1763
  %3116 = vst [vmem:[#allocation2 + $0x66] sm:$0x3] %v1765
  %3117 = vst [vmem:[#allocation2 + $0x68] sm:$0x3] %v1773
  %3118 = vst [vmem:[#allocation2 + $0x6a] sm:$0x3] %v1781
  %3119 = vst [vmem:[#allocation2 + $0x6c] sm:$0x3] %v1780
  %3120 = vst [vmem:[#allocation2 + $0x6e] sm:$0x3] %v1782
  %3121 = vst [vmem:[#allocation2 + $0x70] sm:$0x3] %v1790
  %3122 = vst [vmem:[#allocation2 + $0x72] sm:$0x3] %v1798
  %3123 = vst [vmem:[#allocation2 + $0x74] sm:$0x3] %v1797
  %3124 = vst [vmem:[#allocation2 + $0x76] sm:$0x3] %v1799
  %3125 = vst [vmem:[#allocation2 + $0x78] sm:$0x3] %v1807
  %3126 = vst [vmem:[#allocation2 + $0x7a] sm:$0x3] %v1815
  %3127 = vst [vmem:[#allocation2 + $0x7c] sm:$0x3] %v1814
  %3128 = vst [vmem:[#allocation2 + $0x7e] sm:$0x3] %v1816
  %3129 = vst [vmem:[#allocation2 + $0x80] sm:$0x3] %v1824
  %3130 = vst [vmem:[#allocation2 + $0x82] sm:$0x3] %v1832
  %3131 = vst [vmem:[#allocation2 + $0x84] sm:$0x3] %v1831
  %3132 = vst [vmem:[#allocation2 + $0x86] sm:$0x3] %v1833
  %3133 = vst [vmem:[#allocation2 + $0x88] sm:$0x3] %v1841
  %3134 = vst [vmem:[#allocation2 + $0x8a] sm:$0x3] %v1849
  %3135 = vst [vmem:[#allocation2 + $0x8c] sm:$0x3] %v1848
  %3136 = vst [vmem:[#allocation2 + $0x8e] sm:$0x3] %v1850
  %3137 = vst [vmem:[#allocation2 + $0x90] sm:$0x3] %v1858
  %3138 = vst [vmem:[#allocation2 + $0x92] sm:$0x3] %v1866
  %3139 = vst [vmem:[#allocation2 + $0x94] sm:$0x3] %v1865
  %3140 = vst [vmem:[#allocation2 + $0x96] sm:$0x3] %v1867
  %3141 = vst [vmem:[#allocation2 + $0x98] sm:$0x3] %v1875
  %3142 = vst [vmem:[#allocation2 + $0x9a] sm:$0x3] %v1883
  %3143 = vst [vmem:[#allocation2 + $0x9c] sm:$0x3] %v1882
  %3144 = vst [vmem:[#allocation2 + $0x9e] sm:$0x3] %v1884
  %3145 = vst [vmem:[#allocation2 + $0xa0] sm:$0x3] %v1892
  %3146 = vst [vmem:[#allocation2 + $0xa2] sm:$0x3] %v1900
  %3147 = vst [vmem:[#allocation2 + $0xa4] sm:$0x3] %v1899
  %3148 = vst [vmem:[#allocation2 + $0xa6] sm:$0x3] %v1901
  %3149 = vst [vmem:[#allocation2 + $0xa8] sm:$0x3] %v1909
  %3150 = vst [vmem:[#allocation2 + $0xaa] sm:$0x3] %v1917
  %3151 = vst [vmem:[#allocation2 + $0xac] sm:$0x3] %v1916
  %3152 = vst [vmem:[#allocation2 + $0xae] sm:$0x3] %v1918
  %3153 = vst [vmem:[#allocation2 + $0xb0] sm:$0x3] %v1926
  %3154 = vst [vmem:[#allocation2 + $0xb2] sm:$0x3] %v1934
  %3155 = vst [vmem:[#allocation2 + $0xb4] sm:$0x3] %v1933
  %3156 = vst [vmem:[#allocation2 + $0xb6] sm:$0x3] %v1935
  %3157 = vst [vmem:[#allocation2 + $0xb8] sm:$0x3] %v1943
  %3158 = vst [vmem:[#allocation2 + $0xba] sm:$0x3] %v1951
  %3159 = vst [vmem:[#allocation2 + $0xbc] sm:$0x3] %v1950
  %3160 = vst [vmem:[#allocation2 + $0xbe] sm:$0x3] %v1952
  %3161 = vst [vmem:[#allocation2 + $0xc0] sm:$0x3] %v1960
  %3162 = vst [vmem:[#allocation2 + $0xc2] sm:$0x3] %v1968
  %3163 = vst [vmem:[#allocation2 + $0xc4] sm:$0x3] %v1967
  %3164 = vst [vmem:[#allocation2 + $0xc6] sm:$0x3] %v1969
  %3165 = vst [vmem:[#allocation2 + $0xc8] sm:$0x3] %v1977
  %3166 = vst [vmem:[#allocation2 + $0xca] sm:$0x3] %v1985
  %3167 = vst [vmem:[#allocation2 + $0xcc] sm:$0x3] %v1984
  %3168 = vst [vmem:[#allocation2 + $0xce] sm:$0x3] %v1986
  %3169 = vst [vmem:[#allocation2 + $0xd0] sm:$0x3] %v1994
  %3170 = vst [vmem:[#allocation2 + $0xd2] sm:$0x3] %v2002
  %3171 = vst [vmem:[#allocation2 + $0xd4] sm:$0x3] %v2001
  %3172 = vst [vmem:[#allocation2 + $0xd6] sm:$0x3] %v2003
  %3173 = vst [vmem:[#allocation2 + $0xd8] sm:$0x3] %v2011
  %3174 = vst [vmem:[#allocation2 + $0xda] sm:$0x3] %v2019
  %3175 = vst [vmem:[#allocation2 + $0xdc] sm:$0x3] %v2018
  %3176 = vst [vmem:[#allocation2 + $0xde] sm:$0x3] %v2020
  %3177 = vst [vmem:[#allocation2 + $0xe0] sm:$0x3] %v2028
  %3178 = vst [vmem:[#allocation2 + $0xe2] sm:$0x3] %v2036
  %3179 = vst [vmem:[#allocation2 + $0xe4] sm:$0x3] %v2035
  %3180 = vst [vmem:[#allocation2 + $0xe6] sm:$0x3] %v2037
  %3181 = vst [vmem:[#allocation2 + $0xe8] sm:$0x3] %v2045
  %3182 = vst [vmem:[#allocation2 + $0xea] sm:$0x3] %v2053
  %3183 = vst [vmem:[#allocation2 + $0xec] sm:$0x3] %v2052
  %3184 = vst [vmem:[#allocation2 + $0xee] sm:$0x3] %v2054
  %3185 = vst [vmem:[#allocation2 + $0xf0] sm:$0x3] %v2062
  %3186 = vst [vmem:[#allocation2 + $0xf2] sm:$0x3] %v2070
  %3187 = vst [vmem:[#allocation2 + $0xf4] sm:$0x3] %v2069
  %3188 = vst [vmem:[#allocation2 + $0xf6] sm:$0x3] %v2071
  %3189 = vst [vmem:[#allocation2 + $0xf8] sm:$0x3] %v2079
  %3190 = vst [vmem:[#allocation2 + $0xfa] sm:$0x3] %v2087
  %3191 = vst [vmem:[#allocation2 + $0xfc] sm:$0x3] %v2086
  %3192 = vst [vmem:[#allocation2 + $0xfe] sm:$0x3] %v2088
  %3193 = vst [vmem:[#allocation2 + $0x100] sm:$0x3] %v2096
  %3194 = vst [vmem:[#allocation2 + $0x102] sm:$0x3] %v2104
  %3195 = vst [vmem:[#allocation2 + $0x104] sm:$0x3] %v2103
  %3196 = vst [vmem:[#allocation2 + $0x106] sm:$0x3] %v2105
  %3197 = vst [vmem:[#allocation2 + $0x108] sm:$0x3] %v2113
  %3198 = vst [vmem:[#allocation2 + $0x10a] sm:$0x3] %v2121
  %3199 = vst [vmem:[#allocation2 + $0x10c] sm:$0x3] %v2120
  %3200 = vst [vmem:[#allocation2 + $0x10e] sm:$0x3] %v2122
  %3201 = vst [vmem:[#allocation2 + $0x110] sm:$0x3] %v2130
  %3202 = vst [vmem:[#allocation2 + $0x112] sm:$0x3] %v2138
  %3203 = vst [vmem:[#allocation2 + $0x114] sm:$0x3] %v2137
  %3204 = vst [vmem:[#allocation2 + $0x116] sm:$0x3] %v2139
  %3205 = vst [vmem:[#allocation2 + $0x118] sm:$0x3] %v2147
  %3206 = vst [vmem:[#allocation2 + $0x11a] sm:$0x3] %v2155
  %3207 = vst [vmem:[#allocation2 + $0x11c] sm:$0x3] %v2154
  %3208 = vst [vmem:[#allocation2 + $0x11e] sm:$0x3] %v2156
  %3209 = vst [vmem:[#allocation2 + $0x120] sm:$0x3] %v2164
  %3210 = vst [vmem:[#allocation2 + $0x122] sm:$0x3] %v2172
  %3211 = vst [vmem:[#allocation2 + $0x124] sm:$0x3] %v2171
  %3212 = vst [vmem:[#allocation2 + $0x126] sm:$0x3] %v2173
  %3213 = vst [vmem:[#allocation2 + $0x128] sm:$0x3] %v2181
  %3214 = vst [vmem:[#allocation2 + $0x12a] sm:$0x3] %v2189
  %3215 = vst [vmem:[#allocation2 + $0x12c] sm:$0x3] %v2188
  %3216 = vst [vmem:[#allocation2 + $0x12e] sm:$0x3] %v2190
  %3217 = vst [vmem:[#allocation2 + $0x130] sm:$0x3] %v2198
  %3218 = vst [vmem:[#allocation2 + $0x132] sm:$0x3] %v2206
  %3219 = vst [vmem:[#allocation2 + $0x134] sm:$0x3] %v2205
  %3220 = vst [vmem:[#allocation2 + $0x136] sm:$0x3] %v2207
  %3221 = vst [vmem:[#allocation2 + $0x138] sm:$0x3] %v2215
  %3222 = vst [vmem:[#allocation2 + $0x13a] sm:$0x3] %v2223
  %3223 = vst [vmem:[#allocation2 + $0x13c] sm:$0x3] %v2222
  %3224 = vst [vmem:[#allocation2 + $0x13e] sm:$0x3] %v2224
  %3225 = vst [vmem:[#allocation2 + $0x140] sm:$0x3] %v2232
  %3226 = vst [vmem:[#allocation2 + $0x142] sm:$0x3] %v2240
  %3227 = vst [vmem:[#allocation2 + $0x144] sm:$0x3] %v2239
  %3228 = vst [vmem:[#allocation2 + $0x146] sm:$0x3] %v2241
  %3229 = vst [vmem:[#allocation2 + $0x148] sm:$0x3] %v2249
  %3230 = vst [vmem:[#allocation2 + $0x14a] sm:$0x3] %v2257
  %3231 = vst [vmem:[#allocation2 + $0x14c] sm:$0x3] %v2256
  %3232 = vst [vmem:[#allocation2 + $0x14e] sm:$0x3] %v2258
  %3233 = vst [vmem:[#allocation2 + $0x150] sm:$0x3] %v2266
  %3234 = vst [vmem:[#allocation2 + $0x152] sm:$0x3] %v2274
  %3235 = vst [vmem:[#allocation2 + $0x154] sm:$0x3] %v2273
  %3236 = vst [vmem:[#allocation2 + $0x156] sm:$0x3] %v2275
  %3237 = vst [vmem:[#allocation2 + $0x158] sm:$0x3] %v2283
  %3238 = vst [vmem:[#allocation2 + $0x15a] sm:$0x3] %v2291
  %3239 = vst [vmem:[#allocation2 + $0x15c] sm:$0x3] %v2290
  %3240 = vst [vmem:[#allocation2 + $0x15e] sm:$0x3] %v2292
  %3241 = vst [vmem:[#allocation2 + $0x160] sm:$0x3] %v2300
  %3242 = vst [vmem:[#allocation2 + $0x162] sm:$0x3] %v2308
  %3243 = vst [vmem:[#allocation2 + $0x164] sm:$0x3] %v2307
  %3244 = vst [vmem:[#allocation2 + $0x166] sm:$0x3] %v2309
  %3245 = vst [vmem:[#allocation2 + $0x168] sm:$0x3] %v2317
  %3246 = vst [vmem:[#allocation2 + $0x16a] sm:$0x3] %v2325
  %3247 = vst [vmem:[#allocation2 + $0x16c] sm:$0x3] %v2324
  %3248 = vst [vmem:[#allocation2 + $0x16e] sm:$0x3] %v2326
  %3249 = vst [vmem:[#allocation2 + $0x170] sm:$0x3] %v2334
  %3250 = vst [vmem:[#allocation2 + $0x172] sm:$0x3] %v2342
  %3251 = vst [vmem:[#allocation2 + $0x174] sm:$0x3] %v2341
  %3252 = vst [vmem:[#allocation2 + $0x176] sm:$0x3] %v2343
  %3253 = vst [vmem:[#allocation2 + $0x178] sm:$0x3] %v2351
  %3254 = vst [vmem:[#allocation2 + $0x17a] sm:$0x3] %v2359
  %3255 = vst [vmem:[#allocation2 + $0x17c] sm:$0x3] %v2358
  %3256 = vst [vmem:[#allocation2 + $0x17e] sm:$0x3] %v2360
  %3257 = vst [vmem:[#allocation2 + $0x180] sm:$0x3] %v2368
  %3258 = vst [vmem:[#allocation2 + $0x182] sm:$0x3] %v2376
  %3259 = vst [vmem:[#allocation2 + $0x184] sm:$0x3] %v2375
  %3260 = vst [vmem:[#allocation2 + $0x186] sm:$0x3] %v2377
  %3261 = vst [vmem:[#allocation2 + $0x188] sm:$0x3] %v2385
  %3262 = vst [vmem:[#allocation2 + $0x18a] sm:$0x3] %v2393
  %3263 = vst [vmem:[#allocation2 + $0x18c] sm:$0x3] %v2392
  %3264 = vst [vmem:[#allocation2 + $0x18e] sm:$0x3] %v2394
  %3265 = vst [vmem:[#allocation2 + $0x190] sm:$0x3] %v2402
  %3266 = vst [vmem:[#allocation2 + $0x192] sm:$0x3] %v2410
  %3267 = vst [vmem:[#allocation2 + $0x194] sm:$0x3] %v2409
  %3268 = vst [vmem:[#allocation2 + $0x196] sm:$0x3] %v2411
  %3269 = vst [vmem:[#allocation2 + $0x198] sm:$0x3] %v2419
  %3270 = vst [vmem:[#allocation2 + $0x19a] sm:$0x3] %v2427
  %3271 = vst [vmem:[#allocation2 + $0x19c] sm:$0x3] %v2426
  %3272 = vst [vmem:[#allocation2 + $0x19e] sm:$0x3] %v2428
  %3273 = vst [vmem:[#allocation2 + $0x1a0] sm:$0x3] %v2436
  %3274 = vst [vmem:[#allocation2 + $0x1a2] sm:$0x3] %v2444
  %3275 = vst [vmem:[#allocation2 + $0x1a4] sm:$0x3] %v2443
  %3276 = vst [vmem:[#allocation2 + $0x1a6] sm:$0x3] %v2445
  %3277 = vst [vmem:[#allocation2 + $0x1a8] sm:$0x3] %v2453
  %3278 = vst [vmem:[#allocation2 + $0x1aa] sm:$0x3] %v2461
  %3279 = vst [vmem:[#allocation2 + $0x1ac] sm:$0x3] %v2460
  %3280 = vst [vmem:[#allocation2 + $0x1ae] sm:$0x3] %v2462
  %3281 = vst [vmem:[#allocation2 + $0x1b0] sm:$0x3] %v2470
  %3282 = vst [vmem:[#allocation2 + $0x1b2] sm:$0x3] %v2478
  %3283 = vst [vmem:[#allocation2 + $0x1b4] sm:$0x3] %v2477
  %3284 = vst [vmem:[#allocation2 + $0x1b6] sm:$0x3] %v2479
  %3285 = vst [vmem:[#allocation2 + $0x1b8] sm:$0x3] %v2487
  %3286 = vst [vmem:[#allocation2 + $0x1ba] sm:$0x3] %v2495
  %3287 = vst [vmem:[#allocation2 + $0x1bc] sm:$0x3] %v2494
  %3288 = vst [vmem:[#allocation2 + $0x1be] sm:$0x3] %v2496
  %3289 = vst [vmem:[#allocation2 + $0x1c0] sm:$0x3] %v2504
  %3290 = vst [vmem:[#allocation2 + $0x1c2] sm:$0x3] %v2512
  %3291 = vst [vmem:[#allocation2 + $0x1c4] sm:$0x3] %v2511
  %3292 = vst [vmem:[#allocation2 + $0x1c6] sm:$0x3] %v2513
  %3293 = vst [vmem:[#allocation2 + $0x1c8] sm:$0x3] %v2521
  %3294 = vst [vmem:[#allocation2 + $0x1ca] sm:$0x3] %v2529
  %3295 = vst [vmem:[#allocation2 + $0x1cc] sm:$0x3] %v2528
  %3296 = vst [vmem:[#allocation2 + $0x1ce] sm:$0x3] %v2530
  %3297 = vst [vmem:[#allocation2 + $0x1d0] sm:$0x3] %v2538
  %3298 = vst [vmem:[#allocation2 + $0x1d2] sm:$0x3] %v2546
  %3299 = vst [vmem:[#allocation2 + $0x1d4] sm:$0x3] %v2545
  %3300 = vst [vmem:[#allocation2 + $0x1d6] sm:$0x3] %v2547
  %3301 = vst [vmem:[#allocation2 + $0x1d8] sm:$0x3] %v2555
  %3302 = vst [vmem:[#allocation2 + $0x1da] sm:$0x3] %v2563
  %3303 = vst [vmem:[#allocation2 + $0x1dc] sm:$0x3] %v2562
  %3304 = vst [vmem:[#allocation2 + $0x1de] sm:$0x3] %v2564
  %3305 = vst [vmem:[#allocation2 + $0x1e0] sm:$0x3] %v2572
  %3306 = vst [vmem:[#allocation2 + $0x1e2] sm:$0x3] %v2580
  %3307 = vst [vmem:[#allocation2 + $0x1e4] sm:$0x3] %v2579
  %3308 = vst [vmem:[#allocation2 + $0x1e6] sm:$0x3] %v2581
  %3309 = vst [vmem:[#allocation2 + $0x1e8] sm:$0x3] %v2589
  %3310 = vst [vmem:[#allocation2 + $0x1ea] sm:$0x3] %v2597
  %3311 = vst [vmem:[#allocation2 + $0x1ec] sm:$0x3] %v2596
  %3312 = vst [vmem:[#allocation2 + $0x1ee] sm:$0x3] %v2598
  %3313 = vst [vmem:[#allocation2 + $0x1f0] sm:$0x3] %v2606
  %3314 = vst [vmem:[#allocation2 + $0x1f2] sm:$0x3] %v2614
  %3315 = vst [vmem:[#allocation2 + $0x1f4] sm:$0x3] %v2613
  %3316 = vst [vmem:[#allocation2 + $0x1f6] sm:$0x3] %v2615
  %3317 = vst [vmem:[#allocation2 + $0x1f8] sm:$0x3] %v2623
  %3318 = vst [vmem:[#allocation2 + $0x1fa] sm:$0x3] %v2631
  %3319 = vst [vmem:[#allocation2 + $0x1fc] sm:$0x3] %v2630
  %3320 = vst [vmem:[#allocation2 + $0x1fe] sm:$0x3] %v2632
  %3321 = vst [vmem:[#allocation2 + $0x200] sm:$0x3] %v2640
  %3322 = vst [vmem:[#allocation2 + $0x202] sm:$0x3] %v2648
  %3323 = vst [vmem:[#allocation2 + $0x204] sm:$0x3] %v2647
  %3324 = vst [vmem:[#allocation2 + $0x206] sm:$0x3] %v2649
  %3325 = vst [vmem:[#allocation2 + $0x208] sm:$0x3] %v2657
  %3326 = vst [vmem:[#allocation2 + $0x20a] sm:$0x3] %v2665
  %3327 = vst [vmem:[#allocation2 + $0x20c] sm:$0x3] %v2664
  %3328 = vst [vmem:[#allocation2 + $0x20e] sm:$0x3] %v2666
  %3329 = vst [vmem:[#allocation2 + $0x210] sm:$0x3] %v2674
  %3330 = vst [vmem:[#allocation2 + $0x212] sm:$0x3] %v2682
  %3331 = vst [vmem:[#allocation2 + $0x214] sm:$0x3] %v2681
  %3332 = vst [vmem:[#allocation2 + $0x216] sm:$0x3] %v2683
  %3333 = vst [vmem:[#allocation2 + $0x218] sm:$0x3] %v2691
  %3334 = vst [vmem:[#allocation2 + $0x21a] sm:$0x3] %v2699
  %3335 = vst [vmem:[#allocation2 + $0x21c] sm:$0x3] %v2698
  %3336 = vst [vmem:[#allocation2 + $0x21e] sm:$0x3] %v2700
  %3337 = vst [vmem:[#allocation2 + $0x220] sm:$0x3] %v2708
  %3338 = vst [vmem:[#allocation2 + $0x222] sm:$0x3] %v2716
  %3339 = vst [vmem:[#allocation2 + $0x224] sm:$0x3] %v2715
  %3340 = vst [vmem:[#allocation2 + $0x226] sm:$0x3] %v2717
  %3341 = vst [vmem:[#allocation2 + $0x228] sm:$0x3] %v2725
  %3342 = vst [vmem:[#allocation2 + $0x22a] sm:$0x3] %v2733
  %3343 = vst [vmem:[#allocation2 + $0x22c] sm:$0x3] %v2732
  %3344 = vst [vmem:[#allocation2 + $0x22e] sm:$0x3] %v2734
  %3345 = vst [vmem:[#allocation2 + $0x230] sm:$0x3] %v2742
  %3346 = vst [vmem:[#allocation2 + $0x232] sm:$0x3] %v2750
  %3347 = vst [vmem:[#allocation2 + $0x234] sm:$0x3] %v2749
  %3348 = vst [vmem:[#allocation2 + $0x236] sm:$0x3] %v2751
  %3349 = vst [vmem:[#allocation2 + $0x238] sm:$0x3] %v2759
  %3350 = vst [vmem:[#allocation2 + $0x23a] sm:$0x3] %v2767
  %3351 = vst [vmem:[#allocation2 + $0x23c] sm:$0x3] %v2766
  %3352 = vst [vmem:[#allocation2 + $0x23e] sm:$0x3] %v2768
  %3353 = vst [vmem:[#allocation2 + $0x240] sm:$0x3] %v2775
  %v3354 = vld [vmem:[#allocation2] sm:$0x3]
  %v3355 = vld [vmem:[#allocation2 + $0x4] sm:$0x3]
  %v3356 = vld [vmem:[#allocation2 + $0x8] sm:$0x3]
  %v3357 = vld [vmem:[#allocation2 + $0xc] sm:$0x3]
  %v3358 = vld [vmem:[#allocation2 + $0x10] sm:$0x3]
  %v3359 = vld [vmem:[#allocation2 + $0x14] sm:$0x3]
  %v3360 = vld [vmem:[#allocation2 + $0x18] sm:$0x3]
  %v3361 = vld [vmem:[#allocation2 + $0x1c] sm:$0x3]
  %v3362 = vld [vmem:[#allocation2 + $0x44] sm:$0x3]
  %v3363 = vld [vmem:[#allocation2 + $0x48] sm:$0x3]
  %v3364 = vld [vmem:[#allocation2 + $0x4c] sm:$0x3]
  %v3365 = vld [vmem:[#allocation2 + $0x50] sm:$0x3]
  %v3366 = vld [vmem:[#allocation2 + $0x54] sm:$0x3]
  %v3367 = vld [vmem:[#allocation2 + $0x58] sm:$0x3]
  %v3368 = vld [vmem:[#allocation2 + $0x5c] sm:$0x3]
  %v3369 = vld [vmem:[#allocation2 + $0x60] sm:$0x3]
  %v3370 = vld [vmem:[#allocation2 + $0x88] sm:$0x3]
  %v3371 = vld [vmem:[#allocation2 + $0x8c] sm:$0x3]
  %v3372 = vld [vmem:[#allocation2 + $0x90] sm:$0x3]
  %v3373 = vld [vmem:[#allocation2 + $0x94] sm:$0x3]
  %v3374 = vld [vmem:[#allocation2 + $0x98] sm:$0x3]
  %v3375 = vld [vmem:[#allocation2 + $0x9c] sm:$0x3]
  %v3376 = vld [vmem:[#allocation2 + $0xa0] sm:$0x3]
  %v3377 = vld [vmem:[#allocation2 + $0xa4] sm:$0x3]
  %v3378 = vld [vmem:[#allocation2 + $0xcc] sm:$0x3]
  %v3379 = vld [vmem:[#allocation2 + $0xd0] sm:$0x3]
  %v3380 = vld [vmem:[#allocation2 + $0xd4] sm:$0x3]
  %v3381 = vld [vmem:[#allocation2 + $0xd8] sm:$0x3]
  %v3382 = vld [vmem:[#allocation2 + $0xdc] sm:$0x3]
  %v3383 = vld [vmem:[#allocation2 + $0xe0] sm:$0x3]
  %v3384 = vld [vmem:[#allocation2 + $0xe4] sm:$0x3]
  %v3385 = vld [vmem:[#allocation2 + $0xe8] sm:$0x3]
  %v3386 = vld [vmem:[#allocation2 + $0x110] sm:$0x3]
  %v3387 = vld [vmem:[#allocation2 + $0x114] sm:$0x3]
  %v3388 = vld [vmem:[#allocation2 + $0x118] sm:$0x3]
  %v3389 = vld [vmem:[#allocation2 + $0x11c] sm:$0x3]
  %v3390 = vld [vmem:[#allocation2 + $0x120] sm:$0x3]
  %v3391 = vld [vmem:[#allocation2 + $0x124] sm:$0x3]
  %v3392 = vld [vmem:[#allocation2 + $0x128] sm:$0x3]
  %v3393 = vld [vmem:[#allocation2 + $0x12c] sm:$0x3]
  %v3394 = vld [vmem:[#allocation2 + $0x154] sm:$0x3]
  %v3395 = vld [vmem:[#allocation2 + $0x158] sm:$0x3]
  %v3396 = vld [vmem:[#allocation2 + $0x15c] sm:$0x3]
  %v3397 = vld [vmem:[#allocation2 + $0x160] sm:$0x3]
  %v3398 = vld [vmem:[#allocation2 + $0x164] sm:$0x3]
  %v3399 = vld [vmem:[#allocation2 + $0x168] sm:$0x3]
  %v3400 = vld [vmem:[#allocation2 + $0x16c] sm:$0x3]
  %v3401 = vld [vmem:[#allocation2 + $0x170] sm:$0x3]
  %v3402 = vld [vmem:[#allocation2 + $0x198] sm:$0x3]
  %v3403 = vld [vmem:[#allocation2 + $0x19c] sm:$0x3]
  %v3404 = vld [vmem:[#allocation2 + $0x1a0] sm:$0x3]
  %v3405 = vld [vmem:[#allocation2 + $0x1a4] sm:$0x3]
  %v3406 = vld [vmem:[#allocation2 + $0x1a8] sm:$0x3]
  %v3407 = vld [vmem:[#allocation2 + $0x1ac] sm:$0x3]
  %v3408 = vld [vmem:[#allocation2 + $0x1b0] sm:$0x3]
  %v3409 = vld [vmem:[#allocation2 + $0x1b4] sm:$0x3]
  %v3410 = vld [vmem:[#allocation2 + $0x1dc] sm:$0x3]
  %v3411 = vld [vmem:[#allocation2 + $0x1e0] sm:$0x3]
  %v3412 = vld [vmem:[#allocation2 + $0x1e4] sm:$0x3]
  %v3413 = vld [vmem:[#allocation2 + $0x1e8] sm:$0x3]
  %v3414 = vld [vmem:[#allocation2 + $0x1ec] sm:$0x3]
  %v3415 = vld [vmem:[#allocation2 + $0x1f0] sm:$0x3]
  %v3416 = vld [vmem:[#allocation2 + $0x1f4] sm:$0x3]
  %v3417 = vld [vmem:[#allocation2 + $0x1f8] sm:$0x3]
  %v3482 = vcombine.low %v3354, %v3355
  %v3483 = vcombine.low %v3356, %v3357
  %v3485 = vunpack.c.l.s4 1983009808
  %v3486 = vunpack.c.0.s8 %v3485
  %v3487 = vlaneseq
  %v3488 = vshrl.u32 %v3487, 7
  %v3489 = vsub.s32 %v3486, %v3488
  %v3490 = vrot.slane %v3482, %v3489
  %v3492 = vunpack.c.l.s4 1983009808
  %v3493 = vunpack.c.0.s8 %v3492
  %v3494 = vlaneseq
  %v3495 = vshrl.u32 %v3494, 7
  %v3496 = vsub.s32 %v3493, %v3495
  %v3497 = vrot.slane %v3483, %v3496
  %v3498 = vcombine.low %v3490, %v3497
  %v3499 = vcombine.low %v3358, %v3359
  %v3500 = vcombine.low %v3360, %v3361
  %v3502 = vunpack.c.l.s4 1983009808
  %v3503 = vunpack.c.0.s8 %v3502
  %v3504 = vlaneseq
  %v3505 = vshrl.u32 %v3504, 7
  %v3506 = vsub.s32 %v3503, %v3505
  %v3507 = vrot.slane %v3499, %v3506
  %v3509 = vunpack.c.l.s4 1983009808
  %v3510 = vunpack.c.0.s8 %v3509
  %v3511 = vlaneseq
  %v3512 = vshrl.u32 %v3511, 7
  %v3513 = vsub.s32 %v3510, %v3512
  %v3514 = vrot.slane %v3500, %v3513
  %v3515 = vcombine.low %v3507, %v3514
  %v3516 = vcombine.low %v3362, %v3363
  %v3517 = vcombine.low %v3364, %v3365
  %v3519 = vunpack.c.l.s4 1983009808
  %v3520 = vunpack.c.0.s8 %v3519
  %v3521 = vlaneseq
  %v3522 = vshrl.u32 %v3521, 7
  %v3523 = vsub.s32 %v3520, %v3522
  %v3524 = vrot.slane %v3516, %v3523
  %v3526 = vunpack.c.l.s4 1983009808
  %v3527 = vunpack.c.0.s8 %v3526
  %v3528 = vlaneseq
  %v3529 = vshrl.u32 %v3528, 7
  %v3530 = vsub.s32 %v3527, %v3529
  %v3531 = vrot.slane %v3517, %v3530
  %v3532 = vcombine.low %v3524, %v3531
  %v3533 = vcombine.low %v3366, %v3367
  %v3534 = vcombine.low %v3368, %v3369
  %v3536 = vunpack.c.l.s4 1983009808
  %v3537 = vunpack.c.0.s8 %v3536
  %v3538 = vlaneseq
  %v3539 = vshrl.u32 %v3538, 7
  %v3540 = vsub.s32 %v3537, %v3539
  %v3541 = vrot.slane %v3533, %v3540
  %v3543 = vunpack.c.l.s4 1983009808
  %v3544 = vunpack.c.0.s8 %v3543
  %v3545 = vlaneseq
  %v3546 = vshrl.u32 %v3545, 7
  %v3547 = vsub.s32 %v3544, %v3546
  %v3548 = vrot.slane %v3534, %v3547
  %v3549 = vcombine.low %v3541, %v3548
  %v3550 = vcombine.low %v3370, %v3371
  %v3551 = vcombine.low %v3372, %v3373
  %v3553 = vunpack.c.l.s4 1983009808
  %v3554 = vunpack.c.0.s8 %v3553
  %v3555 = vlaneseq
  %v3556 = vshrl.u32 %v3555, 7
  %v3557 = vsub.s32 %v3554, %v3556
  %v3558 = vrot.slane %v3550, %v3557
  %v3560 = vunpack.c.l.s4 1983009808
  %v3561 = vunpack.c.0.s8 %v3560
  %v3562 = vlaneseq
  %v3563 = vshrl.u32 %v3562, 7
  %v3564 = vsub.s32 %v3561, %v3563
  %v3565 = vrot.slane %v3551, %v3564
  %v3566 = vcombine.low %v3558, %v3565
  %v3567 = vcombine.low %v3374, %v3375
  %v3568 = vcombine.low %v3376, %v3377
  %v3570 = vunpack.c.l.s4 1983009808
  %v3571 = vunpack.c.0.s8 %v3570
  %v3572 = vlaneseq
  %v3573 = vshrl.u32 %v3572, 7
  %v3574 = vsub.s32 %v3571, %v3573
  %v3575 = vrot.slane %v3567, %v3574
  %v3577 = vunpack.c.l.s4 1983009808
  %v3578 = vunpack.c.0.s8 %v3577
  %v3579 = vlaneseq
  %v3580 = vshrl.u32 %v3579, 7
  %v3581 = vsub.s32 %v3578, %v3580
  %v3582 = vrot.slane %v3568, %v3581
  %v3583 = vcombine.low %v3575, %v3582
  %v3584 = vcombine.low %v3378, %v3379
  %v3585 = vcombine.low %v3380, %v3381
  %v3587 = vunpack.c.l.s4 1983009808
  %v3588 = vunpack.c.0.s8 %v3587
  %v3589 = vlaneseq
  %v3590 = vshrl.u32 %v3589, 7
  %v3591 = vsub.s32 %v3588, %v3590
  %v3592 = vrot.slane %v3584, %v3591
  %v3594 = vunpack.c.l.s4 1983009808
  %v3595 = vunpack.c.0.s8 %v3594
  %v3596 = vlaneseq
  %v3597 = vshrl.u32 %v3596, 7
  %v3598 = vsub.s32 %v3595, %v3597
  %v3599 = vrot.slane %v3585, %v3598
  %v3600 = vcombine.low %v3592, %v3599
  %v3601 = vcombine.low %v3382, %v3383
  %v3602 = vcombine.low %v3384, %v3385
  %v3604 = vunpack.c.l.s4 1983009808
  %v3605 = vunpack.c.0.s8 %v3604
  %v3606 = vlaneseq
  %v3607 = vshrl.u32 %v3606, 7
  %v3608 = vsub.s32 %v3605, %v3607
  %v3609 = vrot.slane %v3601, %v3608
  %v3611 = vunpack.c.l.s4 1983009808
  %v3612 = vunpack.c.0.s8 %v3611
  %v3613 = vlaneseq
  %v3614 = vshrl.u32 %v3613, 7
  %v3615 = vsub.s32 %v3612, %v3614
  %v3616 = vrot.slane %v3602, %v3615
  %v3617 = vcombine.low %v3609, %v3616
  %v3618 = vcombine.low %v3386, %v3387
  %v3619 = vcombine.low %v3388, %v3389
  %v3621 = vunpack.c.l.s4 1983009808
  %v3622 = vunpack.c.0.s8 %v3621
  %v3623 = vlaneseq
  %v3624 = vshrl.u32 %v3623, 7
  %v3625 = vsub.s32 %v3622, %v3624
  %v3626 = vrot.slane %v3618, %v3625
  %v3628 = vunpack.c.l.s4 1983009808
  %v3629 = vunpack.c.0.s8 %v3628
  %v3630 = vlaneseq
  %v3631 = vshrl.u32 %v3630, 7
  %v3632 = vsub.s32 %v3629, %v3631
  %v3633 = vrot.slane %v3619, %v3632
  %v3634 = vcombine.low %v3626, %v3633
  %v3635 = vcombine.low %v3390, %v3391
  %v3636 = vcombine.low %v3392, %v3393
  %v3638 = vunpack.c.l.s4 1983009808
  %v3639 = vunpack.c.0.s8 %v3638
  %v3640 = vlaneseq
  %v3641 = vshrl.u32 %v3640, 7
  %v3642 = vsub.s32 %v3639, %v3641
  %v3643 = vrot.slane %v3635, %v3642
  %v3645 = vunpack.c.l.s4 1983009808
  %v3646 = vunpack.c.0.s8 %v3645
  %v3647 = vlaneseq
  %v3648 = vshrl.u32 %v3647, 7
  %v3649 = vsub.s32 %v3646, %v3648
  %v3650 = vrot.slane %v3636, %v3649
  %v3651 = vcombine.low %v3643, %v3650
  %v3652 = vcombine.low %v3394, %v3395
  %v3653 = vcombine.low %v3396, %v3397
  %v3655 = vunpack.c.l.s4 1983009808
  %v3656 = vunpack.c.0.s8 %v3655
  %v3657 = vlaneseq
  %v3658 = vshrl.u32 %v3657, 7
  %v3659 = vsub.s32 %v3656, %v3658
  %v3660 = vrot.slane %v3652, %v3659
  %v3662 = vunpack.c.l.s4 1983009808
  %v3663 = vunpack.c.0.s8 %v3662
  %v3664 = vlaneseq
  %v3665 = vshrl.u32 %v3664, 7
  %v3666 = vsub.s32 %v3663, %v3665
  %v3667 = vrot.slane %v3653, %v3666
  %v3668 = vcombine.low %v3660, %v3667
  %v3669 = vcombine.low %v3398, %v3399
  %v3670 = vcombine.low %v3400, %v3401
  %v3672 = vunpack.c.l.s4 1983009808
  %v3673 = vunpack.c.0.s8 %v3672
  %v3674 = vlaneseq
  %v3675 = vshrl.u32 %v3674, 7
  %v3676 = vsub.s32 %v3673, %v3675
  %v3677 = vrot.slane %v3669, %v3676
  %v3679 = vunpack.c.l.s4 1983009808
  %v3680 = vunpack.c.0.s8 %v3679
  %v3681 = vlaneseq
  %v3682 = vshrl.u32 %v3681, 7
  %v3683 = vsub.s32 %v3680, %v3682
  %v3684 = vrot.slane %v3670, %v3683
  %v3685 = vcombine.low %v3677, %v3684
  %v3686 = vcombine.low %v3402, %v3403
  %v3687 = vcombine.low %v3404, %v3405
  %v3689 = vunpack.c.l.s4 1983009808
  %v3690 = vunpack.c.0.s8 %v3689
  %v3691 = vlaneseq
  %v3692 = vshrl.u32 %v3691, 7
  %v3693 = vsub.s32 %v3690, %v3692
  %v3694 = vrot.slane %v3686, %v3693
  %v3696 = vunpack.c.l.s4 1983009808
  %v3697 = vunpack.c.0.s8 %v3696
  %v3698 = vlaneseq
  %v3699 = vshrl.u32 %v3698, 7
  %v3700 = vsub.s32 %v3697, %v3699
  %v3701 = vrot.slane %v3687, %v3700
  %v3702 = vcombine.low %v3694, %v3701
  %v3703 = vcombine.low %v3406, %v3407
  %v3704 = vcombine.low %v3408, %v3409
  %v3706 = vunpack.c.l.s4 1983009808
  %v3707 = vunpack.c.0.s8 %v3706
  %v3708 = vlaneseq
  %v3709 = vshrl.u32 %v3708, 7
  %v3710 = vsub.s32 %v3707, %v3709
  %v3711 = vrot.slane %v3703, %v3710
  %v3713 = vunpack.c.l.s4 1983009808
  %v3714 = vunpack.c.0.s8 %v3713
  %v3715 = vlaneseq
  %v3716 = vshrl.u32 %v3715, 7
  %v3717 = vsub.s32 %v3714, %v3716
  %v3718 = vrot.slane %v3704, %v3717
  %v3719 = vcombine.low %v3711, %v3718
  %v3720 = vcombine.low %v3410, %v3411
  %v3721 = vcombine.low %v3412, %v3413
  %v3723 = vunpack.c.l.s4 1983009808
  %v3724 = vunpack.c.0.s8 %v3723
  %v3725 = vlaneseq
  %v3726 = vshrl.u32 %v3725, 7
  %v3727 = vsub.s32 %v3724, %v3726
  %v3728 = vrot.slane %v3720, %v3727
  %v3730 = vunpack.c.l.s4 1983009808
  %v3731 = vunpack.c.0.s8 %v3730
  %v3732 = vlaneseq
  %v3733 = vshrl.u32 %v3732, 7
  %v3734 = vsub.s32 %v3731, %v3733
  %v3735 = vrot.slane %v3721, %v3734
  %v3736 = vcombine.low %v3728, %v3735
  %v3737 = vcombine.low %v3414, %v3415
  %v3738 = vcombine.low %v3416, %v3417
  %v3740 = vunpack.c.l.s4 1983009808
  %v3741 = vunpack.c.0.s8 %v3740
  %v3742 = vlaneseq
  %v3743 = vshrl.u32 %v3742, 7
  %v3744 = vsub.s32 %v3741, %v3743
  %v3745 = vrot.slane %v3737, %v3744
  %v3747 = vunpack.c.l.s4 1983009808
  %v3748 = vunpack.c.0.s8 %v3747
  %v3749 = vlaneseq
  %v3750 = vshrl.u32 %v3749, 7
  %v3751 = vsub.s32 %v3748, %v3750
  %v3752 = vrot.slane %v3738, %v3751
  %v3753 = vcombine.low %v3745, %v3752
  %v3770 = vpack.c.bf16 %v3515, %v3498
  %v3771 = vpack.c.bf16 %v3549, %v3532
  %v3772 = vpack.c.bf16 %v3583, %v3566
  %v3773 = vpack.c.bf16 %v3617, %v3600
  %v3774 = vpack.c.bf16 %v3651, %v3634
  %v3775 = vpack.c.bf16 %v3685, %v3668
  %v3776 = vpack.c.bf16 %v3719, %v3702
  %v3777 = vpack.c.bf16 %v3753, %v3736
  %v3778 = vld [vmem:[%s2] sm:$0xf]
  %v3779 = vld [vmem:[%s2 + $0x4] sm:$0xf]
  %v3780 = vld [vmem:[%s2 + $0x8] sm:$0xf]
  %v3781 = vld [vmem:[%s2 + $0xc] sm:$0xf]
  %v3782 = vld [vmem:[%s2 + $0x10] sm:$0xf]
  %v3783 = vld [vmem:[%s2 + $0x14] sm:$0xf]
  %v3784 = vld [vmem:[%s2 + $0x18] sm:$0xf]
  %v3785 = vld [vmem:[%s2 + $0x1c] sm:$0xf]
  %v3786 = vld [vmem:[%s2 + $0x20] sm:$0xf]
  %v3787 = vld [vmem:[%s2 + $0x24] sm:$0xf]
  %v3788 = vld [vmem:[%s2 + $0x28] sm:$0xf]
  %v3789 = vld [vmem:[%s2 + $0x2c] sm:$0xf]
  %v3790 = vld [vmem:[%s2 + $0x30] sm:$0xf]
  %v3791 = vld [vmem:[%s2 + $0x34] sm:$0xf]
  %v3792 = vld [vmem:[%s2 + $0x38] sm:$0xf]
  %v3793 = vld [vmem:[%s2 + $0x3c] sm:$0xf]
  %s3794 = scalar_lea.vmem [#allocation2], 2
  %v3795 = vld [vmem:[%s3794] sm:$0x3]
  %v3796 = vld [vmem:[%s3794 + $0x4] sm:$0x3]
  %v3797 = vld [vmem:[%s3794 + $0x8] sm:$0x3]
  %v3798 = vld [vmem:[%s3794 + $0xc] sm:$0x3]
  %v3799 = vld [vmem:[%s3794 + $0x10] sm:$0x3]
  %v3800 = vld [vmem:[%s3794 + $0x14] sm:$0x3]
  %v3801 = vld [vmem:[%s3794 + $0x18] sm:$0x3]
  %v3802 = vld [vmem:[%s3794 + $0x1c] sm:$0x3]
  %v3803 = vld [vmem:[%s3794 + $0x44] sm:$0x3]
  %v3804 = vld [vmem:[%s3794 + $0x48] sm:$0x3]
  %v3805 = vld [vmem:[%s3794 + $0x4c] sm:$0x3]
  %v3806 = vld [vmem:[%s3794 + $0x50] sm:$0x3]
  %v3807 = vld [vmem:[%s3794 + $0x54] sm:$0x3]
  %v3808 = vld [vmem:[%s3794 + $0x58] sm:$0x3]
  %v3809 = vld [vmem:[%s3794 + $0x5c] sm:$0x3]
  %v3810 = vld [vmem:[%s3794 + $0x60] sm:$0x3]
  %v3811 = vld [vmem:[%s3794 + $0x88] sm:$0x3]
  %v3812 = vld [vmem:[%s3794 + $0x8c] sm:$0x3]
  %v3813 = vld [vmem:[%s3794 + $0x90] sm:$0x3]
  %v3814 = vld [vmem:[%s3794 + $0x94] sm:$0x3]
  %v3815 = vld [vmem:[%s3794 + $0x98] sm:$0x3]
  %v3816 = vld [vmem:[%s3794 + $0x9c] sm:$0x3]
  %v3817 = vld [vmem:[%s3794 + $0xa0] sm:$0x3]
  %v3818 = vld [vmem:[%s3794 + $0xa4] sm:$0x3]
  %v3819 = vld [vmem:[%s3794 + $0xcc] sm:$0x3]
  %v3820 = vld [vmem:[%s3794 + $0xd0] sm:$0x3]
  %v3821 = vld [vmem:[%s3794 + $0xd4] sm:$0x3]
  %v3822 = vld [vmem:[%s3794 + $0xd8] sm:$0x3]
  %v3823 = vld [vmem:[%s3794 + $0xdc] sm:$0x3]
  %v3824 = vld [vmem:[%s3794 + $0xe0] sm:$0x3]
  %v3825 = vld [vmem:[%s3794 + $0xe4] sm:$0x3]
  %v3826 = vld [vmem:[%s3794 + $0xe8] sm:$0x3]
  %v3827 = vld [vmem:[%s3794 + $0x110] sm:$0x3]
  %v3828 = vld [vmem:[%s3794 + $0x114] sm:$0x3]
  %v3829 = vld [vmem:[%s3794 + $0x118] sm:$0x3]
  %v3830 = vld [vmem:[%s3794 + $0x11c] sm:$0x3]
  %v3831 = vld [vmem:[%s3794 + $0x120] sm:$0x3]
  %v3832 = vld [vmem:[%s3794 + $0x124] sm:$0x3]
  %v3833 = vld [vmem:[%s3794 + $0x128] sm:$0x3]
  %v3834 = vld [vmem:[%s3794 + $0x12c] sm:$0x3]
  %v3835 = vld [vmem:[%s3794 + $0x154] sm:$0x3]
  %v3836 = vld [vmem:[%s3794 + $0x158] sm:$0x3]
  %v3837 = vld [vmem:[%s3794 + $0x15c] sm:$0x3]
  %v3838 = vld [vmem:[%s3794 + $0x160] sm:$0x3]
  %v3839 = vld [vmem:[%s3794 + $0x164] sm:$0x3]
  %v3840 = vld [vmem:[%s3794 + $0x168] sm:$0x3]
  %v3841 = vld [vmem:[%s3794 + $0x16c] sm:$0x3]
  %v3842 = vld [vmem:[%s3794 + $0x170] sm:$0x3]
  %v3843 = vld [vmem:[%s3794 + $0x198] sm:$0x3]
  %v3844 = vld [vmem:[%s3794 + $0x19c] sm:$0x3]
  %v3845 = vld [vmem:[%s3794 + $0x1a0] sm:$0x3]
  %v3846 = vld [vmem:[%s3794 + $0x1a4] sm:$0x3]
  %v3847 = vld [vmem:[%s3794 + $0x1a8] sm:$0x3]
  %v3848 = vld [vmem:[%s3794 + $0x1ac] sm:$0x3]
  %v3849 = vld [vmem:[%s3794 + $0x1b0] sm:$0x3]
  %v3850 = vld [vmem:[%s3794 + $0x1b4] sm:$0x3]
  %v3851 = vld [vmem:[%s3794 + $0x1dc] sm:$0x3]
  %v3852 = vld [vmem:[%s3794 + $0x1e0] sm:$0x3]
  %v3853 = vld [vmem:[%s3794 + $0x1e4] sm:$0x3]
  %v3854 = vld [vmem:[%s3794 + $0x1e8] sm:$0x3]
  %v3855 = vld [vmem:[%s3794 + $0x1ec] sm:$0x3]
  %v3856 = vld [vmem:[%s3794 + $0x1f0] sm:$0x3]
  %v3857 = vld [vmem:[%s3794 + $0x1f4] sm:$0x3]
  %v3858 = vld [vmem:[%s3794 + $0x1f8] sm:$0x3]
  %v3923 = vcombine.low %v3795, %v3796
  %v3924 = vcombine.low %v3797, %v3798
  %v3926 = vunpack.c.l.s4 1983009808
  %v3927 = vunpack.c.0.s8 %v3926
  %v3928 = vlaneseq
  %v3929 = vshrl.u32 %v3928, 7
  %v3930 = vsub.s32 %v3927, %v3929
  %v3931 = vrot.slane %v3923, %v3930
  %v3933 = vunpack.c.l.s4 1983009808
  %v3934 = vunpack.c.0.s8 %v3933
  %v3935 = vlaneseq
  %v3936 = vshrl.u32 %v3935, 7
  %v3937 = vsub.s32 %v3934, %v3936
  %v3938 = vrot.slane %v3924, %v3937
  %v3939 = vcombine.low %v3931, %v3938
  %v3940 = vcombine.low %v3799, %v3800
  %v3941 = vcombine.low %v3801, %v3802
  %v3943 = vunpack.c.l.s4 1983009808
  %v3944 = vunpack.c.0.s8 %v3943
  %v3945 = vlaneseq
  %v3946 = vshrl.u32 %v3945, 7
  %v3947 = vsub.s32 %v3944, %v3946
  %v3948 = vrot.slane %v3940, %v3947
  %v3950 = vunpack.c.l.s4 1983009808
  %v3951 = vunpack.c.0.s8 %v3950
  %v3952 = vlaneseq
  %v3953 = vshrl.u32 %v3952, 7
  %v3954 = vsub.s32 %v3951, %v3953
  %v3955 = vrot.slane %v3941, %v3954
  %v3956 = vcombine.low %v3948, %v3955
  %v3957 = vcombine.low %v3803, %v3804
  %v3958 = vcombine.low %v3805, %v3806
  %v3960 = vunpack.c.l.s4 1983009808
  %v3961 = vunpack.c.0.s8 %v3960
  %v3962 = vlaneseq
  %v3963 = vshrl.u32 %v3962, 7
  %v3964 = vsub.s32 %v3961, %v3963
  %v3965 = vrot.slane %v3957, %v3964
  %v3967 = vunpack.c.l.s4 1983009808
  %v3968 = vunpack.c.0.s8 %v3967
  %v3969 = vlaneseq
  %v3970 = vshrl.u32 %v3969, 7
  %v3971 = vsub.s32 %v3968, %v3970
  %v3972 = vrot.slane %v3958, %v3971
  %v3973 = vcombine.low %v3965, %v3972
  %v3974 = vcombine.low %v3807, %v3808
  %v3975 = vcombine.low %v3809, %v3810
  %v3977 = vunpack.c.l.s4 1983009808
  %v3978 = vunpack.c.0.s8 %v3977
  %v3979 = vlaneseq
  %v3980 = vshrl.u32 %v3979, 7
  %v3981 = vsub.s32 %v3978, %v3980
  %v3982 = vrot.slane %v3974, %v3981
  %v3984 = vunpack.c.l.s4 1983009808
  %v3985 = vunpack.c.0.s8 %v3984
  %v3986 = vlaneseq
  %v3987 = vshrl.u32 %v3986, 7
  %v3988 = vsub.s32 %v3985, %v3987
  %v3989 = vrot.slane %v3975, %v3988
  %v3990 = vcombine.low %v3982, %v3989
  %v3991 = vcombine.low %v3811, %v3812
  %v3992 = vcombine.low %v3813, %v3814
  %v3994 = vunpack.c.l.s4 1983009808
  %v3995 = vunpack.c.0.s8 %v3994
  %v3996 = vlaneseq
  %v3997 = vshrl.u32 %v3996, 7
  %v3998 = vsub.s32 %v3995, %v3997
  %v3999 = vrot.slane %v3991, %v3998
  %v4001 = vunpack.c.l.s4 1983009808
  %v4002 = vunpack.c.0.s8 %v4001
  %v4003 = vlaneseq
  %v4004 = vshrl.u32 %v4003, 7
  %v4005 = vsub.s32 %v4002, %v4004
  %v4006 = vrot.slane %v3992, %v4005
  %v4007 = vcombine.low %v3999, %v4006
  %v4008 = vcombine.low %v3815, %v3816
  %v4009 = vcombine.low %v3817, %v3818
  %v4011 = vunpack.c.l.s4 1983009808
  %v4012 = vunpack.c.0.s8 %v4011
  %v4013 = vlaneseq
  %v4014 = vshrl.u32 %v4013, 7
  %v4015 = vsub.s32 %v4012, %v4014
  %v4016 = vrot.slane %v4008, %v4015
  %v4018 = vunpack.c.l.s4 1983009808
  %v4019 = vunpack.c.0.s8 %v4018
  %v4020 = vlaneseq
  %v4021 = vshrl.u32 %v4020, 7
  %v4022 = vsub.s32 %v4019, %v4021
  %v4023 = vrot.slane %v4009, %v4022
  %v4024 = vcombine.low %v4016, %v4023
  %v4025 = vcombine.low %v3819, %v3820
  %v4026 = vcombine.low %v3821, %v3822
  %v4028 = vunpack.c.l.s4 1983009808
  %v4029 = vunpack.c.0.s8 %v4028
  %v4030 = vlaneseq
  %v4031 = vshrl.u32 %v4030, 7
  %v4032 = vsub.s32 %v4029, %v4031
  %v4033 = vrot.slane %v4025, %v4032
  %v4035 = vunpack.c.l.s4 1983009808
  %v4036 = vunpack.c.0.s8 %v4035
  %v4037 = vlaneseq
  %v4038 = vshrl.u32 %v4037, 7
  %v4039 = vsub.s32 %v4036, %v4038
  %v4040 = vrot.slane %v4026, %v4039
  %v4041 = vcombine.low %v4033, %v4040
  %v4042 = vcombine.low %v3823, %v3824
  %v4043 = vcombine.low %v3825, %v3826
  %v4045 = vunpack.c.l.s4 1983009808
  %v4046 = vunpack.c.0.s8 %v4045
  %v4047 = vlaneseq
  %v4048 = vshrl.u32 %v4047, 7
  %v4049 = vsub.s32 %v4046, %v4048
  %v4050 = vrot.slane %v4042, %v4049
  %v4052 = vunpack.c.l.s4 1983009808
  %v4053 = vunpack.c.0.s8 %v4052
  %v4054 = vlaneseq
  %v4055 = vshrl.u32 %v4054, 7
  %v4056 = vsub.s32 %v4053, %v4055
  %v4057 = vrot.slane %v4043, %v4056
  %v4058 = vcombine.low %v4050, %v4057
  %v4059 = vcombine.low %v3827, %v3828
  %v4060 = vcombine.low %v3829, %v3830
  %v4062 = vunpack.c.l.s4 1983009808
  %v4063 = vunpack.c.0.s8 %v4062
  %v4064 = vlaneseq
  %v4065 = vshrl.u32 %v4064, 7
  %v4066 = vsub.s32 %v4063, %v4065
  %v4067 = vrot.slane %v4059, %v4066
  %v4069 = vunpack.c.l.s4 1983009808
  %v4070 = vunpack.c.0.s8 %v4069
  %v4071 = vlaneseq
  %v4072 = vshrl.u32 %v4071, 7
  %v4073 = vsub.s32 %v4070, %v4072
  %v4074 = vrot.slane %v4060, %v4073
  %v4075 = vcombine.low %v4067, %v4074
  %v4076 = vcombine.low %v3831, %v3832
  %v4077 = vcombine.low %v3833, %v3834
  %v4079 = vunpack.c.l.s4 1983009808
  %v4080 = vunpack.c.0.s8 %v4079
  %v4081 = vlaneseq
  %v4082 = vshrl.u32 %v4081, 7
  %v4083 = vsub.s32 %v4080, %v4082
  %v4084 = vrot.slane %v4076, %v4083
  %v4086 = vunpack.c.l.s4 1983009808
  %v4087 = vunpack.c.0.s8 %v4086
  %v4088 = vlaneseq
  %v4089 = vshrl.u32 %v4088, 7
  %v4090 = vsub.s32 %v4087, %v4089
  %v4091 = vrot.slane %v4077, %v4090
  %v4092 = vcombine.low %v4084, %v4091
  %v4093 = vcombine.low %v3835, %v3836
  %v4094 = vcombine.low %v3837, %v3838
  %v4096 = vunpack.c.l.s4 1983009808
  %v4097 = vunpack.c.0.s8 %v4096
  %v4098 = vlaneseq
  %v4099 = vshrl.u32 %v4098, 7
  %v4100 = vsub.s32 %v4097, %v4099
  %v4101 = vrot.slane %v4093, %v4100
  %v4103 = vunpack.c.l.s4 1983009808
  %v4104 = vunpack.c.0.s8 %v4103
  %v4105 = vlaneseq
  %v4106 = vshrl.u32 %v4105, 7
  %v4107 = vsub.s32 %v4104, %v4106
  %v4108 = vrot.slane %v4094, %v4107
  %v4109 = vcombine.low %v4101, %v4108
  %v4110 = vcombine.low %v3839, %v3840
  %v4111 = vcombine.low %v3841, %v3842
  %v4113 = vunpack.c.l.s4 1983009808
  %v4114 = vunpack.c.0.s8 %v4113
  %v4115 = vlaneseq
  %v4116 = vshrl.u32 %v4115, 7
  %v4117 = vsub.s32 %v4114, %v4116
  %v4118 = vrot.slane %v4110, %v4117
  %v4120 = vunpack.c.l.s4 1983009808
  %v4121 = vunpack.c.0.s8 %v4120
  %v4122 = vlaneseq
  %v4123 = vshrl.u32 %v4122, 7
  %v4124 = vsub.s32 %v4121, %v4123
  %v4125 = vrot.slane %v4111, %v4124
  %v4126 = vcombine.low %v4118, %v4125
  %v4127 = vcombine.low %v3843, %v3844
  %v4128 = vcombine.low %v3845, %v3846
  %v4130 = vunpack.c.l.s4 1983009808
  %v4131 = vunpack.c.0.s8 %v4130
  %v4132 = vlaneseq
  %v4133 = vshrl.u32 %v4132, 7
  %v4134 = vsub.s32 %v4131, %v4133
  %v4135 = vrot.slane %v4127, %v4134
  %v4137 = vunpack.c.l.s4 1983009808
  %v4138 = vunpack.c.0.s8 %v4137
  %v4139 = vlaneseq
  %v4140 = vshrl.u32 %v4139, 7
  %v4141 = vsub.s32 %v4138, %v4140
  %v4142 = vrot.slane %v4128, %v4141
  %v4143 = vcombine.low %v4135, %v4142
  %v4144 = vcombine.low %v3847, %v3848
  %v4145 = vcombine.low %v3849, %v3850
  %v4147 = vunpack.c.l.s4 1983009808
  %v4148 = vunpack.c.0.s8 %v4147
  %v4149 = vlaneseq
  %v4150 = vshrl.u32 %v4149, 7
  %v4151 = vsub.s32 %v4148, %v4150
  %v4152 = vrot.slane %v4144, %v4151
  %v4154 = vunpack.c.l.s4 1983009808
  %v4155 = vunpack.c.0.s8 %v4154
  %v4156 = vlaneseq
  %v4157 = vshrl.u32 %v4156, 7
  %v4158 = vsub.s32 %v4155, %v4157
  %v4159 = vrot.slane %v4145, %v4158
  %v4160 = vcombine.low %v4152, %v4159
  %v4161 = vcombine.low %v3851, %v3852
  %v4162 = vcombine.low %v3853, %v3854
  %v4164 = vunpack.c.l.s4 1983009808
  %v4165 = vunpack.c.0.s8 %v4164
  %v4166 = vlaneseq
  %v4167 = vshrl.u32 %v4166, 7
  %v4168 = vsub.s32 %v4165, %v4167
  %v4169 = vrot.slane %v4161, %v4168
  %v4171 = vunpack.c.l.s4 1983009808
  %v4172 = vunpack.c.0.s8 %v4171
  %v4173 = vlaneseq
  %v4174 = vshrl.u32 %v4173, 7
  %v4175 = vsub.s32 %v4172, %v4174
  %v4176 = vrot.slane %v4162, %v4175
  %v4177 = vcombine.low %v4169, %v4176
  %v4178 = vcombine.low %v3855, %v3856
  %v4179 = vcombine.low %v3857, %v3858
  %v4181 = vunpack.c.l.s4 1983009808
  %v4182 = vunpack.c.0.s8 %v4181
  %v4183 = vlaneseq
  %v4184 = vshrl.u32 %v4183, 7
  %v4185 = vsub.s32 %v4182, %v4184
  %v4186 = vrot.slane %v4178, %v4185
  %v4188 = vunpack.c.l.s4 1983009808
  %v4189 = vunpack.c.0.s8 %v4188
  %v4190 = vlaneseq
  %v4191 = vshrl.u32 %v4190, 7
  %v4192 = vsub.s32 %v4189, %v4191
  %v4193 = vrot.slane %v4179, %v4192
  %v4194 = vcombine.low %v4186, %v4193
  %v4211 = vpack.c.bf16 %v3956, %v3939
  %v4212 = vpack.c.bf16 %v3990, %v3973
  %v4213 = vpack.c.bf16 %v4024, %v4007
  %v4214 = vpack.c.bf16 %v4058, %v4041
  %v4215 = vpack.c.bf16 %v4092, %v4075
  %v4216 = vpack.c.bf16 %v4126, %v4109
  %v4217 = vpack.c.bf16 %v4160, %v4143
  %v4218 = vpack.c.bf16 %v4194, %v4177
  %s4219 = scalar_lea.vmem %s2, 64
  %v4220 = vld [vmem:[%s4219] sm:$0xf]
  %v4221 = vld [vmem:[%s4219 + $0x4] sm:$0xf]
  %v4222 = vld [vmem:[%s4219 + $0x8] sm:$0xf]
  %v4223 = vld [vmem:[%s4219 + $0xc] sm:$0xf]
  %v4224 = vld [vmem:[%s4219 + $0x10] sm:$0xf]
  %v4225 = vld [vmem:[%s4219 + $0x14] sm:$0xf]
  %v4226 = vld [vmem:[%s4219 + $0x18] sm:$0xf]
  %v4227 = vld [vmem:[%s4219 + $0x1c] sm:$0xf]
  %v4228 = vld [vmem:[%s4219 + $0x20] sm:$0xf]
  %v4229 = vld [vmem:[%s4219 + $0x24] sm:$0xf]
  %v4230 = vld [vmem:[%s4219 + $0x28] sm:$0xf]
  %v4231 = vld [vmem:[%s4219 + $0x2c] sm:$0xf]
  %v4232 = vld [vmem:[%s4219 + $0x30] sm:$0xf]
  %v4233 = vld [vmem:[%s4219 + $0x34] sm:$0xf]
  %v4234 = vld [vmem:[%s4219 + $0x38] sm:$0xf]
  %v4235 = vld [vmem:[%s4219 + $0x3c] sm:$0xf]
  %v4252 = vunpack.c.l.b16 %v4220
  %v4253 = vunpack.c.l.b16 %v4221
  %v4254 = vunpack.c.l.b16 %v4222
  %v4255 = vunpack.c.l.b16 %v4223
  %v4256 = vunpack.c.l.b16 %v4224
  %v4257 = vunpack.c.l.b16 %v4225
  %v4258 = vunpack.c.l.b16 %v4226
  %v4259 = vunpack.c.l.b16 %v4227
  %v4260 = vunpack.c.l.b16 %v4228
  %v4261 = vunpack.c.l.b16 %v4229
  %v4262 = vunpack.c.l.b16 %v4230
  %v4263 = vunpack.c.l.b16 %v4231
  %v4264 = vunpack.c.l.b16 %v4232
  %v4265 = vunpack.c.l.b16 %v4233
  %v4266 = vunpack.c.l.b16 %v4234
  %v4267 = vunpack.c.l.b16 %v4235
  %v4268 = vpack.c.b16 %v4253, %v4252
  %v4269 = vpack.c.b16 %v4255, %v4254
  %v4270 = vpack.c.b16 %v4257, %v4256
  %v4271 = vpack.c.b16 %v4259, %v4258
  %v4272 = vpack.c.b16 %v4261, %v4260
  %v4273 = vpack.c.b16 %v4263, %v4262
  %v4274 = vpack.c.b16 %v4265, %v4264
  %v4275 = vpack.c.b16 %v4267, %v4266
  %4284 = vmatprep.subr.bf16.mxu0 0
  %4285 = vmatpush1.bf16.msra.mxu0 %v4268
  %4286 = vmatprep.subr.bf16.mxu0 0
  %4287 = vmatpush1.bf16.msra.mxu0 %v4269
  %4288 = vmatprep.subr.bf16.mxu0 0
  %4289 = vmatpush1.bf16.msra.mxu0 %v4270
  %4290 = vmatprep.subr.bf16.mxu0 0
  %4291 = vmatpush1.bf16.msra.mxu0 %v4271
  %4292 = vmatprep.subr.bf16.mxu0 0
  %4293 = vmatpush1.bf16.msra.mxu0 %v4272
  %4294 = vmatprep.subr.bf16.mxu0 0
  %4295 = vmatpush1.bf16.msra.mxu0 %v4273
  %4296 = vmatprep.subr.bf16.mxu0 0
  %4297 = vmatpush1.bf16.msra.mxu0 %v4274
  %4298 = vmatprep.subr.bf16.mxu0 0
  %4299 = vmatpush1.bf16.msra.mxu0 %v4275
  %4300 = vmatprep.subr.bf16.mxu0 0
  %4301 = vmatpush1.bf16.msra.mxu0 0
  %4302 = vmatprep.subr.bf16.mxu0 0
  %4303 = vmatpush1.bf16.msra.mxu0 0
  %4304 = vmatprep.subr.bf16.mxu0 0
  %4305 = vmatpush1.bf16.msra.mxu0 0
  %4306 = vmatprep.subr.bf16.mxu0 0
  %4307 = vmatpush1.bf16.msra.mxu0 0
  %4308 = vmatprep.subr.bf16.mxu0 0
  %4309 = vmatpush1.bf16.msra.mxu0 0
  %4310 = vmatprep.subr.bf16.mxu0 0
  %4311 = vmatpush1.bf16.msra.mxu0 0
  %4312 = vmatprep.subr.bf16.mxu0 0
  %4313 = vmatpush1.bf16.msra.mxu0 0
  %4314 = vmatprep.subr.bf16.mxu0 0
  %4315 = vmatpush1.bf16.msra.mxu0 0
  %4316 = vmatprep.mubr.bf16.mxu0 0
  %4317 = vmatmul.mubr.bf16.gmra.mrb[0].mxu0 %v4211
  %v4318 = vpop.f32.mrb[0].mxu0
  %v4319 = vadd.f32 0.0, %v4318
  %v4320 = vpop.f32.mrb[0].mxu0
  %v4321 = vpop.f32.mrb[0].mxu0
  %v4322 = vadd.f32 0.0, %v4321
  %v4323 = vpop.f32.mrb[0].mxu0
  %4324 = vmatprep.mubr.bf16.mxu0 0
  %4325 = vmatmul.mubr.bf16.gmra.mrb[0].mxu0 %v4212
  %v4326 = vpop.f32.mrb[0].mxu0
  %v4327 = vadd.f32 0.0, %v4326
  %v4328 = vpop.f32.mrb[0].mxu0
  %v4329 = vpop.f32.mrb[0].mxu0
  %v4330 = vadd.f32 0.0, %v4329
  %v4331 = vpop.f32.mrb[0].mxu0
  %4332 = vmatprep.mubr.bf16.mxu0 0
  %4333 = vmatmul.mubr.bf16.gmra.mrb[0].mxu0 %v4213
  %v4334 = vpop.f32.mrb[0].mxu0
  %v4335 = vadd.f32 0.0, %v4334
  %v4336 = vpop.f32.mrb[0].mxu0
  %v4337 = vpop.f32.mrb[0].mxu0
  %v4338 = vadd.f32 0.0, %v4337
  %v4339 = vpop.f32.mrb[0].mxu0
  %4340 = vmatprep.mubr.bf16.mxu0 0
  %4341 = vmatmul.mubr.bf16.gmra.mrb[0].mxu0 %v4214
  %v4342 = vpop.f32.mrb[0].mxu0
  %v4343 = vadd.f32 0.0, %v4342
  %v4344 = vpop.f32.mrb[0].mxu0
  %v4345 = vpop.f32.mrb[0].mxu0
  %v4346 = vadd.f32 0.0, %v4345
  %v4347 = vpop.f32.mrb[0].mxu0
  %4348 = vmatprep.mubr.bf16.mxu0 0
  %4349 = vmatmul.mubr.bf16.gmra.mrb[0].mxu0 %v4215
  %v4350 = vpop.f32.mrb[0].mxu0
  %v4351 = vadd.f32 0.0, %v4350
  %v4352 = vpop.f32.mrb[0].mxu0
  %v4353 = vpop.f32.mrb[0].mxu0
  %v4354 = vadd.f32 0.0, %v4353
  %v4355 = vpop.f32.mrb[0].mxu0
  %4356 = vmatprep.mubr.bf16.mxu0 0
  %4357 = vmatmul.mubr.bf16.gmra.mrb[0].mxu0 %v4216
  %v4358 = vpop.f32.mrb[0].mxu0
  %v4359 = vadd.f32 0.0, %v4358
  %v4360 = vpop.f32.mrb[0].mxu0
  %v4361 = vpop.f32.mrb[0].mxu0
  %v4362 = vadd.f32 0.0, %v4361
  %v4363 = vpop.f32.mrb[0].mxu0
  %4364 = vmatprep.mubr.bf16.mxu0 0
  %4365 = vmatmul.mubr.bf16.gmra.mrb[0].mxu0 %v4217
  %v4366 = vpop.f32.mrb[0].mxu0
  %v4367 = vadd.f32 0.0, %v4366
  %v4368 = vpop.f32.mrb[0].mxu0
  %v4369 = vpop.f32.mrb[0].mxu0
  %v4370 = vadd.f32 0.0, %v4369
  %v4371 = vpop.f32.mrb[0].mxu0
  %4372 = vmatprep.mubr.bf16.mxu0 0
  %4373 = vmatmul.mubr.bf16.gmra.mrb[0].mxu0 %v4218
  %v4374 = vpop.f32.mrb[0].mxu0
  %v4375 = vadd.f32 0.0, %v4374
  %v4376 = vpop.f32.mrb[0].mxu0
  %v4377 = vpop.f32.mrb[0].mxu0
  %v4378 = vadd.f32 0.0, %v4377
  %v4379 = vpop.f32.mrb[0].mxu0
  %4380 = vdwg.mxu0
  %v4397 = vunpack.c.l.b16 %v3778
  %v4398 = vunpack.c.l.b16 %v3779
  %v4399 = vunpack.c.l.b16 %v3780
  %v4400 = vunpack.c.l.b16 %v3781
  %v4401 = vunpack.c.l.b16 %v3782
  %v4402 = vunpack.c.l.b16 %v3783
  %v4403 = vunpack.c.l.b16 %v3784
  %v4404 = vunpack.c.l.b16 %v3785
  %v4405 = vunpack.c.l.b16 %v3786
  %v4406 = vunpack.c.l.b16 %v3787
  %v4407 = vunpack.c.l.b16 %v3788
  %v4408 = vunpack.c.l.b16 %v3789
  %v4409 = vunpack.c.l.b16 %v3790
  %v4410 = vunpack.c.l.b16 %v3791
  %v4411 = vunpack.c.l.b16 %v3792
  %v4412 = vunpack.c.l.b16 %v3793
  %v4413 = vpack.c.b16 %v4398, %v4397
  %v4414 = vpack.c.b16 %v4400, %v4399
  %v4415 = vpack.c.b16 %v4402, %v4401
  %v4416 = vpack.c.b16 %v4404, %v4403
  %v4417 = vpack.c.b16 %v4406, %v4405
  %v4418 = vpack.c.b16 %v4408, %v4407
  %v4419 = vpack.c.b16 %v4410, %v4409
  %v4420 = vpack.c.b16 %v4412, %v4411
  %4429 = vmatprep.subr.bf16.mxu0 0
  %4430 = vmatpush1.bf16.msra.mxu0 %v4413
  %4431 = vmatprep.subr.bf16.mxu0 0
  %4432 = vmatpush1.bf16.msra.mxu0 %v4414
  %4433 = vmatprep.subr.bf16.mxu0 0
  %4434 = vmatpush1.bf16.msra.mxu0 %v4415
  %4435 = vmatprep.subr.bf16.mxu0 0
  %4436 = vmatpush1.bf16.msra.mxu0 %v4416
  %4437 = vmatprep.subr.bf16.mxu0 0
  %4438 = vmatpush1.bf16.msra.mxu0 %v4417
  %4439 = vmatprep.subr.bf16.mxu0 0
  %4440 = vmatpush1.bf16.msra.mxu0 %v4418
  %4441 = vmatprep.subr.bf16.mxu0 0
  %4442 = vmatpush1.bf16.msra.mxu0 %v4419
  %4443 = vmatprep.subr.bf16.mxu0 0
  %4444 = vmatpush1.bf16.msra.mxu0 %v4420
  %4445 = vmatprep.subr.bf16.mxu0 0
  %4446 = vmatpush1.bf16.msra.mxu0 0
  %4447 = vmatprep.subr.bf16.mxu0 0
  %4448 = vmatpush1.bf16.msra.mxu0 0
  %4449 = vmatprep.subr.bf16.mxu0 0
  %4450 = vmatpush1.bf16.msra.mxu0 0
  %4451 = vmatprep.subr.bf16.mxu0 0
  %4452 = vmatpush1.bf16.msra.mxu0 0
  %4453 = vmatprep.subr.bf16.mxu0 0
  %4454 = vmatpush1.bf16.msra.mxu0 0
  %4455 = vmatprep.subr.bf16.mxu0 0
  %4456 = vmatpush1.bf16.msra.mxu0 0
  %4457 = vmatprep.subr.bf16.mxu0 0
  %4458 = vmatpush1.bf16.msra.mxu0 0
  %4459 = vmatprep.subr.bf16.mxu0 0
  %4460 = vmatpush1.bf16.msra.mxu0 0
  %4461 = vmatprep.mubr.bf16.mxu0 0
  %4462 = vmatmul.mubr.bf16.gmra.mrb[0].mxu0 %v3770
  %v4463 = vpop.f32.mrb[0].mxu0
  %v4464 = vadd.f32 %v4319, %v4463
  %v4465 = vpop.f32.mrb[0].mxu0
  %v4466 = vpop.f32.mrb[0].mxu0
  %v4467 = vadd.f32 %v4322, %v4466
  %v4468 = vpop.f32.mrb[0].mxu0
  %4469 = vmatprep.mubr.bf16.mxu0 0
  %4470 = vmatmul.mubr.bf16.gmra.mrb[0].mxu0 %v3771
  %v4471 = vpop.f32.mrb[0].mxu0
  %v4472 = vadd.f32 %v4327, %v4471
  %v4473 = vpop.f32.mrb[0].mxu0
  %v4474 = vpop.f32.mrb[0].mxu0
  %v4475 = vadd.f32 %v4330, %v4474
  %v4476 = vpop.f32.mrb[0].mxu0
  %4477 = vmatprep.mubr.bf16.mxu0 0
  %4478 = vmatmul.mubr.bf16.gmra.mrb[0].mxu0 %v3772
  %v4479 = vpop.f32.mrb[0].mxu0
  %v4480 = vadd.f32 %v4335, %v4479
  %v4481 = vpop.f32.mrb[0].mxu0
  %v4482 = vpop.f32.mrb[0].mxu0
  %v4483 = vadd.f32 %v4338, %v4482
  %v4484 = vpop.f32.mrb[0].mxu0
  %4485 = vmatprep.mubr.bf16.mxu0 0
  %4486 = vmatmul.mubr.bf16.gmra.mrb[0].mxu0 %v3773
  %v4487 = vpop.f32.mrb[0].mxu0
  %v4488 = vadd.f32 %v4343, %v4487
  %v4489 = vpop.f32.mrb[0].mxu0
  %v4490 = vpop.f32.mrb[0].mxu0
  %v4491 = vadd.f32 %v4346, %v4490
  %v4492 = vpop.f32.mrb[0].mxu0
  %4493 = vmatprep.mubr.bf16.mxu0 0
  %4494 = vmatmul.mubr.bf16.gmra.mrb[0].mxu0 %v3774
  %v4495 = vpop.f32.mrb[0].mxu0
  %v4496 = vadd.f32 %v4351, %v4495
  %v4497 = vpop.f32.mrb[0].mxu0
  %v4498 = vpop.f32.mrb[0].mxu0
  %v4499 = vadd.f32 %v4354, %v4498
  %v4500 = vpop.f32.mrb[0].mxu0
  %4501 = vmatprep.mubr.bf16.mxu0 0
  %4502 = vmatmul.mubr.bf16.gmra.mrb[0].mxu0 %v3775
  %v4503 = vpop.f32.mrb[0].mxu0
  %v4504 = vadd.f32 %v4359, %v4503
  %v4505 = vpop.f32.mrb[0].mxu0
  %v4506 = vpop.f32.mrb[0].mxu0
  %v4507 = vadd.f32 %v4362, %v4506
  %v4508 = vpop.f32.mrb[0].mxu0
  %4509 = vmatprep.mubr.bf16.mxu0 0
  %4510 = vmatmul.mubr.bf16.gmra.mrb[0].mxu0 %v3776
  %v4511 = vpop.f32.mrb[0].mxu0
  %v4512 = vadd.f32 %v4367, %v4511
  %v4513 = vpop.f32.mrb[0].mxu0
  %v4514 = vpop.f32.mrb[0].mxu0
  %v4515 = vadd.f32 %v4370, %v4514
  %v4516 = vpop.f32.mrb[0].mxu0
  %4517 = vmatprep.mubr.bf16.mxu0 0
  %4518 = vmatmul.mubr.bf16.gmra.mrb[0].mxu0 %v3777
  %v4519 = vpop.f32.mrb[0].mxu0
  %v4520 = vadd.f32 %v4375, %v4519
  %v4521 = vpop.f32.mrb[0].mxu0
  %v4522 = vpop.f32.mrb[0].mxu0
  %v4523 = vadd.f32 %v4378, %v4522
  %v4524 = vpop.f32.mrb[0].mxu0
  %4525 = vdwg.mxu0
  %s4526 = scalar_lea.vmem [#allocation2], 4
  %v4527 = vld [vmem:[%s4526] sm:$0x3]
  %v4528 = vld [vmem:[%s4526 + $0x4] sm:$0x3]
  %v4529 = vld [vmem:[%s4526 + $0x8] sm:$0x3]
  %v4530 = vld [vmem:[%s4526 + $0xc] sm:$0x3]
  %v4531 = vld [vmem:[%s4526 + $0x10] sm:$0x3]
  %v4532 = vld [vmem:[%s4526 + $0x14] sm:$0x3]
  %v4533 = vld [vmem:[%s4526 + $0x18] sm:$0x3]
  %v4534 = vld [vmem:[%s4526 + $0x1c] sm:$0x3]
  %v4535 = vld [vmem:[%s4526 + $0x44] sm:$0x3]
  %v4536 = vld [vmem:[%s4526 + $0x48] sm:$0x3]
  %v4537 = vld [vmem:[%s4526 + $0x4c] sm:$0x3]
  %v4538 = vld [vmem:[%s4526 + $0x50] sm:$0x3]
  %v4539 = vld [vmem:[%s4526 + $0x54] sm:$0x3]
  %v4540 = vld [vmem:[%s4526 + $0x58] sm:$0x3]
  %v4541 = vld [vmem:[%s4526 + $0x5c] sm:$0x3]
  %v4542 = vld [vmem:[%s4526 + $0x60] sm:$0x3]
  %v4543 = vld [vmem:[%s4526 + $0x88] sm:$0x3]
  %v4544 = vld [vmem:[%s4526 + $0x8c] sm:$0x3]
  %v4545 = vld [vmem:[%s4526 + $0x90] sm:$0x3]
  %v4546 = vld [vmem:[%s4526 + $0x94] sm:$0x3]
  %v4547 = vld [vmem:[%s4526 + $0x98] sm:$0x3]
  %v4548 = vld [vmem:[%s4526 + $0x9c] sm:$0x3]
  %v4549 = vld [vmem:[%s4526 + $0xa0] sm:$0x3]
  %v4550 = vld [vmem:[%s4526 + $0xa4] sm:$0x3]
  %v4551 = vld [vmem:[%s4526 + $0xcc] sm:$0x3]
  %v4552 = vld [vmem:[%s4526 + $0xd0] sm:$0x3]
  %v4553 = vld [vmem:[%s4526 + $0xd4] sm:$0x3]
  %v4554 = vld [vmem:[%s4526 + $0xd8] sm:$0x3]
  %v4555 = vld [vmem:[%s4526 + $0xdc] sm:$0x3]
  %v4556 = vld [vmem:[%s4526 + $0xe0] sm:$0x3]
  %v4557 = vld [vmem:[%s4526 + $0xe4] sm:$0x3]
  %v4558 = vld [vmem:[%s4526 + $0xe8] sm:$0x3]
  %v4559 = vld [vmem:[%s4526 + $0x110] sm:$0x3]
  %v4560 = vld [vmem:[%s4526 + $0x114] sm:$0x3]
  %v4561 = vld [vmem:[%s4526 + $0x118] sm:$0x3]
  %v4562 = vld [vmem:[%s4526 + $0x11c] sm:$0x3]
  %v4563 = vld [vmem:[%s4526 + $0x120] sm:$0x3]
  %v4564 = vld [vmem:[%s4526 + $0x124] sm:$0x3]
  %v4565 = vld [vmem:[%s4526 + $0x128] sm:$0x3]
  %v4566 = vld [vmem:[%s4526 + $0x12c] sm:$0x3]
  %v4567 = vld [vmem:[%s4526 + $0x154] sm:$0x3]
  %v4568 = vld [vmem:[%s4526 + $0x158] sm:$0x3]
  %v4569 = vld [vmem:[%s4526 + $0x15c] sm:$0x3]
  %v4570 = vld [vmem:[%s4526 + $0x160] sm:$0x3]
  %v4571 = vld [vmem:[%s4526 + $0x164] sm:$0x3]
  %v4572 = vld [vmem:[%s4526 + $0x168] sm:$0x3]
  %v4573 = vld [vmem:[%s4526 + $0x16c] sm:$0x3]
  %v4574 = vld [vmem:[%s4526 + $0x170] sm:$0x3]
  %v4575 = vld [vmem:[%s4526 + $0x198] sm:$0x3]
  %v4576 = vld [vmem:[%s4526 + $0x19c] sm:$0x3]
  %v4577 = vld [vmem:[%s4526 + $0x1a0] sm:$0x3]
  %v4578 = vld [vmem:[%s4526 + $0x1a4] sm:$0x3]
  %v4579 = vld [vmem:[%s4526 + $0x1a8] sm:$0x3]
  %v4580 = vld [vmem:[%s4526 + $0x1ac] sm:$0x3]
  %v4581 = vld [vmem:[%s4526 + $0x1b0] sm:$0x3]
  %v4582 = vld [vmem:[%s4526 + $0x1b4] sm:$0x3]
  %v4583 = vld [vmem:[%s4526 + $0x1dc] sm:$0x3]
  %v4584 = vld [vmem:[%s4526 + $0x1e0] sm:$0x3]
  %v4585 = vld [vmem:[%s4526 + $0x1e4] sm:$0x3]
  %v4586 = vld [vmem:[%s4526 + $0x1e8] sm:$0x3]
  %v4587 = vld [vmem:[%s4526 + $0x1ec] sm:$0x3]
  %v4588 = vld [vmem:[%s4526 + $0x1f0] sm:$0x3]
  %v4589 = vld [vmem:[%s4526 + $0x1f4] sm:$0x3]
  %v4590 = vld [vmem:[%s4526 + $0x1f8] sm:$0x3]
  %v4655 = vcombine.low %v4527, %v4528
  %v4656 = vcombine.low %v4529, %v4530
  %v4658 = vunpack.c.l.s4 1983009808
  %v4659 = vunpack.c.0.s8 %v4658
  %v4660 = vlaneseq
  %v4661 = vshrl.u32 %v4660, 7
  %v4662 = vsub.s32 %v4659, %v4661
  %v4663 = vrot.slane %v4655, %v4662
  %v4665 = vunpack.c.l.s4 1983009808
  %v4666 = vunpack.c.0.s8 %v4665
  %v4667 = vlaneseq
  %v4668 = vshrl.u32 %v4667, 7
  %v4669 = vsub.s32 %v4666, %v4668
  %v4670 = vrot.slane %v4656, %v4669
  %v4671 = vcombine.low %v4663, %v4670
  %v4672 = vcombine.low %v4531, %v4532
  %v4673 = vcombine.low %v4533, %v4534
  %v4675 = vunpack.c.l.s4 1983009808
  %v4676 = vunpack.c.0.s8 %v4675
  %v4677 = vlaneseq
  %v4678 = vshrl.u32 %v4677, 7
  %v4679 = vsub.s32 %v4676, %v4678
  %v4680 = vrot.slane %v4672, %v4679
  %v4682 = vunpack.c.l.s4 1983009808
  %v4683 = vunpack.c.0.s8 %v4682
  %v4684 = vlaneseq
  %v4685 = vshrl.u32 %v4684, 7
  %v4686 = vsub.s32 %v4683, %v4685
  %v4687 = vrot.slane %v4673, %v4686
  %v4688 = vcombine.low %v4680, %v4687
  %v4689 = vcombine.low %v4535, %v4536
  %v4690 = vcombine.low %v4537, %v4538
  %v4692 = vunpack.c.l.s4 1983009808
  %v4693 = vunpack.c.0.s8 %v4692
  %v4694 = vlaneseq
  %v4695 = vshrl.u32 %v4694, 7
  %v4696 = vsub.s32 %v4693, %v4695
  %v4697 = vrot.slane %v4689, %v4696
  %v4699 = vunpack.c.l.s4 1983009808
  %v4700 = vunpack.c.0.s8 %v4699
  %v4701 = vlaneseq
  %v4702 = vshrl.u32 %v4701, 7
  %v4703 = vsub.s32 %v4700, %v4702
  %v4704 = vrot.slane %v4690, %v4703
  %v4705 = vcombine.low %v4697, %v4704
  %v4706 = vcombine.low %v4539, %v4540
  %v4707 = vcombine.low %v4541, %v4542
  %v4709 = vunpack.c.l.s4 1983009808
  %v4710 = vunpack.c.0.s8 %v4709
  %v4711 = vlaneseq
  %v4712 = vshrl.u32 %v4711, 7
  %v4713 = vsub.s32 %v4710, %v4712
  %v4714 = vrot.slane %v4706, %v4713
  %v4716 = vunpack.c.l.s4 1983009808
  %v4717 = vunpack.c.0.s8 %v4716
  %v4718 = vlaneseq
  %v4719 = vshrl.u32 %v4718, 7
  %v4720 = vsub.s32 %v4717, %v4719
  %v4721 = vrot.slane %v4707, %v4720
  %v4722 = vcombine.low %v4714, %v4721
  %v4723 = vcombine.low %v4543, %v4544
  %v4724 = vcombine.low %v4545, %v4546
  %v4726 = vunpack.c.l.s4 1983009808
  %v4727 = vunpack.c.0.s8 %v4726
  %v4728 = vlaneseq
  %v4729 = vshrl.u32 %v4728, 7
  %v4730 = vsub.s32 %v4727, %v4729
  %v4731 = vrot.slane %v4723, %v4730
  %v4733 = vunpack.c.l.s4 1983009808
  %v4734 = vunpack.c.0.s8 %v4733
  %v4735 = vlaneseq
  %v4736 = vshrl.u32 %v4735, 7
  %v4737 = vsub.s32 %v4734, %v4736
  %v4738 = vrot.slane %v4724, %v4737
  %v4739 = vcombine.low %v4731, %v4738
  %v4740 = vcombine.low %v4547, %v4548
  %v4741 = vcombine.low %v4549, %v4550
  %v4743 = vunpack.c.l.s4 1983009808
  %v4744 = vunpack.c.0.s8 %v4743
  %v4745 = vlaneseq
  %v4746 = vshrl.u32 %v4745, 7
  %v4747 = vsub.s32 %v4744, %v4746
  %v4748 = vrot.slane %v4740, %v4747
  %v4750 = vunpack.c.l.s4 1983009808
  %v4751 = vunpack.c.0.s8 %v4750
  %v4752 = vlaneseq
  %v4753 = vshrl.u32 %v4752, 7
  %v4754 = vsub.s32 %v4751, %v4753
  %v4755 = vrot.slane %v4741, %v4754
  %v4756 = vcombine.low %v4748, %v4755
  %v4757 = vcombine.low %v4551, %v4552
  %v4758 = vcombine.low %v4553, %v4554
  %v4760 = vunpack.c.l.s4 1983009808
  %v4761 = vunpack.c.0.s8 %v4760
  %v4762 = vlaneseq
  %v4763 = vshrl.u32 %v4762, 7
  %v4764 = vsub.s32 %v4761, %v4763
  %v4765 = vrot.slane %v4757, %v4764
  %v4767 = vunpack.c.l.s4 1983009808
  %v4768 = vunpack.c.0.s8 %v4767
  %v4769 = vlaneseq
  %v4770 = vshrl.u32 %v4769, 7
  %v4771 = vsub.s32 %v4768, %v4770
  %v4772 = vrot.slane %v4758, %v4771
  %v4773 = vcombine.low %v4765, %v4772
  %v4774 = vcombine.low %v4555, %v4556
  %v4775 = vcombine.low %v4557, %v4558
  %v4777 = vunpack.c.l.s4 1983009808
  %v4778 = vunpack.c.0.s8 %v4777
  %v4779 = vlaneseq
  %v4780 = vshrl.u32 %v4779, 7
  %v4781 = vsub.s32 %v4778, %v4780
  %v4782 = vrot.slane %v4774, %v4781
  %v4784 = vunpack.c.l.s4 1983009808
  %v4785 = vunpack.c.0.s8 %v4784
  %v4786 = vlaneseq
  %v4787 = vshrl.u32 %v4786, 7
  %v4788 = vsub.s32 %v4785, %v4787
  %v4789 = vrot.slane %v4775, %v4788
  %v4790 = vcombine.low %v4782, %v4789
  %v4791 = vcombine.low %v4559, %v4560
  %v4792 = vcombine.low %v4561, %v4562
  %v4794 = vunpack.c.l.s4 1983009808
  %v4795 = vunpack.c.0.s8 %v4794
  %v4796 = vlaneseq
  %v4797 = vshrl.u32 %v4796, 7
  %v4798 = vsub.s32 %v4795, %v4797
  %v4799 = vrot.slane %v4791, %v4798
  %v4801 = vunpack.c.l.s4 1983009808
  %v4802 = vunpack.c.0.s8 %v4801
  %v4803 = vlaneseq
  %v4804 = vshrl.u32 %v4803, 7
  %v4805 = vsub.s32 %v4802, %v4804
  %v4806 = vrot.slane %v4792, %v4805
  %v4807 = vcombine.low %v4799, %v4806
  %v4808 = vcombine.low %v4563, %v4564
  %v4809 = vcombine.low %v4565, %v4566
  %v4811 = vunpack.c.l.s4 1983009808
  %v4812 = vunpack.c.0.s8 %v4811
  %v4813 = vlaneseq
  %v4814 = vshrl.u32 %v4813, 7
  %v4815 = vsub.s32 %v4812, %v4814
  %v4816 = vrot.slane %v4808, %v4815
  %v4818 = vunpack.c.l.s4 1983009808
  %v4819 = vunpack.c.0.s8 %v4818
  %v4820 = vlaneseq
  %v4821 = vshrl.u32 %v4820, 7
  %v4822 = vsub.s32 %v4819, %v4821
  %v4823 = vrot.slane %v4809, %v4822
  %v4824 = vcombine.low %v4816, %v4823
  %v4825 = vcombine.low %v4567, %v4568
  %v4826 = vcombine.low %v4569, %v4570
  %v4828 = vunpack.c.l.s4 1983009808
  %v4829 = vunpack.c.0.s8 %v4828
  %v4830 = vlaneseq
  %v4831 = vshrl.u32 %v4830, 7
  %v4832 = vsub.s32 %v4829, %v4831
  %v4833 = vrot.slane %v4825, %v4832
  %v4835 = vunpack.c.l.s4 1983009808
  %v4836 = vunpack.c.0.s8 %v4835
  %v4837 = vlaneseq
  %v4838 = vshrl.u32 %v4837, 7
  %v4839 = vsub.s32 %v4836, %v4838
  %v4840 = vrot.slane %v4826, %v4839
  %v4841 = vcombine.low %v4833, %v4840
  %v4842 = vcombine.low %v4571, %v4572
  %v4843 = vcombine.low %v4573, %v4574
  %v4845 = vunpack.c.l.s4 1983009808
  %v4846 = vunpack.c.0.s8 %v4845
  %v4847 = vlaneseq
  %v4848 = vshrl.u32 %v4847, 7
  %v4849 = vsub.s32 %v4846, %v4848
  %v4850 = vrot.slane %v4842, %v4849
  %v4852 = vunpack.c.l.s4 1983009808
  %v4853 = vunpack.c.0.s8 %v4852
  %v4854 = vlaneseq
  %v4855 = vshrl.u32 %v4854, 7
  %v4856 = vsub.s32 %v4853, %v4855
  %v4857 = vrot.slane %v4843, %v4856
  %v4858 = vcombine.low %v4850, %v4857
  %v4859 = vcombine.low %v4575, %v4576
  %v4860 = vcombine.low %v4577, %v4578
  %v4862 = vunpack.c.l.s4 1983009808
  %v4863 = vunpack.c.0.s8 %v4862
  %v4864 = vlaneseq
  %v4865 = vshrl.u32 %v4864, 7
  %v4866 = vsub.s32 %v4863, %v4865
  %v4867 = vrot.slane %v4859, %v4866
  %v4869 = vunpack.c.l.s4 1983009808
  %v4870 = vunpack.c.0.s8 %v4869
  %v4871 = vlaneseq
  %v4872 = vshrl.u32 %v4871, 7
  %v4873 = vsub.s32 %v4870, %v4872
  %v4874 = vrot.slane %v4860, %v4873
  %v4875 = vcombine.low %v4867, %v4874
  %v4876 = vcombine.low %v4579, %v4580
  %v4877 = vcombine.low %v4581, %v4582
  %v4879 = vunpack.c.l.s4 1983009808
  %v4880 = vunpack.c.0.s8 %v4879
  %v4881 = vlaneseq
  %v4882 = vshrl.u32 %v4881, 7
  %v4883 = vsub.s32 %v4880, %v4882
  %v4884 = vrot.slane %v4876, %v4883
  %v4886 = vunpack.c.l.s4 1983009808
  %v4887 = vunpack.c.0.s8 %v4886
  %v4888 = vlaneseq
  %v4889 = vshrl.u32 %v4888, 7
  %v4890 = vsub.s32 %v4887, %v4889
  %v4891 = vrot.slane %v4877, %v4890
  %v4892 = vcombine.low %v4884, %v4891
  %v4893 = vcombine.low %v4583, %v4584
  %v4894 = vcombine.low %v4585, %v4586
  %v4896 = vunpack.c.l.s4 1983009808
  %v4897 = vunpack.c.0.s8 %v4896
  %v4898 = vlaneseq
  %v4899 = vshrl.u32 %v4898, 7
  %v4900 = vsub.s32 %v4897, %v4899
  %v4901 = vrot.slane %v4893, %v4900
  %v4903 = vunpack.c.l.s4 1983009808
  %v4904 = vunpack.c.0.s8 %v4903
  %v4905 = vlaneseq
  %v4906 = vshrl.u32 %v4905, 7
  %v4907 = vsub.s32 %v4904, %v4906
  %v4908 = vrot.slane %v4894, %v4907
  %v4909 = vcombine.low %v4901, %v4908
  %v4910 = vcombine.low %v4587, %v4588
  %v4911 = vcombine.low %v4589, %v4590
  %v4913 = vunpack.c.l.s4 1983009808
  %v4914 = vunpack.c.0.s8 %v4913
  %v4915 = vlaneseq
  %v4916 = vshrl.u32 %v4915, 7
  %v4917 = vsub.s32 %v4914, %v4916
  %v4918 = vrot.slane %v4910, %v4917
  %v4920 = vunpack.c.l.s4 1983009808
  %v4921 = vunpack.c.0.s8 %v4920
  %v4922 = vlaneseq
  %v4923 = vshrl.u32 %v4922, 7
  %v4924 = vsub.s32 %v4921, %v4923
  %v4925 = vrot.slane %v4911, %v4924
  %v4926 = vcombine.low %v4918, %v4925
  %v4943 = vpack.c.bf16 %v4688, %v4671
  %v4944 = vpack.c.bf16 %v4722, %v4705
  %v4945 = vpack.c.bf16 %v4756, %v4739
  %v4946 = vpack.c.bf16 %v4790, %v4773
  %v4947 = vpack.c.bf16 %v4824, %v4807
  %v4948 = vpack.c.bf16 %v4858, %v4841
  %v4949 = vpack.c.bf16 %v4892, %v4875
  %v4950 = vpack.c.bf16 %v4926, %v4909
  %s4951 = scalar_lea.vmem %s2, 128
  %v4952 = vld [vmem:[%s4951] sm:$0xf]
  %v4953 = vld [vmem:[%s4951 + $0x4] sm:$0xf]
  %v4954 = vld [vmem:[%s4951 + $0x8] sm:$0xf]
  %v4955 = vld [vmem:[%s4951 + $0xc] sm:$0xf]
  %v4956 = vld [vmem:[%s4951 + $0x10] sm:$0xf]
  %v4957 = vld [vmem:[%s4951 + $0x14] sm:$0xf]
  %v4958 = vld [vmem:[%s4951 + $0x18] sm:$0xf]
  %v4959 = vld [vmem:[%s4951 + $0x1c] sm:$0xf]
  %v4960 = vld [vmem:[%s4951 + $0x20] sm:$0xf]
  %v4961 = vld [vmem:[%s4951 + $0x24] sm:$0xf]
  %v4962 = vld [vmem:[%s4951 + $0x28] sm:$0xf]
  %v4963 = vld [vmem:[%s4951 + $0x2c] sm:$0xf]
  %v4964 = vld [vmem:[%s4951 + $0x30] sm:$0xf]
  %v4965 = vld [vmem:[%s4951 + $0x34] sm:$0xf]
  %v4966 = vld [vmem:[%s4951 + $0x38] sm:$0xf]
  %v4967 = vld [vmem:[%s4951 + $0x3c] sm:$0xf]
  %v4984 = vunpack.c.l.b16 %v4952
  %v4985 = vunpack.c.l.b16 %v4953
  %v4986 = vunpack.c.l.b16 %v4954
  %v4987 = vunpack.c.l.b16 %v4955
  %v4988 = vunpack.c.l.b16 %v4956
  %v4989 = vunpack.c.l.b16 %v4957
  %v4990 = vunpack.c.l.b16 %v4958
  %v4991 = vunpack.c.l.b16 %v4959
  %v4992 = vunpack.c.l.b16 %v4960
  %v4993 = vunpack.c.l.b16 %v4961
  %v4994 = vunpack.c.l.b16 %v4962
  %v4995 = vunpack.c.l.b16 %v4963
  %v4996 = vunpack.c.l.b16 %v4964
  %v4997 = vunpack.c.l.b16 %v4965
  %v4998 = vunpack.c.l.b16 %v4966
  %v4999 = vunpack.c.l.b16 %v4967
  %v5000 = vpack.c.b16 %v4985, %v4984
  %v5001 = vpack.c.b16 %v4987, %v4986
  %v5002 = vpack.c.b16 %v4989, %v4988
  %v5003 = vpack.c.b16 %v4991, %v4990
  %v5004 = vpack.c.b16 %v4993, %v4992
  %v5005 = vpack.c.b16 %v4995, %v4994
  %v5006 = vpack.c.b16 %v4997, %v4996
  %v5007 = vpack.c.b16 %v4999, %v4998
  %5016 = vmatprep.subr.bf16.mxu0 0
  %5017 = vmatpush1.bf16.msra.mxu0 %v5000
  %5018 = vmatprep.subr.bf16.mxu0 0
  %5019 = vmatpush1.bf16.msra.mxu0 %v5001
  %5020 = vmatprep.subr.bf16.mxu0 0
  %5021 = vmatpush1.bf16.msra.mxu0 %v5002
  %5022 = vmatprep.subr.bf16.mxu0 0
  %5023 = vmatpush1.bf16.msra.mxu0 %v5003
  %5024 = vmatprep.subr.bf16.mxu0 0
  %5025 = vmatpush1.bf16.msra.mxu0 %v5004
  %5026 = vmatprep.subr.bf16.mxu0 0
  %5027 = vmatpush1.bf16.msra.mxu0 %v5005
  %5028 = vmatprep.subr.bf16.mxu0 0
  %5029 = vmatpush1.bf16.msra.mxu0 %v5006
  %5030 = vmatprep.subr.bf16.mxu0 0
  %5031 = vmatpush1.bf16.msra.mxu0 %v5007
  %5032 = vmatprep.subr.bf16.mxu0 0
  %5033 = vmatpush1.bf16.msra.mxu0 0
  %5034 = vmatprep.subr.bf16.mxu0 0
  %5035 = vmatpush1.bf16.msra.mxu0 0
  %5036 = vmatprep.subr.bf16.mxu0 0
  %5037 = vmatpush1.bf16.msra.mxu0 0
  %5038 = vmatprep.subr.bf16.mxu0 0
  %5039 = vmatpush1.bf16.msra.mxu0 0
  %5040 = vmatprep.subr.bf16.mxu0 0
  %5041 = vmatpush1.bf16.msra.mxu0 0
  %5042 = vmatprep.subr.bf16.mxu0 0
  %5043 = vmatpush1.bf16.msra.mxu0 0
  %5044 = vmatprep.subr.bf16.mxu0 0
  %5045 = vmatpush1.bf16.msra.mxu0 0
  %5046 = vmatprep.subr.bf16.mxu0 0
  %5047 = vmatpush1.bf16.msra.mxu0 0
  %5048 = vmatprep.mubr.bf16.mxu0 0
  %5049 = vmatmul.mubr.bf16.gmra.mrb[0].mxu0 %v4943
  %v5050 = vpop.f32.mrb[0].mxu0
  %v5051 = vadd.f32 0.0, %v5050
  %v5052 = vpop.f32.mrb[0].mxu0
  %v5053 = vpop.f32.mrb[0].mxu0
  %v5054 = vadd.f32 0.0, %v5053
  %v5055 = vpop.f32.mrb[0].mxu0
  %5056 = vmatprep.mubr.bf16.mxu0 0
  %5057 = vmatmul.mubr.bf16.gmra.mrb[0].mxu0 %v4944
  %v5058 = vpop.f32.mrb[0].mxu0
  %v5059 = vadd.f32 0.0, %v5058
  %v5060 = vpop.f32.mrb[0].mxu0
  %v5061 = vpop.f32.mrb[0].mxu0
  %v5062 = vadd.f32 0.0, %v5061
  %v5063 = vpop.f32.mrb[0].mxu0
  %5064 = vmatprep.mubr.bf16.mxu0 0
  %5065 = vmatmul.mubr.bf16.gmra.mrb[0].mxu0 %v4945
  %v5066 = vpop.f32.mrb[0].mxu0
  %v5067 = vadd.f32 0.0, %v5066
  %v5068 = vpop.f32.mrb[0].mxu0
  %v5069 = vpop.f32.mrb[0].mxu0
  %v5070 = vadd.f32 0.0, %v5069
  %v5071 = vpop.f32.mrb[0].mxu0
  %5072 = vmatprep.mubr.bf16.mxu0 0
  %5073 = vmatmul.mubr.bf16.gmra.mrb[0].mxu0 %v4946
  %v5074 = vpop.f32.mrb[0].mxu0
  %v5075 = vadd.f32 0.0, %v5074
  %v5076 = vpop.f32.mrb[0].mxu0
  %v5077 = vpop.f32.mrb[0].mxu0
  %v5078 = vadd.f32 0.0, %v5077
  %v5079 = vpop.f32.mrb[0].mxu0
  %5080 = vmatprep.mubr.bf16.mxu0 0
  %5081 = vmatmul.mubr.bf16.gmra.mrb[0].mxu0 %v4947
  %v5082 = vpop.f32.mrb[0].mxu0
  %v5083 = vadd.f32 0.0, %v5082
  %v5084 = vpop.f32.mrb[0].mxu0
  %v5085 = vpop.f32.mrb[0].mxu0
  %v5086 = vadd.f32 0.0, %v5085
  %v5087 = vpop.f32.mrb[0].mxu0
  %5088 = vmatprep.mubr.bf16.mxu0 0
  %5089 = vmatmul.mubr.bf16.gmra.mrb[0].mxu0 %v4948
  %v5090 = vpop.f32.mrb[0].mxu0
  %v5091 = vadd.f32 0.0, %v5090
  %v5092 = vpop.f32.mrb[0].mxu0
  %v5093 = vpop.f32.mrb[0].mxu0
  %v5094 = vadd.f32 0.0, %v5093
  %v5095 = vpop.f32.mrb[0].mxu0
  %5096 = vmatprep.mubr.bf16.mxu0 0
  %5097 = vmatmul.mubr.bf16.gmra.mrb[0].mxu0 %v4949
  %v5098 = vpop.f32.mrb[0].mxu0
  %v5099 = vadd.f32 0.0, %v5098
  %v5100 = vpop.f32.mrb[0].mxu0
  %v5101 = vpop.f32.mrb[0].mxu0
  %v5102 = vadd.f32 0.0, %v5101
  %v5103 = vpop.f32.mrb[0].mxu0
  %5104 = vmatprep.mubr.bf16.mxu0 0
  %5105 = vmatmul.mubr.bf16.gmra.mrb[0].mxu0 %v4950
  %v5106 = vpop.f32.mrb[0].mxu0
  %v5107 = vadd.f32 0.0, %v5106
  %v5108 = vpop.f32.mrb[0].mxu0
  %v5109 = vpop.f32.mrb[0].mxu0
  %v5110 = vadd.f32 0.0, %v5109
  %v5111 = vpop.f32.mrb[0].mxu0
  %5112 = vdwg.mxu0
  %v5113 = vadd.f32 %v4464, %v5051
  %v5114 = vadd.f32 %v4467, %v5054
  %v5115 = vadd.f32 %v4472, %v5059
  %v5116 = vadd.f32 %v4475, %v5062
  %v5117 = vadd.f32 %v4480, %v5067
  %v5118 = vadd.f32 %v4483, %v5070
  %v5119 = vadd.f32 %v4488, %v5075
  %v5120 = vadd.f32 %v4491, %v5078
  %v5121 = vadd.f32 %v4496, %v5083
  %v5122 = vadd.f32 %v4499, %v5086
  %v5123 = vadd.f32 %v4504, %v5091
  %v5124 = vadd.f32 %v4507, %v5094
  %v5125 = vadd.f32 %v4512, %v5099
  %v5126 = vadd.f32 %v4515, %v5102
  %v5127 = vadd.f32 %v4520, %v5107
  %v5128 = vadd.f32 %v4523, %v5110
  %s5129 = scalar_lea.vmem [#allocation2], 34
  %v5130 = vld [vmem:[%s5129] sm:$0x3]
  %v5131 = vld [vmem:[%s5129 + $0x4] sm:$0x3]
  %v5132 = vld [vmem:[%s5129 + $0x8] sm:$0x3]
  %v5133 = vld [vmem:[%s5129 + $0xc] sm:$0x3]
  %v5134 = vld [vmem:[%s5129 + $0x10] sm:$0x3]
  %v5135 = vld [vmem:[%s5129 + $0x14] sm:$0x3]
  %v5136 = vld [vmem:[%s5129 + $0x18] sm:$0x3]
  %v5137 = vld [vmem:[%s5129 + $0x1c] sm:$0x3]
  %v5138 = vld [vmem:[%s5129 + $0x44] sm:$0x3]
  %v5139 = vld [vmem:[%s5129 + $0x48] sm:$0x3]
  %v5140 = vld [vmem:[%s5129 + $0x4c] sm:$0x3]
  %v5141 = vld [vmem:[%s5129 + $0x50] sm:$0x3]
  %v5142 = vld [vmem:[%s5129 + $0x54] sm:$0x3]
  %v5143 = vld [vmem:[%s5129 + $0x58] sm:$0x3]
  %v5144 = vld [vmem:[%s5129 + $0x5c] sm:$0x3]
  %v5145 = vld [vmem:[%s5129 + $0x60] sm:$0x3]
  %v5146 = vld [vmem:[%s5129 + $0x88] sm:$0x3]
  %v5147 = vld [vmem:[%s5129 + $0x8c] sm:$0x3]
  %v5148 = vld [vmem:[%s5129 + $0x90] sm:$0x3]
  %v5149 = vld [vmem:[%s5129 + $0x94] sm:$0x3]
  %v5150 = vld [vmem:[%s5129 + $0x98] sm:$0x3]
  %v5151 = vld [vmem:[%s5129 + $0x9c] sm:$0x3]
  %v5152 = vld [vmem:[%s5129 + $0xa0] sm:$0x3]
  %v5153 = vld [vmem:[%s5129 + $0xa4] sm:$0x3]
  %v5154 = vld [vmem:[%s5129 + $0xcc] sm:$0x3]
  %v5155 = vld [vmem:[%s5129 + $0xd0] sm:$0x3]
  %v5156 = vld [vmem:[%s5129 + $0xd4] sm:$0x3]
  %v5157 = vld [vmem:[%s5129 + $0xd8] sm:$0x3]
  %v5158 = vld [vmem:[%s5129 + $0xdc] sm:$0x3]
  %v5159 = vld [vmem:[%s5129 + $0xe0] sm:$0x3]
  %v5160 = vld [vmem:[%s5129 + $0xe4] sm:$0x3]
  %v5161 = vld [vmem:[%s5129 + $0xe8] sm:$0x3]
  %v5162 = vld [vmem:[%s5129 + $0x110] sm:$0x3]
  %v5163 = vld [vmem:[%s5129 + $0x114] sm:$0x3]
  %v5164 = vld [vmem:[%s5129 + $0x118] sm:$0x3]
  %v5165 = vld [vmem:[%s5129 + $0x11c] sm:$0x3]
  %v5166 = vld [vmem:[%s5129 + $0x120] sm:$0x3]
  %v5167 = vld [vmem:[%s5129 + $0x124] sm:$0x3]
  %v5168 = vld [vmem:[%s5129 + $0x128] sm:$0x3]
  %v5169 = vld [vmem:[%s5129 + $0x12c] sm:$0x3]
  %v5170 = vld [vmem:[%s5129 + $0x154] sm:$0x3]
  %v5171 = vld [vmem:[%s5129 + $0x158] sm:$0x3]
  %v5172 = vld [vmem:[%s5129 + $0x15c] sm:$0x3]
  %v5173 = vld [vmem:[%s5129 + $0x160] sm:$0x3]
  %v5174 = vld [vmem:[%s5129 + $0x164] sm:$0x3]
  %v5175 = vld [vmem:[%s5129 + $0x168] sm:$0x3]
  %v5176 = vld [vmem:[%s5129 + $0x16c] sm:$0x3]
  %v5177 = vld [vmem:[%s5129 + $0x170] sm:$0x3]
  %v5178 = vld [vmem:[%s5129 + $0x198] sm:$0x3]
  %v5179 = vld [vmem:[%s5129 + $0x19c] sm:$0x3]
  %v5180 = vld [vmem:[%s5129 + $0x1a0] sm:$0x3]
  %v5181 = vld [vmem:[%s5129 + $0x1a4] sm:$0x3]
  %v5182 = vld [vmem:[%s5129 + $0x1a8] sm:$0x3]
  %v5183 = vld [vmem:[%s5129 + $0x1ac] sm:$0x3]
  %v5184 = vld [vmem:[%s5129 + $0x1b0] sm:$0x3]
  %v5185 = vld [vmem:[%s5129 + $0x1b4] sm:$0x3]
  %v5186 = vld [vmem:[%s5129 + $0x1dc] sm:$0x3]
  %v5187 = vld [vmem:[%s5129 + $0x1e0] sm:$0x3]
  %v5188 = vld [vmem:[%s5129 + $0x1e4] sm:$0x3]
  %v5189 = vld [vmem:[%s5129 + $0x1e8] sm:$0x3]
  %v5190 = vld [vmem:[%s5129 + $0x1ec] sm:$0x3]
  %v5191 = vld [vmem:[%s5129 + $0x1f0] sm:$0x3]
  %v5192 = vld [vmem:[%s5129 + $0x1f4] sm:$0x3]
  %v5193 = vld [vmem:[%s5129 + $0x1f8] sm:$0x3]
  %v5258 = vcombine.low %v5130, %v5131
  %v5259 = vcombine.low %v5132, %v5133
  %v5261 = vunpack.c.l.s4 1983009808
  %v5262 = vunpack.c.0.s8 %v5261
  %v5263 = vlaneseq
  %v5264 = vshrl.u32 %v5263, 7
  %v5265 = vsub.s32 %v5262, %v5264
  %v5266 = vrot.slane %v5258, %v5265
  %v5268 = vunpack.c.l.s4 1983009808
  %v5269 = vunpack.c.0.s8 %v5268
  %v5270 = vlaneseq
  %v5271 = vshrl.u32 %v5270, 7
  %v5272 = vsub.s32 %v5269, %v5271
  %v5273 = vrot.slane %v5259, %v5272
  %v5274 = vcombine.low %v5266, %v5273
  %v5275 = vcombine.low %v5134, %v5135
  %v5276 = vcombine.low %v5136, %v5137
  %v5278 = vunpack.c.l.s4 1983009808
  %v5279 = vunpack.c.0.s8 %v5278
  %v5280 = vlaneseq
  %v5281 = vshrl.u32 %v5280, 7
  %v5282 = vsub.s32 %v5279, %v5281
  %v5283 = vrot.slane %v5275, %v5282
  %v5285 = vunpack.c.l.s4 1983009808
  %v5286 = vunpack.c.0.s8 %v5285
  %v5287 = vlaneseq
  %v5288 = vshrl.u32 %v5287, 7
  %v5289 = vsub.s32 %v5286, %v5288
  %v5290 = vrot.slane %v5276, %v5289
  %v5291 = vcombine.low %v5283, %v5290
  %v5292 = vcombine.low %v5138, %v5139
  %v5293 = vcombine.low %v5140, %v5141
  %v5295 = vunpack.c.l.s4 1983009808
  %v5296 = vunpack.c.0.s8 %v5295
  %v5297 = vlaneseq
  %v5298 = vshrl.u32 %v5297, 7
  %v5299 = vsub.s32 %v5296, %v5298
  %v5300 = vrot.slane %v5292, %v5299
  %v5302 = vunpack.c.l.s4 1983009808
  %v5303 = vunpack.c.0.s8 %v5302
  %v5304 = vlaneseq
  %v5305 = vshrl.u32 %v5304, 7
  %v5306 = vsub.s32 %v5303, %v5305
  %v5307 = vrot.slane %v5293, %v5306
  %v5308 = vcombine.low %v5300, %v5307
  %v5309 = vcombine.low %v5142, %v5143
  %v5310 = vcombine.low %v5144, %v5145
  %v5312 = vunpack.c.l.s4 1983009808
  %v5313 = vunpack.c.0.s8 %v5312
  %v5314 = vlaneseq
  %v5315 = vshrl.u32 %v5314, 7
  %v5316 = vsub.s32 %v5313, %v5315
  %v5317 = vrot.slane %v5309, %v5316
  %v5319 = vunpack.c.l.s4 1983009808
  %v5320 = vunpack.c.0.s8 %v5319
  %v5321 = vlaneseq
  %v5322 = vshrl.u32 %v5321, 7
  %v5323 = vsub.s32 %v5320, %v5322
  %v5324 = vrot.slane %v5310, %v5323
  %v5325 = vcombine.low %v5317, %v5324
  %v5326 = vcombine.low %v5146, %v5147
  %v5327 = vcombine.low %v5148, %v5149
  %v5329 = vunpack.c.l.s4 1983009808
  %v5330 = vunpack.c.0.s8 %v5329
  %v5331 = vlaneseq
  %v5332 = vshrl.u32 %v5331, 7
  %v5333 = vsub.s32 %v5330, %v5332
  %v5334 = vrot.slane %v5326, %v5333
  %v5336 = vunpack.c.l.s4 1983009808
  %v5337 = vunpack.c.0.s8 %v5336
  %v5338 = vlaneseq
  %v5339 = vshrl.u32 %v5338, 7
  %v5340 = vsub.s32 %v5337, %v5339
  %v5341 = vrot.slane %v5327, %v5340
  %v5342 = vcombine.low %v5334, %v5341
  %v5343 = vcombine.low %v5150, %v5151
  %v5344 = vcombine.low %v5152, %v5153
  %v5346 = vunpack.c.l.s4 1983009808
  %v5347 = vunpack.c.0.s8 %v5346
  %v5348 = vlaneseq
  %v5349 = vshrl.u32 %v5348, 7
  %v5350 = vsub.s32 %v5347, %v5349
  %v5351 = vrot.slane %v5343, %v5350
  %v5353 = vunpack.c.l.s4 1983009808
  %v5354 = vunpack.c.0.s8 %v5353
  %v5355 = vlaneseq
  %v5356 = vshrl.u32 %v5355, 7
  %v5357 = vsub.s32 %v5354, %v5356
  %v5358 = vrot.slane %v5344, %v5357
  %v5359 = vcombine.low %v5351, %v5358
  %v5360 = vcombine.low %v5154, %v5155
  %v5361 = vcombine.low %v5156, %v5157
  %v5363 = vunpack.c.l.s4 1983009808
  %v5364 = vunpack.c.0.s8 %v5363
  %v5365 = vlaneseq
  %v5366 = vshrl.u32 %v5365, 7
  %v5367 = vsub.s32 %v5364, %v5366
  %v5368 = vrot.slane %v5360, %v5367
  %v5370 = vunpack.c.l.s4 1983009808
  %v5371 = vunpack.c.0.s8 %v5370
  %v5372 = vlaneseq
  %v5373 = vshrl.u32 %v5372, 7
  %v5374 = vsub.s32 %v5371, %v5373
  %v5375 = vrot.slane %v5361, %v5374
  %v5376 = vcombine.low %v5368, %v5375
  %v5377 = vcombine.low %v5158, %v5159
  %v5378 = vcombine.low %v5160, %v5161
  %v5380 = vunpack.c.l.s4 1983009808
  %v5381 = vunpack.c.0.s8 %v5380
  %v5382 = vlaneseq
  %v5383 = vshrl.u32 %v5382, 7
  %v5384 = vsub.s32 %v5381, %v5383
  %v5385 = vrot.slane %v5377, %v5384
  %v5387 = vunpack.c.l.s4 1983009808
  %v5388 = vunpack.c.0.s8 %v5387
  %v5389 = vlaneseq
  %v5390 = vshrl.u32 %v5389, 7
  %v5391 = vsub.s32 %v5388, %v5390
  %v5392 = vrot.slane %v5378, %v5391
  %v5393 = vcombine.low %v5385, %v5392
  %v5394 = vcombine.low %v5162, %v5163
  %v5395 = vcombine.low %v5164, %v5165
  %v5397 = vunpack.c.l.s4 1983009808
  %v5398 = vunpack.c.0.s8 %v5397
  %v5399 = vlaneseq
  %v5400 = vshrl.u32 %v5399, 7
  %v5401 = vsub.s32 %v5398, %v5400
  %v5402 = vrot.slane %v5394, %v5401
  %v5404 = vunpack.c.l.s4 1983009808
  %v5405 = vunpack.c.0.s8 %v5404
  %v5406 = vlaneseq
  %v5407 = vshrl.u32 %v5406, 7
  %v5408 = vsub.s32 %v5405, %v5407
  %v5409 = vrot.slane %v5395, %v5408
  %v5410 = vcombine.low %v5402, %v5409
  %v5411 = vcombine.low %v5166, %v5167
  %v5412 = vcombine.low %v5168, %v5169
  %v5414 = vunpack.c.l.s4 1983009808
  %v5415 = vunpack.c.0.s8 %v5414
  %v5416 = vlaneseq
  %v5417 = vshrl.u32 %v5416, 7
  %v5418 = vsub.s32 %v5415, %v5417
  %v5419 = vrot.slane %v5411, %v5418
  %v5421 = vunpack.c.l.s4 1983009808
  %v5422 = vunpack.c.0.s8 %v5421
  %v5423 = vlaneseq
  %v5424 = vshrl.u32 %v5423, 7
  %v5425 = vsub.s32 %v5422, %v5424
  %v5426 = vrot.slane %v5412, %v5425
  %v5427 = vcombine.low %v5419, %v5426
  %v5428 = vcombine.low %v5170, %v5171
  %v5429 = vcombine.low %v5172, %v5173
  %v5431 = vunpack.c.l.s4 1983009808
  %v5432 = vunpack.c.0.s8 %v5431
  %v5433 = vlaneseq
  %v5434 = vshrl.u32 %v5433, 7
  %v5435 = vsub.s32 %v5432, %v5434
  %v5436 = vrot.slane %v5428, %v5435
  %v5438 = vunpack.c.l.s4 1983009808
  %v5439 = vunpack.c.0.s8 %v5438
  %v5440 = vlaneseq
  %v5441 = vshrl.u32 %v5440, 7
  %v5442 = vsub.s32 %v5439, %v5441
  %v5443 = vrot.slane %v5429, %v5442
  %v5444 = vcombine.low %v5436, %v5443
  %v5445 = vcombine.low %v5174, %v5175
  %v5446 = vcombine.low %v5176, %v5177
  %v5448 = vunpack.c.l.s4 1983009808
  %v5449 = vunpack.c.0.s8 %v5448
  %v5450 = vlaneseq
  %v5451 = vshrl.u32 %v5450, 7
  %v5452 = vsub.s32 %v5449, %v5451
  %v5453 = vrot.slane %v5445, %v5452
  %v5455 = vunpack.c.l.s4 1983009808
  %v5456 = vunpack.c.0.s8 %v5455
  %v5457 = vlaneseq
  %v5458 = vshrl.u32 %v5457, 7
  %v5459 = vsub.s32 %v5456, %v5458
  %v5460 = vrot.slane %v5446, %v5459
  %v5461 = vcombine.low %v5453, %v5460
  %v5462 = vcombine.low %v5178, %v5179
  %v5463 = vcombine.low %v5180, %v5181
  %v5465 = vunpack.c.l.s4 1983009808
  %v5466 = vunpack.c.0.s8 %v5465
  %v5467 = vlaneseq
  %v5468 = vshrl.u32 %v5467, 7
  %v5469 = vsub.s32 %v5466, %v5468
  %v5470 = vrot.slane %v5462, %v5469
  %v5472 = vunpack.c.l.s4 1983009808
  %v5473 = vunpack.c.0.s8 %v5472
  %v5474 = vlaneseq
  %v5475 = vshrl.u32 %v5474, 7
  %v5476 = vsub.s32 %v5473, %v5475
  %v5477 = vrot.slane %v5463, %v5476
  %v5478 = vcombine.low %v5470, %v5477
  %v5479 = vcombine.low %v5182, %v5183
  %v5480 = vcombine.low %v5184, %v5185
  %v5482 = vunpack.c.l.s4 1983009808
  %v5483 = vunpack.c.0.s8 %v5482
  %v5484 = vlaneseq
  %v5485 = vshrl.u32 %v5484, 7
  %v5486 = vsub.s32 %v5483, %v5485
  %v5487 = vrot.slane %v5479, %v5486
  %v5489 = vunpack.c.l.s4 1983009808
  %v5490 = vunpack.c.0.s8 %v5489
  %v5491 = vlaneseq
  %v5492 = vshrl.u32 %v5491, 7
  %v5493 = vsub.s32 %v5490, %v5492
  %v5494 = vrot.slane %v5480, %v5493
  %v5495 = vcombine.low %v5487, %v5494
  %v5496 = vcombine.low %v5186, %v5187
  %v5497 = vcombine.low %v5188, %v5189
  %v5499 = vunpack.c.l.s4 1983009808
  %v5500 = vunpack.c.0.s8 %v5499
  %v5501 = vlaneseq
  %v5502 = vshrl.u32 %v5501, 7
  %v5503 = vsub.s32 %v5500, %v5502
  %v5504 = vrot.slane %v5496, %v5503
  %v5506 = vunpack.c.l.s4 1983009808
  %v5507 = vunpack.c.0.s8 %v5506
  %v5508 = vlaneseq
  %v5509 = vshrl.u32 %v5508, 7
  %v5510 = vsub.s32 %v5507, %v5509
  %v5511 = vrot.slane %v5497, %v5510
  %v5512 = vcombine.low %v5504, %v5511
  %v5513 = vcombine.low %v5190, %v5191
  %v5514 = vcombine.low %v5192, %v5193
  %v5516 = vunpack.c.l.s4 1983009808
  %v5517 = vunpack.c.0.s8 %v5516
  %v5518 = vlaneseq
  %v5519 = vshrl.u32 %v5518, 7
  %v5520 = vsub.s32 %v5517, %v5519
  %v5521 = vrot.slane %v5513, %v5520
  %v5523 = vunpack.c.l.s4 1983009808
  %v5524 = vunpack.c.0.s8 %v5523
  %v5525 = vlaneseq
  %v5526 = vshrl.u32 %v5525, 7
  %v5527 = vsub.s32 %v5524, %v5526
  %v5528 = vrot.slane %v5514, %v5527
  %v5529 = vcombine.low %v5521, %v5528
  %v5546 = vpack.c.bf16 %v5291, %v5274
  %v5547 = vpack.c.bf16 %v5325, %v5308
  %v5548 = vpack.c.bf16 %v5359, %v5342
  %v5549 = vpack.c.bf16 %v5393, %v5376
  %v5550 = vpack.c.bf16 %v5427, %v5410
  %v5551 = vpack.c.bf16 %v5461, %v5444
  %v5552 = vpack.c.bf16 %v5495, %v5478
  %v5553 = vpack.c.bf16 %v5529, %v5512
  %s5554 = scalar_lea.vmem %s2, 192
  %v5555 = vld [vmem:[%s5554] sm:$0xf]
  %v5556 = vld [vmem:[%s5554 + $0x4] sm:$0xf]
  %v5557 = vld [vmem:[%s5554 + $0x8] sm:$0xf]
  %v5558 = vld [vmem:[%s5554 + $0xc] sm:$0xf]
  %v5559 = vld [vmem:[%s5554 + $0x10] sm:$0xf]
  %v5560 = vld [vmem:[%s5554 + $0x14] sm:$0xf]
  %v5561 = vld [vmem:[%s5554 + $0x18] sm:$0xf]
  %v5562 = vld [vmem:[%s5554 + $0x1c] sm:$0xf]
  %v5563 = vld [vmem:[%s5554 + $0x20] sm:$0xf]
  %v5564 = vld [vmem:[%s5554 + $0x24] sm:$0xf]
  %v5565 = vld [vmem:[%s5554 + $0x28] sm:$0xf]
  %v5566 = vld [vmem:[%s5554 + $0x2c] sm:$0xf]
  %v5567 = vld [vmem:[%s5554 + $0x30] sm:$0xf]
  %v5568 = vld [vmem:[%s5554 + $0x34] sm:$0xf]
  %v5569 = vld [vmem:[%s5554 + $0x38] sm:$0xf]
  %v5570 = vld [vmem:[%s5554 + $0x3c] sm:$0xf]
  %v5587 = vunpack.c.l.b16 %v5555
  %v5588 = vunpack.c.l.b16 %v5556
  %v5589 = vunpack.c.l.b16 %v5557
  %v5590 = vunpack.c.l.b16 %v5558
  %v5591 = vunpack.c.l.b16 %v5559
  %v5592 = vunpack.c.l.b16 %v5560
  %v5593 = vunpack.c.l.b16 %v5561
  %v5594 = vunpack.c.l.b16 %v5562
  %v5595 = vunpack.c.l.b16 %v5563
  %v5596 = vunpack.c.l.b16 %v5564
  %v5597 = vunpack.c.l.b16 %v5565
  %v5598 = vunpack.c.l.b16 %v5566
  %v5599 = vunpack.c.l.b16 %v5567
  %v5600 = vunpack.c.l.b16 %v5568
  %v5601 = vunpack.c.l.b16 %v5569
  %v5602 = vunpack.c.l.b16 %v5570
  %v5603 = vpack.c.b16 %v5588, %v5587
  %v5604 = vpack.c.b16 %v5590, %v5589
  %v5605 = vpack.c.b16 %v5592, %v5591
  %v5606 = vpack.c.b16 %v5594, %v5593
  %v5607 = vpack.c.b16 %v5596, %v5595
  %v5608 = vpack.c.b16 %v5598, %v5597
  %v5609 = vpack.c.b16 %v5600, %v5599
  %v5610 = vpack.c.b16 %v5602, %v5601
  %5619 = vmatprep.subr.bf16.mxu0 0
  %5620 = vmatpush1.bf16.msra.mxu0 %v5603
  %5621 = vmatprep.subr.bf16.mxu0 0
  %5622 = vmatpush1.bf16.msra.mxu0 %v5604
  %5623 = vmatprep.subr.bf16.mxu0 0
  %5624 = vmatpush1.bf16.msra.mxu0 %v5605
  %5625 = vmatprep.subr.bf16.mxu0 0
  %5626 = vmatpush1.bf16.msra.mxu0 %v5606
  %5627 = vmatprep.subr.bf16.mxu0 0
  %5628 = vmatpush1.bf16.msra.mxu0 %v5607
  %5629 = vmatprep.subr.bf16.mxu0 0
  %5630 = vmatpush1.bf16.msra.mxu0 %v5608
  %5631 = vmatprep.subr.bf16.mxu0 0
  %5632 = vmatpush1.bf16.msra.mxu0 %v5609
  %5633 = vmatprep.subr.bf16.mxu0 0
  %5634 = vmatpush1.bf16.msra.mxu0 %v5610
  %5635 = vmatprep.subr.bf16.mxu0 0
  %5636 = vmatpush1.bf16.msra.mxu0 0
  %5637 = vmatprep.subr.bf16.mxu0 0
  %5638 = vmatpush1.bf16.msra.mxu0 0
  %5639 = vmatprep.subr.bf16.mxu0 0
  %5640 = vmatpush1.bf16.msra.mxu0 0
  %5641 = vmatprep.subr.bf16.mxu0 0
  %5642 = vmatpush1.bf16.msra.mxu0 0
  %5643 = vmatprep.subr.bf16.mxu0 0
  %5644 = vmatpush1.bf16.msra.mxu0 0
  %5645 = vmatprep.subr.bf16.mxu0 0
  %5646 = vmatpush1.bf16.msra.mxu0 0
  %5647 = vmatprep.subr.bf16.mxu0 0
  %5648 = vmatpush1.bf16.msra.mxu0 0
  %5649 = vmatprep.subr.bf16.mxu0 0
  %5650 = vmatpush1.bf16.msra.mxu0 0
  %5651 = vmatprep.mubr.bf16.mxu0 0
  %5652 = vmatmul.mubr.bf16.gmra.mrb[0].mxu0 %v5546
  %v5653 = vpop.f32.mrb[0].mxu0
  %v5654 = vadd.f32 0.0, %v5653
  %v5655 = vpop.f32.mrb[0].mxu0
  %v5656 = vpop.f32.mrb[0].mxu0
  %v5657 = vadd.f32 0.0, %v5656
  %v5658 = vpop.f32.mrb[0].mxu0
  %5659 = vmatprep.mubr.bf16.mxu0 0
  %5660 = vmatmul.mubr.bf16.gmra.mrb[0].mxu0 %v5547
  %v5661 = vpop.f32.mrb[0].mxu0
  %v5662 = vadd.f32 0.0, %v5661
  %v5663 = vpop.f32.mrb[0].mxu0
  %v5664 = vpop.f32.mrb[0].mxu0
  %v5665 = vadd.f32 0.0, %v5664
  %v5666 = vpop.f32.mrb[0].mxu0
  %5667 = vmatprep.mubr.bf16.mxu0 0
  %5668 = vmatmul.mubr.bf16.gmra.mrb[0].mxu0 %v5548
  %v5669 = vpop.f32.mrb[0].mxu0
  %v5670 = vadd.f32 0.0, %v5669
  %v5671 = vpop.f32.mrb[0].mxu0
  %v5672 = vpop.f32.mrb[0].mxu0
  %v5673 = vadd.f32 0.0, %v5672
  %v5674 = vpop.f32.mrb[0].mxu0
  %5675 = vmatprep.mubr.bf16.mxu0 0
  %5676 = vmatmul.mubr.bf16.gmra.mrb[0].mxu0 %v5549
  %v5677 = vpop.f32.mrb[0].mxu0
  %v5678 = vadd.f32 0.0, %v5677
  %v5679 = vpop.f32.mrb[0].mxu0
  %v5680 = vpop.f32.mrb[0].mxu0
  %v5681 = vadd.f32 0.0, %v5680
  %v5682 = vpop.f32.mrb[0].mxu0
  %5683 = vmatprep.mubr.bf16.mxu0 0
  %5684 = vmatmul.mubr.bf16.gmra.mrb[0].mxu0 %v5550
  %v5685 = vpop.f32.mrb[0].mxu0
  %v5686 = vadd.f32 0.0, %v5685
  %v5687 = vpop.f32.mrb[0].mxu0
  %v5688 = vpop.f32.mrb[0].mxu0
  %v5689 = vadd.f32 0.0, %v5688
  %v5690 = vpop.f32.mrb[0].mxu0
  %5691 = vmatprep.mubr.bf16.mxu0 0
  %5692 = vmatmul.mubr.bf16.gmra.mrb[0].mxu0 %v5551
  %v5693 = vpop.f32.mrb[0].mxu0
  %v5694 = vadd.f32 0.0, %v5693
  %v5695 = vpop.f32.mrb[0].mxu0
  %v5696 = vpop.f32.mrb[0].mxu0
  %v5697 = vadd.f32 0.0, %v5696
  %v5698 = vpop.f32.mrb[0].mxu0
  %5699 = vmatprep.mubr.bf16.mxu0 0
  %5700 = vmatmul.mubr.bf16.gmra.mrb[0].mxu0 %v5552
  %v5701 = vpop.f32.mrb[0].mxu0
  %v5702 = vadd.f32 0.0, %v5701
  %v5703 = vpop.f32.mrb[0].mxu0
  %v5704 = vpop.f32.mrb[0].mxu0
  %v5705 = vadd.f32 0.0, %v5704
  %v5706 = vpop.f32.mrb[0].mxu0
  %5707 = vmatprep.mubr.bf16.mxu0 0
  %5708 = vmatmul.mubr.bf16.gmra.mrb[0].mxu0 %v5553
  %v5709 = vpop.f32.mrb[0].mxu0
  %v5710 = vadd.f32 0.0, %v5709
  %v5711 = vpop.f32.mrb[0].mxu0
  %v5712 = vpop.f32.mrb[0].mxu0
  %v5713 = vadd.f32 0.0, %v5712
  %v5714 = vpop.f32.mrb[0].mxu0
  %5715 = vdwg.mxu0
  %v5716 = vadd.f32 %v5113, %v5654
  %v5717 = vadd.f32 %v5114, %v5657
  %v5718 = vadd.f32 %v5115, %v5662
  %v5719 = vadd.f32 %v5116, %v5665
  %v5720 = vadd.f32 %v5117, %v5670
  %v5721 = vadd.f32 %v5118, %v5673
  %v5722 = vadd.f32 %v5119, %v5678
  %v5723 = vadd.f32 %v5120, %v5681
  %v5724 = vadd.f32 %v5121, %v5686
  %v5725 = vadd.f32 %v5122, %v5689
  %v5726 = vadd.f32 %v5123, %v5694
  %v5727 = vadd.f32 %v5124, %v5697
  %v5728 = vadd.f32 %v5125, %v5702
  %v5729 = vadd.f32 %v5126, %v5705
  %v5730 = vadd.f32 %v5127, %v5710
  %v5731 = vadd.f32 %v5128, %v5713
  %s5732 = scalar_lea.vmem [#allocation2], 36
  %v5733 = vld [vmem:[%s5732] sm:$0x3]
  %v5734 = vld [vmem:[%s5732 + $0x4] sm:$0x3]
  %v5735 = vld [vmem:[%s5732 + $0x8] sm:$0x3]
  %v5736 = vld [vmem:[%s5732 + $0xc] sm:$0x3]
  %v5737 = vld [vmem:[%s5732 + $0x10] sm:$0x3]
  %v5738 = vld [vmem:[%s5732 + $0x14] sm:$0x3]
  %v5739 = vld [vmem:[%s5732 + $0x18] sm:$0x3]
  %v5740 = vld [vmem:[%s5732 + $0x1c] sm:$0x3]
  %v5741 = vld [vmem:[%s5732 + $0x44] sm:$0x3]
  %v5742 = vld [vmem:[%s5732 + $0x48] sm:$0x3]
  %v5743 = vld [vmem:[%s5732 + $0x4c] sm:$0x3]
  %v5744 = vld [vmem:[%s5732 + $0x50] sm:$0x3]
  %v5745 = vld [vmem:[%s5732 + $0x54] sm:$0x3]
  %v5746 = vld [vmem:[%s5732 + $0x58] sm:$0x3]
  %v5747 = vld [vmem:[%s5732 + $0x5c] sm:$0x3]
  %v5748 = vld [vmem:[%s5732 + $0x60] sm:$0x3]
  %v5749 = vld [vmem:[%s5732 + $0x88] sm:$0x3]
  %v5750 = vld [vmem:[%s5732 + $0x8c] sm:$0x3]
  %v5751 = vld [vmem:[%s5732 + $0x90] sm:$0x3]
  %v5752 = vld [vmem:[%s5732 + $0x94] sm:$0x3]
  %v5753 = vld [vmem:[%s5732 + $0x98] sm:$0x3]
  %v5754 = vld [vmem:[%s5732 + $0x9c] sm:$0x3]
  %v5755 = vld [vmem:[%s5732 + $0xa0] sm:$0x3]
  %v5756 = vld [vmem:[%s5732 + $0xa4] sm:$0x3]
  %v5757 = vld [vmem:[%s5732 + $0xcc] sm:$0x3]
  %v5758 = vld [vmem:[%s5732 + $0xd0] sm:$0x3]
  %v5759 = vld [vmem:[%s5732 + $0xd4] sm:$0x3]
  %v5760 = vld [vmem:[%s5732 + $0xd8] sm:$0x3]
  %v5761 = vld [vmem:[%s5732 + $0xdc] sm:$0x3]
  %v5762 = vld [vmem:[%s5732 + $0xe0] sm:$0x3]
  %v5763 = vld [vmem:[%s5732 + $0xe4] sm:$0x3]
  %v5764 = vld [vmem:[%s5732 + $0xe8] sm:$0x3]
  %v5765 = vld [vmem:[%s5732 + $0x110] sm:$0x3]
  %v5766 = vld [vmem:[%s5732 + $0x114] sm:$0x3]
  %v5767 = vld [vmem:[%s5732 + $0x118] sm:$0x3]
  %v5768 = vld [vmem:[%s5732 + $0x11c] sm:$0x3]
  %v5769 = vld [vmem:[%s5732 + $0x120] sm:$0x3]
  %v5770 = vld [vmem:[%s5732 + $0x124] sm:$0x3]
  %v5771 = vld [vmem:[%s5732 + $0x128] sm:$0x3]
  %v5772 = vld [vmem:[%s5732 + $0x12c] sm:$0x3]
  %v5773 = vld [vmem:[%s5732 + $0x154] sm:$0x3]
  %v5774 = vld [vmem:[%s5732 + $0x158] sm:$0x3]
  %v5775 = vld [vmem:[%s5732 + $0x15c] sm:$0x3]
  %v5776 = vld [vmem:[%s5732 + $0x160] sm:$0x3]
  %v5777 = vld [vmem:[%s5732 + $0x164] sm:$0x3]
  %v5778 = vld [vmem:[%s5732 + $0x168] sm:$0x3]
  %v5779 = vld [vmem:[%s5732 + $0x16c] sm:$0x3]
  %v5780 = vld [vmem:[%s5732 + $0x170] sm:$0x3]
  %v5781 = vld [vmem:[%s5732 + $0x198] sm:$0x3]
  %v5782 = vld [vmem:[%s5732 + $0x19c] sm:$0x3]
  %v5783 = vld [vmem:[%s5732 + $0x1a0] sm:$0x3]
  %v5784 = vld [vmem:[%s5732 + $0x1a4] sm:$0x3]
  %v5785 = vld [vmem:[%s5732 + $0x1a8] sm:$0x3]
  %v5786 = vld [vmem:[%s5732 + $0x1ac] sm:$0x3]
  %v5787 = vld [vmem:[%s5732 + $0x1b0] sm:$0x3]
  %v5788 = vld [vmem:[%s5732 + $0x1b4] sm:$0x3]
  %v5789 = vld [vmem:[%s5732 + $0x1dc] sm:$0x3]
  %v5790 = vld [vmem:[%s5732 + $0x1e0] sm:$0x3]
  %v5791 = vld [vmem:[%s5732 + $0x1e4] sm:$0x3]
  %v5792 = vld [vmem:[%s5732 + $0x1e8] sm:$0x3]
  %v5793 = vld [vmem:[%s5732 + $0x1ec] sm:$0x3]
  %v5794 = vld [vmem:[%s5732 + $0x1f0] sm:$0x3]
  %v5795 = vld [vmem:[%s5732 + $0x1f4] sm:$0x3]
  %v5796 = vld [vmem:[%s5732 + $0x1f8] sm:$0x3]
  %v5861 = vcombine.low %v5733, %v5734
  %v5862 = vcombine.low %v5735, %v5736
  %v5864 = vunpack.c.l.s4 1983009808
  %v5865 = vunpack.c.0.s8 %v5864
  %v5866 = vlaneseq
  %v5867 = vshrl.u32 %v5866, 7
  %v5868 = vsub.s32 %v5865, %v5867
  %v5869 = vrot.slane %v5861, %v5868
  %v5871 = vunpack.c.l.s4 1983009808
  %v5872 = vunpack.c.0.s8 %v5871
  %v5873 = vlaneseq
  %v5874 = vshrl.u32 %v5873, 7
  %v5875 = vsub.s32 %v5872, %v5874
  %v5876 = vrot.slane %v5862, %v5875
  %v5877 = vcombine.low %v5869, %v5876
  %v5878 = vcombine.low %v5737, %v5738
  %v5879 = vcombine.low %v5739, %v5740
  %v5881 = vunpack.c.l.s4 1983009808
  %v5882 = vunpack.c.0.s8 %v5881
  %v5883 = vlaneseq
  %v5884 = vshrl.u32 %v5883, 7
  %v5885 = vsub.s32 %v5882, %v5884
  %v5886 = vrot.slane %v5878, %v5885
  %v5888 = vunpack.c.l.s4 1983009808
  %v5889 = vunpack.c.0.s8 %v5888
  %v5890 = vlaneseq
  %v5891 = vshrl.u32 %v5890, 7
  %v5892 = vsub.s32 %v5889, %v5891
  %v5893 = vrot.slane %v5879, %v5892
  %v5894 = vcombine.low %v5886, %v5893
  %v5895 = vcombine.low %v5741, %v5742
  %v5896 = vcombine.low %v5743, %v5744
  %v5898 = vunpack.c.l.s4 1983009808
  %v5899 = vunpack.c.0.s8 %v5898
  %v5900 = vlaneseq
  %v5901 = vshrl.u32 %v5900, 7
  %v5902 = vsub.s32 %v5899, %v5901
  %v5903 = vrot.slane %v5895, %v5902
  %v5905 = vunpack.c.l.s4 1983009808
  %v5906 = vunpack.c.0.s8 %v5905
  %v5907 = vlaneseq
  %v5908 = vshrl.u32 %v5907, 7
  %v5909 = vsub.s32 %v5906, %v5908
  %v5910 = vrot.slane %v5896, %v5909
  %v5911 = vcombine.low %v5903, %v5910
  %v5912 = vcombine.low %v5745, %v5746
  %v5913 = vcombine.low %v5747, %v5748
  %v5915 = vunpack.c.l.s4 1983009808
  %v5916 = vunpack.c.0.s8 %v5915
  %v5917 = vlaneseq
  %v5918 = vshrl.u32 %v5917, 7
  %v5919 = vsub.s32 %v5916, %v5918
  %v5920 = vrot.slane %v5912, %v5919
  %v5922 = vunpack.c.l.s4 1983009808
  %v5923 = vunpack.c.0.s8 %v5922
  %v5924 = vlaneseq
  %v5925 = vshrl.u32 %v5924, 7
  %v5926 = vsub.s32 %v5923, %v5925
  %v5927 = vrot.slane %v5913, %v5926
  %v5928 = vcombine.low %v5920, %v5927
  %v5929 = vcombine.low %v5749, %v5750
  %v5930 = vcombine.low %v5751, %v5752
  %v5932 = vunpack.c.l.s4 1983009808
  %v5933 = vunpack.c.0.s8 %v5932
  %v5934 = vlaneseq
  %v5935 = vshrl.u32 %v5934, 7
  %v5936 = vsub.s32 %v5933, %v5935
  %v5937 = vrot.slane %v5929, %v5936
  %v5939 = vunpack.c.l.s4 1983009808
  %v5940 = vunpack.c.0.s8 %v5939
  %v5941 = vlaneseq
  %v5942 = vshrl.u32 %v5941, 7
  %v5943 = vsub.s32 %v5940, %v5942
  %v5944 = vrot.slane %v5930, %v5943
  %v5945 = vcombine.low %v5937, %v5944
  %v5946 = vcombine.low %v5753, %v5754
  %v5947 = vcombine.low %v5755, %v5756
  %v5949 = vunpack.c.l.s4 1983009808
  %v5950 = vunpack.c.0.s8 %v5949
  %v5951 = vlaneseq
  %v5952 = vshrl.u32 %v5951, 7
  %v5953 = vsub.s32 %v5950, %v5952
  %v5954 = vrot.slane %v5946, %v5953
  %v5956 = vunpack.c.l.s4 1983009808
  %v5957 = vunpack.c.0.s8 %v5956
  %v5958 = vlaneseq
  %v5959 = vshrl.u32 %v5958, 7
  %v5960 = vsub.s32 %v5957, %v5959
  %v5961 = vrot.slane %v5947, %v5960
  %v5962 = vcombine.low %v5954, %v5961
  %v5963 = vcombine.low %v5757, %v5758
  %v5964 = vcombine.low %v5759, %v5760
  %v5966 = vunpack.c.l.s4 1983009808
  %v5967 = vunpack.c.0.s8 %v5966
  %v5968 = vlaneseq
  %v5969 = vshrl.u32 %v5968, 7
  %v5970 = vsub.s32 %v5967, %v5969
  %v5971 = vrot.slane %v5963, %v5970
  %v5973 = vunpack.c.l.s4 1983009808
  %v5974 = vunpack.c.0.s8 %v5973
  %v5975 = vlaneseq
  %v5976 = vshrl.u32 %v5975, 7
  %v5977 = vsub.s32 %v5974, %v5976
  %v5978 = vrot.slane %v5964, %v5977
  %v5979 = vcombine.low %v5971, %v5978
  %v5980 = vcombine.low %v5761, %v5762
  %v5981 = vcombine.low %v5763, %v5764
  %v5983 = vunpack.c.l.s4 1983009808
  %v5984 = vunpack.c.0.s8 %v5983
  %v5985 = vlaneseq
  %v5986 = vshrl.u32 %v5985, 7
  %v5987 = vsub.s32 %v5984, %v5986
  %v5988 = vrot.slane %v5980, %v5987
  %v5990 = vunpack.c.l.s4 1983009808
  %v5991 = vunpack.c.0.s8 %v5990
  %v5992 = vlaneseq
  %v5993 = vshrl.u32 %v5992, 7
  %v5994 = vsub.s32 %v5991, %v5993
  %v5995 = vrot.slane %v5981, %v5994
  %v5996 = vcombine.low %v5988, %v5995
  %v5997 = vcombine.low %v5765, %v5766
  %v5998 = vcombine.low %v5767, %v5768
  %v6000 = vunpack.c.l.s4 1983009808
  %v6001 = vunpack.c.0.s8 %v6000
  %v6002 = vlaneseq
  %v6003 = vshrl.u32 %v6002, 7
  %v6004 = vsub.s32 %v6001, %v6003
  %v6005 = vrot.slane %v5997, %v6004
  %v6007 = vunpack.c.l.s4 1983009808
  %v6008 = vunpack.c.0.s8 %v6007
  %v6009 = vlaneseq
  %v6010 = vshrl.u32 %v6009, 7
  %v6011 = vsub.s32 %v6008, %v6010
  %v6012 = vrot.slane %v5998, %v6011
  %v6013 = vcombine.low %v6005, %v6012
  %v6014 = vcombine.low %v5769, %v5770
  %v6015 = vcombine.low %v5771, %v5772
  %v6017 = vunpack.c.l.s4 1983009808
  %v6018 = vunpack.c.0.s8 %v6017
  %v6019 = vlaneseq
  %v6020 = vshrl.u32 %v6019, 7
  %v6021 = vsub.s32 %v6018, %v6020
  %v6022 = vrot.slane %v6014, %v6021
  %v6024 = vunpack.c.l.s4 1983009808
  %v6025 = vunpack.c.0.s8 %v6024
  %v6026 = vlaneseq
  %v6027 = vshrl.u32 %v6026, 7
  %v6028 = vsub.s32 %v6025, %v6027
  %v6029 = vrot.slane %v6015, %v6028
  %v6030 = vcombine.low %v6022, %v6029
  %v6031 = vcombine.low %v5773, %v5774
  %v6032 = vcombine.low %v5775, %v5776
  %v6034 = vunpack.c.l.s4 1983009808
  %v6035 = vunpack.c.0.s8 %v6034
  %v6036 = vlaneseq
  %v6037 = vshrl.u32 %v6036, 7
  %v6038 = vsub.s32 %v6035, %v6037
  %v6039 = vrot.slane %v6031, %v6038
  %v6041 = vunpack.c.l.s4 1983009808
  %v6042 = vunpack.c.0.s8 %v6041
  %v6043 = vlaneseq
  %v6044 = vshrl.u32 %v6043, 7
  %v6045 = vsub.s32 %v6042, %v6044
  %v6046 = vrot.slane %v6032, %v6045
  %v6047 = vcombine.low %v6039, %v6046
  %v6048 = vcombine.low %v5777, %v5778
  %v6049 = vcombine.low %v5779, %v5780
  %v6051 = vunpack.c.l.s4 1983009808
  %v6052 = vunpack.c.0.s8 %v6051
  %v6053 = vlaneseq
  %v6054 = vshrl.u32 %v6053, 7
  %v6055 = vsub.s32 %v6052, %v6054
  %v6056 = vrot.slane %v6048, %v6055
  %v6058 = vunpack.c.l.s4 1983009808
  %v6059 = vunpack.c.0.s8 %v6058
  %v6060 = vlaneseq
  %v6061 = vshrl.u32 %v6060, 7
  %v6062 = vsub.s32 %v6059, %v6061
  %v6063 = vrot.slane %v6049, %v6062
  %v6064 = vcombine.low %v6056, %v6063
  %v6065 = vcombine.low %v5781, %v5782
  %v6066 = vcombine.low %v5783, %v5784
  %v6068 = vunpack.c.l.s4 1983009808
  %v6069 = vunpack.c.0.s8 %v6068
  %v6070 = vlaneseq
  %v6071 = vshrl.u32 %v6070, 7
  %v6072 = vsub.s32 %v6069, %v6071
  %v6073 = vrot.slane %v6065, %v6072
  %v6075 = vunpack.c.l.s4 1983009808
  %v6076 = vunpack.c.0.s8 %v6075
  %v6077 = vlaneseq
  %v6078 = vshrl.u32 %v6077, 7
  %v6079 = vsub.s32 %v6076, %v6078
  %v6080 = vrot.slane %v6066, %v6079
  %v6081 = vcombine.low %v6073, %v6080
  %v6082 = vcombine.low %v5785, %v5786
  %v6083 = vcombine.low %v5787, %v5788
  %v6085 = vunpack.c.l.s4 1983009808
  %v6086 = vunpack.c.0.s8 %v6085
  %v6087 = vlaneseq
  %v6088 = vshrl.u32 %v6087, 7
  %v6089 = vsub.s32 %v6086, %v6088
  %v6090 = vrot.slane %v6082, %v6089
  %v6092 = vunpack.c.l.s4 1983009808
  %v6093 = vunpack.c.0.s8 %v6092
  %v6094 = vlaneseq
  %v6095 = vshrl.u32 %v6094, 7
  %v6096 = vsub.s32 %v6093, %v6095
  %v6097 = vrot.slane %v6083, %v6096
  %v6098 = vcombine.low %v6090, %v6097
  %v6099 = vcombine.low %v5789, %v5790
  %v6100 = vcombine.low %v5791, %v5792
  %v6102 = vunpack.c.l.s4 1983009808
  %v6103 = vunpack.c.0.s8 %v6102
  %v6104 = vlaneseq
  %v6105 = vshrl.u32 %v6104, 7
  %v6106 = vsub.s32 %v6103, %v6105
  %v6107 = vrot.slane %v6099, %v6106
  %v6109 = vunpack.c.l.s4 1983009808
  %v6110 = vunpack.c.0.s8 %v6109
  %v6111 = vlaneseq
  %v6112 = vshrl.u32 %v6111, 7
  %v6113 = vsub.s32 %v6110, %v6112
  %v6114 = vrot.slane %v6100, %v6113
  %v6115 = vcombine.low %v6107, %v6114
  %v6116 = vcombine.low %v5793, %v5794
  %v6117 = vcombine.low %v5795, %v5796
  %v6119 = vunpack.c.l.s4 1983009808
  %v6120 = vunpack.c.0.s8 %v6119
  %v6121 = vlaneseq
  %v6122 = vshrl.u32 %v6121, 7
  %v6123 = vsub.s32 %v6120, %v6122
  %v6124 = vrot.slane %v6116, %v6123
  %v6126 = vunpack.c.l.s4 1983009808
  %v6127 = vunpack.c.0.s8 %v6126
  %v6128 = vlaneseq
  %v6129 = vshrl.u32 %v6128, 7
  %v6130 = vsub.s32 %v6127, %v6129
  %v6131 = vrot.slane %v6117, %v6130
  %v6132 = vcombine.low %v6124, %v6131
  %v6149 = vpack.c.bf16 %v5894, %v5877
  %v6150 = vpack.c.bf16 %v5928, %v5911
  %v6151 = vpack.c.bf16 %v5962, %v5945
  %v6152 = vpack.c.bf16 %v5996, %v5979
  %v6153 = vpack.c.bf16 %v6030, %v6013
  %v6154 = vpack.c.bf16 %v6064, %v6047
  %v6155 = vpack.c.bf16 %v6098, %v6081
  %v6156 = vpack.c.bf16 %v6132, %v6115
  %s6157 = scalar_lea.vmem %s2, 256
  %v6158 = vld [vmem:[%s6157] sm:$0xf]
  %v6159 = vld [vmem:[%s6157 + $0x4] sm:$0xf]
  %v6160 = vld [vmem:[%s6157 + $0x8] sm:$0xf]
  %v6161 = vld [vmem:[%s6157 + $0xc] sm:$0xf]
  %v6162 = vld [vmem:[%s6157 + $0x10] sm:$0xf]
  %v6163 = vld [vmem:[%s6157 + $0x14] sm:$0xf]
  %v6164 = vld [vmem:[%s6157 + $0x18] sm:$0xf]
  %v6165 = vld [vmem:[%s6157 + $0x1c] sm:$0xf]
  %v6166 = vld [vmem:[%s6157 + $0x20] sm:$0xf]
  %v6167 = vld [vmem:[%s6157 + $0x24] sm:$0xf]
  %v6168 = vld [vmem:[%s6157 + $0x28] sm:$0xf]
  %v6169 = vld [vmem:[%s6157 + $0x2c] sm:$0xf]
  %v6170 = vld [vmem:[%s6157 + $0x30] sm:$0xf]
  %v6171 = vld [vmem:[%s6157 + $0x34] sm:$0xf]
  %v6172 = vld [vmem:[%s6157 + $0x38] sm:$0xf]
  %v6173 = vld [vmem:[%s6157 + $0x3c] sm:$0xf]
  %v6190 = vunpack.c.l.b16 %v6158
  %v6191 = vunpack.c.l.b16 %v6159
  %v6192 = vunpack.c.l.b16 %v6160
  %v6193 = vunpack.c.l.b16 %v6161
  %v6194 = vunpack.c.l.b16 %v6162
  %v6195 = vunpack.c.l.b16 %v6163
  %v6196 = vunpack.c.l.b16 %v6164
  %v6197 = vunpack.c.l.b16 %v6165
  %v6198 = vunpack.c.l.b16 %v6166
  %v6199 = vunpack.c.l.b16 %v6167
  %v6200 = vunpack.c.l.b16 %v6168
  %v6201 = vunpack.c.l.b16 %v6169
  %v6202 = vunpack.c.l.b16 %v6170
  %v6203 = vunpack.c.l.b16 %v6171
  %v6204 = vunpack.c.l.b16 %v6172
  %v6205 = vunpack.c.l.b16 %v6173
  %v6206 = vpack.c.b16 %v6191, %v6190
  %v6207 = vpack.c.b16 %v6193, %v6192
  %v6208 = vpack.c.b16 %v6195, %v6194
  %v6209 = vpack.c.b16 %v6197, %v6196
  %v6210 = vpack.c.b16 %v6199, %v6198
  %v6211 = vpack.c.b16 %v6201, %v6200
  %v6212 = vpack.c.b16 %v6203, %v6202
  %v6213 = vpack.c.b16 %v6205, %v6204
  %6222 = vmatprep.subr.bf16.mxu0 0
  %6223 = vmatpush1.bf16.msra.mxu0 %v6206
  %6224 = vmatprep.subr.bf16.mxu0 0
  %6225 = vmatpush1.bf16.msra.mxu0 %v6207
  %6226 = vmatprep.subr.bf16.mxu0 0
  %6227 = vmatpush1.bf16.msra.mxu0 %v6208
  %6228 = vmatprep.subr.bf16.mxu0 0
  %6229 = vmatpush1.bf16.msra.mxu0 %v6209
  %6230 = vmatprep.subr.bf16.mxu0 0
  %6231 = vmatpush1.bf16.msra.mxu0 %v6210
  %6232 = vmatprep.subr.bf16.mxu0 0
  %6233 = vmatpush1.bf16.msra.mxu0 %v6211
  %6234 = vmatprep.subr.bf16.mxu0 0
  %6235 = vmatpush1.bf16.msra.mxu0 %v6212
  %6236 = vmatprep.subr.bf16.mxu0 0
  %6237 = vmatpush1.bf16.msra.mxu0 %v6213
  %6238 = vmatprep.subr.bf16.mxu0 0
  %6239 = vmatpush1.bf16.msra.mxu0 0
  %6240 = vmatprep.subr.bf16.mxu0 0
  %6241 = vmatpush1.bf16.msra.mxu0 0
  %6242 = vmatprep.subr.bf16.mxu0 0
  %6243 = vmatpush1.bf16.msra.mxu0 0
  %6244 = vmatprep.subr.bf16.mxu0 0
  %6245 = vmatpush1.bf16.msra.mxu0 0
  %6246 = vmatprep.subr.bf16.mxu0 0
  %6247 = vmatpush1.bf16.msra.mxu0 0
  %6248 = vmatprep.subr.bf16.mxu0 0
  %6249 = vmatpush1.bf16.msra.mxu0 0
  %6250 = vmatprep.subr.bf16.mxu0 0
  %6251 = vmatpush1.bf16.msra.mxu0 0
  %6252 = vmatprep.subr.bf16.mxu0 0
  %6253 = vmatpush1.bf16.msra.mxu0 0
  %6254 = vmatprep.mubr.bf16.mxu0 0
  %6255 = vmatmul.mubr.bf16.gmra.mrb[0].mxu0 %v6149
  %v6256 = vpop.f32.mrb[0].mxu0
  %v6257 = vadd.f32 0.0, %v6256
  %v6258 = vpop.f32.mrb[0].mxu0
  %v6259 = vpop.f32.mrb[0].mxu0
  %v6260 = vadd.f32 0.0, %v6259
  %v6261 = vpop.f32.mrb[0].mxu0
  %6262 = vmatprep.mubr.bf16.mxu0 0
  %6263 = vmatmul.mubr.bf16.gmra.mrb[0].mxu0 %v6150
  %v6264 = vpop.f32.mrb[0].mxu0
  %v6265 = vadd.f32 0.0, %v6264
  %v6266 = vpop.f32.mrb[0].mxu0
  %v6267 = vpop.f32.mrb[0].mxu0
  %v6268 = vadd.f32 0.0, %v6267
  %v6269 = vpop.f32.mrb[0].mxu0
  %6270 = vmatprep.mubr.bf16.mxu0 0
  %6271 = vmatmul.mubr.bf16.gmra.mrb[0].mxu0 %v6151
  %v6272 = vpop.f32.mrb[0].mxu0
  %v6273 = vadd.f32 0.0, %v6272
  %v6274 = vpop.f32.mrb[0].mxu0
  %v6275 = vpop.f32.mrb[0].mxu0
  %v6276 = vadd.f32 0.0, %v6275
  %v6277 = vpop.f32.mrb[0].mxu0
  %6278 = vmatprep.mubr.bf16.mxu0 0
  %6279 = vmatmul.mubr.bf16.gmra.mrb[0].mxu0 %v6152
  %v6280 = vpop.f32.mrb[0].mxu0
  %v6281 = vadd.f32 0.0, %v6280
  %v6282 = vpop.f32.mrb[0].mxu0
  %v6283 = vpop.f32.mrb[0].mxu0
  %v6284 = vadd.f32 0.0, %v6283
  %v6285 = vpop.f32.mrb[0].mxu0
  %6286 = vmatprep.mubr.bf16.mxu0 0
  %6287 = vmatmul.mubr.bf16.gmra.mrb[0].mxu0 %v6153
  %v6288 = vpop.f32.mrb[0].mxu0
  %v6289 = vadd.f32 0.0, %v6288
  %v6290 = vpop.f32.mrb[0].mxu0
  %v6291 = vpop.f32.mrb[0].mxu0
  %v6292 = vadd.f32 0.0, %v6291
  %v6293 = vpop.f32.mrb[0].mxu0
  %6294 = vmatprep.mubr.bf16.mxu0 0
  %6295 = vmatmul.mubr.bf16.gmra.mrb[0].mxu0 %v6154
  %v6296 = vpop.f32.mrb[0].mxu0
  %v6297 = vadd.f32 0.0, %v6296
  %v6298 = vpop.f32.mrb[0].mxu0
  %v6299 = vpop.f32.mrb[0].mxu0
  %v6300 = vadd.f32 0.0, %v6299
  %v6301 = vpop.f32.mrb[0].mxu0
  %6302 = vmatprep.mubr.bf16.mxu0 0
  %6303 = vmatmul.mubr.bf16.gmra.mrb[0].mxu0 %v6155
  %v6304 = vpop.f32.mrb[0].mxu0
  %v6305 = vadd.f32 0.0, %v6304
  %v6306 = vpop.f32.mrb[0].mxu0
  %v6307 = vpop.f32.mrb[0].mxu0
  %v6308 = vadd.f32 0.0, %v6307
  %v6309 = vpop.f32.mrb[0].mxu0
  %6310 = vmatprep.mubr.bf16.mxu0 0
  %6311 = vmatmul.mubr.bf16.gmra.mrb[0].mxu0 %v6156
  %v6312 = vpop.f32.mrb[0].mxu0
  %v6313 = vadd.f32 0.0, %v6312
  %v6314 = vpop.f32.mrb[0].mxu0
  %v6315 = vpop.f32.mrb[0].mxu0
  %v6316 = vadd.f32 0.0, %v6315
  %v6317 = vpop.f32.mrb[0].mxu0
  %6318 = vdwg.mxu0
  %v6319 = vadd.f32 %v5716, %v6257
  %v6320 = vadd.f32 %v5717, %v6260
  %v6321 = vadd.f32 %v5718, %v6265
  %v6322 = vadd.f32 %v5719, %v6268
  %v6323 = vadd.f32 %v5720, %v6273
  %v6324 = vadd.f32 %v5721, %v6276
  %v6325 = vadd.f32 %v5722, %v6281
  %v6326 = vadd.f32 %v5723, %v6284
  %v6327 = vadd.f32 %v5724, %v6289
  %v6328 = vadd.f32 %v5725, %v6292
  %v6329 = vadd.f32 %v5726, %v6297
  %v6330 = vadd.f32 %v5727, %v6300
  %v6331 = vadd.f32 %v5728, %v6305
  %v6332 = vadd.f32 %v5729, %v6308
  %v6333 = vadd.f32 %v5730, %v6313
  %v6334 = vadd.f32 %v5731, %v6316
  %s6335 = scalar_lea.vmem [#allocation2], 38
  %v6336 = vld [vmem:[%s6335] sm:$0x3]
  %v6337 = vld [vmem:[%s6335 + $0x4] sm:$0x3]
  %v6338 = vld [vmem:[%s6335 + $0x8] sm:$0x3]
  %v6339 = vld [vmem:[%s6335 + $0xc] sm:$0x3]
  %v6340 = vld [vmem:[%s6335 + $0x10] sm:$0x3]
  %v6341 = vld [vmem:[%s6335 + $0x14] sm:$0x3]
  %v6342 = vld [vmem:[%s6335 + $0x18] sm:$0x3]
  %v6343 = vld [vmem:[%s6335 + $0x1c] sm:$0x3]
  %v6344 = vld [vmem:[%s6335 + $0x44] sm:$0x3]
  %v6345 = vld [vmem:[%s6335 + $0x48] sm:$0x3]
  %v6346 = vld [vmem:[%s6335 + $0x4c] sm:$0x3]
  %v6347 = vld [vmem:[%s6335 + $0x50] sm:$0x3]
  %v6348 = vld [vmem:[%s6335 + $0x54] sm:$0x3]
  %v6349 = vld [vmem:[%s6335 + $0x58] sm:$0x3]
  %v6350 = vld [vmem:[%s6335 + $0x5c] sm:$0x3]
  %v6351 = vld [vmem:[%s6335 + $0x60] sm:$0x3]
  %v6352 = vld [vmem:[%s6335 + $0x88] sm:$0x3]
  %v6353 = vld [vmem:[%s6335 + $0x8c] sm:$0x3]
  %v6354 = vld [vmem:[%s6335 + $0x90] sm:$0x3]
  %v6355 = vld [vmem:[%s6335 + $0x94] sm:$0x3]
  %v6356 = vld [vmem:[%s6335 + $0x98] sm:$0x3]
  %v6357 = vld [vmem:[%s6335 + $0x9c] sm:$0x3]
  %v6358 = vld [vmem:[%s6335 + $0xa0] sm:$0x3]
  %v6359 = vld [vmem:[%s6335 + $0xa4] sm:$0x3]
  %v6360 = vld [vmem:[%s6335 + $0xcc] sm:$0x3]
  %v6361 = vld [vmem:[%s6335 + $0xd0] sm:$0x3]
  %v6362 = vld [vmem:[%s6335 + $0xd4] sm:$0x3]
  %v6363 = vld [vmem:[%s6335 + $0xd8] sm:$0x3]
  %v6364 = vld [vmem:[%s6335 + $0xdc] sm:$0x3]
  %v6365 = vld [vmem:[%s6335 + $0xe0] sm:$0x3]
  %v6366 = vld [vmem:[%s6335 + $0xe4] sm:$0x3]
  %v6367 = vld [vmem:[%s6335 + $0xe8] sm:$0x3]
  %v6368 = vld [vmem:[%s6335 + $0x110] sm:$0x3]
  %v6369 = vld [vmem:[%s6335 + $0x114] sm:$0x3]
  %v6370 = vld [vmem:[%s6335 + $0x118] sm:$0x3]
  %v6371 = vld [vmem:[%s6335 + $0x11c] sm:$0x3]
  %v6372 = vld [vmem:[%s6335 + $0x120] sm:$0x3]
  %v6373 = vld [vmem:[%s6335 + $0x124] sm:$0x3]
  %v6374 = vld [vmem:[%s6335 + $0x128] sm:$0x3]
  %v6375 = vld [vmem:[%s6335 + $0x12c] sm:$0x3]
  %v6376 = vld [vmem:[%s6335 + $0x154] sm:$0x3]
  %v6377 = vld [vmem:[%s6335 + $0x158] sm:$0x3]
  %v6378 = vld [vmem:[%s6335 + $0x15c] sm:$0x3]
  %v6379 = vld [vmem:[%s6335 + $0x160] sm:$0x3]
  %v6380 = vld [vmem:[%s6335 + $0x164] sm:$0x3]
  %v6381 = vld [vmem:[%s6335 + $0x168] sm:$0x3]
  %v6382 = vld [vmem:[%s6335 + $0x16c] sm:$0x3]
  %v6383 = vld [vmem:[%s6335 + $0x170] sm:$0x3]
  %v6384 = vld [vmem:[%s6335 + $0x198] sm:$0x3]
  %v6385 = vld [vmem:[%s6335 + $0x19c] sm:$0x3]
  %v6386 = vld [vmem:[%s6335 + $0x1a0] sm:$0x3]
  %v6387 = vld [vmem:[%s6335 + $0x1a4] sm:$0x3]
  %v6388 = vld [vmem:[%s6335 + $0x1a8] sm:$0x3]
  %v6389 = vld [vmem:[%s6335 + $0x1ac] sm:$0x3]
  %v6390 = vld [vmem:[%s6335 + $0x1b0] sm:$0x3]
  %v6391 = vld [vmem:[%s6335 + $0x1b4] sm:$0x3]
  %v6392 = vld [vmem:[%s6335 + $0x1dc] sm:$0x3]
  %v6393 = vld [vmem:[%s6335 + $0x1e0] sm:$0x3]
  %v6394 = vld [vmem:[%s6335 + $0x1e4] sm:$0x3]
  %v6395 = vld [vmem:[%s6335 + $0x1e8] sm:$0x3]
  %v6396 = vld [vmem:[%s6335 + $0x1ec] sm:$0x3]
  %v6397 = vld [vmem:[%s6335 + $0x1f0] sm:$0x3]
  %v6398 = vld [vmem:[%s6335 + $0x1f4] sm:$0x3]
  %v6399 = vld [vmem:[%s6335 + $0x1f8] sm:$0x3]
  %v6464 = vcombine.low %v6336, %v6337
  %v6465 = vcombine.low %v6338, %v6339
  %v6467 = vunpack.c.l.s4 1983009808
  %v6468 = vunpack.c.0.s8 %v6467
  %v6469 = vlaneseq
  %v6470 = vshrl.u32 %v6469, 7
  %v6471 = vsub.s32 %v6468, %v6470
  %v6472 = vrot.slane %v6464, %v6471
  %v6474 = vunpack.c.l.s4 1983009808
  %v6475 = vunpack.c.0.s8 %v6474
  %v6476 = vlaneseq
  %v6477 = vshrl.u32 %v6476, 7
  %v6478 = vsub.s32 %v6475, %v6477
  %v6479 = vrot.slane %v6465, %v6478
  %v6480 = vcombine.low %v6472, %v6479
  %v6481 = vcombine.low %v6340, %v6341
  %v6482 = vcombine.low %v6342, %v6343
  %v6484 = vunpack.c.l.s4 1983009808
  %v6485 = vunpack.c.0.s8 %v6484
  %v6486 = vlaneseq
  %v6487 = vshrl.u32 %v6486, 7
  %v6488 = vsub.s32 %v6485, %v6487
  %v6489 = vrot.slane %v6481, %v6488
  %v6491 = vunpack.c.l.s4 1983009808
  %v6492 = vunpack.c.0.s8 %v6491
  %v6493 = vlaneseq
  %v6494 = vshrl.u32 %v6493, 7
  %v6495 = vsub.s32 %v6492, %v6494
  %v6496 = vrot.slane %v6482, %v6495
  %v6497 = vcombine.low %v6489, %v6496
  %v6498 = vcombine.low %v6344, %v6345
  %v6499 = vcombine.low %v6346, %v6347
  %v6501 = vunpack.c.l.s4 1983009808
  %v6502 = vunpack.c.0.s8 %v6501
  %v6503 = vlaneseq
  %v6504 = vshrl.u32 %v6503, 7
  %v6505 = vsub.s32 %v6502, %v6504
  %v6506 = vrot.slane %v6498, %v6505
  %v6508 = vunpack.c.l.s4 1983009808
  %v6509 = vunpack.c.0.s8 %v6508
  %v6510 = vlaneseq
  %v6511 = vshrl.u32 %v6510, 7
  %v6512 = vsub.s32 %v6509, %v6511
  %v6513 = vrot.slane %v6499, %v6512
  %v6514 = vcombine.low %v6506, %v6513
  %v6515 = vcombine.low %v6348, %v6349
  %v6516 = vcombine.low %v6350, %v6351
  %v6518 = vunpack.c.l.s4 1983009808
  %v6519 = vunpack.c.0.s8 %v6518
  %v6520 = vlaneseq
  %v6521 = vshrl.u32 %v6520, 7
  %v6522 = vsub.s32 %v6519, %v6521
  %v6523 = vrot.slane %v6515, %v6522
  %v6525 = vunpack.c.l.s4 1983009808
  %v6526 = vunpack.c.0.s8 %v6525
  %v6527 = vlaneseq
  %v6528 = vshrl.u32 %v6527, 7
  %v6529 = vsub.s32 %v6526, %v6528
  %v6530 = vrot.slane %v6516, %v6529
  %v6531 = vcombine.low %v6523, %v6530
  %v6532 = vcombine.low %v6352, %v6353
  %v6533 = vcombine.low %v6354, %v6355
  %v6535 = vunpack.c.l.s4 1983009808
  %v6536 = vunpack.c.0.s8 %v6535
  %v6537 = vlaneseq
  %v6538 = vshrl.u32 %v6537, 7
  %v6539 = vsub.s32 %v6536, %v6538
  %v6540 = vrot.slane %v6532, %v6539
  %v6542 = vunpack.c.l.s4 1983009808
  %v6543 = vunpack.c.0.s8 %v6542
  %v6544 = vlaneseq
  %v6545 = vshrl.u32 %v6544, 7
  %v6546 = vsub.s32 %v6543, %v6545
  %v6547 = vrot.slane %v6533, %v6546
  %v6548 = vcombine.low %v6540, %v6547
  %v6549 = vcombine.low %v6356, %v6357
  %v6550 = vcombine.low %v6358, %v6359
  %v6552 = vunpack.c.l.s4 1983009808
  %v6553 = vunpack.c.0.s8 %v6552
  %v6554 = vlaneseq
  %v6555 = vshrl.u32 %v6554, 7
  %v6556 = vsub.s32 %v6553, %v6555
  %v6557 = vrot.slane %v6549, %v6556
  %v6559 = vunpack.c.l.s4 1983009808
  %v6560 = vunpack.c.0.s8 %v6559
  %v6561 = vlaneseq
  %v6562 = vshrl.u32 %v6561, 7
  %v6563 = vsub.s32 %v6560, %v6562
  %v6564 = vrot.slane %v6550, %v6563
  %v6565 = vcombine.low %v6557, %v6564
  %v6566 = vcombine.low %v6360, %v6361
  %v6567 = vcombine.low %v6362, %v6363
  %v6569 = vunpack.c.l.s4 1983009808
  %v6570 = vunpack.c.0.s8 %v6569
  %v6571 = vlaneseq
  %v6572 = vshrl.u32 %v6571, 7
  %v6573 = vsub.s32 %v6570, %v6572
  %v6574 = vrot.slane %v6566, %v6573
  %v6576 = vunpack.c.l.s4 1983009808
  %v6577 = vunpack.c.0.s8 %v6576
  %v6578 = vlaneseq
  %v6579 = vshrl.u32 %v6578, 7
  %v6580 = vsub.s32 %v6577, %v6579
  %v6581 = vrot.slane %v6567, %v6580
  %v6582 = vcombine.low %v6574, %v6581
  %v6583 = vcombine.low %v6364, %v6365
  %v6584 = vcombine.low %v6366, %v6367
  %v6586 = vunpack.c.l.s4 1983009808
  %v6587 = vunpack.c.0.s8 %v6586
  %v6588 = vlaneseq
  %v6589 = vshrl.u32 %v6588, 7
  %v6590 = vsub.s32 %v6587, %v6589
  %v6591 = vrot.slane %v6583, %v6590
  %v6593 = vunpack.c.l.s4 1983009808
  %v6594 = vunpack.c.0.s8 %v6593
  %v6595 = vlaneseq
  %v6596 = vshrl.u32 %v6595, 7
  %v6597 = vsub.s32 %v6594, %v6596
  %v6598 = vrot.slane %v6584, %v6597
  %v6599 = vcombine.low %v6591, %v6598
  %v6600 = vcombine.low %v6368, %v6369
  %v6601 = vcombine.low %v6370, %v6371
  %v6603 = vunpack.c.l.s4 1983009808
  %v6604 = vunpack.c.0.s8 %v6603
  %v6605 = vlaneseq
  %v6606 = vshrl.u32 %v6605, 7
  %v6607 = vsub.s32 %v6604, %v6606
  %v6608 = vrot.slane %v6600, %v6607
  %v6610 = vunpack.c.l.s4 1983009808
  %v6611 = vunpack.c.0.s8 %v6610
  %v6612 = vlaneseq
  %v6613 = vshrl.u32 %v6612, 7
  %v6614 = vsub.s32 %v6611, %v6613
  %v6615 = vrot.slane %v6601, %v6614
  %v6616 = vcombine.low %v6608, %v6615
  %v6617 = vcombine.low %v6372, %v6373
  %v6618 = vcombine.low %v6374, %v6375
  %v6620 = vunpack.c.l.s4 1983009808
  %v6621 = vunpack.c.0.s8 %v6620
  %v6622 = vlaneseq
  %v6623 = vshrl.u32 %v6622, 7
  %v6624 = vsub.s32 %v6621, %v6623
  %v6625 = vrot.slane %v6617, %v6624
  %v6627 = vunpack.c.l.s4 1983009808
  %v6628 = vunpack.c.0.s8 %v6627
  %v6629 = vlaneseq
  %v6630 = vshrl.u32 %v6629, 7
  %v6631 = vsub.s32 %v6628, %v6630
  %v6632 = vrot.slane %v6618, %v6631
  %v6633 = vcombine.low %v6625, %v6632
  %v6634 = vcombine.low %v6376, %v6377
  %v6635 = vcombine.low %v6378, %v6379
  %v6637 = vunpack.c.l.s4 1983009808
  %v6638 = vunpack.c.0.s8 %v6637
  %v6639 = vlaneseq
  %v6640 = vshrl.u32 %v6639, 7
  %v6641 = vsub.s32 %v6638, %v6640
  %v6642 = vrot.slane %v6634, %v6641
  %v6644 = vunpack.c.l.s4 1983009808
  %v6645 = vunpack.c.0.s8 %v6644
  %v6646 = vlaneseq
  %v6647 = vshrl.u32 %v6646, 7
  %v6648 = vsub.s32 %v6645, %v6647
  %v6649 = vrot.slane %v6635, %v6648
  %v6650 = vcombine.low %v6642, %v6649
  %v6651 = vcombine.low %v6380, %v6381
  %v6652 = vcombine.low %v6382, %v6383
  %v6654 = vunpack.c.l.s4 1983009808
  %v6655 = vunpack.c.0.s8 %v6654
  %v6656 = vlaneseq
  %v6657 = vshrl.u32 %v6656, 7
  %v6658 = vsub.s32 %v6655, %v6657
  %v6659 = vrot.slane %v6651, %v6658
  %v6661 = vunpack.c.l.s4 1983009808
  %v6662 = vunpack.c.0.s8 %v6661
  %v6663 = vlaneseq
  %v6664 = vshrl.u32 %v6663, 7
  %v6665 = vsub.s32 %v6662, %v6664
  %v6666 = vrot.slane %v6652, %v6665
  %v6667 = vcombine.low %v6659, %v6666
  %v6668 = vcombine.low %v6384, %v6385
  %v6669 = vcombine.low %v6386, %v6387
  %v6671 = vunpack.c.l.s4 1983009808
  %v6672 = vunpack.c.0.s8 %v6671
  %v6673 = vlaneseq
  %v6674 = vshrl.u32 %v6673, 7
  %v6675 = vsub.s32 %v6672, %v6674
  %v6676 = vrot.slane %v6668, %v6675
  %v6678 = vunpack.c.l.s4 1983009808
  %v6679 = vunpack.c.0.s8 %v6678
  %v6680 = vlaneseq
  %v6681 = vshrl.u32 %v6680, 7
  %v6682 = vsub.s32 %v6679, %v6681
  %v6683 = vrot.slane %v6669, %v6682
  %v6684 = vcombine.low %v6676, %v6683
  %v6685 = vcombine.low %v6388, %v6389
  %v6686 = vcombine.low %v6390, %v6391
  %v6688 = vunpack.c.l.s4 1983009808
  %v6689 = vunpack.c.0.s8 %v6688
  %v6690 = vlaneseq
  %v6691 = vshrl.u32 %v6690, 7
  %v6692 = vsub.s32 %v6689, %v6691
  %v6693 = vrot.slane %v6685, %v6692
  %v6695 = vunpack.c.l.s4 1983009808
  %v6696 = vunpack.c.0.s8 %v6695
  %v6697 = vlaneseq
  %v6698 = vshrl.u32 %v6697, 7
  %v6699 = vsub.s32 %v6696, %v6698
  %v6700 = vrot.slane %v6686, %v6699
  %v6701 = vcombine.low %v6693, %v6700
  %v6702 = vcombine.low %v6392, %v6393
  %v6703 = vcombine.low %v6394, %v6395
  %v6705 = vunpack.c.l.s4 1983009808
  %v6706 = vunpack.c.0.s8 %v6705
  %v6707 = vlaneseq
  %v6708 = vshrl.u32 %v6707, 7
  %v6709 = vsub.s32 %v6706, %v6708
  %v6710 = vrot.slane %v6702, %v6709
  %v6712 = vunpack.c.l.s4 1983009808
  %v6713 = vunpack.c.0.s8 %v6712
  %v6714 = vlaneseq
  %v6715 = vshrl.u32 %v6714, 7
  %v6716 = vsub.s32 %v6713, %v6715
  %v6717 = vrot.slane %v6703, %v6716
  %v6718 = vcombine.low %v6710, %v6717
  %v6719 = vcombine.low %v6396, %v6397
  %v6720 = vcombine.low %v6398, %v6399
  %v6722 = vunpack.c.l.s4 1983009808
  %v6723 = vunpack.c.0.s8 %v6722
  %v6724 = vlaneseq
  %v6725 = vshrl.u32 %v6724, 7
  %v6726 = vsub.s32 %v6723, %v6725
  %v6727 = vrot.slane %v6719, %v6726
  %v6729 = vunpack.c.l.s4 1983009808
  %v6730 = vunpack.c.0.s8 %v6729
  %v6731 = vlaneseq
  %v6732 = vshrl.u32 %v6731, 7
  %v6733 = vsub.s32 %v6730, %v6732
  %v6734 = vrot.slane %v6720, %v6733
  %v6735 = vcombine.low %v6727, %v6734
  %v6752 = vpack.c.bf16 %v6497, %v6480
  %v6753 = vpack.c.bf16 %v6531, %v6514
  %v6754 = vpack.c.bf16 %v6565, %v6548
  %v6755 = vpack.c.bf16 %v6599, %v6582
  %v6756 = vpack.c.bf16 %v6633, %v6616
  %v6757 = vpack.c.bf16 %v6667, %v6650
  %v6758 = vpack.c.bf16 %v6701, %v6684
  %v6759 = vpack.c.bf16 %v6735, %v6718
  %s6760 = scalar_lea.vmem %s2, 320
  %v6761 = vld [vmem:[%s6760] sm:$0xf]
  %v6762 = vld [vmem:[%s6760 + $0x4] sm:$0xf]
  %v6763 = vld [vmem:[%s6760 + $0x8] sm:$0xf]
  %v6764 = vld [vmem:[%s6760 + $0xc] sm:$0xf]
  %v6765 = vld [vmem:[%s6760 + $0x10] sm:$0xf]
  %v6766 = vld [vmem:[%s6760 + $0x14] sm:$0xf]
  %v6767 = vld [vmem:[%s6760 + $0x18] sm:$0xf]
  %v6768 = vld [vmem:[%s6760 + $0x1c] sm:$0xf]
  %v6769 = vld [vmem:[%s6760 + $0x20] sm:$0xf]
  %v6770 = vld [vmem:[%s6760 + $0x24] sm:$0xf]
  %v6771 = vld [vmem:[%s6760 + $0x28] sm:$0xf]
  %v6772 = vld [vmem:[%s6760 + $0x2c] sm:$0xf]
  %v6773 = vld [vmem:[%s6760 + $0x30] sm:$0xf]
  %v6774 = vld [vmem:[%s6760 + $0x34] sm:$0xf]
  %v6775 = vld [vmem:[%s6760 + $0x38] sm:$0xf]
  %v6776 = vld [vmem:[%s6760 + $0x3c] sm:$0xf]
  %v6793 = vunpack.c.l.b16 %v6761
  %v6794 = vunpack.c.l.b16 %v6762
  %v6795 = vunpack.c.l.b16 %v6763
  %v6796 = vunpack.c.l.b16 %v6764
  %v6797 = vunpack.c.l.b16 %v6765
  %v6798 = vunpack.c.l.b16 %v6766
  %v6799 = vunpack.c.l.b16 %v6767
  %v6800 = vunpack.c.l.b16 %v6768
  %v6801 = vunpack.c.l.b16 %v6769
  %v6802 = vunpack.c.l.b16 %v6770
  %v6803 = vunpack.c.l.b16 %v6771
  %v6804 = vunpack.c.l.b16 %v6772
  %v6805 = vunpack.c.l.b16 %v6773
  %v6806 = vunpack.c.l.b16 %v6774
  %v6807 = vunpack.c.l.b16 %v6775
  %v6808 = vunpack.c.l.b16 %v6776
  %v6809 = vpack.c.b16 %v6794, %v6793
  %v6810 = vpack.c.b16 %v6796, %v6795
  %v6811 = vpack.c.b16 %v6798, %v6797
  %v6812 = vpack.c.b16 %v6800, %v6799
  %v6813 = vpack.c.b16 %v6802, %v6801
  %v6814 = vpack.c.b16 %v6804, %v6803
  %v6815 = vpack.c.b16 %v6806, %v6805
  %v6816 = vpack.c.b16 %v6808, %v6807
  %6825 = vmatprep.subr.bf16.mxu0 0
  %6826 = vmatpush1.bf16.msra.mxu0 %v6809
  %6827 = vmatprep.subr.bf16.mxu0 0
  %6828 = vmatpush1.bf16.msra.mxu0 %v6810
  %6829 = vmatprep.subr.bf16.mxu0 0
  %6830 = vmatpush1.bf16.msra.mxu0 %v6811
  %6831 = vmatprep.subr.bf16.mxu0 0
  %6832 = vmatpush1.bf16.msra.mxu0 %v6812
  %6833 = vmatprep.subr.bf16.mxu0 0
  %6834 = vmatpush1.bf16.msra.mxu0 %v6813
  %6835 = vmatprep.subr.bf16.mxu0 0
  %6836 = vmatpush1.bf16.msra.mxu0 %v6814
  %6837 = vmatprep.subr.bf16.mxu0 0
  %6838 = vmatpush1.bf16.msra.mxu0 %v6815
  %6839 = vmatprep.subr.bf16.mxu0 0
  %6840 = vmatpush1.bf16.msra.mxu0 %v6816
  %6841 = vmatprep.subr.bf16.mxu0 0
  %6842 = vmatpush1.bf16.msra.mxu0 0
  %6843 = vmatprep.subr.bf16.mxu0 0
  %6844 = vmatpush1.bf16.msra.mxu0 0
  %6845 = vmatprep.subr.bf16.mxu0 0
  %6846 = vmatpush1.bf16.msra.mxu0 0
  %6847 = vmatprep.subr.bf16.mxu0 0
  %6848 = vmatpush1.bf16.msra.mxu0 0
  %6849 = vmatprep.subr.bf16.mxu0 0
  %6850 = vmatpush1.bf16.msra.mxu0 0
  %6851 = vmatprep.subr.bf16.mxu0 0
  %6852 = vmatpush1.bf16.msra.mxu0 0
  %6853 = vmatprep.subr.bf16.mxu0 0
  %6854 = vmatpush1.bf16.msra.mxu0 0
  %6855 = vmatprep.subr.bf16.mxu0 0
  %6856 = vmatpush1.bf16.msra.mxu0 0
  %6857 = vmatprep.mubr.bf16.mxu0 0
  %6858 = vmatmul.mubr.bf16.gmra.mrb[0].mxu0 %v6752
  %v6859 = vpop.f32.mrb[0].mxu0
  %v6860 = vadd.f32 0.0, %v6859
  %v6861 = vpop.f32.mrb[0].mxu0
  %v6862 = vpop.f32.mrb[0].mxu0
  %v6863 = vadd.f32 0.0, %v6862
  %v6864 = vpop.f32.mrb[0].mxu0
  %6865 = vmatprep.mubr.bf16.mxu0 0
  %6866 = vmatmul.mubr.bf16.gmra.mrb[0].mxu0 %v6753
  %v6867 = vpop.f32.mrb[0].mxu0
  %v6868 = vadd.f32 0.0, %v6867
  %v6869 = vpop.f32.mrb[0].mxu0
  %v6870 = vpop.f32.mrb[0].mxu0
  %v6871 = vadd.f32 0.0, %v6870
  %v6872 = vpop.f32.mrb[0].mxu0
  %6873 = vmatprep.mubr.bf16.mxu0 0
  %6874 = vmatmul.mubr.bf16.gmra.mrb[0].mxu0 %v6754
  %v6875 = vpop.f32.mrb[0].mxu0
  %v6876 = vadd.f32 0.0, %v6875
  %v6877 = vpop.f32.mrb[0].mxu0
  %v6878 = vpop.f32.mrb[0].mxu0
  %v6879 = vadd.f32 0.0, %v6878
  %v6880 = vpop.f32.mrb[0].mxu0
  %6881 = vmatprep.mubr.bf16.mxu0 0
  %6882 = vmatmul.mubr.bf16.gmra.mrb[0].mxu0 %v6755
  %v6883 = vpop.f32.mrb[0].mxu0
  %v6884 = vadd.f32 0.0, %v6883
  %v6885 = vpop.f32.mrb[0].mxu0
  %v6886 = vpop.f32.mrb[0].mxu0
  %v6887 = vadd.f32 0.0, %v6886
  %v6888 = vpop.f32.mrb[0].mxu0
  %6889 = vmatprep.mubr.bf16.mxu0 0
  %6890 = vmatmul.mubr.bf16.gmra.mrb[0].mxu0 %v6756
  %v6891 = vpop.f32.mrb[0].mxu0
  %v6892 = vadd.f32 0.0, %v6891
  %v6893 = vpop.f32.mrb[0].mxu0
  %v6894 = vpop.f32.mrb[0].mxu0
  %v6895 = vadd.f32 0.0, %v6894
  %v6896 = vpop.f32.mrb[0].mxu0
  %6897 = vmatprep.mubr.bf16.mxu0 0
  %6898 = vmatmul.mubr.bf16.gmra.mrb[0].mxu0 %v6757
  %v6899 = vpop.f32.mrb[0].mxu0
  %v6900 = vadd.f32 0.0, %v6899
  %v6901 = vpop.f32.mrb[0].mxu0
  %v6902 = vpop.f32.mrb[0].mxu0
  %v6903 = vadd.f32 0.0, %v6902
  %v6904 = vpop.f32.mrb[0].mxu0
  %6905 = vmatprep.mubr.bf16.mxu0 0
  %6906 = vmatmul.mubr.bf16.gmra.mrb[0].mxu0 %v6758
  %v6907 = vpop.f32.mrb[0].mxu0
  %v6908 = vadd.f32 0.0, %v6907
  %v6909 = vpop.f32.mrb[0].mxu0
  %v6910 = vpop.f32.mrb[0].mxu0
  %v6911 = vadd.f32 0.0, %v6910
  %v6912 = vpop.f32.mrb[0].mxu0
  %6913 = vmatprep.mubr.bf16.mxu0 0
  %6914 = vmatmul.mubr.bf16.gmra.mrb[0].mxu0 %v6759
  %v6915 = vpop.f32.mrb[0].mxu0
  %v6916 = vadd.f32 0.0, %v6915
  %v6917 = vpop.f32.mrb[0].mxu0
  %v6918 = vpop.f32.mrb[0].mxu0
  %v6919 = vadd.f32 0.0, %v6918
  %v6920 = vpop.f32.mrb[0].mxu0
  %6921 = vdwg.mxu0
  %v6922 = vadd.f32 %v6319, %v6860
  %v6923 = vadd.f32 %v6320, %v6863
  %v6924 = vadd.f32 %v6321, %v6868
  %v6925 = vadd.f32 %v6322, %v6871
  %v6926 = vadd.f32 %v6323, %v6876
  %v6927 = vadd.f32 %v6324, %v6879
  %v6928 = vadd.f32 %v6325, %v6884
  %v6929 = vadd.f32 %v6326, %v6887
  %v6930 = vadd.f32 %v6327, %v6892
  %v6931 = vadd.f32 %v6328, %v6895
  %v6932 = vadd.f32 %v6329, %v6900
  %v6933 = vadd.f32 %v6330, %v6903
  %v6934 = vadd.f32 %v6331, %v6908
  %v6935 = vadd.f32 %v6332, %v6911
  %v6936 = vadd.f32 %v6333, %v6916
  %v6937 = vadd.f32 %v6334, %v6919
  %s6938 = scalar_lea.vmem [#allocation2], 68
  %v6939 = vld [vmem:[%s6938] sm:$0x3]
  %v6940 = vld [vmem:[%s6938 + $0x4] sm:$0x3]
  %v6941 = vld [vmem:[%s6938 + $0x8] sm:$0x3]
  %v6942 = vld [vmem:[%s6938 + $0xc] sm:$0x3]
  %v6943 = vld [vmem:[%s6938 + $0x10] sm:$0x3]
  %v6944 = vld [vmem:[%s6938 + $0x14] sm:$0x3]
  %v6945 = vld [vmem:[%s6938 + $0x18] sm:$0x3]
  %v6946 = vld [vmem:[%s6938 + $0x1c] sm:$0x3]
  %v6947 = vld [vmem:[%s6938 + $0x44] sm:$0x3]
  %v6948 = vld [vmem:[%s6938 + $0x48] sm:$0x3]
  %v6949 = vld [vmem:[%s6938 + $0x4c] sm:$0x3]
  %v6950 = vld [vmem:[%s6938 + $0x50] sm:$0x3]
  %v6951 = vld [vmem:[%s6938 + $0x54] sm:$0x3]
  %v6952 = vld [vmem:[%s6938 + $0x58] sm:$0x3]
  %v6953 = vld [vmem:[%s6938 + $0x5c] sm:$0x3]
  %v6954 = vld [vmem:[%s6938 + $0x60] sm:$0x3]
  %v6955 = vld [vmem:[%s6938 + $0x88] sm:$0x3]
  %v6956 = vld [vmem:[%s6938 + $0x8c] sm:$0x3]
  %v6957 = vld [vmem:[%s6938 + $0x90] sm:$0x3]
  %v6958 = vld [vmem:[%s6938 + $0x94] sm:$0x3]
  %v6959 = vld [vmem:[%s6938 + $0x98] sm:$0x3]
  %v6960 = vld [vmem:[%s6938 + $0x9c] sm:$0x3]
  %v6961 = vld [vmem:[%s6938 + $0xa0] sm:$0x3]
  %v6962 = vld [vmem:[%s6938 + $0xa4] sm:$0x3]
  %v6963 = vld [vmem:[%s6938 + $0xcc] sm:$0x3]
  %v6964 = vld [vmem:[%s6938 + $0xd0] sm:$0x3]
  %v6965 = vld [vmem:[%s6938 + $0xd4] sm:$0x3]
  %v6966 = vld [vmem:[%s6938 + $0xd8] sm:$0x3]
  %v6967 = vld [vmem:[%s6938 + $0xdc] sm:$0x3]
  %v6968 = vld [vmem:[%s6938 + $0xe0] sm:$0x3]
  %v6969 = vld [vmem:[%s6938 + $0xe4] sm:$0x3]
  %v6970 = vld [vmem:[%s6938 + $0xe8] sm:$0x3]
  %v6971 = vld [vmem:[%s6938 + $0x110] sm:$0x3]
  %v6972 = vld [vmem:[%s6938 + $0x114] sm:$0x3]
  %v6973 = vld [vmem:[%s6938 + $0x118] sm:$0x3]
  %v6974 = vld [vmem:[%s6938 + $0x11c] sm:$0x3]
  %v6975 = vld [vmem:[%s6938 + $0x120] sm:$0x3]
  %v6976 = vld [vmem:[%s6938 + $0x124] sm:$0x3]
  %v6977 = vld [vmem:[%s6938 + $0x128] sm:$0x3]
  %v6978 = vld [vmem:[%s6938 + $0x12c] sm:$0x3]
  %v6979 = vld [vmem:[%s6938 + $0x154] sm:$0x3]
  %v6980 = vld [vmem:[%s6938 + $0x158] sm:$0x3]
  %v6981 = vld [vmem:[%s6938 + $0x15c] sm:$0x3]
  %v6982 = vld [vmem:[%s6938 + $0x160] sm:$0x3]
  %v6983 = vld [vmem:[%s6938 + $0x164] sm:$0x3]
  %v6984 = vld [vmem:[%s6938 + $0x168] sm:$0x3]
  %v6985 = vld [vmem:[%s6938 + $0x16c] sm:$0x3]
  %v6986 = vld [vmem:[%s6938 + $0x170] sm:$0x3]
  %v6987 = vld [vmem:[%s6938 + $0x198] sm:$0x3]
  %v6988 = vld [vmem:[%s6938 + $0x19c] sm:$0x3]
  %v6989 = vld [vmem:[%s6938 + $0x1a0] sm:$0x3]
  %v6990 = vld [vmem:[%s6938 + $0x1a4] sm:$0x3]
  %v6991 = vld [vmem:[%s6938 + $0x1a8] sm:$0x3]
  %v6992 = vld [vmem:[%s6938 + $0x1ac] sm:$0x3]
  %v6993 = vld [vmem:[%s6938 + $0x1b0] sm:$0x3]
  %v6994 = vld [vmem:[%s6938 + $0x1b4] sm:$0x3]
  %v6995 = vld [vmem:[%s6938 + $0x1dc] sm:$0x3]
  %v6996 = vld [vmem:[%s6938 + $0x1e0] sm:$0x3]
  %v6997 = vld [vmem:[%s6938 + $0x1e4] sm:$0x3]
  %v6998 = vld [vmem:[%s6938 + $0x1e8] sm:$0x3]
  %v6999 = vld [vmem:[%s6938 + $0x1ec] sm:$0x3]
  %v7000 = vld [vmem:[%s6938 + $0x1f0] sm:$0x3]
  %v7001 = vld [vmem:[%s6938 + $0x1f4] sm:$0x3]
  %v7002 = vld [vmem:[%s6938 + $0x1f8] sm:$0x3]
  %v7067 = vcombine.low %v6939, %v6940
  %v7068 = vcombine.low %v6941, %v6942
  %v7070 = vunpack.c.l.s4 1983009808
  %v7071 = vunpack.c.0.s8 %v7070
  %v7072 = vlaneseq
  %v7073 = vshrl.u32 %v7072, 7
  %v7074 = vsub.s32 %v7071, %v7073
  %v7075 = vrot.slane %v7067, %v7074
  %v7077 = vunpack.c.l.s4 1983009808
  %v7078 = vunpack.c.0.s8 %v7077
  %v7079 = vlaneseq
  %v7080 = vshrl.u32 %v7079, 7
  %v7081 = vsub.s32 %v7078, %v7080
  %v7082 = vrot.slane %v7068, %v7081
  %v7083 = vcombine.low %v7075, %v7082
  %v7084 = vcombine.low %v6943, %v6944
  %v7085 = vcombine.low %v6945, %v6946
  %v7087 = vunpack.c.l.s4 1983009808
  %v7088 = vunpack.c.0.s8 %v7087
  %v7089 = vlaneseq
  %v7090 = vshrl.u32 %v7089, 7
  %v7091 = vsub.s32 %v7088, %v7090
  %v7092 = vrot.slane %v7084, %v7091
  %v7094 = vunpack.c.l.s4 1983009808
  %v7095 = vunpack.c.0.s8 %v7094
  %v7096 = vlaneseq
  %v7097 = vshrl.u32 %v7096, 7
  %v7098 = vsub.s32 %v7095, %v7097
  %v7099 = vrot.slane %v7085, %v7098
  %v7100 = vcombine.low %v7092, %v7099
  %v7101 = vcombine.low %v6947, %v6948
  %v7102 = vcombine.low %v6949, %v6950
  %v7104 = vunpack.c.l.s4 1983009808
  %v7105 = vunpack.c.0.s8 %v7104
  %v7106 = vlaneseq
  %v7107 = vshrl.u32 %v7106, 7
  %v7108 = vsub.s32 %v7105, %v7107
  %v7109 = vrot.slane %v7101, %v7108
  %v7111 = vunpack.c.l.s4 1983009808
  %v7112 = vunpack.c.0.s8 %v7111
  %v7113 = vlaneseq
  %v7114 = vshrl.u32 %v7113, 7
  %v7115 = vsub.s32 %v7112, %v7114
  %v7116 = vrot.slane %v7102, %v7115
  %v7117 = vcombine.low %v7109, %v7116
  %v7118 = vcombine.low %v6951, %v6952
  %v7119 = vcombine.low %v6953, %v6954
  %v7121 = vunpack.c.l.s4 1983009808
  %v7122 = vunpack.c.0.s8 %v7121
  %v7123 = vlaneseq
  %v7124 = vshrl.u32 %v7123, 7
  %v7125 = vsub.s32 %v7122, %v7124
  %v7126 = vrot.slane %v7118, %v7125
  %v7128 = vunpack.c.l.s4 1983009808
  %v7129 = vunpack.c.0.s8 %v7128
  %v7130 = vlaneseq
  %v7131 = vshrl.u32 %v7130, 7
  %v7132 = vsub.s32 %v7129, %v7131
  %v7133 = vrot.slane %v7119, %v7132
  %v7134 = vcombine.low %v7126, %v7133
  %v7135 = vcombine.low %v6955, %v6956
  %v7136 = vcombine.low %v6957, %v6958
  %v7138 = vunpack.c.l.s4 1983009808
  %v7139 = vunpack.c.0.s8 %v7138
  %v7140 = vlaneseq
  %v7141 = vshrl.u32 %v7140, 7
  %v7142 = vsub.s32 %v7139, %v7141
  %v7143 = vrot.slane %v7135, %v7142
  %v7145 = vunpack.c.l.s4 1983009808
  %v7146 = vunpack.c.0.s8 %v7145
  %v7147 = vlaneseq
  %v7148 = vshrl.u32 %v7147, 7
  %v7149 = vsub.s32 %v7146, %v7148
  %v7150 = vrot.slane %v7136, %v7149
  %v7151 = vcombine.low %v7143, %v7150
  %v7152 = vcombine.low %v6959, %v6960
  %v7153 = vcombine.low %v6961, %v6962
  %v7155 = vunpack.c.l.s4 1983009808
  %v7156 = vunpack.c.0.s8 %v7155
  %v7157 = vlaneseq
  %v7158 = vshrl.u32 %v7157, 7
  %v7159 = vsub.s32 %v7156, %v7158
  %v7160 = vrot.slane %v7152, %v7159
  %v7162 = vunpack.c.l.s4 1983009808
  %v7163 = vunpack.c.0.s8 %v7162
  %v7164 = vlaneseq
  %v7165 = vshrl.u32 %v7164, 7
  %v7166 = vsub.s32 %v7163, %v7165
  %v7167 = vrot.slane %v7153, %v7166
  %v7168 = vcombine.low %v7160, %v7167
  %v7169 = vcombine.low %v6963, %v6964
  %v7170 = vcombine.low %v6965, %v6966
  %v7172 = vunpack.c.l.s4 1983009808
  %v7173 = vunpack.c.0.s8 %v7172
  %v7174 = vlaneseq
  %v7175 = vshrl.u32 %v7174, 7
  %v7176 = vsub.s32 %v7173, %v7175
  %v7177 = vrot.slane %v7169, %v7176
  %v7179 = vunpack.c.l.s4 1983009808
  %v7180 = vunpack.c.0.s8 %v7179
  %v7181 = vlaneseq
  %v7182 = vshrl.u32 %v7181, 7
  %v7183 = vsub.s32 %v7180, %v7182
  %v7184 = vrot.slane %v7170, %v7183
  %v7185 = vcombine.low %v7177, %v7184
  %v7186 = vcombine.low %v6967, %v6968
  %v7187 = vcombine.low %v6969, %v6970
  %v7189 = vunpack.c.l.s4 1983009808
  %v7190 = vunpack.c.0.s8 %v7189
  %v7191 = vlaneseq
  %v7192 = vshrl.u32 %v7191, 7
  %v7193 = vsub.s32 %v7190, %v7192
  %v7194 = vrot.slane %v7186, %v7193
  %v7196 = vunpack.c.l.s4 1983009808
  %v7197 = vunpack.c.0.s8 %v7196
  %v7198 = vlaneseq
  %v7199 = vshrl.u32 %v7198, 7
  %v7200 = vsub.s32 %v7197, %v7199
  %v7201 = vrot.slane %v7187, %v7200
  %v7202 = vcombine.low %v7194, %v7201
  %v7203 = vcombine.low %v6971, %v6972
  %v7204 = vcombine.low %v6973, %v6974
  %v7206 = vunpack.c.l.s4 1983009808
  %v7207 = vunpack.c.0.s8 %v7206
  %v7208 = vlaneseq
  %v7209 = vshrl.u32 %v7208, 7
  %v7210 = vsub.s32 %v7207, %v7209
  %v7211 = vrot.slane %v7203, %v7210
  %v7213 = vunpack.c.l.s4 1983009808
  %v7214 = vunpack.c.0.s8 %v7213
  %v7215 = vlaneseq
  %v7216 = vshrl.u32 %v7215, 7
  %v7217 = vsub.s32 %v7214, %v7216
  %v7218 = vrot.slane %v7204, %v7217
  %v7219 = vcombine.low %v7211, %v7218
  %v7220 = vcombine.low %v6975, %v6976
  %v7221 = vcombine.low %v6977, %v6978
  %v7223 = vunpack.c.l.s4 1983009808
  %v7224 = vunpack.c.0.s8 %v7223
  %v7225 = vlaneseq
  %v7226 = vshrl.u32 %v7225, 7
  %v7227 = vsub.s32 %v7224, %v7226
  %v7228 = vrot.slane %v7220, %v7227
  %v7230 = vunpack.c.l.s4 1983009808
  %v7231 = vunpack.c.0.s8 %v7230
  %v7232 = vlaneseq
  %v7233 = vshrl.u32 %v7232, 7
  %v7234 = vsub.s32 %v7231, %v7233
  %v7235 = vrot.slane %v7221, %v7234
  %v7236 = vcombine.low %v7228, %v7235
  %v7237 = vcombine.low %v6979, %v6980
  %v7238 = vcombine.low %v6981, %v6982
  %v7240 = vunpack.c.l.s4 1983009808
  %v7241 = vunpack.c.0.s8 %v7240
  %v7242 = vlaneseq
  %v7243 = vshrl.u32 %v7242, 7
  %v7244 = vsub.s32 %v7241, %v7243
  %v7245 = vrot.slane %v7237, %v7244
  %v7247 = vunpack.c.l.s4 1983009808
  %v7248 = vunpack.c.0.s8 %v7247
  %v7249 = vlaneseq
  %v7250 = vshrl.u32 %v7249, 7
  %v7251 = vsub.s32 %v7248, %v7250
  %v7252 = vrot.slane %v7238, %v7251
  %v7253 = vcombine.low %v7245, %v7252
  %v7254 = vcombine.low %v6983, %v6984
  %v7255 = vcombine.low %v6985, %v6986
  %v7257 = vunpack.c.l.s4 1983009808
  %v7258 = vunpack.c.0.s8 %v7257
  %v7259 = vlaneseq
  %v7260 = vshrl.u32 %v7259, 7
  %v7261 = vsub.s32 %v7258, %v7260
  %v7262 = vrot.slane %v7254, %v7261
  %v7264 = vunpack.c.l.s4 1983009808
  %v7265 = vunpack.c.0.s8 %v7264
  %v7266 = vlaneseq
  %v7267 = vshrl.u32 %v7266, 7
  %v7268 = vsub.s32 %v7265, %v7267
  %v7269 = vrot.slane %v7255, %v7268
  %v7270 = vcombine.low %v7262, %v7269
  %v7271 = vcombine.low %v6987, %v6988
  %v7272 = vcombine.low %v6989, %v6990
  %v7274 = vunpack.c.l.s4 1983009808
  %v7275 = vunpack.c.0.s8 %v7274
  %v7276 = vlaneseq
  %v7277 = vshrl.u32 %v7276, 7
  %v7278 = vsub.s32 %v7275, %v7277
  %v7279 = vrot.slane %v7271, %v7278
  %v7281 = vunpack.c.l.s4 1983009808
  %v7282 = vunpack.c.0.s8 %v7281
  %v7283 = vlaneseq
  %v7284 = vshrl.u32 %v7283, 7
  %v7285 = vsub.s32 %v7282, %v7284
  %v7286 = vrot.slane %v7272, %v7285
  %v7287 = vcombine.low %v7279, %v7286
  %v7288 = vcombine.low %v6991, %v6992
  %v7289 = vcombine.low %v6993, %v6994
  %v7291 = vunpack.c.l.s4 1983009808
  %v7292 = vunpack.c.0.s8 %v7291
  %v7293 = vlaneseq
  %v7294 = vshrl.u32 %v7293, 7
  %v7295 = vsub.s32 %v7292, %v7294
  %v7296 = vrot.slane %v7288, %v7295
  %v7298 = vunpack.c.l.s4 1983009808
  %v7299 = vunpack.c.0.s8 %v7298
  %v7300 = vlaneseq
  %v7301 = vshrl.u32 %v7300, 7
  %v7302 = vsub.s32 %v7299, %v7301
  %v7303 = vrot.slane %v7289, %v7302
  %v7304 = vcombine.low %v7296, %v7303
  %v7305 = vcombine.low %v6995, %v6996
  %v7306 = vcombine.low %v6997, %v6998
  %v7308 = vunpack.c.l.s4 1983009808
  %v7309 = vunpack.c.0.s8 %v7308
  %v7310 = vlaneseq
  %v7311 = vshrl.u32 %v7310, 7
  %v7312 = vsub.s32 %v7309, %v7311
  %v7313 = vrot.slane %v7305, %v7312
  %v7315 = vunpack.c.l.s4 1983009808
  %v7316 = vunpack.c.0.s8 %v7315
  %v7317 = vlaneseq
  %v7318 = vshrl.u32 %v7317, 7
  %v7319 = vsub.s32 %v7316, %v7318
  %v7320 = vrot.slane %v7306, %v7319
  %v7321 = vcombine.low %v7313, %v7320
  %v7322 = vcombine.low %v6999, %v7000
  %v7323 = vcombine.low %v7001, %v7002
  %v7325 = vunpack.c.l.s4 1983009808
  %v7326 = vunpack.c.0.s8 %v7325
  %v7327 = vlaneseq
  %v7328 = vshrl.u32 %v7327, 7
  %v7329 = vsub.s32 %v7326, %v7328
  %v7330 = vrot.slane %v7322, %v7329
  %v7332 = vunpack.c.l.s4 1983009808
  %v7333 = vunpack.c.0.s8 %v7332
  %v7334 = vlaneseq
  %v7335 = vshrl.u32 %v7334, 7
  %v7336 = vsub.s32 %v7333, %v7335
  %v7337 = vrot.slane %v7323, %v7336
  %v7338 = vcombine.low %v7330, %v7337
  %v7355 = vpack.c.bf16 %v7100, %v7083
  %v7356 = vpack.c.bf16 %v7134, %v7117
  %v7357 = vpack.c.bf16 %v7168, %v7151
  %v7358 = vpack.c.bf16 %v7202, %v7185
  %v7359 = vpack.c.bf16 %v7236, %v7219
  %v7360 = vpack.c.bf16 %v7270, %v7253
  %v7361 = vpack.c.bf16 %v7304, %v7287
  %v7362 = vpack.c.bf16 %v7338, %v7321
  %s7363 = scalar_lea.vmem %s2, 384
  %v7364 = vld [vmem:[%s7363] sm:$0xf]
  %v7365 = vld [vmem:[%s7363 + $0x4] sm:$0xf]
  %v7366 = vld [vmem:[%s7363 + $0x8] sm:$0xf]
  %v7367 = vld [vmem:[%s7363 + $0xc] sm:$0xf]
  %v7368 = vld [vmem:[%s7363 + $0x10] sm:$0xf]
  %v7369 = vld [vmem:[%s7363 + $0x14] sm:$0xf]
  %v7370 = vld [vmem:[%s7363 + $0x18] sm:$0xf]
  %v7371 = vld [vmem:[%s7363 + $0x1c] sm:$0xf]
  %v7372 = vld [vmem:[%s7363 + $0x20] sm:$0xf]
  %v7373 = vld [vmem:[%s7363 + $0x24] sm:$0xf]
  %v7374 = vld [vmem:[%s7363 + $0x28] sm:$0xf]
  %v7375 = vld [vmem:[%s7363 + $0x2c] sm:$0xf]
  %v7376 = vld [vmem:[%s7363 + $0x30] sm:$0xf]
  %v7377 = vld [vmem:[%s7363 + $0x34] sm:$0xf]
  %v7378 = vld [vmem:[%s7363 + $0x38] sm:$0xf]
  %v7379 = vld [vmem:[%s7363 + $0x3c] sm:$0xf]
  %v7396 = vunpack.c.l.b16 %v7364
  %v7397 = vunpack.c.l.b16 %v7365
  %v7398 = vunpack.c.l.b16 %v7366
  %v7399 = vunpack.c.l.b16 %v7367
  %v7400 = vunpack.c.l.b16 %v7368
  %v7401 = vunpack.c.l.b16 %v7369
  %v7402 = vunpack.c.l.b16 %v7370
  %v7403 = vunpack.c.l.b16 %v7371
  %v7404 = vunpack.c.l.b16 %v7372
  %v7405 = vunpack.c.l.b16 %v7373
  %v7406 = vunpack.c.l.b16 %v7374
  %v7407 = vunpack.c.l.b16 %v7375
  %v7408 = vunpack.c.l.b16 %v7376
  %v7409 = vunpack.c.l.b16 %v7377
  %v7410 = vunpack.c.l.b16 %v7378
  %v7411 = vunpack.c.l.b16 %v7379
  %v7412 = vpack.c.b16 %v7397, %v7396
  %v7413 = vpack.c.b16 %v7399, %v7398
  %v7414 = vpack.c.b16 %v7401, %v7400
  %v7415 = vpack.c.b16 %v7403, %v7402
  %v7416 = vpack.c.b16 %v7405, %v7404
  %v7417 = vpack.c.b16 %v7407, %v7406
  %v7418 = vpack.c.b16 %v7409, %v7408
  %v7419 = vpack.c.b16 %v7411, %v7410
  %7428 = vmatprep.subr.bf16.mxu0 0
  %7429 = vmatpush1.bf16.msra.mxu0 %v7412
  %7430 = vmatprep.subr.bf16.mxu0 0
  %7431 = vmatpush1.bf16.msra.mxu0 %v7413
  %7432 = vmatprep.subr.bf16.mxu0 0
  %7433 = vmatpush1.bf16.msra.mxu0 %v7414
  %7434 = vmatprep.subr.bf16.mxu0 0
  %7435 = vmatpush1.bf16.msra.mxu0 %v7415
  %7436 = vmatprep.subr.bf16.mxu0 0
  %7437 = vmatpush1.bf16.msra.mxu0 %v7416
  %7438 = vmatprep.subr.bf16.mxu0 0
  %7439 = vmatpush1.bf16.msra.mxu0 %v7417
  %7440 = vmatprep.subr.bf16.mxu0 0
  %7441 = vmatpush1.bf16.msra.mxu0 %v7418
  %7442 = vmatprep.subr.bf16.mxu0 0
  %7443 = vmatpush1.bf16.msra.mxu0 %v7419
  %7444 = vmatprep.subr.bf16.mxu0 0
  %7445 = vmatpush1.bf16.msra.mxu0 0
  %7446 = vmatprep.subr.bf16.mxu0 0
  %7447 = vmatpush1.bf16.msra.mxu0 0
  %7448 = vmatprep.subr.bf16.mxu0 0
  %7449 = vmatpush1.bf16.msra.mxu0 0
  %7450 = vmatprep.subr.bf16.mxu0 0
  %7451 = vmatpush1.bf16.msra.mxu0 0
  %7452 = vmatprep.subr.bf16.mxu0 0
  %7453 = vmatpush1.bf16.msra.mxu0 0
  %7454 = vmatprep.subr.bf16.mxu0 0
  %7455 = vmatpush1.bf16.msra.mxu0 0
  %7456 = vmatprep.subr.bf16.mxu0 0
  %7457 = vmatpush1.bf16.msra.mxu0 0
  %7458 = vmatprep.subr.bf16.mxu0 0
  %7459 = vmatpush1.bf16.msra.mxu0 0
  %7460 = vmatprep.mubr.bf16.mxu0 0
  %7461 = vmatmul.mubr.bf16.gmra.mrb[0].mxu0 %v7355
  %v7462 = vpop.f32.mrb[0].mxu0
  %v7463 = vadd.f32 0.0, %v7462
  %v7464 = vpop.f32.mrb[0].mxu0
  %v7465 = vpop.f32.mrb[0].mxu0
  %v7466 = vadd.f32 0.0, %v7465
  %v7467 = vpop.f32.mrb[0].mxu0
  %7468 = vmatprep.mubr.bf16.mxu0 0
  %7469 = vmatmul.mubr.bf16.gmra.mrb[0].mxu0 %v7356
  %v7470 = vpop.f32.mrb[0].mxu0
  %v7471 = vadd.f32 0.0, %v7470
  %v7472 = vpop.f32.mrb[0].mxu0
  %v7473 = vpop.f32.mrb[0].mxu0
  %v7474 = vadd.f32 0.0, %v7473
  %v7475 = vpop.f32.mrb[0].mxu0
  %7476 = vmatprep.mubr.bf16.mxu0 0
  %7477 = vmatmul.mubr.bf16.gmra.mrb[0].mxu0 %v7357
  %v7478 = vpop.f32.mrb[0].mxu0
  %v7479 = vadd.f32 0.0, %v7478
  %v7480 = vpop.f32.mrb[0].mxu0
  %v7481 = vpop.f32.mrb[0].mxu0
  %v7482 = vadd.f32 0.0, %v7481
  %v7483 = vpop.f32.mrb[0].mxu0
  %7484 = vmatprep.mubr.bf16.mxu0 0
  %7485 = vmatmul.mubr.bf16.gmra.mrb[0].mxu0 %v7358
  %v7486 = vpop.f32.mrb[0].mxu0
  %v7487 = vadd.f32 0.0, %v7486
  %v7488 = vpop.f32.mrb[0].mxu0
  %v7489 = vpop.f32.mrb[0].mxu0
  %v7490 = vadd.f32 0.0, %v7489
  %v7491 = vpop.f32.mrb[0].mxu0
  %7492 = vmatprep.mubr.bf16.mxu0 0
  %7493 = vmatmul.mubr.bf16.gmra.mrb[0].mxu0 %v7359
  %v7494 = vpop.f32.mrb[0].mxu0
  %v7495 = vadd.f32 0.0, %v7494
  %v7496 = vpop.f32.mrb[0].mxu0
  %v7497 = vpop.f32.mrb[0].mxu0
  %v7498 = vadd.f32 0.0, %v7497
  %v7499 = vpop.f32.mrb[0].mxu0
  %7500 = vmatprep.mubr.bf16.mxu0 0
  %7501 = vmatmul.mubr.bf16.gmra.mrb[0].mxu0 %v7360
  %v7502 = vpop.f32.mrb[0].mxu0
  %v7503 = vadd.f32 0.0, %v7502
  %v7504 = vpop.f32.mrb[0].mxu0
  %v7505 = vpop.f32.mrb[0].mxu0
  %v7506 = vadd.f32 0.0, %v7505
  %v7507 = vpop.f32.mrb[0].mxu0
  %7508 = vmatprep.mubr.bf16.mxu0 0
  %7509 = vmatmul.mubr.bf16.gmra.mrb[0].mxu0 %v7361
  %v7510 = vpop.f32.mrb[0].mxu0
  %v7511 = vadd.f32 0.0, %v7510
  %v7512 = vpop.f32.mrb[0].mxu0
  %v7513 = vpop.f32.mrb[0].mxu0
  %v7514 = vadd.f32 0.0, %v7513
  %v7515 = vpop.f32.mrb[0].mxu0
  %7516 = vmatprep.mubr.bf16.mxu0 0
  %7517 = vmatmul.mubr.bf16.gmra.mrb[0].mxu0 %v7362
  %v7518 = vpop.f32.mrb[0].mxu0
  %v7519 = vadd.f32 0.0, %v7518
  %v7520 = vpop.f32.mrb[0].mxu0
  %v7521 = vpop.f32.mrb[0].mxu0
  %v7522 = vadd.f32 0.0, %v7521
  %v7523 = vpop.f32.mrb[0].mxu0
  %7524 = vdwg.mxu0
  %v7525 = vadd.f32 %v6922, %v7463
  %v7526 = vadd.f32 %v6923, %v7466
  %v7527 = vadd.f32 %v6924, %v7471
  %v7528 = vadd.f32 %v6925, %v7474
  %v7529 = vadd.f32 %v6926, %v7479
  %v7530 = vadd.f32 %v6927, %v7482
  %v7531 = vadd.f32 %v6928, %v7487
  %v7532 = vadd.f32 %v6929, %v7490
  %v7533 = vadd.f32 %v6930, %v7495
  %v7534 = vadd.f32 %v6931, %v7498
  %v7535 = vadd.f32 %v6932, %v7503
  %v7536 = vadd.f32 %v6933, %v7506
  %v7537 = vadd.f32 %v6934, %v7511
  %v7538 = vadd.f32 %v6935, %v7514
  %v7539 = vadd.f32 %v6936, %v7519
  %v7540 = vadd.f32 %v6937, %v7522
  %s7541 = scalar_lea.vmem [#allocation2], 70
  %v7542 = vld [vmem:[%s7541] sm:$0x3]
  %v7543 = vld [vmem:[%s7541 + $0x4] sm:$0x3]
  %v7544 = vld [vmem:[%s7541 + $0x8] sm:$0x3]
  %v7545 = vld [vmem:[%s7541 + $0xc] sm:$0x3]
  %v7546 = vld [vmem:[%s7541 + $0x10] sm:$0x3]
  %v7547 = vld [vmem:[%s7541 + $0x14] sm:$0x3]
  %v7548 = vld [vmem:[%s7541 + $0x18] sm:$0x3]
  %v7549 = vld [vmem:[%s7541 + $0x1c] sm:$0x3]
  %v7550 = vld [vmem:[%s7541 + $0x44] sm:$0x3]
  %v7551 = vld [vmem:[%s7541 + $0x48] sm:$0x3]
  %v7552 = vld [vmem:[%s7541 + $0x4c] sm:$0x3]
  %v7553 = vld [vmem:[%s7541 + $0x50] sm:$0x3]
  %v7554 = vld [vmem:[%s7541 + $0x54] sm:$0x3]
  %v7555 = vld [vmem:[%s7541 + $0x58] sm:$0x3]
  %v7556 = vld [vmem:[%s7541 + $0x5c] sm:$0x3]
  %v7557 = vld [vmem:[%s7541 + $0x60] sm:$0x3]
  %v7558 = vld [vmem:[%s7541 + $0x88] sm:$0x3]
  %v7559 = vld [vmem:[%s7541 + $0x8c] sm:$0x3]
  %v7560 = vld [vmem:[%s7541 + $0x90] sm:$0x3]
  %v7561 = vld [vmem:[%s7541 + $0x94] sm:$0x3]
  %v7562 = vld [vmem:[%s7541 + $0x98] sm:$0x3]
  %v7563 = vld [vmem:[%s7541 + $0x9c] sm:$0x3]
  %v7564 = vld [vmem:[%s7541 + $0xa0] sm:$0x3]
  %v7565 = vld [vmem:[%s7541 + $0xa4] sm:$0x3]
  %v7566 = vld [vmem:[%s7541 + $0xcc] sm:$0x3]
  %v7567 = vld [vmem:[%s7541 + $0xd0] sm:$0x3]
  %v7568 = vld [vmem:[%s7541 + $0xd4] sm:$0x3]
  %v7569 = vld [vmem:[%s7541 + $0xd8] sm:$0x3]
  %v7570 = vld [vmem:[%s7541 + $0xdc] sm:$0x3]
  %v7571 = vld [vmem:[%s7541 + $0xe0] sm:$0x3]
  %v7572 = vld [vmem:[%s7541 + $0xe4] sm:$0x3]
  %v7573 = vld [vmem:[%s7541 + $0xe8] sm:$0x3]
  %v7574 = vld [vmem:[%s7541 + $0x110] sm:$0x3]
  %v7575 = vld [vmem:[%s7541 + $0x114] sm:$0x3]
  %v7576 = vld [vmem:[%s7541 + $0x118] sm:$0x3]
  %v7577 = vld [vmem:[%s7541 + $0x11c] sm:$0x3]
  %v7578 = vld [vmem:[%s7541 + $0x120] sm:$0x3]
  %v7579 = vld [vmem:[%s7541 + $0x124] sm:$0x3]
  %v7580 = vld [vmem:[%s7541 + $0x128] sm:$0x3]
  %v7581 = vld [vmem:[%s7541 + $0x12c] sm:$0x3]
  %v7582 = vld [vmem:[%s7541 + $0x154] sm:$0x3]
  %v7583 = vld [vmem:[%s7541 + $0x158] sm:$0x3]
  %v7584 = vld [vmem:[%s7541 + $0x15c] sm:$0x3]
  %v7585 = vld [vmem:[%s7541 + $0x160] sm:$0x3]
  %v7586 = vld [vmem:[%s7541 + $0x164] sm:$0x3]
  %v7587 = vld [vmem:[%s7541 + $0x168] sm:$0x3]
  %v7588 = vld [vmem:[%s7541 + $0x16c] sm:$0x3]
  %v7589 = vld [vmem:[%s7541 + $0x170] sm:$0x3]
  %v7590 = vld [vmem:[%s7541 + $0x198] sm:$0x3]
  %v7591 = vld [vmem:[%s7541 + $0x19c] sm:$0x3]
  %v7592 = vld [vmem:[%s7541 + $0x1a0] sm:$0x3]
  %v7593 = vld [vmem:[%s7541 + $0x1a4] sm:$0x3]
  %v7594 = vld [vmem:[%s7541 + $0x1a8] sm:$0x3]
  %v7595 = vld [vmem:[%s7541 + $0x1ac] sm:$0x3]
  %v7596 = vld [vmem:[%s7541 + $0x1b0] sm:$0x3]
  %v7597 = vld [vmem:[%s7541 + $0x1b4] sm:$0x3]
  %v7598 = vld [vmem:[%s7541 + $0x1dc] sm:$0x3]
  %v7599 = vld [vmem:[%s7541 + $0x1e0] sm:$0x3]
  %v7600 = vld [vmem:[%s7541 + $0x1e4] sm:$0x3]
  %v7601 = vld [vmem:[%s7541 + $0x1e8] sm:$0x3]
  %v7602 = vld [vmem:[%s7541 + $0x1ec] sm:$0x3]
  %v7603 = vld [vmem:[%s7541 + $0x1f0] sm:$0x3]
  %v7604 = vld [vmem:[%s7541 + $0x1f4] sm:$0x3]
  %v7605 = vld [vmem:[%s7541 + $0x1f8] sm:$0x3]
  %v7670 = vcombine.low %v7542, %v7543
  %v7671 = vcombine.low %v7544, %v7545
  %v7673 = vunpack.c.l.s4 1983009808
  %v7674 = vunpack.c.0.s8 %v7673
  %v7675 = vlaneseq
  %v7676 = vshrl.u32 %v7675, 7
  %v7677 = vsub.s32 %v7674, %v7676
  %v7678 = vrot.slane %v7670, %v7677
  %v7680 = vunpack.c.l.s4 1983009808
  %v7681 = vunpack.c.0.s8 %v7680
  %v7682 = vlaneseq
  %v7683 = vshrl.u32 %v7682, 7
  %v7684 = vsub.s32 %v7681, %v7683
  %v7685 = vrot.slane %v7671, %v7684
  %v7686 = vcombine.low %v7678, %v7685
  %v7687 = vcombine.low %v7546, %v7547
  %v7688 = vcombine.low %v7548, %v7549
  %v7690 = vunpack.c.l.s4 1983009808
  %v7691 = vunpack.c.0.s8 %v7690
  %v7692 = vlaneseq
  %v7693 = vshrl.u32 %v7692, 7
  %v7694 = vsub.s32 %v7691, %v7693
  %v7695 = vrot.slane %v7687, %v7694
  %v7697 = vunpack.c.l.s4 1983009808
  %v7698 = vunpack.c.0.s8 %v7697
  %v7699 = vlaneseq
  %v7700 = vshrl.u32 %v7699, 7
  %v7701 = vsub.s32 %v7698, %v7700
  %v7702 = vrot.slane %v7688, %v7701
  %v7703 = vcombine.low %v7695, %v7702
  %v7704 = vcombine.low %v7550, %v7551
  %v7705 = vcombine.low %v7552, %v7553
  %v7707 = vunpack.c.l.s4 1983009808
  %v7708 = vunpack.c.0.s8 %v7707
  %v7709 = vlaneseq
  %v7710 = vshrl.u32 %v7709, 7
  %v7711 = vsub.s32 %v7708, %v7710
  %v7712 = vrot.slane %v7704, %v7711
  %v7714 = vunpack.c.l.s4 1983009808
  %v7715 = vunpack.c.0.s8 %v7714
  %v7716 = vlaneseq
  %v7717 = vshrl.u32 %v7716, 7
  %v7718 = vsub.s32 %v7715, %v7717
  %v7719 = vrot.slane %v7705, %v7718
  %v7720 = vcombine.low %v7712, %v7719
  %v7721 = vcombine.low %v7554, %v7555
  %v7722 = vcombine.low %v7556, %v7557
  %v7724 = vunpack.c.l.s4 1983009808
  %v7725 = vunpack.c.0.s8 %v7724
  %v7726 = vlaneseq
  %v7727 = vshrl.u32 %v7726, 7
  %v7728 = vsub.s32 %v7725, %v7727
  %v7729 = vrot.slane %v7721, %v7728
  %v7731 = vunpack.c.l.s4 1983009808
  %v7732 = vunpack.c.0.s8 %v7731
  %v7733 = vlaneseq
  %v7734 = vshrl.u32 %v7733, 7
  %v7735 = vsub.s32 %v7732, %v7734
  %v7736 = vrot.slane %v7722, %v7735
  %v7737 = vcombine.low %v7729, %v7736
  %v7738 = vcombine.low %v7558, %v7559
  %v7739 = vcombine.low %v7560, %v7561
  %v7741 = vunpack.c.l.s4 1983009808
  %v7742 = vunpack.c.0.s8 %v7741
  %v7743 = vlaneseq
  %v7744 = vshrl.u32 %v7743, 7
  %v7745 = vsub.s32 %v7742, %v7744
  %v7746 = vrot.slane %v7738, %v7745
  %v7748 = vunpack.c.l.s4 1983009808
  %v7749 = vunpack.c.0.s8 %v7748
  %v7750 = vlaneseq
  %v7751 = vshrl.u32 %v7750, 7
  %v7752 = vsub.s32 %v7749, %v7751
  %v7753 = vrot.slane %v7739, %v7752
  %v7754 = vcombine.low %v7746, %v7753
  %v7755 = vcombine.low %v7562, %v7563
  %v7756 = vcombine.low %v7564, %v7565
  %v7758 = vunpack.c.l.s4 1983009808
  %v7759 = vunpack.c.0.s8 %v7758
  %v7760 = vlaneseq
  %v7761 = vshrl.u32 %v7760, 7
  %v7762 = vsub.s32 %v7759, %v7761
  %v7763 = vrot.slane %v7755, %v7762
  %v7765 = vunpack.c.l.s4 1983009808
  %v7766 = vunpack.c.0.s8 %v7765
  %v7767 = vlaneseq
  %v7768 = vshrl.u32 %v7767, 7
  %v7769 = vsub.s32 %v7766, %v7768
  %v7770 = vrot.slane %v7756, %v7769
  %v7771 = vcombine.low %v7763, %v7770
  %v7772 = vcombine.low %v7566, %v7567
  %v7773 = vcombine.low %v7568, %v7569
  %v7775 = vunpack.c.l.s4 1983009808
  %v7776 = vunpack.c.0.s8 %v7775
  %v7777 = vlaneseq
  %v7778 = vshrl.u32 %v7777, 7
  %v7779 = vsub.s32 %v7776, %v7778
  %v7780 = vrot.slane %v7772, %v7779
  %v7782 = vunpack.c.l.s4 1983009808
  %v7783 = vunpack.c.0.s8 %v7782
  %v7784 = vlaneseq
  %v7785 = vshrl.u32 %v7784, 7
  %v7786 = vsub.s32 %v7783, %v7785
  %v7787 = vrot.slane %v7773, %v7786
  %v7788 = vcombine.low %v7780, %v7787
  %v7789 = vcombine.low %v7570, %v7571
  %v7790 = vcombine.low %v7572, %v7573
  %v7792 = vunpack.c.l.s4 1983009808
  %v7793 = vunpack.c.0.s8 %v7792
  %v7794 = vlaneseq
  %v7795 = vshrl.u32 %v7794, 7
  %v7796 = vsub.s32 %v7793, %v7795
  %v7797 = vrot.slane %v7789, %v7796
  %v7799 = vunpack.c.l.s4 1983009808
  %v7800 = vunpack.c.0.s8 %v7799
  %v7801 = vlaneseq
  %v7802 = vshrl.u32 %v7801, 7
  %v7803 = vsub.s32 %v7800, %v7802
  %v7804 = vrot.slane %v7790, %v7803
  %v7805 = vcombine.low %v7797, %v7804
  %v7806 = vcombine.low %v7574, %v7575
  %v7807 = vcombine.low %v7576, %v7577
  %v7809 = vunpack.c.l.s4 1983009808
  %v7810 = vunpack.c.0.s8 %v7809
  %v7811 = vlaneseq
  %v7812 = vshrl.u32 %v7811, 7
  %v7813 = vsub.s32 %v7810, %v7812
  %v7814 = vrot.slane %v7806, %v7813
  %v7816 = vunpack.c.l.s4 1983009808
  %v7817 = vunpack.c.0.s8 %v7816
  %v7818 = vlaneseq
  %v7819 = vshrl.u32 %v7818, 7
  %v7820 = vsub.s32 %v7817, %v7819
  %v7821 = vrot.slane %v7807, %v7820
  %v7822 = vcombine.low %v7814, %v7821
  %v7823 = vcombine.low %v7578, %v7579
  %v7824 = vcombine.low %v7580, %v7581
  %v7826 = vunpack.c.l.s4 1983009808
  %v7827 = vunpack.c.0.s8 %v7826
  %v7828 = vlaneseq
  %v7829 = vshrl.u32 %v7828, 7
  %v7830 = vsub.s32 %v7827, %v7829
  %v7831 = vrot.slane %v7823, %v7830
  %v7833 = vunpack.c.l.s4 1983009808
  %v7834 = vunpack.c.0.s8 %v7833
  %v7835 = vlaneseq
  %v7836 = vshrl.u32 %v7835, 7
  %v7837 = vsub.s32 %v7834, %v7836
  %v7838 = vrot.slane %v7824, %v7837
  %v7839 = vcombine.low %v7831, %v7838
  %v7840 = vcombine.low %v7582, %v7583
  %v7841 = vcombine.low %v7584, %v7585
  %v7843 = vunpack.c.l.s4 1983009808
  %v7844 = vunpack.c.0.s8 %v7843
  %v7845 = vlaneseq
  %v7846 = vshrl.u32 %v7845, 7
  %v7847 = vsub.s32 %v7844, %v7846
  %v7848 = vrot.slane %v7840, %v7847
  %v7850 = vunpack.c.l.s4 1983009808
  %v7851 = vunpack.c.0.s8 %v7850
  %v7852 = vlaneseq
  %v7853 = vshrl.u32 %v7852, 7
  %v7854 = vsub.s32 %v7851, %v7853
  %v7855 = vrot.slane %v7841, %v7854
  %v7856 = vcombine.low %v7848, %v7855
  %v7857 = vcombine.low %v7586, %v7587
  %v7858 = vcombine.low %v7588, %v7589
  %v7860 = vunpack.c.l.s4 1983009808
  %v7861 = vunpack.c.0.s8 %v7860
  %v7862 = vlaneseq
  %v7863 = vshrl.u32 %v7862, 7
  %v7864 = vsub.s32 %v7861, %v7863
  %v7865 = vrot.slane %v7857, %v7864
  %v7867 = vunpack.c.l.s4 1983009808
  %v7868 = vunpack.c.0.s8 %v7867
  %v7869 = vlaneseq
  %v7870 = vshrl.u32 %v7869, 7
  %v7871 = vsub.s32 %v7868, %v7870
  %v7872 = vrot.slane %v7858, %v7871
  %v7873 = vcombine.low %v7865, %v7872
  %v7874 = vcombine.low %v7590, %v7591
  %v7875 = vcombine.low %v7592, %v7593
  %v7877 = vunpack.c.l.s4 1983009808
  %v7878 = vunpack.c.0.s8 %v7877
  %v7879 = vlaneseq
  %v7880 = vshrl.u32 %v7879, 7
  %v7881 = vsub.s32 %v7878, %v7880
  %v7882 = vrot.slane %v7874, %v7881
  %v7884 = vunpack.c.l.s4 1983009808
  %v7885 = vunpack.c.0.s8 %v7884
  %v7886 = vlaneseq
  %v7887 = vshrl.u32 %v7886, 7
  %v7888 = vsub.s32 %v7885, %v7887
  %v7889 = vrot.slane %v7875, %v7888
  %v7890 = vcombine.low %v7882, %v7889
  %v7891 = vcombine.low %v7594, %v7595
  %v7892 = vcombine.low %v7596, %v7597
  %v7894 = vunpack.c.l.s4 1983009808
  %v7895 = vunpack.c.0.s8 %v7894
  %v7896 = vlaneseq
  %v7897 = vshrl.u32 %v7896, 7
  %v7898 = vsub.s32 %v7895, %v7897
  %v7899 = vrot.slane %v7891, %v7898
  %v7901 = vunpack.c.l.s4 1983009808
  %v7902 = vunpack.c.0.s8 %v7901
  %v7903 = vlaneseq
  %v7904 = vshrl.u32 %v7903, 7
  %v7905 = vsub.s32 %v7902, %v7904
  %v7906 = vrot.slane %v7892, %v7905
  %v7907 = vcombine.low %v7899, %v7906
  %v7908 = vcombine.low %v7598, %v7599
  %v7909 = vcombine.low %v7600, %v7601
  %v7911 = vunpack.c.l.s4 1983009808
  %v7912 = vunpack.c.0.s8 %v7911
  %v7913 = vlaneseq
  %v7914 = vshrl.u32 %v7913, 7
  %v7915 = vsub.s32 %v7912, %v7914
  %v7916 = vrot.slane %v7908, %v7915
  %v7918 = vunpack.c.l.s4 1983009808
  %v7919 = vunpack.c.0.s8 %v7918
  %v7920 = vlaneseq
  %v7921 = vshrl.u32 %v7920, 7
  %v7922 = vsub.s32 %v7919, %v7921
  %v7923 = vrot.slane %v7909, %v7922
  %v7924 = vcombine.low %v7916, %v7923
  %v7925 = vcombine.low %v7602, %v7603
  %v7926 = vcombine.low %v7604, %v7605
  %v7928 = vunpack.c.l.s4 1983009808
  %v7929 = vunpack.c.0.s8 %v7928
  %v7930 = vlaneseq
  %v7931 = vshrl.u32 %v7930, 7
  %v7932 = vsub.s32 %v7929, %v7931
  %v7933 = vrot.slane %v7925, %v7932
  %v7935 = vunpack.c.l.s4 1983009808
  %v7936 = vunpack.c.0.s8 %v7935
  %v7937 = vlaneseq
  %v7938 = vshrl.u32 %v7937, 7
  %v7939 = vsub.s32 %v7936, %v7938
  %v7940 = vrot.slane %v7926, %v7939
  %v7941 = vcombine.low %v7933, %v7940
  %v7958 = vpack.c.bf16 %v7703, %v7686
  %v7959 = vpack.c.bf16 %v7737, %v7720
  %v7960 = vpack.c.bf16 %v7771, %v7754
  %v7961 = vpack.c.bf16 %v7805, %v7788
  %v7962 = vpack.c.bf16 %v7839, %v7822
  %v7963 = vpack.c.bf16 %v7873, %v7856
  %v7964 = vpack.c.bf16 %v7907, %v7890
  %v7965 = vpack.c.bf16 %v7941, %v7924
  %s7966 = scalar_lea.vmem %s2, 448
  %v7967 = vld [vmem:[%s7966] sm:$0xf]
  %v7968 = vld [vmem:[%s7966 + $0x4] sm:$0xf]
  %v7969 = vld [vmem:[%s7966 + $0x8] sm:$0xf]
  %v7970 = vld [vmem:[%s7966 + $0xc] sm:$0xf]
  %v7971 = vld [vmem:[%s7966 + $0x10] sm:$0xf]
  %v7972 = vld [vmem:[%s7966 + $0x14] sm:$0xf]
  %v7973 = vld [vmem:[%s7966 + $0x18] sm:$0xf]
  %v7974 = vld [vmem:[%s7966 + $0x1c] sm:$0xf]
  %v7975 = vld [vmem:[%s7966 + $0x20] sm:$0xf]
  %v7976 = vld [vmem:[%s7966 + $0x24] sm:$0xf]
  %v7977 = vld [vmem:[%s7966 + $0x28] sm:$0xf]
  %v7978 = vld [vmem:[%s7966 + $0x2c] sm:$0xf]
  %v7979 = vld [vmem:[%s7966 + $0x30] sm:$0xf]
  %v7980 = vld [vmem:[%s7966 + $0x34] sm:$0xf]
  %v7981 = vld [vmem:[%s7966 + $0x38] sm:$0xf]
  %v7982 = vld [vmem:[%s7966 + $0x3c] sm:$0xf]
  %v7999 = vunpack.c.l.b16 %v7967
  %v8000 = vunpack.c.l.b16 %v7968
  %v8001 = vunpack.c.l.b16 %v7969
  %v8002 = vunpack.c.l.b16 %v7970
  %v8003 = vunpack.c.l.b16 %v7971
  %v8004 = vunpack.c.l.b16 %v7972
  %v8005 = vunpack.c.l.b16 %v7973
  %v8006 = vunpack.c.l.b16 %v7974
  %v8007 = vunpack.c.l.b16 %v7975
  %v8008 = vunpack.c.l.b16 %v7976
  %v8009 = vunpack.c.l.b16 %v7977
  %v8010 = vunpack.c.l.b16 %v7978
  %v8011 = vunpack.c.l.b16 %v7979
  %v8012 = vunpack.c.l.b16 %v7980
  %v8013 = vunpack.c.l.b16 %v7981
  %v8014 = vunpack.c.l.b16 %v7982
  %v8015 = vpack.c.b16 %v8000, %v7999
  %v8016 = vpack.c.b16 %v8002, %v8001
  %v8017 = vpack.c.b16 %v8004, %v8003
  %v8018 = vpack.c.b16 %v8006, %v8005
  %v8019 = vpack.c.b16 %v8008, %v8007
  %v8020 = vpack.c.b16 %v8010, %v8009
  %v8021 = vpack.c.b16 %v8012, %v8011
  %v8022 = vpack.c.b16 %v8014, %v8013
  %8031 = vmatprep.subr.bf16.mxu0 0
  %8032 = vmatpush1.bf16.msra.mxu0 %v8015
  %8033 = vmatprep.subr.bf16.mxu0 0
  %8034 = vmatpush1.bf16.msra.mxu0 %v8016
  %8035 = vmatprep.subr.bf16.mxu0 0
  %8036 = vmatpush1.bf16.msra.mxu0 %v8017
  %8037 = vmatprep.subr.bf16.mxu0 0
  %8038 = vmatpush1.bf16.msra.mxu0 %v8018
  %8039 = vmatprep.subr.bf16.mxu0 0
  %8040 = vmatpush1.bf16.msra.mxu0 %v8019
  %8041 = vmatprep.subr.bf16.mxu0 0
  %8042 = vmatpush1.bf16.msra.mxu0 %v8020
  %8043 = vmatprep.subr.bf16.mxu0 0
  %8044 = vmatpush1.bf16.msra.mxu0 %v8021
  %8045 = vmatprep.subr.bf16.mxu0 0
  %8046 = vmatpush1.bf16.msra.mxu0 %v8022
  %8047 = vmatprep.subr.bf16.mxu0 0
  %8048 = vmatpush1.bf16.msra.mxu0 0
  %8049 = vmatprep.subr.bf16.mxu0 0
  %8050 = vmatpush1.bf16.msra.mxu0 0
  %8051 = vmatprep.subr.bf16.mxu0 0
  %8052 = vmatpush1.bf16.msra.mxu0 0
  %8053 = vmatprep.subr.bf16.mxu0 0
  %8054 = vmatpush1.bf16.msra.mxu0 0
  %8055 = vmatprep.subr.bf16.mxu0 0
  %8056 = vmatpush1.bf16.msra.mxu0 0
  %8057 = vmatprep.subr.bf16.mxu0 0
  %8058 = vmatpush1.bf16.msra.mxu0 0
  %8059 = vmatprep.subr.bf16.mxu0 0
  %8060 = vmatpush1.bf16.msra.mxu0 0
  %8061 = vmatprep.subr.bf16.mxu0 0
  %8062 = vmatpush1.bf16.msra.mxu0 0
  %8063 = vmatprep.mubr.bf16.mxu0 0
  %8064 = vmatmul.mubr.bf16.gmra.mrb[0].mxu0 %v7958
  %v8065 = vpop.f32.mrb[0].mxu0
  %v8066 = vadd.f32 0.0, %v8065
  %v8067 = vpop.f32.mrb[0].mxu0
  %v8068 = vpop.f32.mrb[0].mxu0
  %v8069 = vadd.f32 0.0, %v8068
  %v8070 = vpop.f32.mrb[0].mxu0
  %8071 = vmatprep.mubr.bf16.mxu0 0
  %8072 = vmatmul.mubr.bf16.gmra.mrb[0].mxu0 %v7959
  %v8073 = vpop.f32.mrb[0].mxu0
  %v8074 = vadd.f32 0.0, %v8073
  %v8075 = vpop.f32.mrb[0].mxu0
  %v8076 = vpop.f32.mrb[0].mxu0
  %v8077 = vadd.f32 0.0, %v8076
  %v8078 = vpop.f32.mrb[0].mxu0
  %8079 = vmatprep.mubr.bf16.mxu0 0
  %8080 = vmatmul.mubr.bf16.gmra.mrb[0].mxu0 %v7960
  %v8081 = vpop.f32.mrb[0].mxu0
  %v8082 = vadd.f32 0.0, %v8081
  %v8083 = vpop.f32.mrb[0].mxu0
  %v8084 = vpop.f32.mrb[0].mxu0
  %v8085 = vadd.f32 0.0, %v8084
  %v8086 = vpop.f32.mrb[0].mxu0
  %8087 = vmatprep.mubr.bf16.mxu0 0
  %8088 = vmatmul.mubr.bf16.gmra.mrb[0].mxu0 %v7961
  %v8089 = vpop.f32.mrb[0].mxu0
  %v8090 = vadd.f32 0.0, %v8089
  %v8091 = vpop.f32.mrb[0].mxu0
  %v8092 = vpop.f32.mrb[0].mxu0
  %v8093 = vadd.f32 0.0, %v8092
  %v8094 = vpop.f32.mrb[0].mxu0
  %8095 = vmatprep.mubr.bf16.mxu0 0
  %8096 = vmatmul.mubr.bf16.gmra.mrb[0].mxu0 %v7962
  %v8097 = vpop.f32.mrb[0].mxu0
  %v8098 = vadd.f32 0.0, %v8097
  %v8099 = vpop.f32.mrb[0].mxu0
  %v8100 = vpop.f32.mrb[0].mxu0
  %v8101 = vadd.f32 0.0, %v8100
  %v8102 = vpop.f32.mrb[0].mxu0
  %8103 = vmatprep.mubr.bf16.mxu0 0
  %8104 = vmatmul.mubr.bf16.gmra.mrb[0].mxu0 %v7963
  %v8105 = vpop.f32.mrb[0].mxu0
  %v8106 = vadd.f32 0.0, %v8105
  %v8107 = vpop.f32.mrb[0].mxu0
  %v8108 = vpop.f32.mrb[0].mxu0
  %v8109 = vadd.f32 0.0, %v8108
  %v8110 = vpop.f32.mrb[0].mxu0
  %8111 = vmatprep.mubr.bf16.mxu0 0
  %8112 = vmatmul.mubr.bf16.gmra.mrb[0].mxu0 %v7964
  %v8113 = vpop.f32.mrb[0].mxu0
  %v8114 = vadd.f32 0.0, %v8113
  %v8115 = vpop.f32.mrb[0].mxu0
  %v8116 = vpop.f32.mrb[0].mxu0
  %v8117 = vadd.f32 0.0, %v8116
  %v8118 = vpop.f32.mrb[0].mxu0
  %8119 = vmatprep.mubr.bf16.mxu0 0
  %8120 = vmatmul.mubr.bf16.gmra.mrb[0].mxu0 %v7965
  %v8121 = vpop.f32.mrb[0].mxu0
  %v8122 = vadd.f32 0.0, %v8121
  %v8123 = vpop.f32.mrb[0].mxu0
  %v8124 = vpop.f32.mrb[0].mxu0
  %v8125 = vadd.f32 0.0, %v8124
  %v8126 = vpop.f32.mrb[0].mxu0
  %8127 = vdwg.mxu0
  %v8128 = vadd.f32 %v7525, %v8066
  %v8129 = vadd.f32 %v7526, %v8069
  %v8130 = vadd.f32 %v7527, %v8074
  %v8131 = vadd.f32 %v7528, %v8077
  %v8132 = vadd.f32 %v7529, %v8082
  %v8133 = vadd.f32 %v7530, %v8085
  %v8134 = vadd.f32 %v7531, %v8090
  %v8135 = vadd.f32 %v7532, %v8093
  %v8136 = vadd.f32 %v7533, %v8098
  %v8137 = vadd.f32 %v7534, %v8101
  %v8138 = vadd.f32 %v7535, %v8106
  %v8139 = vadd.f32 %v7536, %v8109
  %v8140 = vadd.f32 %v7537, %v8114
  %v8141 = vadd.f32 %v7538, %v8117
  %v8142 = vadd.f32 %v7539, %v8122
  %v8143 = vadd.f32 %v7540, %v8125
  %s8144 = scalar_lea.vmem [#allocation2], 72
  %v8145 = vld [vmem:[%s8144] sm:$0x3]
  %v8146 = vld [vmem:[%s8144 + $0x4] sm:$0x3]
  %v8147 = vld [vmem:[%s8144 + $0x8] sm:$0x3]
  %v8148 = vld [vmem:[%s8144 + $0xc] sm:$0x3]
  %v8149 = vld [vmem:[%s8144 + $0x10] sm:$0x3]
  %v8150 = vld [vmem:[%s8144 + $0x14] sm:$0x3]
  %v8151 = vld [vmem:[%s8144 + $0x18] sm:$0x3]
  %v8152 = vld [vmem:[%s8144 + $0x1c] sm:$0x3]
  %v8153 = vld [vmem:[%s8144 + $0x44] sm:$0x3]
  %v8154 = vld [vmem:[%s8144 + $0x48] sm:$0x3]
  %v8155 = vld [vmem:[%s8144 + $0x4c] sm:$0x3]
  %v8156 = vld [vmem:[%s8144 + $0x50] sm:$0x3]
  %v8157 = vld [vmem:[%s8144 + $0x54] sm:$0x3]
  %v8158 = vld [vmem:[%s8144 + $0x58] sm:$0x3]
  %v8159 = vld [vmem:[%s8144 + $0x5c] sm:$0x3]
  %v8160 = vld [vmem:[%s8144 + $0x60] sm:$0x3]
  %v8161 = vld [vmem:[%s8144 + $0x88] sm:$0x3]
  %v8162 = vld [vmem:[%s8144 + $0x8c] sm:$0x3]
  %v8163 = vld [vmem:[%s8144 + $0x90] sm:$0x3]
  %v8164 = vld [vmem:[%s8144 + $0x94] sm:$0x3]
  %v8165 = vld [vmem:[%s8144 + $0x98] sm:$0x3]
  %v8166 = vld [vmem:[%s8144 + $0x9c] sm:$0x3]
  %v8167 = vld [vmem:[%s8144 + $0xa0] sm:$0x3]
  %v8168 = vld [vmem:[%s8144 + $0xa4] sm:$0x3]
  %v8169 = vld [vmem:[%s8144 + $0xcc] sm:$0x3]
  %v8170 = vld [vmem:[%s8144 + $0xd0] sm:$0x3]
  %v8171 = vld [vmem:[%s8144 + $0xd4] sm:$0x3]
  %v8172 = vld [vmem:[%s8144 + $0xd8] sm:$0x3]
  %v8173 = vld [vmem:[%s8144 + $0xdc] sm:$0x3]
  %v8174 = vld [vmem:[%s8144 + $0xe0] sm:$0x3]
  %v8175 = vld [vmem:[%s8144 + $0xe4] sm:$0x3]
  %v8176 = vld [vmem:[%s8144 + $0xe8] sm:$0x3]
  %v8177 = vld [vmem:[%s8144 + $0x110] sm:$0x3]
  %v8178 = vld [vmem:[%s8144 + $0x114] sm:$0x3]
  %v8179 = vld [vmem:[%s8144 + $0x118] sm:$0x3]
  %v8180 = vld [vmem:[%s8144 + $0x11c] sm:$0x3]
  %v8181 = vld [vmem:[%s8144 + $0x120] sm:$0x3]
  %v8182 = vld [vmem:[%s8144 + $0x124] sm:$0x3]
  %v8183 = vld [vmem:[%s8144 + $0x128] sm:$0x3]
  %v8184 = vld [vmem:[%s8144 + $0x12c] sm:$0x3]
  %v8185 = vld [vmem:[%s8144 + $0x154] sm:$0x3]
  %v8186 = vld [vmem:[%s8144 + $0x158] sm:$0x3]
  %v8187 = vld [vmem:[%s8144 + $0x15c] sm:$0x3]
  %v8188 = vld [vmem:[%s8144 + $0x160] sm:$0x3]
  %v8189 = vld [vmem:[%s8144 + $0x164] sm:$0x3]
  %v8190 = vld [vmem:[%s8144 + $0x168] sm:$0x3]
  %v8191 = vld [vmem:[%s8144 + $0x16c] sm:$0x3]
  %v8192 = vld [vmem:[%s8144 + $0x170] sm:$0x3]
  %v8193 = vld [vmem:[%s8144 + $0x198] sm:$0x3]
  %v8194 = vld [vmem:[%s8144 + $0x19c] sm:$0x3]
  %v8195 = vld [vmem:[%s8144 + $0x1a0] sm:$0x3]
  %v8196 = vld [vmem:[%s8144 + $0x1a4] sm:$0x3]
  %v8197 = vld [vmem:[%s8144 + $0x1a8] sm:$0x3]
  %v8198 = vld [vmem:[%s8144 + $0x1ac] sm:$0x3]
  %v8199 = vld [vmem:[%s8144 + $0x1b0] sm:$0x3]
  %v8200 = vld [vmem:[%s8144 + $0x1b4] sm:$0x3]
  %v8201 = vld [vmem:[%s8144 + $0x1dc] sm:$0x3]
  %v8202 = vld [vmem:[%s8144 + $0x1e0] sm:$0x3]
  %v8203 = vld [vmem:[%s8144 + $0x1e4] sm:$0x3]
  %v8204 = vld [vmem:[%s8144 + $0x1e8] sm:$0x3]
  %v8205 = vld [vmem:[%s8144 + $0x1ec] sm:$0x3]
  %v8206 = vld [vmem:[%s8144 + $0x1f0] sm:$0x3]
  %v8207 = vld [vmem:[%s8144 + $0x1f4] sm:$0x3]
  %v8208 = vld [vmem:[%s8144 + $0x1f8] sm:$0x3]
  %v8273 = vcombine.low %v8145, %v8146
  %v8274 = vcombine.low %v8147, %v8148
  %v8276 = vunpack.c.l.s4 1983009808
  %v8277 = vunpack.c.0.s8 %v8276
  %v8278 = vlaneseq
  %v8279 = vshrl.u32 %v8278, 7
  %v8280 = vsub.s32 %v8277, %v8279
  %v8281 = vrot.slane %v8273, %v8280
  %v8283 = vunpack.c.l.s4 1983009808
  %v8284 = vunpack.c.0.s8 %v8283
  %v8285 = vlaneseq
  %v8286 = vshrl.u32 %v8285, 7
  %v8287 = vsub.s32 %v8284, %v8286
  %v8288 = vrot.slane %v8274, %v8287
  %v8289 = vcombine.low %v8281, %v8288
  %v8290 = vcombine.low %v8149, %v8150
  %v8291 = vcombine.low %v8151, %v8152
  %v8293 = vunpack.c.l.s4 1983009808
  %v8294 = vunpack.c.0.s8 %v8293
  %v8295 = vlaneseq
  %v8296 = vshrl.u32 %v8295, 7
  %v8297 = vsub.s32 %v8294, %v8296
  %v8298 = vrot.slane %v8290, %v8297
  %v8300 = vunpack.c.l.s4 1983009808
  %v8301 = vunpack.c.0.s8 %v8300
  %v8302 = vlaneseq
  %v8303 = vshrl.u32 %v8302, 7
  %v8304 = vsub.s32 %v8301, %v8303
  %v8305 = vrot.slane %v8291, %v8304
  %v8306 = vcombine.low %v8298, %v8305
  %v8307 = vcombine.low %v8153, %v8154
  %v8308 = vcombine.low %v8155, %v8156
  %v8310 = vunpack.c.l.s4 1983009808
  %v8311 = vunpack.c.0.s8 %v8310
  %v8312 = vlaneseq
  %v8313 = vshrl.u32 %v8312, 7
  %v8314 = vsub.s32 %v8311, %v8313
  %v8315 = vrot.slane %v8307, %v8314
  %v8317 = vunpack.c.l.s4 1983009808
  %v8318 = vunpack.c.0.s8 %v8317
  %v8319 = vlaneseq
  %v8320 = vshrl.u32 %v8319, 7
  %v8321 = vsub.s32 %v8318, %v8320
  %v8322 = vrot.slane %v8308, %v8321
  %v8323 = vcombine.low %v8315, %v8322
  %v8324 = vcombine.low %v8157, %v8158
  %v8325 = vcombine.low %v8159, %v8160
  %v8327 = vunpack.c.l.s4 1983009808
  %v8328 = vunpack.c.0.s8 %v8327
  %v8329 = vlaneseq
  %v8330 = vshrl.u32 %v8329, 7
  %v8331 = vsub.s32 %v8328, %v8330
  %v8332 = vrot.slane %v8324, %v8331
  %v8334 = vunpack.c.l.s4 1983009808
  %v8335 = vunpack.c.0.s8 %v8334
  %v8336 = vlaneseq
  %v8337 = vshrl.u32 %v8336, 7
  %v8338 = vsub.s32 %v8335, %v8337
  %v8339 = vrot.slane %v8325, %v8338
  %v8340 = vcombine.low %v8332, %v8339
  %v8341 = vcombine.low %v8161, %v8162
  %v8342 = vcombine.low %v8163, %v8164
  %v8344 = vunpack.c.l.s4 1983009808
  %v8345 = vunpack.c.0.s8 %v8344
  %v8346 = vlaneseq
  %v8347 = vshrl.u32 %v8346, 7
  %v8348 = vsub.s32 %v8345, %v8347
  %v8349 = vrot.slane %v8341, %v8348
  %v8351 = vunpack.c.l.s4 1983009808
  %v8352 = vunpack.c.0.s8 %v8351
  %v8353 = vlaneseq
  %v8354 = vshrl.u32 %v8353, 7
  %v8355 = vsub.s32 %v8352, %v8354
  %v8356 = vrot.slane %v8342, %v8355
  %v8357 = vcombine.low %v8349, %v8356
  %v8358 = vcombine.low %v8165, %v8166
  %v8359 = vcombine.low %v8167, %v8168
  %v8361 = vunpack.c.l.s4 1983009808
  %v8362 = vunpack.c.0.s8 %v8361
  %v8363 = vlaneseq
  %v8364 = vshrl.u32 %v8363, 7
  %v8365 = vsub.s32 %v8362, %v8364
  %v8366 = vrot.slane %v8358, %v8365
  %v8368 = vunpack.c.l.s4 1983009808
  %v8369 = vunpack.c.0.s8 %v8368
  %v8370 = vlaneseq
  %v8371 = vshrl.u32 %v8370, 7
  %v8372 = vsub.s32 %v8369, %v8371
  %v8373 = vrot.slane %v8359, %v8372
  %v8374 = vcombine.low %v8366, %v8373
  %v8375 = vcombine.low %v8169, %v8170
  %v8376 = vcombine.low %v8171, %v8172
  %v8378 = vunpack.c.l.s4 1983009808
  %v8379 = vunpack.c.0.s8 %v8378
  %v8380 = vlaneseq
  %v8381 = vshrl.u32 %v8380, 7
  %v8382 = vsub.s32 %v8379, %v8381
  %v8383 = vrot.slane %v8375, %v8382
  %v8385 = vunpack.c.l.s4 1983009808
  %v8386 = vunpack.c.0.s8 %v8385
  %v8387 = vlaneseq
  %v8388 = vshrl.u32 %v8387, 7
  %v8389 = vsub.s32 %v8386, %v8388
  %v8390 = vrot.slane %v8376, %v8389
  %v8391 = vcombine.low %v8383, %v8390
  %v8392 = vcombine.low %v8173, %v8174
  %v8393 = vcombine.low %v8175, %v8176
  %v8395 = vunpack.c.l.s4 1983009808
  %v8396 = vunpack.c.0.s8 %v8395
  %v8397 = vlaneseq
  %v8398 = vshrl.u32 %v8397, 7
  %v8399 = vsub.s32 %v8396, %v8398
  %v8400 = vrot.slane %v8392, %v8399
  %v8402 = vunpack.c.l.s4 1983009808
  %v8403 = vunpack.c.0.s8 %v8402
  %v8404 = vlaneseq
  %v8405 = vshrl.u32 %v8404, 7
  %v8406 = vsub.s32 %v8403, %v8405
  %v8407 = vrot.slane %v8393, %v8406
  %v8408 = vcombine.low %v8400, %v8407
  %v8409 = vcombine.low %v8177, %v8178
  %v8410 = vcombine.low %v8179, %v8180
  %v8412 = vunpack.c.l.s4 1983009808
  %v8413 = vunpack.c.0.s8 %v8412
  %v8414 = vlaneseq
  %v8415 = vshrl.u32 %v8414, 7
  %v8416 = vsub.s32 %v8413, %v8415
  %v8417 = vrot.slane %v8409, %v8416
  %v8419 = vunpack.c.l.s4 1983009808
  %v8420 = vunpack.c.0.s8 %v8419
  %v8421 = vlaneseq
  %v8422 = vshrl.u32 %v8421, 7
  %v8423 = vsub.s32 %v8420, %v8422
  %v8424 = vrot.slane %v8410, %v8423
  %v8425 = vcombine.low %v8417, %v8424
  %v8426 = vcombine.low %v8181, %v8182
  %v8427 = vcombine.low %v8183, %v8184
  %v8429 = vunpack.c.l.s4 1983009808
  %v8430 = vunpack.c.0.s8 %v8429
  %v8431 = vlaneseq
  %v8432 = vshrl.u32 %v8431, 7
  %v8433 = vsub.s32 %v8430, %v8432
  %v8434 = vrot.slane %v8426, %v8433
  %v8436 = vunpack.c.l.s4 1983009808
  %v8437 = vunpack.c.0.s8 %v8436
  %v8438 = vlaneseq
  %v8439 = vshrl.u32 %v8438, 7
  %v8440 = vsub.s32 %v8437, %v8439
  %v8441 = vrot.slane %v8427, %v8440
  %v8442 = vcombine.low %v8434, %v8441
  %v8443 = vcombine.low %v8185, %v8186
  %v8444 = vcombine.low %v8187, %v8188
  %v8446 = vunpack.c.l.s4 1983009808
  %v8447 = vunpack.c.0.s8 %v8446
  %v8448 = vlaneseq
  %v8449 = vshrl.u32 %v8448, 7
  %v8450 = vsub.s32 %v8447, %v8449
  %v8451 = vrot.slane %v8443, %v8450
  %v8453 = vunpack.c.l.s4 1983009808
  %v8454 = vunpack.c.0.s8 %v8453
  %v8455 = vlaneseq
  %v8456 = vshrl.u32 %v8455, 7
  %v8457 = vsub.s32 %v8454, %v8456
  %v8458 = vrot.slane %v8444, %v8457
  %v8459 = vcombine.low %v8451, %v8458
  %v8460 = vcombine.low %v8189, %v8190
  %v8461 = vcombine.low %v8191, %v8192
  %v8463 = vunpack.c.l.s4 1983009808
  %v8464 = vunpack.c.0.s8 %v8463
  %v8465 = vlaneseq
  %v8466 = vshrl.u32 %v8465, 7
  %v8467 = vsub.s32 %v8464, %v8466
  %v8468 = vrot.slane %v8460, %v8467
  %v8470 = vunpack.c.l.s4 1983009808
  %v8471 = vunpack.c.0.s8 %v8470
  %v8472 = vlaneseq
  %v8473 = vshrl.u32 %v8472, 7
  %v8474 = vsub.s32 %v8471, %v8473
  %v8475 = vrot.slane %v8461, %v8474
  %v8476 = vcombine.low %v8468, %v8475
  %v8477 = vcombine.low %v8193, %v8194
  %v8478 = vcombine.low %v8195, %v8196
  %v8480 = vunpack.c.l.s4 1983009808
  %v8481 = vunpack.c.0.s8 %v8480
  %v8482 = vlaneseq
  %v8483 = vshrl.u32 %v8482, 7
  %v8484 = vsub.s32 %v8481, %v8483
  %v8485 = vrot.slane %v8477, %v8484
  %v8487 = vunpack.c.l.s4 1983009808
  %v8488 = vunpack.c.0.s8 %v8487
  %v8489 = vlaneseq
  %v8490 = vshrl.u32 %v8489, 7
  %v8491 = vsub.s32 %v8488, %v8490
  %v8492 = vrot.slane %v8478, %v8491
  %v8493 = vcombine.low %v8485, %v8492
  %v8494 = vcombine.low %v8197, %v8198
  %v8495 = vcombine.low %v8199, %v8200
  %v8497 = vunpack.c.l.s4 1983009808
  %v8498 = vunpack.c.0.s8 %v8497
  %v8499 = vlaneseq
  %v8500 = vshrl.u32 %v8499, 7
  %v8501 = vsub.s32 %v8498, %v8500
  %v8502 = vrot.slane %v8494, %v8501
  %v8504 = vunpack.c.l.s4 1983009808
  %v8505 = vunpack.c.0.s8 %v8504
  %v8506 = vlaneseq
  %v8507 = vshrl.u32 %v8506, 7
  %v8508 = vsub.s32 %v8505, %v8507
  %v8509 = vrot.slane %v8495, %v8508
  %v8510 = vcombine.low %v8502, %v8509
  %v8511 = vcombine.low %v8201, %v8202
  %v8512 = vcombine.low %v8203, %v8204
  %v8514 = vunpack.c.l.s4 1983009808
  %v8515 = vunpack.c.0.s8 %v8514
  %v8516 = vlaneseq
  %v8517 = vshrl.u32 %v8516, 7
  %v8518 = vsub.s32 %v8515, %v8517
  %v8519 = vrot.slane %v8511, %v8518
  %v8521 = vunpack.c.l.s4 1983009808
  %v8522 = vunpack.c.0.s8 %v8521
  %v8523 = vlaneseq
  %v8524 = vshrl.u32 %v8523, 7
  %v8525 = vsub.s32 %v8522, %v8524
  %v8526 = vrot.slane %v8512, %v8525
  %v8527 = vcombine.low %v8519, %v8526
  %v8528 = vcombine.low %v8205, %v8206
  %v8529 = vcombine.low %v8207, %v8208
  %v8531 = vunpack.c.l.s4 1983009808
  %v8532 = vunpack.c.0.s8 %v8531
  %v8533 = vlaneseq
  %v8534 = vshrl.u32 %v8533, 7
  %v8535 = vsub.s32 %v8532, %v8534
  %v8536 = vrot.slane %v8528, %v8535
  %v8538 = vunpack.c.l.s4 1983009808
  %v8539 = vunpack.c.0.s8 %v8538
  %v8540 = vlaneseq
  %v8541 = vshrl.u32 %v8540, 7
  %v8542 = vsub.s32 %v8539, %v8541
  %v8543 = vrot.slane %v8529, %v8542
  %v8544 = vcombine.low %v8536, %v8543
  %v8561 = vpack.c.bf16 %v8306, %v8289
  %v8562 = vpack.c.bf16 %v8340, %v8323
  %v8563 = vpack.c.bf16 %v8374, %v8357
  %v8564 = vpack.c.bf16 %v8408, %v8391
  %v8565 = vpack.c.bf16 %v8442, %v8425
  %v8566 = vpack.c.bf16 %v8476, %v8459
  %v8567 = vpack.c.bf16 %v8510, %v8493
  %v8568 = vpack.c.bf16 %v8544, %v8527
  %s8569 = scalar_lea.vmem %s2, 512
  %v8570 = vld [vmem:[%s8569] sm:$0xf]
  %v8571 = vld [vmem:[%s8569 + $0x4] sm:$0xf]
  %v8572 = vld [vmem:[%s8569 + $0x8] sm:$0xf]
  %v8573 = vld [vmem:[%s8569 + $0xc] sm:$0xf]
  %v8574 = vld [vmem:[%s8569 + $0x10] sm:$0xf]
  %v8575 = vld [vmem:[%s8569 + $0x14] sm:$0xf]
  %v8576 = vld [vmem:[%s8569 + $0x18] sm:$0xf]
  %v8577 = vld [vmem:[%s8569 + $0x1c] sm:$0xf]
  %v8578 = vld [vmem:[%s8569 + $0x20] sm:$0xf]
  %v8579 = vld [vmem:[%s8569 + $0x24] sm:$0xf]
  %v8580 = vld [vmem:[%s8569 + $0x28] sm:$0xf]
  %v8581 = vld [vmem:[%s8569 + $0x2c] sm:$0xf]
  %v8582 = vld [vmem:[%s8569 + $0x30] sm:$0xf]
  %v8583 = vld [vmem:[%s8569 + $0x34] sm:$0xf]
  %v8584 = vld [vmem:[%s8569 + $0x38] sm:$0xf]
  %v8585 = vld [vmem:[%s8569 + $0x3c] sm:$0xf]
  %v8602 = vunpack.c.l.b16 %v8570
  %v8603 = vunpack.c.l.b16 %v8571
  %v8604 = vunpack.c.l.b16 %v8572
  %v8605 = vunpack.c.l.b16 %v8573
  %v8606 = vunpack.c.l.b16 %v8574
  %v8607 = vunpack.c.l.b16 %v8575
  %v8608 = vunpack.c.l.b16 %v8576
  %v8609 = vunpack.c.l.b16 %v8577
  %v8610 = vunpack.c.l.b16 %v8578
  %v8611 = vunpack.c.l.b16 %v8579
  %v8612 = vunpack.c.l.b16 %v8580
  %v8613 = vunpack.c.l.b16 %v8581
  %v8614 = vunpack.c.l.b16 %v8582
  %v8615 = vunpack.c.l.b16 %v8583
  %v8616 = vunpack.c.l.b16 %v8584
  %v8617 = vunpack.c.l.b16 %v8585
  %v8618 = vpack.c.b16 %v8603, %v8602
  %v8619 = vpack.c.b16 %v8605, %v8604
  %v8620 = vpack.c.b16 %v8607, %v8606
  %v8621 = vpack.c.b16 %v8609, %v8608
  %v8622 = vpack.c.b16 %v8611, %v8610
  %v8623 = vpack.c.b16 %v8613, %v8612
  %v8624 = vpack.c.b16 %v8615, %v8614
  %v8625 = vpack.c.b16 %v8617, %v8616
  %8634 = vmatprep.subr.bf16.mxu0 0
  %8635 = vmatpush1.bf16.msra.mxu0 %v8618
  %8636 = vmatprep.subr.bf16.mxu0 0
  %8637 = vmatpush1.bf16.msra.mxu0 %v8619
  %8638 = vmatprep.subr.bf16.mxu0 0
  %8639 = vmatpush1.bf16.msra.mxu0 %v8620
  %8640 = vmatprep.subr.bf16.mxu0 0
  %8641 = vmatpush1.bf16.msra.mxu0 %v8621
  %8642 = vmatprep.subr.bf16.mxu0 0
  %8643 = vmatpush1.bf16.msra.mxu0 %v8622
  %8644 = vmatprep.subr.bf16.mxu0 0
  %8645 = vmatpush1.bf16.msra.mxu0 %v8623
  %8646 = vmatprep.subr.bf16.mxu0 0
  %8647 = vmatpush1.bf16.msra.mxu0 %v8624
  %8648 = vmatprep.subr.bf16.mxu0 0
  %8649 = vmatpush1.bf16.msra.mxu0 %v8625
  %8650 = vmatprep.subr.bf16.mxu0 0
  %8651 = vmatpush1.bf16.msra.mxu0 0
  %8652 = vmatprep.subr.bf16.mxu0 0
  %8653 = vmatpush1.bf16.msra.mxu0 0
  %8654 = vmatprep.subr.bf16.mxu0 0
  %8655 = vmatpush1.bf16.msra.mxu0 0
  %8656 = vmatprep.subr.bf16.mxu0 0
  %8657 = vmatpush1.bf16.msra.mxu0 0
  %8658 = vmatprep.subr.bf16.mxu0 0
  %8659 = vmatpush1.bf16.msra.mxu0 0
  %8660 = vmatprep.subr.bf16.mxu0 0
  %8661 = vmatpush1.bf16.msra.mxu0 0
  %8662 = vmatprep.subr.bf16.mxu0 0
  %8663 = vmatpush1.bf16.msra.mxu0 0
  %8664 = vmatprep.subr.bf16.mxu0 0
  %8665 = vmatpush1.bf16.msra.mxu0 0
  %8666 = vmatprep.mubr.bf16.mxu0 0
  %8667 = vmatmul.mubr.bf16.gmra.mrb[0].mxu0 %v8561
  %v8668 = vpop.f32.mrb[0].mxu0
  %v8669 = vadd.f32 0.0, %v8668
  %v8670 = vpop.f32.mrb[0].mxu0
  %v8671 = vpop.f32.mrb[0].mxu0
  %v8672 = vadd.f32 0.0, %v8671
  %v8673 = vpop.f32.mrb[0].mxu0
  %8674 = vmatprep.mubr.bf16.mxu0 0
  %8675 = vmatmul.mubr.bf16.gmra.mrb[0].mxu0 %v8562
  %v8676 = vpop.f32.mrb[0].mxu0
  %v8677 = vadd.f32 0.0, %v8676
  %v8678 = vpop.f32.mrb[0].mxu0
  %v8679 = vpop.f32.mrb[0].mxu0
  %v8680 = vadd.f32 0.0, %v8679
  %v8681 = vpop.f32.mrb[0].mxu0
  %8682 = vmatprep.mubr.bf16.mxu0 0
  %8683 = vmatmul.mubr.bf16.gmra.mrb[0].mxu0 %v8563
  %v8684 = vpop.f32.mrb[0].mxu0
  %v8685 = vadd.f32 0.0, %v8684
  %v8686 = vpop.f32.mrb[0].mxu0
  %v8687 = vpop.f32.mrb[0].mxu0
  %v8688 = vadd.f32 0.0, %v8687
  %v8689 = vpop.f32.mrb[0].mxu0
  %8690 = vmatprep.mubr.bf16.mxu0 0
  %8691 = vmatmul.mubr.bf16.gmra.mrb[0].mxu0 %v8564
  %v8692 = vpop.f32.mrb[0].mxu0
  %v8693 = vadd.f32 0.0, %v8692
  %v8694 = vpop.f32.mrb[0].mxu0
  %v8695 = vpop.f32.mrb[0].mxu0
  %v8696 = vadd.f32 0.0, %v8695
  %v8697 = vpop.f32.mrb[0].mxu0
  %8698 = vmatprep.mubr.bf16.mxu0 0
  %8699 = vmatmul.mubr.bf16.gmra.mrb[0].mxu0 %v8565
  %v8700 = vpop.f32.mrb[0].mxu0
  %v8701 = vadd.f32 0.0, %v8700
  %v8702 = vpop.f32.mrb[0].mxu0
  %v8703 = vpop.f32.mrb[0].mxu0
  %v8704 = vadd.f32 0.0, %v8703
  %v8705 = vpop.f32.mrb[0].mxu0
  %8706 = vmatprep.mubr.bf16.mxu0 0
  %8707 = vmatmul.mubr.bf16.gmra.mrb[0].mxu0 %v8566
  %v8708 = vpop.f32.mrb[0].mxu0
  %v8709 = vadd.f32 0.0, %v8708
  %v8710 = vpop.f32.mrb[0].mxu0
  %v8711 = vpop.f32.mrb[0].mxu0
  %v8712 = vadd.f32 0.0, %v8711
  %v8713 = vpop.f32.mrb[0].mxu0
  %8714 = vmatprep.mubr.bf16.mxu0 0
  %8715 = vmatmul.mubr.bf16.gmra.mrb[0].mxu0 %v8567
  %v8716 = vpop.f32.mrb[0].mxu0
  %v8717 = vadd.f32 0.0, %v8716
  %v8718 = vpop.f32.mrb[0].mxu0
  %v8719 = vpop.f32.mrb[0].mxu0
  %v8720 = vadd.f32 0.0, %v8719
  %v8721 = vpop.f32.mrb[0].mxu0
  %8722 = vmatprep.mubr.bf16.mxu0 0
  %8723 = vmatmul.mubr.bf16.gmra.mrb[0].mxu0 %v8568
  %v8724 = vpop.f32.mrb[0].mxu0
  %v8725 = vadd.f32 0.0, %v8724
  %v8726 = vpop.f32.mrb[0].mxu0
  %v8727 = vpop.f32.mrb[0].mxu0
  %v8728 = vadd.f32 0.0, %v8727
  %v8729 = vpop.f32.mrb[0].mxu0
  %8730 = vdwg.mxu0
  %v8731 = vadd.f32 %v8128, %v8669
  %v8732 = vadd.f32 %v8129, %v8672
  %v8733 = vadd.f32 %v8130, %v8677
  %v8734 = vadd.f32 %v8131, %v8680
  %v8735 = vadd.f32 %v8132, %v8685
  %v8736 = vadd.f32 %v8133, %v8688
  %v8737 = vadd.f32 %v8134, %v8693
  %v8738 = vadd.f32 %v8135, %v8696
  %v8739 = vadd.f32 %v8136, %v8701
  %v8740 = vadd.f32 %v8137, %v8704
  %v8741 = vadd.f32 %v8138, %v8709
  %v8742 = vadd.f32 %v8139, %v8712
  %v8743 = vadd.f32 %v8140, %v8717
  %v8744 = vadd.f32 %v8141, %v8720
  %v8745 = vadd.f32 %v8142, %v8725
  %v8746 = vadd.f32 %v8143, %v8728
  %v8747 = vadd.f32 %v8731, %v8732
  %v8748 = vadd.f32 %v8747, %v8733
  %v8749 = vadd.f32 %v8748, %v8734
  %v8750 = vadd.f32 %v8749, %v8735
  %v8751 = vadd.f32 %v8750, %v8736
  %v8752 = vadd.f32 %v8751, %v8737
  %v8753 = vadd.f32 %v8752, %v8738
  %v8754 = vadd.f32 %v8753, %v8739
  %v8755 = vadd.f32 %v8754, %v8740
  %v8756 = vadd.f32 %v8755, %v8741
  %v8757 = vadd.f32 %v8756, %v8742
  %v8758 = vadd.f32 %v8757, %v8743
  %v8759 = vadd.f32 %v8758, %v8744
  %v8760 = vadd.f32 %v8759, %v8745
  %v8761 = vadd.f32 %v8760, %v8746
  %v8762 = vrot.slane %v8761, 4
  %v8763 = vadd.f32 %v8761, %v8762
  %v8764 = vrot.slane %v8763, 2
  %v8765 = vadd.f32 %v8763, %v8764
  %v8766 = vrot.slane %v8765, 1
  %v8767 = vadd.f32 %v8765, %v8766
  %v8768 = vmul.f32 %v8767, 0.0078125
  %v8769 = vmul.f32 %v8731, %v8731
  %v8770 = vmul.f32 %v8732, %v8732
  %v8771 = vmul.f32 %v8733, %v8733
  %v8772 = vmul.f32 %v8734, %v8734
  %v8773 = vmul.f32 %v8735, %v8735
  %v8774 = vmul.f32 %v8736, %v8736
  %v8775 = vmul.f32 %v8737, %v8737
  %v8776 = vmul.f32 %v8738, %v8738
  %v8777 = vmul.f32 %v8739, %v8739
  %v8778 = vmul.f32 %v8740, %v8740
  %v8779 = vmul.f32 %v8741, %v8741
  %v8780 = vmul.f32 %v8742, %v8742
  %v8781 = vmul.f32 %v8743, %v8743
  %v8782 = vmul.f32 %v8744, %v8744
  %v8783 = vmul.f32 %v8745, %v8745
  %v8784 = vmul.f32 %v8746, %v8746
  %v8785 = vadd.f32 %v8769, %v8770
  %v8786 = vadd.f32 %v8785, %v8771
  %v8787 = vadd.f32 %v8786, %v8772
  %v8788 = vadd.f32 %v8787, %v8773
  %v8789 = vadd.f32 %v8788, %v8774
  %v8790 = vadd.f32 %v8789, %v8775
  %v8791 = vadd.f32 %v8790, %v8776
  %v8792 = vadd.f32 %v8791, %v8777
  %v8793 = vadd.f32 %v8792, %v8778
  %v8794 = vadd.f32 %v8793, %v8779
  %v8795 = vadd.f32 %v8794, %v8780
  %v8796 = vadd.f32 %v8795, %v8781
  %v8797 = vadd.f32 %v8796, %v8782
  %v8798 = vadd.f32 %v8797, %v8783
  %v8799 = vadd.f32 %v8798, %v8784
  %v8800 = vrot.slane %v8799, 4
  %v8801 = vadd.f32 %v8799, %v8800
  %v8802 = vrot.slane %v8801, 2
  %v8803 = vadd.f32 %v8801, %v8802
  %v8804 = vrot.slane %v8803, 1
  %v8805 = vadd.f32 %v8803, %v8804
  %v8806 = vmul.f32 %v8805, 0.0078125
  %v8807 = vmul.f32 %v8768, %v8768
  %v8808 = vsub.f32 %v8806, %v8807
  %v8809 = vmax.f32 %v8808, 0.0
  %v8810 = vld [vmem:[%s5 + $0x1] sm:$0x1]
  %v8811 = vld [vmem:[%s6 + $0x1] sm:$0x1]
  %v8812 = vsub.f32 %v8731, %v8768
  %v8813 = vsub.f32 %v8732, %v8768
  %v8814 = vsub.f32 %v8733, %v8768
  %v8815 = vsub.f32 %v8734, %v8768
  %v8816 = vsub.f32 %v8735, %v8768
  %v8817 = vsub.f32 %v8736, %v8768
  %v8818 = vsub.f32 %v8737, %v8768
  %v8819 = vsub.f32 %v8738, %v8768
  %v8820 = vsub.f32 %v8739, %v8768
  %v8821 = vsub.f32 %v8740, %v8768
  %v8822 = vsub.f32 %v8741, %v8768
  %v8823 = vsub.f32 %v8742, %v8768
  %v8824 = vsub.f32 %v8743, %v8768
  %v8825 = vsub.f32 %v8744, %v8768
  %v8826 = vsub.f32 %v8745, %v8768
  %v8827 = vsub.f32 %v8746, %v8768
  %v8828 = vadd.f32 %v8809, 1e-05
  %v8829 = vrsqrt.pop %v8828
  %v8830 = vmul.f32 %v8812, %v8829
  %v8831 = vmul.f32 %v8813, %v8829
  %v8832 = vmul.f32 %v8814, %v8829
  %v8833 = vmul.f32 %v8815, %v8829
  %v8834 = vmul.f32 %v8816, %v8829
  %v8835 = vmul.f32 %v8817, %v8829
  %v8836 = vmul.f32 %v8818, %v8829
  %v8837 = vmul.f32 %v8819, %v8829
  %v8838 = vmul.f32 %v8820, %v8829
  %v8839 = vmul.f32 %v8821, %v8829
  %v8840 = vmul.f32 %v8822, %v8829
  %v8841 = vmul.f32 %v8823, %v8829
  %v8842 = vmul.f32 %v8824, %v8829
  %v8843 = vmul.f32 %v8825, %v8829
  %v8844 = vmul.f32 %v8826, %v8829
  %v8845 = vmul.f32 %v8827, %v8829
  %v8846 = vlaneseq
  %v8847 = vshrl.u32 %v8846, 7
  %v8848 = vsub.s32 0, %v8847
  %v8849 = vrot.slane %v8810, %v8848
  %v8850 = vmul.f32 %v8830, %v8849
  %v8851 = vmul.f32 %v8831, %v8849
  %v8852 = vmul.f32 %v8832, %v8849
  %v8853 = vmul.f32 %v8833, %v8849
  %v8854 = vmul.f32 %v8834, %v8849
  %v8855 = vmul.f32 %v8835, %v8849
  %v8856 = vmul.f32 %v8836, %v8849
  %v8857 = vmul.f32 %v8837, %v8849
  %v8858 = vmul.f32 %v8838, %v8849
  %v8859 = vmul.f32 %v8839, %v8849
  %v8860 = vmul.f32 %v8840, %v8849
  %v8861 = vmul.f32 %v8841, %v8849
  %v8862 = vmul.f32 %v8842, %v8849
  %v8863 = vmul.f32 %v8843, %v8849
  %v8864 = vmul.f32 %v8844, %v8849
  %v8865 = vmul.f32 %v8845, %v8849
  %v8866 = vlaneseq
  %v8867 = vshrl.u32 %v8866, 7
  %v8868 = vsub.s32 0, %v8867
  %v8869 = vrot.slane %v8811, %v8868
  %v8870 = vadd.f32 %v8850, %v8869
  %v8871 = vadd.f32 %v8851, %v8869
  %v8872 = vadd.f32 %v8852, %v8869
  %v8873 = vadd.f32 %v8853, %v8869
  %v8874 = vadd.f32 %v8854, %v8869
  %v8875 = vadd.f32 %v8855, %v8869
  %v8876 = vadd.f32 %v8856, %v8869
  %v8877 = vadd.f32 %v8857, %v8869
  %v8878 = vadd.f32 %v8858, %v8869
  %v8879 = vadd.f32 %v8859, %v8869
  %v8880 = vadd.f32 %v8860, %v8869
  %v8881 = vadd.f32 %v8861, %v8869
  %v8882 = vadd.f32 %v8862, %v8869
  %v8883 = vadd.f32 %v8863, %v8869
  %v8884 = vadd.f32 %v8864, %v8869
  %v8885 = vadd.f32 %v8865, %v8869
  %vm8886 = vcmp.ge.f32.partialorder %v8870, 0.0
  %vm8887 = vcmp.ge.f32.partialorder %v8871, 0.0
  %vm8888 = vcmp.ge.f32.partialorder %v8872, 0.0
  %vm8889 = vcmp.ge.f32.partialorder %v8873, 0.0
  %vm8890 = vcmp.ge.f32.partialorder %v8874, 0.0
  %vm8891 = vcmp.ge.f32.partialorder %v8875, 0.0
  %vm8892 = vcmp.ge.f32.partialorder %v8876, 0.0
  %vm8893 = vcmp.ge.f32.partialorder %v8877, 0.0
  %vm8894 = vcmp.ge.f32.partialorder %v8878, 0.0
  %vm8895 = vcmp.ge.f32.partialorder %v8879, 0.0
  %vm8896 = vcmp.ge.f32.partialorder %v8880, 0.0
  %vm8897 = vcmp.ge.f32.partialorder %v8881, 0.0
  %vm8898 = vcmp.ge.f32.partialorder %v8882, 0.0
  %vm8899 = vcmp.ge.f32.partialorder %v8883, 0.0
  %vm8900 = vcmp.ge.f32.partialorder %v8884, 0.0
  %vm8901 = vcmp.ge.f32.partialorder %v8885, 0.0
  %v8902 = vmul.f32 %v8870, 0.01
  %v8903 = vmul.f32 %v8871, 0.01
  %v8904 = vmul.f32 %v8872, 0.01
  %v8905 = vmul.f32 %v8873, 0.01
  %v8906 = vmul.f32 %v8874, 0.01
  %v8907 = vmul.f32 %v8875, 0.01
  %v8908 = vmul.f32 %v8876, 0.01
  %v8909 = vmul.f32 %v8877, 0.01
  %v8910 = vmul.f32 %v8878, 0.01
  %v8911 = vmul.f32 %v8879, 0.01
  %v8912 = vmul.f32 %v8880, 0.01
  %v8913 = vmul.f32 %v8881, 0.01
  %v8914 = vmul.f32 %v8882, 0.01
  %v8915 = vmul.f32 %v8883, 0.01
  %v8916 = vmul.f32 %v8884, 0.01
  %v8917 = vmul.f32 %v8885, 0.01
  %v8918 = vsel %vm8886, %v8870, %v8902
  %v8919 = vsel %vm8887, %v8871, %v8903
  %v8920 = vsel %vm8888, %v8872, %v8904
  %v8921 = vsel %vm8889, %v8873, %v8905
  %v8922 = vsel %vm8890, %v8874, %v8906
  %v8923 = vsel %vm8891, %v8875, %v8907
  %v8924 = vsel %vm8892, %v8876, %v8908
  %v8925 = vsel %vm8893, %v8877, %v8909
  %v8926 = vsel %vm8894, %v8878, %v8910
  %v8927 = vsel %vm8895, %v8879, %v8911
  %v8928 = vsel %vm8896, %v8880, %v8912
  %v8929 = vsel %vm8897, %v8881, %v8913
  %v8930 = vsel %vm8898, %v8882, %v8914
  %v8931 = vsel %vm8899, %v8883, %v8915
  %v8932 = vsel %vm8900, %v8884, %v8916
  %v8933 = vsel %vm8901, %v8885, %v8917
  %v8950 = vcombine.high %v8918, %v8918
  %v8952 = vunpack.c.l.s4 1983009808
  %v8953 = vunpack.c.0.s8 %v8952
  %v8954 = vlaneseq
  %v8955 = vshrl.u32 %v8954, 7
  %v8956 = vsub.s32 %v8953, %v8955
  %v8957 = vrot.slane %v8918, %v8956
  %v8959 = vunpack.c.l.s4 1983009808
  %v8960 = vunpack.c.0.s8 %v8959
  %v8961 = vlaneseq
  %v8962 = vshrl.u32 %v8961, 7
  %v8963 = vsub.s32 %v8960, %v8962
  %v8964 = vrot.slane %v8950, %v8963
  %v8965 = vcombine.high %v8957, %v8957
  %v8966 = vcombine.high %v8964, %v8964
  %v8967 = vcombine.high %v8919, %v8919
  %v8969 = vunpack.c.l.s4 1983009808
  %v8970 = vunpack.c.0.s8 %v8969
  %v8971 = vlaneseq
  %v8972 = vshrl.u32 %v8971, 7
  %v8973 = vsub.s32 %v8970, %v8972
  %v8974 = vrot.slane %v8919, %v8973
  %v8976 = vunpack.c.l.s4 1983009808
  %v8977 = vunpack.c.0.s8 %v8976
  %v8978 = vlaneseq
  %v8979 = vshrl.u32 %v8978, 7
  %v8980 = vsub.s32 %v8977, %v8979
  %v8981 = vrot.slane %v8967, %v8980
  %v8982 = vcombine.high %v8974, %v8974
  %v8983 = vcombine.high %v8981, %v8981
  %v8984 = vcombine.high %v8920, %v8920
  %v8986 = vunpack.c.l.s4 1983009808
  %v8987 = vunpack.c.0.s8 %v8986
  %v8988 = vlaneseq
  %v8989 = vshrl.u32 %v8988, 7
  %v8990 = vsub.s32 %v8987, %v8989
  %v8991 = vrot.slane %v8920, %v8990
  %v8993 = vunpack.c.l.s4 1983009808
  %v8994 = vunpack.c.0.s8 %v8993
  %v8995 = vlaneseq
  %v8996 = vshrl.u32 %v8995, 7
  %v8997 = vsub.s32 %v8994, %v8996
  %v8998 = vrot.slane %v8984, %v8997
  %v8999 = vcombine.high %v8991, %v8991
  %v9000 = vcombine.high %v8998, %v8998
  %v9001 = vcombine.high %v8921, %v8921
  %v9003 = vunpack.c.l.s4 1983009808
  %v9004 = vunpack.c.0.s8 %v9003
  %v9005 = vlaneseq
  %v9006 = vshrl.u32 %v9005, 7
  %v9007 = vsub.s32 %v9004, %v9006
  %v9008 = vrot.slane %v8921, %v9007
  %v9010 = vunpack.c.l.s4 1983009808
  %v9011 = vunpack.c.0.s8 %v9010
  %v9012 = vlaneseq
  %v9013 = vshrl.u32 %v9012, 7
  %v9014 = vsub.s32 %v9011, %v9013
  %v9015 = vrot.slane %v9001, %v9014
  %v9016 = vcombine.high %v9008, %v9008
  %v9017 = vcombine.high %v9015, %v9015
  %v9018 = vcombine.high %v8922, %v8922
  %v9020 = vunpack.c.l.s4 1983009808
  %v9021 = vunpack.c.0.s8 %v9020
  %v9022 = vlaneseq
  %v9023 = vshrl.u32 %v9022, 7
  %v9024 = vsub.s32 %v9021, %v9023
  %v9025 = vrot.slane %v8922, %v9024
  %v9027 = vunpack.c.l.s4 1983009808
  %v9028 = vunpack.c.0.s8 %v9027
  %v9029 = vlaneseq
  %v9030 = vshrl.u32 %v9029, 7
  %v9031 = vsub.s32 %v9028, %v9030
  %v9032 = vrot.slane %v9018, %v9031
  %v9033 = vcombine.high %v9025, %v9025
  %v9034 = vcombine.high %v9032, %v9032
  %v9035 = vcombine.high %v8923, %v8923
  %v9037 = vunpack.c.l.s4 1983009808
  %v9038 = vunpack.c.0.s8 %v9037
  %v9039 = vlaneseq
  %v9040 = vshrl.u32 %v9039, 7
  %v9041 = vsub.s32 %v9038, %v9040
  %v9042 = vrot.slane %v8923, %v9041
  %v9044 = vunpack.c.l.s4 1983009808
  %v9045 = vunpack.c.0.s8 %v9044
  %v9046 = vlaneseq
  %v9047 = vshrl.u32 %v9046, 7
  %v9048 = vsub.s32 %v9045, %v9047
  %v9049 = vrot.slane %v9035, %v9048
  %v9050 = vcombine.high %v9042, %v9042
  %v9051 = vcombine.high %v9049, %v9049
  %v9052 = vcombine.high %v8924, %v8924
  %v9054 = vunpack.c.l.s4 1983009808
  %v9055 = vunpack.c.0.s8 %v9054
  %v9056 = vlaneseq
  %v9057 = vshrl.u32 %v9056, 7
  %v9058 = vsub.s32 %v9055, %v9057
  %v9059 = vrot.slane %v8924, %v9058
  %v9061 = vunpack.c.l.s4 1983009808
  %v9062 = vunpack.c.0.s8 %v9061
  %v9063 = vlaneseq
  %v9064 = vshrl.u32 %v9063, 7
  %v9065 = vsub.s32 %v9062, %v9064
  %v9066 = vrot.slane %v9052, %v9065
  %v9067 = vcombine.high %v9059, %v9059
  %v9068 = vcombine.high %v9066, %v9066
  %v9069 = vcombine.high %v8925, %v8925
  %v9071 = vunpack.c.l.s4 1983009808
  %v9072 = vunpack.c.0.s8 %v9071
  %v9073 = vlaneseq
  %v9074 = vshrl.u32 %v9073, 7
  %v9075 = vsub.s32 %v9072, %v9074
  %v9076 = vrot.slane %v8925, %v9075
  %v9078 = vunpack.c.l.s4 1983009808
  %v9079 = vunpack.c.0.s8 %v9078
  %v9080 = vlaneseq
  %v9081 = vshrl.u32 %v9080, 7
  %v9082 = vsub.s32 %v9079, %v9081
  %v9083 = vrot.slane %v9069, %v9082
  %v9084 = vcombine.high %v9076, %v9076
  %v9085 = vcombine.high %v9083, %v9083
  %v9086 = vcombine.high %v8926, %v8926
  %v9088 = vunpack.c.l.s4 1983009808
  %v9089 = vunpack.c.0.s8 %v9088
  %v9090 = vlaneseq
  %v9091 = vshrl.u32 %v9090, 7
  %v9092 = vsub.s32 %v9089, %v9091
  %v9093 = vrot.slane %v8926, %v9092
  %v9095 = vunpack.c.l.s4 1983009808
  %v9096 = vunpack.c.0.s8 %v9095
  %v9097 = vlaneseq
  %v9098 = vshrl.u32 %v9097, 7
  %v9099 = vsub.s32 %v9096, %v9098
  %v9100 = vrot.slane %v9086, %v9099
  %v9101 = vcombine.high %v9093, %v9093
  %v9102 = vcombine.high %v9100, %v9100
  %v9103 = vcombine.high %v8927, %v8927
  %v9105 = vunpack.c.l.s4 1983009808
  %v9106 = vunpack.c.0.s8 %v9105
  %v9107 = vlaneseq
  %v9108 = vshrl.u32 %v9107, 7
  %v9109 = vsub.s32 %v9106, %v9108
  %v9110 = vrot.slane %v8927, %v9109
  %v9112 = vunpack.c.l.s4 1983009808
  %v9113 = vunpack.c.0.s8 %v9112
  %v9114 = vlaneseq
  %v9115 = vshrl.u32 %v9114, 7
  %v9116 = vsub.s32 %v9113, %v9115
  %v9117 = vrot.slane %v9103, %v9116
  %v9118 = vcombine.high %v9110, %v9110
  %v9119 = vcombine.high %v9117, %v9117
  %v9120 = vcombine.high %v8928, %v8928
  %v9122 = vunpack.c.l.s4 1983009808
  %v9123 = vunpack.c.0.s8 %v9122
  %v9124 = vlaneseq
  %v9125 = vshrl.u32 %v9124, 7
  %v9126 = vsub.s32 %v9123, %v9125
  %v9127 = vrot.slane %v8928, %v9126
  %v9129 = vunpack.c.l.s4 1983009808
  %v9130 = vunpack.c.0.s8 %v9129
  %v9131 = vlaneseq
  %v9132 = vshrl.u32 %v9131, 7
  %v9133 = vsub.s32 %v9130, %v9132
  %v9134 = vrot.slane %v9120, %v9133
  %v9135 = vcombine.high %v9127, %v9127
  %v9136 = vcombine.high %v9134, %v9134
  %v9137 = vcombine.high %v8929, %v8929
  %v9139 = vunpack.c.l.s4 1983009808
  %v9140 = vunpack.c.0.s8 %v9139
  %v9141 = vlaneseq
  %v9142 = vshrl.u32 %v9141, 7
  %v9143 = vsub.s32 %v9140, %v9142
  %v9144 = vrot.slane %v8929, %v9143
  %v9146 = vunpack.c.l.s4 1983009808
  %v9147 = vunpack.c.0.s8 %v9146
  %v9148 = vlaneseq
  %v9149 = vshrl.u32 %v9148, 7
  %v9150 = vsub.s32 %v9147, %v9149
  %v9151 = vrot.slane %v9137, %v9150
  %v9152 = vcombine.high %v9144, %v9144
  %v9153 = vcombine.high %v9151, %v9151
  %v9154 = vcombine.high %v8930, %v8930
  %v9156 = vunpack.c.l.s4 1983009808
  %v9157 = vunpack.c.0.s8 %v9156
  %v9158 = vlaneseq
  %v9159 = vshrl.u32 %v9158, 7
  %v9160 = vsub.s32 %v9157, %v9159
  %v9161 = vrot.slane %v8930, %v9160
  %v9163 = vunpack.c.l.s4 1983009808
  %v9164 = vunpack.c.0.s8 %v9163
  %v9165 = vlaneseq
  %v9166 = vshrl.u32 %v9165, 7
  %v9167 = vsub.s32 %v9164, %v9166
  %v9168 = vrot.slane %v9154, %v9167
  %v9169 = vcombine.high %v9161, %v9161
  %v9170 = vcombine.high %v9168, %v9168
  %v9171 = vcombine.high %v8931, %v8931
  %v9173 = vunpack.c.l.s4 1983009808
  %v9174 = vunpack.c.0.s8 %v9173
  %v9175 = vlaneseq
  %v9176 = vshrl.u32 %v9175, 7
  %v9177 = vsub.s32 %v9174, %v9176
  %v9178 = vrot.slane %v8931, %v9177
  %v9180 = vunpack.c.l.s4 1983009808
  %v9181 = vunpack.c.0.s8 %v9180
  %v9182 = vlaneseq
  %v9183 = vshrl.u32 %v9182, 7
  %v9184 = vsub.s32 %v9181, %v9183
  %v9185 = vrot.slane %v9171, %v9184
  %v9186 = vcombine.high %v9178, %v9178
  %v9187 = vcombine.high %v9185, %v9185
  %v9188 = vcombine.high %v8932, %v8932
  %v9190 = vunpack.c.l.s4 1983009808
  %v9191 = vunpack.c.0.s8 %v9190
  %v9192 = vlaneseq
  %v9193 = vshrl.u32 %v9192, 7
  %v9194 = vsub.s32 %v9191, %v9193
  %v9195 = vrot.slane %v8932, %v9194
  %v9197 = vunpack.c.l.s4 1983009808
  %v9198 = vunpack.c.0.s8 %v9197
  %v9199 = vlaneseq
  %v9200 = vshrl.u32 %v9199, 7
  %v9201 = vsub.s32 %v9198, %v9200
  %v9202 = vrot.slane %v9188, %v9201
  %v9203 = vcombine.high %v9195, %v9195
  %v9204 = vcombine.high %v9202, %v9202
  %v9205 = vcombine.high %v8933, %v8933
  %v9207 = vunpack.c.l.s4 1983009808
  %v9208 = vunpack.c.0.s8 %v9207
  %v9209 = vlaneseq
  %v9210 = vshrl.u32 %v9209, 7
  %v9211 = vsub.s32 %v9208, %v9210
  %v9212 = vrot.slane %v8933, %v9211
  %v9214 = vunpack.c.l.s4 1983009808
  %v9215 = vunpack.c.0.s8 %v9214
  %v9216 = vlaneseq
  %v9217 = vshrl.u32 %v9216, 7
  %v9218 = vsub.s32 %v9215, %v9217
  %v9219 = vrot.slane %v9205, %v9218
  %v9220 = vcombine.high %v9212, %v9212
  %v9221 = vcombine.high %v9219, %v9219
  %9286 = vst [vmem:[#allocation3] sm:$0x3] %v8957
  %9287 = vst [vmem:[#allocation3 + $0x2] sm:$0x3] %v8965
  %9288 = vst [vmem:[#allocation3 + $0x4] sm:$0x3] %v8964
  %9289 = vst [vmem:[#allocation3 + $0x6] sm:$0x3] %v8966
  %9290 = vst [vmem:[#allocation3 + $0x8] sm:$0x3] %v8974
  %9291 = vst [vmem:[#allocation3 + $0xa] sm:$0x3] %v8982
  %9292 = vst [vmem:[#allocation3 + $0xc] sm:$0x3] %v8981
  %9293 = vst [vmem:[#allocation3 + $0xe] sm:$0x3] %v8983
  %9294 = vst [vmem:[#allocation3 + $0x10] sm:$0x3] %v8991
  %9295 = vst [vmem:[#allocation3 + $0x12] sm:$0x3] %v8999
  %9296 = vst [vmem:[#allocation3 + $0x14] sm:$0x3] %v8998
  %9297 = vst [vmem:[#allocation3 + $0x16] sm:$0x3] %v9000
  %9298 = vst [vmem:[#allocation3 + $0x18] sm:$0x3] %v9008
  %9299 = vst [vmem:[#allocation3 + $0x1a] sm:$0x3] %v9016
  %9300 = vst [vmem:[#allocation3 + $0x1c] sm:$0x3] %v9015
  %9301 = vst [vmem:[#allocation3 + $0x1e] sm:$0x3] %v9017
  %9302 = vst [vmem:[#allocation3 + $0x20] sm:$0x3] %v9025
  %9303 = vst [vmem:[#allocation3 + $0x22] sm:$0x3] %v9033
  %9304 = vst [vmem:[#allocation3 + $0x24] sm:$0x3] %v9032
  %9305 = vst [vmem:[#allocation3 + $0x26] sm:$0x3] %v9034
  %9306 = vst [vmem:[#allocation3 + $0x28] sm:$0x3] %v9042
  %9307 = vst [vmem:[#allocation3 + $0x2a] sm:$0x3] %v9050
  %9308 = vst [vmem:[#allocation3 + $0x2c] sm:$0x3] %v9049
  %9309 = vst [vmem:[#allocation3 + $0x2e] sm:$0x3] %v9051
  %9310 = vst [vmem:[#allocation3 + $0x30] sm:$0x3] %v9059
  %9311 = vst [vmem:[#allocation3 + $0x32] sm:$0x3] %v9067
  %9312 = vst [vmem:[#allocation3 + $0x34] sm:$0x3] %v9066
  %9313 = vst [vmem:[#allocation3 + $0x36] sm:$0x3] %v9068
  %9314 = vst [vmem:[#allocation3 + $0x38] sm:$0x3] %v9076
  %9315 = vst [vmem:[#allocation3 + $0x3a] sm:$0x3] %v9084
  %9316 = vst [vmem:[#allocation3 + $0x3c] sm:$0x3] %v9083
  %9317 = vst [vmem:[#allocation3 + $0x3e] sm:$0x3] %v9085
  %9318 = vst [vmem:[#allocation3 + $0x40] sm:$0x3] %v9093
  %9319 = vst [vmem:[#allocation3 + $0x42] sm:$0x3] %v9101
  %9320 = vst [vmem:[#allocation3 + $0x44] sm:$0x3] %v9100
  %9321 = vst [vmem:[#allocation3 + $0x46] sm:$0x3] %v9102
  %9322 = vst [vmem:[#allocation3 + $0x48] sm:$0x3] %v9110
  %9323 = vst [vmem:[#allocation3 + $0x4a] sm:$0x3] %v9118
  %9324 = vst [vmem:[#allocation3 + $0x4c] sm:$0x3] %v9117
  %9325 = vst [vmem:[#allocation3 + $0x4e] sm:$0x3] %v9119
  %9326 = vst [vmem:[#allocation3 + $0x50] sm:$0x3] %v9127
  %9327 = vst [vmem:[#allocation3 + $0x52] sm:$0x3] %v9135
  %9328 = vst [vmem:[#allocation3 + $0x54] sm:$0x3] %v9134
  %9329 = vst [vmem:[#allocation3 + $0x56] sm:$0x3] %v9136
  %9330 = vst [vmem:[#allocation3 + $0x58] sm:$0x3] %v9144
  %9331 = vst [vmem:[#allocation3 + $0x5a] sm:$0x3] %v9152
  %9332 = vst [vmem:[#allocation3 + $0x5c] sm:$0x3] %v9151
  %9333 = vst [vmem:[#allocation3 + $0x5e] sm:$0x3] %v9153
  %9334 = vst [vmem:[#allocation3 + $0x60] sm:$0x3] %v9161
  %9335 = vst [vmem:[#allocation3 + $0x62] sm:$0x3] %v9169
  %9336 = vst [vmem:[#allocation3 + $0x64] sm:$0x3] %v9168
  %9337 = vst [vmem:[#allocation3 + $0x66] sm:$0x3] %v9170
  %9338 = vst [vmem:[#allocation3 + $0x68] sm:$0x3] %v9178
  %9339 = vst [vmem:[#allocation3 + $0x6a] sm:$0x3] %v9186
  %9340 = vst [vmem:[#allocation3 + $0x6c] sm:$0x3] %v9185
  %9341 = vst [vmem:[#allocation3 + $0x6e] sm:$0x3] %v9187
  %9342 = vst [vmem:[#allocation3 + $0x70] sm:$0x3] %v9195
  %9343 = vst [vmem:[#allocation3 + $0x72] sm:$0x3] %v9203
  %9344 = vst [vmem:[#allocation3 + $0x74] sm:$0x3] %v9202
  %9345 = vst [vmem:[#allocation3 + $0x76] sm:$0x3] %v9204
  %9346 = vst [vmem:[#allocation3 + $0x78] sm:$0x3] %v9212
  %9347 = vst [vmem:[#allocation3 + $0x7a] sm:$0x3] %v9220
  %9348 = vst [vmem:[#allocation3 + $0x7c] sm:$0x3] %v9219
  %9349 = vst [vmem:[#allocation3 + $0x7e] sm:$0x3] %v9221
  %v9350 = vld [vmem:[#allocation3] sm:$0x3]
  %v9351 = vld [vmem:[#allocation3 + $0x4] sm:$0x3]
  %v9352 = vld [vmem:[#allocation3 + $0x8] sm:$0x3]
  %v9353 = vld [vmem:[#allocation3 + $0x20] sm:$0x3]
  %v9354 = vld [vmem:[#allocation3 + $0x24] sm:$0x3]
  %v9355 = vld [vmem:[#allocation3 + $0x28] sm:$0x3]
  %v9356 = vld [vmem:[#allocation3 + $0x40] sm:$0x3]
  %v9357 = vld [vmem:[#allocation3 + $0x44] sm:$0x3]
  %v9358 = vld [vmem:[#allocation3 + $0x48] sm:$0x3]
  %v9368 = vcombine.low %v9350, %v9351
  %v9369 = vcombine.low %v9352, %v9353
  %v9371 = vunpack.c.l.s4 1983009808
  %v9372 = vunpack.c.0.s8 %v9371
  %v9373 = vlaneseq
  %v9374 = vshrl.u32 %v9373, 7
  %v9375 = vsub.s32 %v9372, %v9374
  %v9376 = vrot.slane %v9368, %v9375
  %v9378 = vunpack.c.l.s4 1983009808
  %v9379 = vunpack.c.0.s8 %v9378
  %v9380 = vlaneseq
  %v9381 = vshrl.u32 %v9380, 7
  %v9382 = vsub.s32 %v9379, %v9381
  %v9383 = vrot.slane %v9369, %v9382
  %v9384 = vcombine.low %v9376, %v9383
  %v9385 = vcombine.low %v9354, %v9355
  %v9386 = vcombine.low %v9356, %v9357
  %v9388 = vunpack.c.l.s4 1983009808
  %v9389 = vunpack.c.0.s8 %v9388
  %v9390 = vlaneseq
  %v9391 = vshrl.u32 %v9390, 7
  %v9392 = vsub.s32 %v9389, %v9391
  %v9393 = vrot.slane %v9385, %v9392
  %v9395 = vunpack.c.l.s4 1983009808
  %v9396 = vunpack.c.0.s8 %v9395
  %v9397 = vlaneseq
  %v9398 = vshrl.u32 %v9397, 7
  %v9399 = vsub.s32 %v9396, %v9398
  %v9400 = vrot.slane %v9386, %v9399
  %v9401 = vcombine.low %v9393, %v9400
  %v9403 = vunpack.c.l.s4 1983009808
  %v9404 = vunpack.c.0.s8 %v9403
  %v9405 = vlaneseq
  %v9406 = vshrl.u32 %v9405, 7
  %v9407 = vsub.s32 %v9404, %v9406
  %v9408 = vrot.slane %v9358, %v9407
  %v9412 = vpack.c.bf16 %v9401, %v9384
  %v9413 = vpack.c.bf16 %v9408, %v9408
  %v9414 = vld [vmem:[%s3] sm:$0xf]
  %v9415 = vld [vmem:[%s3 + $0x4] sm:$0xf]
  %v9416 = vld [vmem:[%s3 + $0x8] sm:$0xf]
  %v9417 = vld [vmem:[%s3 + $0xc] sm:$0xf]
  %v9418 = vld [vmem:[%s3 + $0x10] sm:$0xf]
  %v9419 = vld [vmem:[%s3 + $0x14] sm:$0xf]
  %v9420 = vld [vmem:[%s3 + $0x18] sm:$0xf]
  %v9421 = vld [vmem:[%s3 + $0x1c] sm:$0xf]
  %v9422 = vld [vmem:[%s3 + $0x20] sm:$0xf]
  %v9423 = vld [vmem:[%s3 + $0x24] sm:$0xf]
  %v9424 = vld [vmem:[%s3 + $0x28] sm:$0xf]
  %v9425 = vld [vmem:[%s3 + $0x2c] sm:$0xf]
  %v9426 = vld [vmem:[%s3 + $0x30] sm:$0xf]
  %v9427 = vld [vmem:[%s3 + $0x34] sm:$0xf]
  %v9428 = vld [vmem:[%s3 + $0x38] sm:$0xf]
  %v9429 = vld [vmem:[%s3 + $0x3c] sm:$0xf]
  %s9430 = scalar_lea.vmem [#allocation3], 2
  %v9431 = vld [vmem:[%s9430] sm:$0x3]
  %v9432 = vld [vmem:[%s9430 + $0x4] sm:$0x3]
  %v9433 = vld [vmem:[%s9430 + $0x8] sm:$0x3]
  %v9434 = vld [vmem:[%s9430 + $0x20] sm:$0x3]
  %v9435 = vld [vmem:[%s9430 + $0x24] sm:$0x3]
  %v9436 = vld [vmem:[%s9430 + $0x28] sm:$0x3]
  %v9437 = vld [vmem:[%s9430 + $0x40] sm:$0x3]
  %v9438 = vld [vmem:[%s9430 + $0x44] sm:$0x3]
  %v9439 = vld [vmem:[%s9430 + $0x48] sm:$0x3]
  %v9449 = vcombine.low %v9431, %v9432
  %v9450 = vcombine.low %v9433, %v9434
  %v9452 = vunpack.c.l.s4 1983009808
  %v9453 = vunpack.c.0.s8 %v9452
  %v9454 = vlaneseq
  %v9455 = vshrl.u32 %v9454, 7
  %v9456 = vsub.s32 %v9453, %v9455
  %v9457 = vrot.slane %v9449, %v9456
  %v9459 = vunpack.c.l.s4 1983009808
  %v9460 = vunpack.c.0.s8 %v9459
  %v9461 = vlaneseq
  %v9462 = vshrl.u32 %v9461, 7
  %v9463 = vsub.s32 %v9460, %v9462
  %v9464 = vrot.slane %v9450, %v9463
  %v9465 = vcombine.low %v9457, %v9464
  %v9466 = vcombine.low %v9435, %v9436
  %v9467 = vcombine.low %v9437, %v9438
  %v9469 = vunpack.c.l.s4 1983009808
  %v9470 = vunpack.c.0.s8 %v9469
  %v9471 = vlaneseq
  %v9472 = vshrl.u32 %v9471, 7
  %v9473 = vsub.s32 %v9470, %v9472
  %v9474 = vrot.slane %v9466, %v9473
  %v9476 = vunpack.c.l.s4 1983009808
  %v9477 = vunpack.c.0.s8 %v9476
  %v9478 = vlaneseq
  %v9479 = vshrl.u32 %v9478, 7
  %v9480 = vsub.s32 %v9477, %v9479
  %v9481 = vrot.slane %v9467, %v9480
  %v9482 = vcombine.low %v9474, %v9481
  %v9484 = vunpack.c.l.s4 1983009808
  %v9485 = vunpack.c.0.s8 %v9484
  %v9486 = vlaneseq
  %v9487 = vshrl.u32 %v9486, 7
  %v9488 = vsub.s32 %v9485, %v9487
  %v9489 = vrot.slane %v9439, %v9488
  %v9493 = vpack.c.bf16 %v9482, %v9465
  %v9494 = vpack.c.bf16 %v9489, %v9489
  %s9495 = scalar_lea.vmem %s3, 64
  %v9496 = vld [vmem:[%s9495] sm:$0xf]
  %v9497 = vld [vmem:[%s9495 + $0x4] sm:$0xf]
  %v9498 = vld [vmem:[%s9495 + $0x8] sm:$0xf]
  %v9499 = vld [vmem:[%s9495 + $0xc] sm:$0xf]
  %v9500 = vld [vmem:[%s9495 + $0x10] sm:$0xf]
  %v9501 = vld [vmem:[%s9495 + $0x14] sm:$0xf]
  %v9502 = vld [vmem:[%s9495 + $0x18] sm:$0xf]
  %v9503 = vld [vmem:[%s9495 + $0x1c] sm:$0xf]
  %v9504 = vld [vmem:[%s9495 + $0x20] sm:$0xf]
  %v9505 = vld [vmem:[%s9495 + $0x24] sm:$0xf]
  %v9506 = vld [vmem:[%s9495 + $0x28] sm:$0xf]
  %v9507 = vld [vmem:[%s9495 + $0x2c] sm:$0xf]
  %v9508 = vld [vmem:[%s9495 + $0x30] sm:$0xf]
  %v9509 = vld [vmem:[%s9495 + $0x34] sm:$0xf]
  %v9510 = vld [vmem:[%s9495 + $0x38] sm:$0xf]
  %v9511 = vld [vmem:[%s9495 + $0x3c] sm:$0xf]
  %v9528 = vunpack.c.l.b16 %v9496
  %v9529 = vunpack.c.l.b16 %v9497
  %v9530 = vunpack.c.l.b16 %v9498
  %v9531 = vunpack.c.l.b16 %v9499
  %v9532 = vunpack.c.l.b16 %v9500
  %v9533 = vunpack.c.l.b16 %v9501
  %v9534 = vunpack.c.l.b16 %v9502
  %v9535 = vunpack.c.l.b16 %v9503
  %v9536 = vunpack.c.l.b16 %v9504
  %v9537 = vunpack.c.l.b16 %v9505
  %v9538 = vunpack.c.l.b16 %v9506
  %v9539 = vunpack.c.l.b16 %v9507
  %v9540 = vunpack.c.l.b16 %v9508
  %v9541 = vunpack.c.l.b16 %v9509
  %v9542 = vunpack.c.l.b16 %v9510
  %v9543 = vunpack.c.l.b16 %v9511
  %v9544 = vpack.c.b16 %v9529, %v9528
  %v9545 = vpack.c.b16 %v9531, %v9530
  %v9546 = vpack.c.b16 %v9533, %v9532
  %v9547 = vpack.c.b16 %v9535, %v9534
  %v9548 = vpack.c.b16 %v9537, %v9536
  %v9549 = vpack.c.b16 %v9539, %v9538
  %v9550 = vpack.c.b16 %v9541, %v9540
  %v9551 = vpack.c.b16 %v9543, %v9542
  %9560 = vmatprep.subr.bf16.mxu0 0
  %9561 = vmatpush1.bf16.msra.mxu0 %v9544
  %9562 = vmatprep.subr.bf16.mxu0 0
  %9563 = vmatpush1.bf16.msra.mxu0 %v9545
  %9564 = vmatprep.subr.bf16.mxu0 0
  %9565 = vmatpush1.bf16.msra.mxu0 %v9546
  %9566 = vmatprep.subr.bf16.mxu0 0
  %9567 = vmatpush1.bf16.msra.mxu0 %v9547
  %9568 = vmatprep.subr.bf16.mxu0 0
  %9569 = vmatpush1.bf16.msra.mxu0 %v9548
  %9570 = vmatprep.subr.bf16.mxu0 0
  %9571 = vmatpush1.bf16.msra.mxu0 %v9549
  %9572 = vmatprep.subr.bf16.mxu0 0
  %9573 = vmatpush1.bf16.msra.mxu0 %v9550
  %9574 = vmatprep.subr.bf16.mxu0 0
  %9575 = vmatpush1.bf16.msra.mxu0 %v9551
  %9576 = vmatprep.subr.bf16.mxu0 0
  %9577 = vmatpush1.bf16.msra.mxu0 0
  %9578 = vmatprep.subr.bf16.mxu0 0
  %9579 = vmatpush1.bf16.msra.mxu0 0
  %9580 = vmatprep.subr.bf16.mxu0 0
  %9581 = vmatpush1.bf16.msra.mxu0 0
  %9582 = vmatprep.subr.bf16.mxu0 0
  %9583 = vmatpush1.bf16.msra.mxu0 0
  %9584 = vmatprep.subr.bf16.mxu0 0
  %9585 = vmatpush1.bf16.msra.mxu0 0
  %9586 = vmatprep.subr.bf16.mxu0 0
  %9587 = vmatpush1.bf16.msra.mxu0 0
  %9588 = vmatprep.subr.bf16.mxu0 0
  %9589 = vmatpush1.bf16.msra.mxu0 0
  %9590 = vmatprep.subr.bf16.mxu0 0
  %9591 = vmatpush1.bf16.msra.mxu0 0
  %9592 = vmatprep.mubr.bf16.mxu0 0
  %9593 = vmatmul.mubr.bf16.gmra.mrb[0].mxu0 %v9493
  %v9594 = vpop.f32.mrb[0].mxu0
  %v9595 = vadd.f32 0.0, %v9594
  %v9596 = vpop.f32.mrb[0].mxu0
  %v9597 = vpop.f32.mrb[0].mxu0
  %v9598 = vadd.f32 0.0, %v9597
  %v9599 = vpop.f32.mrb[0].mxu0
  %9600 = vmatprep.mubr.bf16.mxu0 0
  %9601 = vmatmul.mubr.bf16.gmra.mrb[0].mxu0 %v9494
  %v9602 = vpop.f32.mrb[0].mxu0
  %v9603 = vadd.f32 0.0, %v9602
  %v9604 = vpop.f32.mrb[0].mxu0
  %v9605 = vpop.f32.mrb[0].mxu0
  %v9606 = vpop.f32.mrb[0].mxu0
  %9607 = vdwg.mxu0
  %v9624 = vunpack.c.l.b16 %v9414
  %v9625 = vunpack.c.l.b16 %v9415
  %v9626 = vunpack.c.l.b16 %v9416
  %v9627 = vunpack.c.l.b16 %v9417
  %v9628 = vunpack.c.l.b16 %v9418
  %v9629 = vunpack.c.l.b16 %v9419
  %v9630 = vunpack.c.l.b16 %v9420
  %v9631 = vunpack.c.l.b16 %v9421
  %v9632 = vunpack.c.l.b16 %v9422
  %v9633 = vunpack.c.l.b16 %v9423
  %v9634 = vunpack.c.l.b16 %v9424
  %v9635 = vunpack.c.l.b16 %v9425
  %v9636 = vunpack.c.l.b16 %v9426
  %v9637 = vunpack.c.l.b16 %v9427
  %v9638 = vunpack.c.l.b16 %v9428
  %v9639 = vunpack.c.l.b16 %v9429
  %v9640 = vpack.c.b16 %v9625, %v9624
  %v9641 = vpack.c.b16 %v9627, %v9626
  %v9642 = vpack.c.b16 %v9629, %v9628
  %v9643 = vpack.c.b16 %v9631, %v9630
  %v9644 = vpack.c.b16 %v9633, %v9632
  %v9645 = vpack.c.b16 %v9635, %v9634
  %v9646 = vpack.c.b16 %v9637, %v9636
  %v9647 = vpack.c.b16 %v9639, %v9638
  %9656 = vmatprep.subr.bf16.mxu0 0
  %9657 = vmatpush1.bf16.msra.mxu0 %v9640
  %9658 = vmatprep.subr.bf16.mxu0 0
  %9659 = vmatpush1.bf16.msra.mxu0 %v9641
  %9660 = vmatprep.subr.bf16.mxu0 0
  %9661 = vmatpush1.bf16.msra.mxu0 %v9642
  %9662 = vmatprep.subr.bf16.mxu0 0
  %9663 = vmatpush1.bf16.msra.mxu0 %v9643
  %9664 = vmatprep.subr.bf16.mxu0 0
  %9665 = vmatpush1.bf16.msra.mxu0 %v9644
  %9666 = vmatprep.subr.bf16.mxu0 0
  %9667 = vmatpush1.bf16.msra.mxu0 %v9645
  %9668 = vmatprep.subr.bf16.mxu0 0
  %9669 = vmatpush1.bf16.msra.mxu0 %v9646
  %9670 = vmatprep.subr.bf16.mxu0 0
  %9671 = vmatpush1.bf16.msra.mxu0 %v9647
  %9672 = vmatprep.subr.bf16.mxu0 0
  %9673 = vmatpush1.bf16.msra.mxu0 0
  %9674 = vmatprep.subr.bf16.mxu0 0
  %9675 = vmatpush1.bf16.msra.mxu0 0
  %9676 = vmatprep.subr.bf16.mxu0 0
  %9677 = vmatpush1.bf16.msra.mxu0 0
  %9678 = vmatprep.subr.bf16.mxu0 0
  %9679 = vmatpush1.bf16.msra.mxu0 0
  %9680 = vmatprep.subr.bf16.mxu0 0
  %9681 = vmatpush1.bf16.msra.mxu0 0
  %9682 = vmatprep.subr.bf16.mxu0 0
  %9683 = vmatpush1.bf16.msra.mxu0 0
  %9684 = vmatprep.subr.bf16.mxu0 0
  %9685 = vmatpush1.bf16.msra.mxu0 0
  %9686 = vmatprep.subr.bf16.mxu0 0
  %9687 = vmatpush1.bf16.msra.mxu0 0
  %9688 = vmatprep.mubr.bf16.mxu0 0
  %9689 = vmatmul.mubr.bf16.gmra.mrb[0].mxu0 %v9412
  %v9690 = vpop.f32.mrb[0].mxu0
  %v9691 = vadd.f32 %v9595, %v9690
  %v9692 = vpop.f32.mrb[0].mxu0
  %v9693 = vpop.f32.mrb[0].mxu0
  %v9694 = vadd.f32 %v9598, %v9693
  %v9695 = vpop.f32.mrb[0].mxu0
  %9696 = vmatprep.mubr.bf16.mxu0 0
  %9697 = vmatmul.mubr.bf16.gmra.mrb[0].mxu0 %v9413
  %v9698 = vpop.f32.mrb[0].mxu0
  %v9699 = vadd.f32 %v9603, %v9698
  %v9700 = vpop.f32.mrb[0].mxu0
  %v9701 = vpop.f32.mrb[0].mxu0
  %v9702 = vpop.f32.mrb[0].mxu0
  %9703 = vdwg.mxu0
  %s9704 = scalar_lea.vmem [#allocation3], 4
  %v9705 = vld [vmem:[%s9704] sm:$0x3]
  %v9706 = vld [vmem:[%s9704 + $0x4] sm:$0x3]
  %v9707 = vld [vmem:[%s9704 + $0x8] sm:$0x3]
  %v9708 = vld [vmem:[%s9704 + $0x20] sm:$0x3]
  %v9709 = vld [vmem:[%s9704 + $0x24] sm:$0x3]
  %v9710 = vld [vmem:[%s9704 + $0x28] sm:$0x3]
  %v9711 = vld [vmem:[%s9704 + $0x40] sm:$0x3]
  %v9712 = vld [vmem:[%s9704 + $0x44] sm:$0x3]
  %v9713 = vld [vmem:[%s9704 + $0x48] sm:$0x3]
  %v9723 = vcombine.low %v9705, %v9706
  %v9724 = vcombine.low %v9707, %v9708
  %v9726 = vunpack.c.l.s4 1983009808
  %v9727 = vunpack.c.0.s8 %v9726
  %v9728 = vlaneseq
  %v9729 = vshrl.u32 %v9728, 7
  %v9730 = vsub.s32 %v9727, %v9729
  %v9731 = vrot.slane %v9723, %v9730
  %v9733 = vunpack.c.l.s4 1983009808
  %v9734 = vunpack.c.0.s8 %v9733
  %v9735 = vlaneseq
  %v9736 = vshrl.u32 %v9735, 7
  %v9737 = vsub.s32 %v9734, %v9736
  %v9738 = vrot.slane %v9724, %v9737
  %v9739 = vcombine.low %v9731, %v9738
  %v9740 = vcombine.low %v9709, %v9710
  %v9741 = vcombine.low %v9711, %v9712
  %v9743 = vunpack.c.l.s4 1983009808
  %v9744 = vunpack.c.0.s8 %v9743
  %v9745 = vlaneseq
  %v9746 = vshrl.u32 %v9745, 7
  %v9747 = vsub.s32 %v9744, %v9746
  %v9748 = vrot.slane %v9740, %v9747
  %v9750 = vunpack.c.l.s4 1983009808
  %v9751 = vunpack.c.0.s8 %v9750
  %v9752 = vlaneseq
  %v9753 = vshrl.u32 %v9752, 7
  %v9754 = vsub.s32 %v9751, %v9753
  %v9755 = vrot.slane %v9741, %v9754
  %v9756 = vcombine.low %v9748, %v9755
  %v9758 = vunpack.c.l.s4 1983009808
  %v9759 = vunpack.c.0.s8 %v9758
  %v9760 = vlaneseq
  %v9761 = vshrl.u32 %v9760, 7
  %v9762 = vsub.s32 %v9759, %v9761
  %v9763 = vrot.slane %v9713, %v9762
  %v9767 = vpack.c.bf16 %v9756, %v9739
  %v9768 = vpack.c.bf16 %v9763, %v9763
  %s9769 = scalar_lea.vmem %s3, 128
  %v9770 = vld [vmem:[%s9769] sm:$0xf]
  %v9771 = vld [vmem:[%s9769 + $0x4] sm:$0xf]
  %v9772 = vld [vmem:[%s9769 + $0x8] sm:$0xf]
  %v9773 = vld [vmem:[%s9769 + $0xc] sm:$0xf]
  %v9774 = vld [vmem:[%s9769 + $0x10] sm:$0xf]
  %v9775 = vld [vmem:[%s9769 + $0x14] sm:$0xf]
  %v9776 = vld [vmem:[%s9769 + $0x18] sm:$0xf]
  %v9777 = vld [vmem:[%s9769 + $0x1c] sm:$0xf]
  %v9778 = vld [vmem:[%s9769 + $0x20] sm:$0xf]
  %v9779 = vld [vmem:[%s9769 + $0x24] sm:$0xf]
  %v9780 = vld [vmem:[%s9769 + $0x28] sm:$0xf]
  %v9781 = vld [vmem:[%s9769 + $0x2c] sm:$0xf]
  %v9782 = vld [vmem:[%s9769 + $0x30] sm:$0xf]
  %v9783 = vld [vmem:[%s9769 + $0x34] sm:$0xf]
  %v9784 = vld [vmem:[%s9769 + $0x38] sm:$0xf]
  %v9785 = vld [vmem:[%s9769 + $0x3c] sm:$0xf]
  %v9802 = vunpack.c.l.b16 %v9770
  %v9803 = vunpack.c.l.b16 %v9771
  %v9804 = vunpack.c.l.b16 %v9772
  %v9805 = vunpack.c.l.b16 %v9773
  %v9806 = vunpack.c.l.b16 %v9774
  %v9807 = vunpack.c.l.b16 %v9775
  %v9808 = vunpack.c.l.b16 %v9776
  %v9809 = vunpack.c.l.b16 %v9777
  %v9810 = vunpack.c.l.b16 %v9778
  %v9811 = vunpack.c.l.b16 %v9779
  %v9812 = vunpack.c.l.b16 %v9780
  %v9813 = vunpack.c.l.b16 %v9781
  %v9814 = vunpack.c.l.b16 %v9782
  %v9815 = vunpack.c.l.b16 %v9783
  %v9816 = vunpack.c.l.b16 %v9784
  %v9817 = vunpack.c.l.b16 %v9785
  %v9818 = vpack.c.b16 %v9803, %v9802
  %v9819 = vpack.c.b16 %v9805, %v9804
  %v9820 = vpack.c.b16 %v9807, %v9806
  %v9821 = vpack.c.b16 %v9809, %v9808
  %v9822 = vpack.c.b16 %v9811, %v9810
  %v9823 = vpack.c.b16 %v9813, %v9812
  %v9824 = vpack.c.b16 %v9815, %v9814
  %v9825 = vpack.c.b16 %v9817, %v9816
  %9834 = vmatprep.subr.bf16.mxu0 0
  %9835 = vmatpush1.bf16.msra.mxu0 %v9818
  %9836 = vmatprep.subr.bf16.mxu0 0
  %9837 = vmatpush1.bf16.msra.mxu0 %v9819
  %9838 = vmatprep.subr.bf16.mxu0 0
  %9839 = vmatpush1.bf16.msra.mxu0 %v9820
  %9840 = vmatprep.subr.bf16.mxu0 0
  %9841 = vmatpush1.bf16.msra.mxu0 %v9821
  %9842 = vmatprep.subr.bf16.mxu0 0
  %9843 = vmatpush1.bf16.msra.mxu0 %v9822
  %9844 = vmatprep.subr.bf16.mxu0 0
  %9845 = vmatpush1.bf16.msra.mxu0 %v9823
  %9846 = vmatprep.subr.bf16.mxu0 0
  %9847 = vmatpush1.bf16.msra.mxu0 %v9824
  %9848 = vmatprep.subr.bf16.mxu0 0
  %9849 = vmatpush1.bf16.msra.mxu0 %v9825
  %9850 = vmatprep.subr.bf16.mxu0 0
  %9851 = vmatpush1.bf16.msra.mxu0 0
  %9852 = vmatprep.subr.bf16.mxu0 0
  %9853 = vmatpush1.bf16.msra.mxu0 0
  %9854 = vmatprep.subr.bf16.mxu0 0
  %9855 = vmatpush1.bf16.msra.mxu0 0
  %9856 = vmatprep.subr.bf16.mxu0 0
  %9857 = vmatpush1.bf16.msra.mxu0 0
  %9858 = vmatprep.subr.bf16.mxu0 0
  %9859 = vmatpush1.bf16.msra.mxu0 0
  %9860 = vmatprep.subr.bf16.mxu0 0
  %9861 = vmatpush1.bf16.msra.mxu0 0
  %9862 = vmatprep.subr.bf16.mxu0 0
  %9863 = vmatpush1.bf16.msra.mxu0 0
  %9864 = vmatprep.subr.bf16.mxu0 0
  %9865 = vmatpush1.bf16.msra.mxu0 0
  %9866 = vmatprep.mubr.bf16.mxu0 0
  %9867 = vmatmul.mubr.bf16.gmra.mrb[0].mxu0 %v9767
  %v9868 = vpop.f32.mrb[0].mxu0
  %v9869 = vadd.f32 0.0, %v9868
  %v9870 = vpop.f32.mrb[0].mxu0
  %v9871 = vpop.f32.mrb[0].mxu0
  %v9872 = vadd.f32 0.0, %v9871
  %v9873 = vpop.f32.mrb[0].mxu0
  %9874 = vmatprep.mubr.bf16.mxu0 0
  %9875 = vmatmul.mubr.bf16.gmra.mrb[0].mxu0 %v9768
  %v9876 = vpop.f32.mrb[0].mxu0
  %v9877 = vadd.f32 0.0, %v9876
  %v9878 = vpop.f32.mrb[0].mxu0
  %v9879 = vpop.f32.mrb[0].mxu0
  %v9880 = vpop.f32.mrb[0].mxu0
  %9881 = vdwg.mxu0
  %v9882 = vadd.f32 %v9691, %v9869
  %v9883 = vadd.f32 %v9694, %v9872
  %v9884 = vadd.f32 %v9699, %v9877
  %s9885 = scalar_lea.vmem [#allocation3], 16
  %v9886 = vld [vmem:[%s9885] sm:$0x3]
  %v9887 = vld [vmem:[%s9885 + $0x4] sm:$0x3]
  %v9888 = vld [vmem:[%s9885 + $0x8] sm:$0x3]
  %v9889 = vld [vmem:[%s9885 + $0x20] sm:$0x3]
  %v9890 = vld [vmem:[%s9885 + $0x24] sm:$0x3]
  %v9891 = vld [vmem:[%s9885 + $0x28] sm:$0x3]
  %v9892 = vld [vmem:[%s9885 + $0x40] sm:$0x3]
  %v9893 = vld [vmem:[%s9885 + $0x44] sm:$0x3]
  %v9894 = vld [vmem:[%s9885 + $0x48] sm:$0x3]
  %v9904 = vcombine.low %v9886, %v9887
  %v9905 = vcombine.low %v9888, %v9889
  %v9907 = vunpack.c.l.s4 1983009808
  %v9908 = vunpack.c.0.s8 %v9907
  %v9909 = vlaneseq
  %v9910 = vshrl.u32 %v9909, 7
  %v9911 = vsub.s32 %v9908, %v9910
  %v9912 = vrot.slane %v9904, %v9911
  %v9914 = vunpack.c.l.s4 1983009808
  %v9915 = vunpack.c.0.s8 %v9914
  %v9916 = vlaneseq
  %v9917 = vshrl.u32 %v9916, 7
  %v9918 = vsub.s32 %v9915, %v9917
  %v9919 = vrot.slane %v9905, %v9918
  %v9920 = vcombine.low %v9912, %v9919
  %v9921 = vcombine.low %v9890, %v9891
  %v9922 = vcombine.low %v9892, %v9893
  %v9924 = vunpack.c.l.s4 1983009808
  %v9925 = vunpack.c.0.s8 %v9924
  %v9926 = vlaneseq
  %v9927 = vshrl.u32 %v9926, 7
  %v9928 = vsub.s32 %v9925, %v9927
  %v9929 = vrot.slane %v9921, %v9928
  %v9931 = vunpack.c.l.s4 1983009808
  %v9932 = vunpack.c.0.s8 %v9931
  %v9933 = vlaneseq
  %v9934 = vshrl.u32 %v9933, 7
  %v9935 = vsub.s32 %v9932, %v9934
  %v9936 = vrot.slane %v9922, %v9935
  %v9937 = vcombine.low %v9929, %v9936
  %v9939 = vunpack.c.l.s4 1983009808
  %v9940 = vunpack.c.0.s8 %v9939
  %v9941 = vlaneseq
  %v9942 = vshrl.u32 %v9941, 7
  %v9943 = vsub.s32 %v9940, %v9942
  %v9944 = vrot.slane %v9894, %v9943
  %v9948 = vpack.c.bf16 %v9937, %v9920
  %v9949 = vpack.c.bf16 %v9944, %v9944
  %s9950 = scalar_lea.vmem %s3, 192
  %v9951 = vld [vmem:[%s9950] sm:$0xf]
  %v9952 = vld [vmem:[%s9950 + $0x4] sm:$0xf]
  %v9953 = vld [vmem:[%s9950 + $0x8] sm:$0xf]
  %v9954 = vld [vmem:[%s9950 + $0xc] sm:$0xf]
  %v9955 = vld [vmem:[%s9950 + $0x10] sm:$0xf]
  %v9956 = vld [vmem:[%s9950 + $0x14] sm:$0xf]
  %v9957 = vld [vmem:[%s9950 + $0x18] sm:$0xf]
  %v9958 = vld [vmem:[%s9950 + $0x1c] sm:$0xf]
  %v9959 = vld [vmem:[%s9950 + $0x20] sm:$0xf]
  %v9960 = vld [vmem:[%s9950 + $0x24] sm:$0xf]
  %v9961 = vld [vmem:[%s9950 + $0x28] sm:$0xf]
  %v9962 = vld [vmem:[%s9950 + $0x2c] sm:$0xf]
  %v9963 = vld [vmem:[%s9950 + $0x30] sm:$0xf]
  %v9964 = vld [vmem:[%s9950 + $0x34] sm:$0xf]
  %v9965 = vld [vmem:[%s9950 + $0x38] sm:$0xf]
  %v9966 = vld [vmem:[%s9950 + $0x3c] sm:$0xf]
  %v9983 = vunpack.c.l.b16 %v9951
  %v9984 = vunpack.c.l.b16 %v9952
  %v9985 = vunpack.c.l.b16 %v9953
  %v9986 = vunpack.c.l.b16 %v9954
  %v9987 = vunpack.c.l.b16 %v9955
  %v9988 = vunpack.c.l.b16 %v9956
  %v9989 = vunpack.c.l.b16 %v9957
  %v9990 = vunpack.c.l.b16 %v9958
  %v9991 = vunpack.c.l.b16 %v9959
  %v9992 = vunpack.c.l.b16 %v9960
  %v9993 = vunpack.c.l.b16 %v9961
  %v9994 = vunpack.c.l.b16 %v9962
  %v9995 = vunpack.c.l.b16 %v9963
  %v9996 = vunpack.c.l.b16 %v9964
  %v9997 = vunpack.c.l.b16 %v9965
  %v9998 = vunpack.c.l.b16 %v9966
  %v9999 = vpack.c.b16 %v9984, %v9983
  %v10000 = vpack.c.b16 %v9986, %v9985
  %v10001 = vpack.c.b16 %v9988, %v9987
  %v10002 = vpack.c.b16 %v9990, %v9989
  %v10003 = vpack.c.b16 %v9992, %v9991
  %v10004 = vpack.c.b16 %v9994, %v9993
  %v10005 = vpack.c.b16 %v9996, %v9995
  %v10006 = vpack.c.b16 %v9998, %v9997
  %10015 = vmatprep.subr.bf16.mxu0 0
  %10016 = vmatpush1.bf16.msra.mxu0 %v9999
  %10017 = vmatprep.subr.bf16.mxu0 0
  %10018 = vmatpush1.bf16.msra.mxu0 %v10000
  %10019 = vmatprep.subr.bf16.mxu0 0
  %10020 = vmatpush1.bf16.msra.mxu0 %v10001
  %10021 = vmatprep.subr.bf16.mxu0 0
  %10022 = vmatpush1.bf16.msra.mxu0 %v10002
  %10023 = vmatprep.subr.bf16.mxu0 0
  %10024 = vmatpush1.bf16.msra.mxu0 %v10003
  %10025 = vmatprep.subr.bf16.mxu0 0
  %10026 = vmatpush1.bf16.msra.mxu0 %v10004
  %10027 = vmatprep.subr.bf16.mxu0 0
  %10028 = vmatpush1.bf16.msra.mxu0 %v10005
  %10029 = vmatprep.subr.bf16.mxu0 0
  %10030 = vmatpush1.bf16.msra.mxu0 %v10006
  %10031 = vmatprep.subr.bf16.mxu0 0
  %10032 = vmatpush1.bf16.msra.mxu0 0
  %10033 = vmatprep.subr.bf16.mxu0 0
  %10034 = vmatpush1.bf16.msra.mxu0 0
  %10035 = vmatprep.subr.bf16.mxu0 0
  %10036 = vmatpush1.bf16.msra.mxu0 0
  %10037 = vmatprep.subr.bf16.mxu0 0
  %10038 = vmatpush1.bf16.msra.mxu0 0
  %10039 = vmatprep.subr.bf16.mxu0 0
  %10040 = vmatpush1.bf16.msra.mxu0 0
  %10041 = vmatprep.subr.bf16.mxu0 0
  %10042 = vmatpush1.bf16.msra.mxu0 0
  %10043 = vmatprep.subr.bf16.mxu0 0
  %10044 = vmatpush1.bf16.msra.mxu0 0
  %10045 = vmatprep.subr.bf16.mxu0 0
  %10046 = vmatpush1.bf16.msra.mxu0 0
  %10047 = vmatprep.mubr.bf16.mxu0 0
  %10048 = vmatmul.mubr.bf16.gmra.mrb[0].mxu0 %v9948
  %v10049 = vpop.f32.mrb[0].mxu0
  %v10050 = vadd.f32 0.0, %v10049
  %v10051 = vpop.f32.mrb[0].mxu0
  %v10052 = vpop.f32.mrb[0].mxu0
  %v10053 = vadd.f32 0.0, %v10052
  %v10054 = vpop.f32.mrb[0].mxu0
  %10055 = vmatprep.mubr.bf16.mxu0 0
  %10056 = vmatmul.mubr.bf16.gmra.mrb[0].mxu0 %v9949
  %v10057 = vpop.f32.mrb[0].mxu0
  %v10058 = vadd.f32 0.0, %v10057
  %v10059 = vpop.f32.mrb[0].mxu0
  %v10060 = vpop.f32.mrb[0].mxu0
  %v10061 = vpop.f32.mrb[0].mxu0
  %10062 = vdwg.mxu0
  %v10063 = vadd.f32 %v9882, %v10050
  %v10064 = vadd.f32 %v9883, %v10053
  %v10065 = vadd.f32 %v9884, %v10058
  %s10066 = scalar_lea.vmem [#allocation3], 18
  %v10067 = vld [vmem:[%s10066] sm:$0x3]
  %v10068 = vld [vmem:[%s10066 + $0x4] sm:$0x3]
  %v10069 = vld [vmem:[%s10066 + $0x8] sm:$0x3]
  %v10070 = vld [vmem:[%s10066 + $0x20] sm:$0x3]
  %v10071 = vld [vmem:[%s10066 + $0x24] sm:$0x3]
  %v10072 = vld [vmem:[%s10066 + $0x28] sm:$0x3]
  %v10073 = vld [vmem:[%s10066 + $0x40] sm:$0x3]
  %v10074 = vld [vmem:[%s10066 + $0x44] sm:$0x3]
  %v10075 = vld [vmem:[%s10066 + $0x48] sm:$0x3]
  %v10085 = vcombine.low %v10067, %v10068
  %v10086 = vcombine.low %v10069, %v10070
  %v10088 = vunpack.c.l.s4 1983009808
  %v10089 = vunpack.c.0.s8 %v10088
  %v10090 = vlaneseq
  %v10091 = vshrl.u32 %v10090, 7
  %v10092 = vsub.s32 %v10089, %v10091
  %v10093 = vrot.slane %v10085, %v10092
  %v10095 = vunpack.c.l.s4 1983009808
  %v10096 = vunpack.c.0.s8 %v10095
  %v10097 = vlaneseq
  %v10098 = vshrl.u32 %v10097, 7
  %v10099 = vsub.s32 %v10096, %v10098
  %v10100 = vrot.slane %v10086, %v10099
  %v10101 = vcombine.low %v10093, %v10100
  %v10102 = vcombine.low %v10071, %v10072
  %v10103 = vcombine.low %v10073, %v10074
  %v10105 = vunpack.c.l.s4 1983009808
  %v10106 = vunpack.c.0.s8 %v10105
  %v10107 = vlaneseq
  %v10108 = vshrl.u32 %v10107, 7
  %v10109 = vsub.s32 %v10106, %v10108
  %v10110 = vrot.slane %v10102, %v10109
  %v10112 = vunpack.c.l.s4 1983009808
  %v10113 = vunpack.c.0.s8 %v10112
  %v10114 = vlaneseq
  %v10115 = vshrl.u32 %v10114, 7
  %v10116 = vsub.s32 %v10113, %v10115
  %v10117 = vrot.slane %v10103, %v10116
  %v10118 = vcombine.low %v10110, %v10117
  %v10120 = vunpack.c.l.s4 1983009808
  %v10121 = vunpack.c.0.s8 %v10120
  %v10122 = vlaneseq
  %v10123 = vshrl.u32 %v10122, 7
  %v10124 = vsub.s32 %v10121, %v10123
  %v10125 = vrot.slane %v10075, %v10124
  %v10129 = vpack.c.bf16 %v10118, %v10101
  %v10130 = vpack.c.bf16 %v10125, %v10125
  %s10131 = scalar_lea.vmem %s3, 256
  %v10132 = vld [vmem:[%s10131] sm:$0xf]
  %v10133 = vld [vmem:[%s10131 + $0x4] sm:$0xf]
  %v10134 = vld [vmem:[%s10131 + $0x8] sm:$0xf]
  %v10135 = vld [vmem:[%s10131 + $0xc] sm:$0xf]
  %v10136 = vld [vmem:[%s10131 + $0x10] sm:$0xf]
  %v10137 = vld [vmem:[%s10131 + $0x14] sm:$0xf]
  %v10138 = vld [vmem:[%s10131 + $0x18] sm:$0xf]
  %v10139 = vld [vmem:[%s10131 + $0x1c] sm:$0xf]
  %v10140 = vld [vmem:[%s10131 + $0x20] sm:$0xf]
  %v10141 = vld [vmem:[%s10131 + $0x24] sm:$0xf]
  %v10142 = vld [vmem:[%s10131 + $0x28] sm:$0xf]
  %v10143 = vld [vmem:[%s10131 + $0x2c] sm:$0xf]
  %v10144 = vld [vmem:[%s10131 + $0x30] sm:$0xf]
  %v10145 = vld [vmem:[%s10131 + $0x34] sm:$0xf]
  %v10146 = vld [vmem:[%s10131 + $0x38] sm:$0xf]
  %v10147 = vld [vmem:[%s10131 + $0x3c] sm:$0xf]
  %v10164 = vunpack.c.l.b16 %v10132
  %v10165 = vunpack.c.l.b16 %v10133
  %v10166 = vunpack.c.l.b16 %v10134
  %v10167 = vunpack.c.l.b16 %v10135
  %v10168 = vunpack.c.l.b16 %v10136
  %v10169 = vunpack.c.l.b16 %v10137
  %v10170 = vunpack.c.l.b16 %v10138
  %v10171 = vunpack.c.l.b16 %v10139
  %v10172 = vunpack.c.l.b16 %v10140
  %v10173 = vunpack.c.l.b16 %v10141
  %v10174 = vunpack.c.l.b16 %v10142
  %v10175 = vunpack.c.l.b16 %v10143
  %v10176 = vunpack.c.l.b16 %v10144
  %v10177 = vunpack.c.l.b16 %v10145
  %v10178 = vunpack.c.l.b16 %v10146
  %v10179 = vunpack.c.l.b16 %v10147
  %v10180 = vpack.c.b16 %v10165, %v10164
  %v10181 = vpack.c.b16 %v10167, %v10166
  %v10182 = vpack.c.b16 %v10169, %v10168
  %v10183 = vpack.c.b16 %v10171, %v10170
  %v10184 = vpack.c.b16 %v10173, %v10172
  %v10185 = vpack.c.b16 %v10175, %v10174
  %v10186 = vpack.c.b16 %v10177, %v10176
  %v10187 = vpack.c.b16 %v10179, %v10178
  %10196 = vmatprep.subr.bf16.mxu0 0
  %10197 = vmatpush1.bf16.msra.mxu0 %v10180
  %10198 = vmatprep.subr.bf16.mxu0 0
  %10199 = vmatpush1.bf16.msra.mxu0 %v10181
  %10200 = vmatprep.subr.bf16.mxu0 0
  %10201 = vmatpush1.bf16.msra.mxu0 %v10182
  %10202 = vmatprep.subr.bf16.mxu0 0
  %10203 = vmatpush1.bf16.msra.mxu0 %v10183
  %10204 = vmatprep.subr.bf16.mxu0 0
  %10205 = vmatpush1.bf16.msra.mxu0 %v10184
  %10206 = vmatprep.subr.bf16.mxu0 0
  %10207 = vmatpush1.bf16.msra.mxu0 %v10185
  %10208 = vmatprep.subr.bf16.mxu0 0
  %10209 = vmatpush1.bf16.msra.mxu0 %v10186
  %10210 = vmatprep.subr.bf16.mxu0 0
  %10211 = vmatpush1.bf16.msra.mxu0 %v10187
  %10212 = vmatprep.subr.bf16.mxu0 0
  %10213 = vmatpush1.bf16.msra.mxu0 0
  %10214 = vmatprep.subr.bf16.mxu0 0
  %10215 = vmatpush1.bf16.msra.mxu0 0
  %10216 = vmatprep.subr.bf16.mxu0 0
  %10217 = vmatpush1.bf16.msra.mxu0 0
  %10218 = vmatprep.subr.bf16.mxu0 0
  %10219 = vmatpush1.bf16.msra.mxu0 0
  %10220 = vmatprep.subr.bf16.mxu0 0
  %10221 = vmatpush1.bf16.msra.mxu0 0
  %10222 = vmatprep.subr.bf16.mxu0 0
  %10223 = vmatpush1.bf16.msra.mxu0 0
  %10224 = vmatprep.subr.bf16.mxu0 0
  %10225 = vmatpush1.bf16.msra.mxu0 0
  %10226 = vmatprep.subr.bf16.mxu0 0
  %10227 = vmatpush1.bf16.msra.mxu0 0
  %10228 = vmatprep.mubr.bf16.mxu0 0
  %10229 = vmatmul.mubr.bf16.gmra.mrb[0].mxu0 %v10129
  %v10230 = vpop.f32.mrb[0].mxu0
  %v10231 = vadd.f32 0.0, %v10230
  %v10232 = vpop.f32.mrb[0].mxu0
  %v10233 = vpop.f32.mrb[0].mxu0
  %v10234 = vadd.f32 0.0, %v10233
  %v10235 = vpop.f32.mrb[0].mxu0
  %10236 = vmatprep.mubr.bf16.mxu0 0
  %10237 = vmatmul.mubr.bf16.gmra.mrb[0].mxu0 %v10130
  %v10238 = vpop.f32.mrb[0].mxu0
  %v10239 = vadd.f32 0.0, %v10238
  %v10240 = vpop.f32.mrb[0].mxu0
  %v10241 = vpop.f32.mrb[0].mxu0
  %v10242 = vpop.f32.mrb[0].mxu0
  %10243 = vdwg.mxu0
  %v10244 = vadd.f32 %v10063, %v10231
  %v10245 = vadd.f32 %v10064, %v10234
  %v10246 = vadd.f32 %v10065, %v10239
  %s10247 = scalar_lea.vmem [#allocation3], 20
  %v10248 = vld [vmem:[%s10247] sm:$0x3]
  %v10249 = vld [vmem:[%s10247 + $0x4] sm:$0x3]
  %v10250 = vld [vmem:[%s10247 + $0x8] sm:$0x3]
  %v10251 = vld [vmem:[%s10247 + $0x20] sm:$0x3]
  %v10252 = vld [vmem:[%s10247 + $0x24] sm:$0x3]
  %v10253 = vld [vmem:[%s10247 + $0x28] sm:$0x3]
  %v10254 = vld [vmem:[%s10247 + $0x40] sm:$0x3]
  %v10255 = vld [vmem:[%s10247 + $0x44] sm:$0x3]
  %v10256 = vld [vmem:[%s10247 + $0x48] sm:$0x3]
  %v10266 = vcombine.low %v10248, %v10249
  %v10267 = vcombine.low %v10250, %v10251
  %v10269 = vunpack.c.l.s4 1983009808
  %v10270 = vunpack.c.0.s8 %v10269
  %v10271 = vlaneseq
  %v10272 = vshrl.u32 %v10271, 7
  %v10273 = vsub.s32 %v10270, %v10272
  %v10274 = vrot.slane %v10266, %v10273
  %v10276 = vunpack.c.l.s4 1983009808
  %v10277 = vunpack.c.0.s8 %v10276
  %v10278 = vlaneseq
  %v10279 = vshrl.u32 %v10278, 7
  %v10280 = vsub.s32 %v10277, %v10279
  %v10281 = vrot.slane %v10267, %v10280
  %v10282 = vcombine.low %v10274, %v10281
  %v10283 = vcombine.low %v10252, %v10253
  %v10284 = vcombine.low %v10254, %v10255
  %v10286 = vunpack.c.l.s4 1983009808
  %v10287 = vunpack.c.0.s8 %v10286
  %v10288 = vlaneseq
  %v10289 = vshrl.u32 %v10288, 7
  %v10290 = vsub.s32 %v10287, %v10289
  %v10291 = vrot.slane %v10283, %v10290
  %v10293 = vunpack.c.l.s4 1983009808
  %v10294 = vunpack.c.0.s8 %v10293
  %v10295 = vlaneseq
  %v10296 = vshrl.u32 %v10295, 7
  %v10297 = vsub.s32 %v10294, %v10296
  %v10298 = vrot.slane %v10284, %v10297
  %v10299 = vcombine.low %v10291, %v10298
  %v10301 = vunpack.c.l.s4 1983009808
  %v10302 = vunpack.c.0.s8 %v10301
  %v10303 = vlaneseq
  %v10304 = vshrl.u32 %v10303, 7
  %v10305 = vsub.s32 %v10302, %v10304
  %v10306 = vrot.slane %v10256, %v10305
  %v10310 = vpack.c.bf16 %v10299, %v10282
  %v10311 = vpack.c.bf16 %v10306, %v10306
  %s10312 = scalar_lea.vmem %s3, 320
  %v10313 = vld [vmem:[%s10312] sm:$0xf]
  %v10314 = vld [vmem:[%s10312 + $0x4] sm:$0xf]
  %v10315 = vld [vmem:[%s10312 + $0x8] sm:$0xf]
  %v10316 = vld [vmem:[%s10312 + $0xc] sm:$0xf]
  %v10317 = vld [vmem:[%s10312 + $0x10] sm:$0xf]
  %v10318 = vld [vmem:[%s10312 + $0x14] sm:$0xf]
  %v10319 = vld [vmem:[%s10312 + $0x18] sm:$0xf]
  %v10320 = vld [vmem:[%s10312 + $0x1c] sm:$0xf]
  %v10321 = vld [vmem:[%s10312 + $0x20] sm:$0xf]
  %v10322 = vld [vmem:[%s10312 + $0x24] sm:$0xf]
  %v10323 = vld [vmem:[%s10312 + $0x28] sm:$0xf]
  %v10324 = vld [vmem:[%s10312 + $0x2c] sm:$0xf]
  %v10325 = vld [vmem:[%s10312 + $0x30] sm:$0xf]
  %v10326 = vld [vmem:[%s10312 + $0x34] sm:$0xf]
  %v10327 = vld [vmem:[%s10312 + $0x38] sm:$0xf]
  %v10328 = vld [vmem:[%s10312 + $0x3c] sm:$0xf]
  %v10345 = vunpack.c.l.b16 %v10313
  %v10346 = vunpack.c.l.b16 %v10314
  %v10347 = vunpack.c.l.b16 %v10315
  %v10348 = vunpack.c.l.b16 %v10316
  %v10349 = vunpack.c.l.b16 %v10317
  %v10350 = vunpack.c.l.b16 %v10318
  %v10351 = vunpack.c.l.b16 %v10319
  %v10352 = vunpack.c.l.b16 %v10320
  %v10353 = vunpack.c.l.b16 %v10321
  %v10354 = vunpack.c.l.b16 %v10322
  %v10355 = vunpack.c.l.b16 %v10323
  %v10356 = vunpack.c.l.b16 %v10324
  %v10357 = vunpack.c.l.b16 %v10325
  %v10358 = vunpack.c.l.b16 %v10326
  %v10359 = vunpack.c.l.b16 %v10327
  %v10360 = vunpack.c.l.b16 %v10328
  %v10361 = vpack.c.b16 %v10346, %v10345
  %v10362 = vpack.c.b16 %v10348, %v10347
  %v10363 = vpack.c.b16 %v10350, %v10349
  %v10364 = vpack.c.b16 %v10352, %v10351
  %v10365 = vpack.c.b16 %v10354, %v10353
  %v10366 = vpack.c.b16 %v10356, %v10355
  %v10367 = vpack.c.b16 %v10358, %v10357
  %v10368 = vpack.c.b16 %v10360, %v10359
  %10377 = vmatprep.subr.bf16.mxu0 0
  %10378 = vmatpush1.bf16.msra.mxu0 %v10361
  %10379 = vmatprep.subr.bf16.mxu0 0
  %10380 = vmatpush1.bf16.msra.mxu0 %v10362
  %10381 = vmatprep.subr.bf16.mxu0 0
  %10382 = vmatpush1.bf16.msra.mxu0 %v10363
  %10383 = vmatprep.subr.bf16.mxu0 0
  %10384 = vmatpush1.bf16.msra.mxu0 %v10364
  %10385 = vmatprep.subr.bf16.mxu0 0
  %10386 = vmatpush1.bf16.msra.mxu0 %v10365
  %10387 = vmatprep.subr.bf16.mxu0 0
  %10388 = vmatpush1.bf16.msra.mxu0 %v10366
  %10389 = vmatprep.subr.bf16.mxu0 0
  %10390 = vmatpush1.bf16.msra.mxu0 %v10367
  %10391 = vmatprep.subr.bf16.mxu0 0
  %10392 = vmatpush1.bf16.msra.mxu0 %v10368
  %10393 = vmatprep.subr.bf16.mxu0 0
  %10394 = vmatpush1.bf16.msra.mxu0 0
  %10395 = vmatprep.subr.bf16.mxu0 0
  %10396 = vmatpush1.bf16.msra.mxu0 0
  %10397 = vmatprep.subr.bf16.mxu0 0
  %10398 = vmatpush1.bf16.msra.mxu0 0
  %10399 = vmatprep.subr.bf16.mxu0 0
  %10400 = vmatpush1.bf16.msra.mxu0 0
  %10401 = vmatprep.subr.bf16.mxu0 0
  %10402 = vmatpush1.bf16.msra.mxu0 0
  %10403 = vmatprep.subr.bf16.mxu0 0
  %10404 = vmatpush1.bf16.msra.mxu0 0
  %10405 = vmatprep.subr.bf16.mxu0 0
  %10406 = vmatpush1.bf16.msra.mxu0 0
  %10407 = vmatprep.subr.bf16.mxu0 0
  %10408 = vmatpush1.bf16.msra.mxu0 0
  %10409 = vmatprep.mubr.bf16.mxu0 0
  %10410 = vmatmul.mubr.bf16.gmra.mrb[0].mxu0 %v10310
  %v10411 = vpop.f32.mrb[0].mxu0
  %v10412 = vadd.f32 0.0, %v10411
  %v10413 = vpop.f32.mrb[0].mxu0
  %v10414 = vpop.f32.mrb[0].mxu0
  %v10415 = vadd.f32 0.0, %v10414
  %v10416 = vpop.f32.mrb[0].mxu0
  %10417 = vmatprep.mubr.bf16.mxu0 0
  %10418 = vmatmul.mubr.bf16.gmra.mrb[0].mxu0 %v10311
  %v10419 = vpop.f32.mrb[0].mxu0
  %v10420 = vadd.f32 0.0, %v10419
  %v10421 = vpop.f32.mrb[0].mxu0
  %v10422 = vpop.f32.mrb[0].mxu0
  %v10423 = vpop.f32.mrb[0].mxu0
  %10424 = vdwg.mxu0
  %v10425 = vadd.f32 %v10244, %v10412
  %v10426 = vadd.f32 %v10245, %v10415
  %v10427 = vadd.f32 %v10246, %v10420
  %s10428 = scalar_lea.vmem [#allocation3], 32
  %v10429 = vld [vmem:[%s10428] sm:$0x3]
  %v10430 = vld [vmem:[%s10428 + $0x4] sm:$0x3]
  %v10431 = vld [vmem:[%s10428 + $0x8] sm:$0x3]
  %v10432 = vld [vmem:[%s10428 + $0x20] sm:$0x3]
  %v10433 = vld [vmem:[%s10428 + $0x24] sm:$0x3]
  %v10434 = vld [vmem:[%s10428 + $0x28] sm:$0x3]
  %v10435 = vld [vmem:[%s10428 + $0x40] sm:$0x3]
  %v10436 = vld [vmem:[%s10428 + $0x44] sm:$0x3]
  %v10437 = vld [vmem:[%s10428 + $0x48] sm:$0x3]
  %v10447 = vcombine.low %v10429, %v10430
  %v10448 = vcombine.low %v10431, %v10432
  %v10450 = vunpack.c.l.s4 1983009808
  %v10451 = vunpack.c.0.s8 %v10450
  %v10452 = vlaneseq
  %v10453 = vshrl.u32 %v10452, 7
  %v10454 = vsub.s32 %v10451, %v10453
  %v10455 = vrot.slane %v10447, %v10454
  %v10457 = vunpack.c.l.s4 1983009808
  %v10458 = vunpack.c.0.s8 %v10457
  %v10459 = vlaneseq
  %v10460 = vshrl.u32 %v10459, 7
  %v10461 = vsub.s32 %v10458, %v10460
  %v10462 = vrot.slane %v10448, %v10461
  %v10463 = vcombine.low %v10455, %v10462
  %v10464 = vcombine.low %v10433, %v10434
  %v10465 = vcombine.low %v10435, %v10436
  %v10467 = vunpack.c.l.s4 1983009808
  %v10468 = vunpack.c.0.s8 %v10467
  %v10469 = vlaneseq
  %v10470 = vshrl.u32 %v10469, 7
  %v10471 = vsub.s32 %v10468, %v10470
  %v10472 = vrot.slane %v10464, %v10471
  %v10474 = vunpack.c.l.s4 1983009808
  %v10475 = vunpack.c.0.s8 %v10474
  %v10476 = vlaneseq
  %v10477 = vshrl.u32 %v10476, 7
  %v10478 = vsub.s32 %v10475, %v10477
  %v10479 = vrot.slane %v10465, %v10478
  %v10480 = vcombine.low %v10472, %v10479
  %v10482 = vunpack.c.l.s4 1983009808
  %v10483 = vunpack.c.0.s8 %v10482
  %v10484 = vlaneseq
  %v10485 = vshrl.u32 %v10484, 7
  %v10486 = vsub.s32 %v10483, %v10485
  %v10487 = vrot.slane %v10437, %v10486
  %v10491 = vpack.c.bf16 %v10480, %v10463
  %v10492 = vpack.c.bf16 %v10487, %v10487
  %s10493 = scalar_lea.vmem %s3, 384
  %v10494 = vld [vmem:[%s10493] sm:$0xf]
  %v10495 = vld [vmem:[%s10493 + $0x4] sm:$0xf]
  %v10496 = vld [vmem:[%s10493 + $0x8] sm:$0xf]
  %v10497 = vld [vmem:[%s10493 + $0xc] sm:$0xf]
  %v10498 = vld [vmem:[%s10493 + $0x10] sm:$0xf]
  %v10499 = vld [vmem:[%s10493 + $0x14] sm:$0xf]
  %v10500 = vld [vmem:[%s10493 + $0x18] sm:$0xf]
  %v10501 = vld [vmem:[%s10493 + $0x1c] sm:$0xf]
  %v10502 = vld [vmem:[%s10493 + $0x20] sm:$0xf]
  %v10503 = vld [vmem:[%s10493 + $0x24] sm:$0xf]
  %v10504 = vld [vmem:[%s10493 + $0x28] sm:$0xf]
  %v10505 = vld [vmem:[%s10493 + $0x2c] sm:$0xf]
  %v10506 = vld [vmem:[%s10493 + $0x30] sm:$0xf]
  %v10507 = vld [vmem:[%s10493 + $0x34] sm:$0xf]
  %v10508 = vld [vmem:[%s10493 + $0x38] sm:$0xf]
  %v10509 = vld [vmem:[%s10493 + $0x3c] sm:$0xf]
  %v10526 = vunpack.c.l.b16 %v10494
  %v10527 = vunpack.c.l.b16 %v10495
  %v10528 = vunpack.c.l.b16 %v10496
  %v10529 = vunpack.c.l.b16 %v10497
  %v10530 = vunpack.c.l.b16 %v10498
  %v10531 = vunpack.c.l.b16 %v10499
  %v10532 = vunpack.c.l.b16 %v10500
  %v10533 = vunpack.c.l.b16 %v10501
  %v10534 = vunpack.c.l.b16 %v10502
  %v10535 = vunpack.c.l.b16 %v10503
  %v10536 = vunpack.c.l.b16 %v10504
  %v10537 = vunpack.c.l.b16 %v10505
  %v10538 = vunpack.c.l.b16 %v10506
  %v10539 = vunpack.c.l.b16 %v10507
  %v10540 = vunpack.c.l.b16 %v10508
  %v10541 = vunpack.c.l.b16 %v10509
  %v10542 = vpack.c.b16 %v10527, %v10526
  %v10543 = vpack.c.b16 %v10529, %v10528
  %v10544 = vpack.c.b16 %v10531, %v10530
  %v10545 = vpack.c.b16 %v10533, %v10532
  %v10546 = vpack.c.b16 %v10535, %v10534
  %v10547 = vpack.c.b16 %v10537, %v10536
  %v10548 = vpack.c.b16 %v10539, %v10538
  %v10549 = vpack.c.b16 %v10541, %v10540
  %10558 = vmatprep.subr.bf16.mxu0 0
  %10559 = vmatpush1.bf16.msra.mxu0 %v10542
  %10560 = vmatprep.subr.bf16.mxu0 0
  %10561 = vmatpush1.bf16.msra.mxu0 %v10543
  %10562 = vmatprep.subr.bf16.mxu0 0
  %10563 = vmatpush1.bf16.msra.mxu0 %v10544
  %10564 = vmatprep.subr.bf16.mxu0 0
  %10565 = vmatpush1.bf16.msra.mxu0 %v10545
  %10566 = vmatprep.subr.bf16.mxu0 0
  %10567 = vmatpush1.bf16.msra.mxu0 %v10546
  %10568 = vmatprep.subr.bf16.mxu0 0
  %10569 = vmatpush1.bf16.msra.mxu0 %v10547
  %10570 = vmatprep.subr.bf16.mxu0 0
  %10571 = vmatpush1.bf16.msra.mxu0 %v10548
  %10572 = vmatprep.subr.bf16.mxu0 0
  %10573 = vmatpush1.bf16.msra.mxu0 %v10549
  %10574 = vmatprep.subr.bf16.mxu0 0
  %10575 = vmatpush1.bf16.msra.mxu0 0
  %10576 = vmatprep.subr.bf16.mxu0 0
  %10577 = vmatpush1.bf16.msra.mxu0 0
  %10578 = vmatprep.subr.bf16.mxu0 0
  %10579 = vmatpush1.bf16.msra.mxu0 0
  %10580 = vmatprep.subr.bf16.mxu0 0
  %10581 = vmatpush1.bf16.msra.mxu0 0
  %10582 = vmatprep.subr.bf16.mxu0 0
  %10583 = vmatpush1.bf16.msra.mxu0 0
  %10584 = vmatprep.subr.bf16.mxu0 0
  %10585 = vmatpush1.bf16.msra.mxu0 0
  %10586 = vmatprep.subr.bf16.mxu0 0
  %10587 = vmatpush1.bf16.msra.mxu0 0
  %10588 = vmatprep.subr.bf16.mxu0 0
  %10589 = vmatpush1.bf16.msra.mxu0 0
  %10590 = vmatprep.mubr.bf16.mxu0 0
  %10591 = vmatmul.mubr.bf16.gmra.mrb[0].mxu0 %v10491
  %v10592 = vpop.f32.mrb[0].mxu0
  %v10593 = vadd.f32 0.0, %v10592
  %v10594 = vpop.f32.mrb[0].mxu0
  %v10595 = vpop.f32.mrb[0].mxu0
  %v10596 = vadd.f32 0.0, %v10595
  %v10597 = vpop.f32.mrb[0].mxu0
  %10598 = vmatprep.mubr.bf16.mxu0 0
  %10599 = vmatmul.mubr.bf16.gmra.mrb[0].mxu0 %v10492
  %v10600 = vpop.f32.mrb[0].mxu0
  %v10601 = vadd.f32 0.0, %v10600
  %v10602 = vpop.f32.mrb[0].mxu0
  %v10603 = vpop.f32.mrb[0].mxu0
  %v10604 = vpop.f32.mrb[0].mxu0
  %10605 = vdwg.mxu0
  %v10606 = vadd.f32 %v10425, %v10593
  %v10607 = vadd.f32 %v10426, %v10596
  %v10608 = vadd.f32 %v10427, %v10601
  %s10609 = scalar_lea.vmem [#allocation3], 34
  %v10610 = vld [vmem:[%s10609] sm:$0x3]
  %v10611 = vld [vmem:[%s10609 + $0x4] sm:$0x3]
  %v10612 = vld [vmem:[%s10609 + $0x8] sm:$0x3]
  %v10613 = vld [vmem:[%s10609 + $0x20] sm:$0x3]
  %v10614 = vld [vmem:[%s10609 + $0x24] sm:$0x3]
  %v10615 = vld [vmem:[%s10609 + $0x28] sm:$0x3]
  %v10616 = vld [vmem:[%s10609 + $0x40] sm:$0x3]
  %v10617 = vld [vmem:[%s10609 + $0x44] sm:$0x3]
  %v10618 = vld [vmem:[%s10609 + $0x48] sm:$0x3]
  %v10628 = vcombine.low %v10610, %v10611
  %v10629 = vcombine.low %v10612, %v10613
  %v10631 = vunpack.c.l.s4 1983009808
  %v10632 = vunpack.c.0.s8 %v10631
  %v10633 = vlaneseq
  %v10634 = vshrl.u32 %v10633, 7
  %v10635 = vsub.s32 %v10632, %v10634
  %v10636 = vrot.slane %v10628, %v10635
  %v10638 = vunpack.c.l.s4 1983009808
  %v10639 = vunpack.c.0.s8 %v10638
  %v10640 = vlaneseq
  %v10641 = vshrl.u32 %v10640, 7
  %v10642 = vsub.s32 %v10639, %v10641
  %v10643 = vrot.slane %v10629, %v10642
  %v10644 = vcombine.low %v10636, %v10643
  %v10645 = vcombine.low %v10614, %v10615
  %v10646 = vcombine.low %v10616, %v10617
  %v10648 = vunpack.c.l.s4 1983009808
  %v10649 = vunpack.c.0.s8 %v10648
  %v10650 = vlaneseq
  %v10651 = vshrl.u32 %v10650, 7
  %v10652 = vsub.s32 %v10649, %v10651
  %v10653 = vrot.slane %v10645, %v10652
  %v10655 = vunpack.c.l.s4 1983009808
  %v10656 = vunpack.c.0.s8 %v10655
  %v10657 = vlaneseq
  %v10658 = vshrl.u32 %v10657, 7
  %v10659 = vsub.s32 %v10656, %v10658
  %v10660 = vrot.slane %v10646, %v10659
  %v10661 = vcombine.low %v10653, %v10660
  %v10663 = vunpack.c.l.s4 1983009808
  %v10664 = vunpack.c.0.s8 %v10663
  %v10665 = vlaneseq
  %v10666 = vshrl.u32 %v10665, 7
  %v10667 = vsub.s32 %v10664, %v10666
  %v10668 = vrot.slane %v10618, %v10667
  %v10672 = vpack.c.bf16 %v10661, %v10644
  %v10673 = vpack.c.bf16 %v10668, %v10668
  %s10674 = scalar_lea.vmem %s3, 448
  %v10675 = vld [vmem:[%s10674] sm:$0xf]
  %v10676 = vld [vmem:[%s10674 + $0x4] sm:$0xf]
  %v10677 = vld [vmem:[%s10674 + $0x8] sm:$0xf]
  %v10678 = vld [vmem:[%s10674 + $0xc] sm:$0xf]
  %v10679 = vld [vmem:[%s10674 + $0x10] sm:$0xf]
  %v10680 = vld [vmem:[%s10674 + $0x14] sm:$0xf]
  %v10681 = vld [vmem:[%s10674 + $0x18] sm:$0xf]
  %v10682 = vld [vmem:[%s10674 + $0x1c] sm:$0xf]
  %v10683 = vld [vmem:[%s10674 + $0x20] sm:$0xf]
  %v10684 = vld [vmem:[%s10674 + $0x24] sm:$0xf]
  %v10685 = vld [vmem:[%s10674 + $0x28] sm:$0xf]
  %v10686 = vld [vmem:[%s10674 + $0x2c] sm:$0xf]
  %v10687 = vld [vmem:[%s10674 + $0x30] sm:$0xf]
  %v10688 = vld [vmem:[%s10674 + $0x34] sm:$0xf]
  %v10689 = vld [vmem:[%s10674 + $0x38] sm:$0xf]
  %v10690 = vld [vmem:[%s10674 + $0x3c] sm:$0xf]
  %v10707 = vunpack.c.l.b16 %v10675
  %v10708 = vunpack.c.l.b16 %v10676
  %v10709 = vunpack.c.l.b16 %v10677
  %v10710 = vunpack.c.l.b16 %v10678
  %v10711 = vunpack.c.l.b16 %v10679
  %v10712 = vunpack.c.l.b16 %v10680
  %v10713 = vunpack.c.l.b16 %v10681
  %v10714 = vunpack.c.l.b16 %v10682
  %v10715 = vunpack.c.l.b16 %v10683
  %v10716 = vunpack.c.l.b16 %v10684
  %v10717 = vunpack.c.l.b16 %v10685
  %v10718 = vunpack.c.l.b16 %v10686
  %v10719 = vunpack.c.l.b16 %v10687
  %v10720 = vunpack.c.l.b16 %v10688
  %v10721 = vunpack.c.l.b16 %v10689
  %v10722 = vunpack.c.l.b16 %v10690
  %v10723 = vpack.c.b16 %v10708, %v10707
  %v10724 = vpack.c.b16 %v10710, %v10709
  %v10725 = vpack.c.b16 %v10712, %v10711
  %v10726 = vpack.c.b16 %v10714, %v10713
  %v10727 = vpack.c.b16 %v10716, %v10715
  %v10728 = vpack.c.b16 %v10718, %v10717
  %v10729 = vpack.c.b16 %v10720, %v10719
  %v10730 = vpack.c.b16 %v10722, %v10721
  %10739 = vmatprep.subr.bf16.mxu0 0
  %10740 = vmatpush1.bf16.msra.mxu0 %v10723
  %10741 = vmatprep.subr.bf16.mxu0 0
  %10742 = vmatpush1.bf16.msra.mxu0 %v10724
  %10743 = vmatprep.subr.bf16.mxu0 0
  %10744 = vmatpush1.bf16.msra.mxu0 %v10725
  %10745 = vmatprep.subr.bf16.mxu0 0
  %10746 = vmatpush1.bf16.msra.mxu0 %v10726
  %10747 = vmatprep.subr.bf16.mxu0 0
  %10748 = vmatpush1.bf16.msra.mxu0 %v10727
  %10749 = vmatprep.subr.bf16.mxu0 0
  %10750 = vmatpush1.bf16.msra.mxu0 %v10728
  %10751 = vmatprep.subr.bf16.mxu0 0
  %10752 = vmatpush1.bf16.msra.mxu0 %v10729
  %10753 = vmatprep.subr.bf16.mxu0 0
  %10754 = vmatpush1.bf16.msra.mxu0 %v10730
  %10755 = vmatprep.subr.bf16.mxu0 0
  %10756 = vmatpush1.bf16.msra.mxu0 0
  %10757 = vmatprep.subr.bf16.mxu0 0
  %10758 = vmatpush1.bf16.msra.mxu0 0
  %10759 = vmatprep.subr.bf16.mxu0 0
  %10760 = vmatpush1.bf16.msra.mxu0 0
  %10761 = vmatprep.subr.bf16.mxu0 0
  %10762 = vmatpush1.bf16.msra.mxu0 0
  %10763 = vmatprep.subr.bf16.mxu0 0
  %10764 = vmatpush1.bf16.msra.mxu0 0
  %10765 = vmatprep.subr.bf16.mxu0 0
  %10766 = vmatpush1.bf16.msra.mxu0 0
  %10767 = vmatprep.subr.bf16.mxu0 0
  %10768 = vmatpush1.bf16.msra.mxu0 0
  %10769 = vmatprep.subr.bf16.mxu0 0
  %10770 = vmatpush1.bf16.msra.mxu0 0
  %10771 = vmatprep.mubr.bf16.mxu0 0
  %10772 = vmatmul.mubr.bf16.gmra.mrb[0].mxu0 %v10672
  %v10773 = vpop.f32.mrb[0].mxu0
  %v10774 = vadd.f32 0.0, %v10773
  %v10775 = vpop.f32.mrb[0].mxu0
  %v10776 = vpop.f32.mrb[0].mxu0
  %v10777 = vadd.f32 0.0, %v10776
  %v10778 = vpop.f32.mrb[0].mxu0
  %10779 = vmatprep.mubr.bf16.mxu0 0
  %10780 = vmatmul.mubr.bf16.gmra.mrb[0].mxu0 %v10673
  %v10781 = vpop.f32.mrb[0].mxu0
  %v10782 = vadd.f32 0.0, %v10781
  %v10783 = vpop.f32.mrb[0].mxu0
  %v10784 = vpop.f32.mrb[0].mxu0
  %v10785 = vpop.f32.mrb[0].mxu0
  %10786 = vdwg.mxu0
  %v10787 = vadd.f32 %v10606, %v10774
  %v10788 = vadd.f32 %v10607, %v10777
  %v10789 = vadd.f32 %v10608, %v10782
  %s10790 = scalar_lea.vmem [#allocation3], 36
  %v10791 = vld [vmem:[%s10790] sm:$0x3]
  %v10792 = vld [vmem:[%s10790 + $0x4] sm:$0x3]
  %v10793 = vld [vmem:[%s10790 + $0x8] sm:$0x3]
  %v10794 = vld [vmem:[%s10790 + $0x20] sm:$0x3]
  %v10795 = vld [vmem:[%s10790 + $0x24] sm:$0x3]
  %v10796 = vld [vmem:[%s10790 + $0x28] sm:$0x3]
  %v10797 = vld [vmem:[%s10790 + $0x40] sm:$0x3]
  %v10798 = vld [vmem:[%s10790 + $0x44] sm:$0x3]
  %v10799 = vld [vmem:[%s10790 + $0x48] sm:$0x3]
  %v10809 = vcombine.low %v10791, %v10792
  %v10810 = vcombine.low %v10793, %v10794
  %v10812 = vunpack.c.l.s4 1983009808
  %v10813 = vunpack.c.0.s8 %v10812
  %v10814 = vlaneseq
  %v10815 = vshrl.u32 %v10814, 7
  %v10816 = vsub.s32 %v10813, %v10815
  %v10817 = vrot.slane %v10809, %v10816
  %v10819 = vunpack.c.l.s4 1983009808
  %v10820 = vunpack.c.0.s8 %v10819
  %v10821 = vlaneseq
  %v10822 = vshrl.u32 %v10821, 7
  %v10823 = vsub.s32 %v10820, %v10822
  %v10824 = vrot.slane %v10810, %v10823
  %v10825 = vcombine.low %v10817, %v10824
  %v10826 = vcombine.low %v10795, %v10796
  %v10827 = vcombine.low %v10797, %v10798
  %v10829 = vunpack.c.l.s4 1983009808
  %v10830 = vunpack.c.0.s8 %v10829
  %v10831 = vlaneseq
  %v10832 = vshrl.u32 %v10831, 7
  %v10833 = vsub.s32 %v10830, %v10832
  %v10834 = vrot.slane %v10826, %v10833
  %v10836 = vunpack.c.l.s4 1983009808
  %v10837 = vunpack.c.0.s8 %v10836
  %v10838 = vlaneseq
  %v10839 = vshrl.u32 %v10838, 7
  %v10840 = vsub.s32 %v10837, %v10839
  %v10841 = vrot.slane %v10827, %v10840
  %v10842 = vcombine.low %v10834, %v10841
  %v10844 = vunpack.c.l.s4 1983009808
  %v10845 = vunpack.c.0.s8 %v10844
  %v10846 = vlaneseq
  %v10847 = vshrl.u32 %v10846, 7
  %v10848 = vsub.s32 %v10845, %v10847
  %v10849 = vrot.slane %v10799, %v10848
  %v10853 = vpack.c.bf16 %v10842, %v10825
  %v10854 = vpack.c.bf16 %v10849, %v10849
  %s10855 = scalar_lea.vmem %s3, 512
  %v10856 = vld [vmem:[%s10855] sm:$0xf]
  %v10857 = vld [vmem:[%s10855 + $0x4] sm:$0xf]
  %v10858 = vld [vmem:[%s10855 + $0x8] sm:$0xf]
  %v10859 = vld [vmem:[%s10855 + $0xc] sm:$0xf]
  %v10860 = vld [vmem:[%s10855 + $0x10] sm:$0xf]
  %v10861 = vld [vmem:[%s10855 + $0x14] sm:$0xf]
  %v10862 = vld [vmem:[%s10855 + $0x18] sm:$0xf]
  %v10863 = vld [vmem:[%s10855 + $0x1c] sm:$0xf]
  %v10864 = vld [vmem:[%s10855 + $0x20] sm:$0xf]
  %v10865 = vld [vmem:[%s10855 + $0x24] sm:$0xf]
  %v10866 = vld [vmem:[%s10855 + $0x28] sm:$0xf]
  %v10867 = vld [vmem:[%s10855 + $0x2c] sm:$0xf]
  %v10868 = vld [vmem:[%s10855 + $0x30] sm:$0xf]
  %v10869 = vld [vmem:[%s10855 + $0x34] sm:$0xf]
  %v10870 = vld [vmem:[%s10855 + $0x38] sm:$0xf]
  %v10871 = vld [vmem:[%s10855 + $0x3c] sm:$0xf]
  %v10888 = vunpack.c.l.b16 %v10856
  %v10889 = vunpack.c.l.b16 %v10857
  %v10890 = vunpack.c.l.b16 %v10858
  %v10891 = vunpack.c.l.b16 %v10859
  %v10892 = vunpack.c.l.b16 %v10860
  %v10893 = vunpack.c.l.b16 %v10861
  %v10894 = vunpack.c.l.b16 %v10862
  %v10895 = vunpack.c.l.b16 %v10863
  %v10896 = vunpack.c.l.b16 %v10864
  %v10897 = vunpack.c.l.b16 %v10865
  %v10898 = vunpack.c.l.b16 %v10866
  %v10899 = vunpack.c.l.b16 %v10867
  %v10900 = vunpack.c.l.b16 %v10868
  %v10901 = vunpack.c.l.b16 %v10869
  %v10902 = vunpack.c.l.b16 %v10870
  %v10903 = vunpack.c.l.b16 %v10871
  %v10904 = vpack.c.b16 %v10889, %v10888
  %v10905 = vpack.c.b16 %v10891, %v10890
  %v10906 = vpack.c.b16 %v10893, %v10892
  %v10907 = vpack.c.b16 %v10895, %v10894
  %v10908 = vpack.c.b16 %v10897, %v10896
  %v10909 = vpack.c.b16 %v10899, %v10898
  %v10910 = vpack.c.b16 %v10901, %v10900
  %v10911 = vpack.c.b16 %v10903, %v10902
  %10920 = vmatprep.subr.bf16.mxu0 0
  %10921 = vmatpush1.bf16.msra.mxu0 %v10904
  %10922 = vmatprep.subr.bf16.mxu0 0
  %10923 = vmatpush1.bf16.msra.mxu0 %v10905
  %10924 = vmatprep.subr.bf16.mxu0 0
  %10925 = vmatpush1.bf16.msra.mxu0 %v10906
  %10926 = vmatprep.subr.bf16.mxu0 0
  %10927 = vmatpush1.bf16.msra.mxu0 %v10907
  %10928 = vmatprep.subr.bf16.mxu0 0
  %10929 = vmatpush1.bf16.msra.mxu0 %v10908
  %10930 = vmatprep.subr.bf16.mxu0 0
  %10931 = vmatpush1.bf16.msra.mxu0 %v10909
  %10932 = vmatprep.subr.bf16.mxu0 0
  %10933 = vmatpush1.bf16.msra.mxu0 %v10910
  %10934 = vmatprep.subr.bf16.mxu0 0
  %10935 = vmatpush1.bf16.msra.mxu0 %v10911
  %10936 = vmatprep.subr.bf16.mxu0 0
  %10937 = vmatpush1.bf16.msra.mxu0 0
  %10938 = vmatprep.subr.bf16.mxu0 0
  %10939 = vmatpush1.bf16.msra.mxu0 0
  %10940 = vmatprep.subr.bf16.mxu0 0
  %10941 = vmatpush1.bf16.msra.mxu0 0
  %10942 = vmatprep.subr.bf16.mxu0 0
  %10943 = vmatpush1.bf16.msra.mxu0 0
  %10944 = vmatprep.subr.bf16.mxu0 0
  %10945 = vmatpush1.bf16.msra.mxu0 0
  %10946 = vmatprep.subr.bf16.mxu0 0
  %10947 = vmatpush1.bf16.msra.mxu0 0
  %10948 = vmatprep.subr.bf16.mxu0 0
  %10949 = vmatpush1.bf16.msra.mxu0 0
  %10950 = vmatprep.subr.bf16.mxu0 0
  %10951 = vmatpush1.bf16.msra.mxu0 0
  %10952 = vmatprep.mubr.bf16.mxu0 0
  %10953 = vmatmul.mubr.bf16.gmra.mrb[0].mxu0 %v10853
  %v10954 = vpop.f32.mrb[0].mxu0
  %v10955 = vadd.f32 0.0, %v10954
  %v10956 = vpop.f32.mrb[0].mxu0
  %v10957 = vpop.f32.mrb[0].mxu0
  %v10958 = vadd.f32 0.0, %v10957
  %v10959 = vpop.f32.mrb[0].mxu0
  %10960 = vmatprep.mubr.bf16.mxu0 0
  %10961 = vmatmul.mubr.bf16.gmra.mrb[0].mxu0 %v10854
  %v10962 = vpop.f32.mrb[0].mxu0
  %v10963 = vadd.f32 0.0, %v10962
  %v10964 = vpop.f32.mrb[0].mxu0
  %v10965 = vpop.f32.mrb[0].mxu0
  %v10966 = vpop.f32.mrb[0].mxu0
  %10967 = vdwg.mxu0
  %v10968 = vadd.f32 %v10787, %v10955
  %v10969 = vadd.f32 %v10788, %v10958
  %v10970 = vadd.f32 %v10789, %v10963
  %v10971 = vadd.f32 %v10968, %v10969
  %v10972 = vsel %vm783, %v10970, 0.0
  %v10973 = vadd.f32 %v10971, %v10972
  %v10974 = vrot.slane %v10973, 4
  %v10975 = vadd.f32 %v10973, %v10974
  %v10976 = vrot.slane %v10975, 2
  %v10977 = vadd.f32 %v10975, %v10976
  %v10978 = vrot.slane %v10977, 1
  %v10979 = vadd.f32 %v10977, %v10978
  %v10980 = vmul.f32 %v10979, 0.055555556
  %v10981 = vmul.f32 %v10968, %v10968
  %v10982 = vmul.f32 %v10969, %v10969
  %v10983 = vmul.f32 %v10970, %v10970
  %v10984 = vadd.f32 %v10981, %v10982
  %v10985 = vsel %vm783, %v10983, 0.0
  %v10986 = vadd.f32 %v10984, %v10985
  %v10987 = vrot.slane %v10986, 4
  %v10988 = vadd.f32 %v10986, %v10987
  %v10989 = vrot.slane %v10988, 2
  %v10990 = vadd.f32 %v10988, %v10989
  %v10991 = vrot.slane %v10990, 1
  %v10992 = vadd.f32 %v10990, %v10991
  %v10993 = vmul.f32 %v10992, 0.055555556
  %v10994 = vmul.f32 %v10980, %v10980
  %v10995 = vsub.f32 %v10993, %v10994
  %v10996 = vmax.f32 %v10995, 0.0
  %v10997 = vld [vmem:[%s5 + $0x2] sm:$0x1]
  %v10998 = vld [vmem:[%s6 + $0x2] sm:$0x1]
  %v10999 = vsub.f32 %v10968, %v10980
  %v11000 = vsub.f32 %v10969, %v10980
  %v11001 = vsub.f32 %v10970, %v10980
  %v11002 = vadd.f32 %v10996, 1e-05
  %v11003 = vrsqrt.pop %v11002
  %v11004 = vmul.f32 %v10999, %v11003
  %v11005 = vmul.f32 %v11000, %v11003
  %v11006 = vmul.f32 %v11001, %v11003
  %v11007 = vlaneseq
  %v11008 = vshrl.u32 %v11007, 7
  %v11009 = vsub.s32 0, %v11008
  %v11010 = vrot.slane %v10997, %v11009
  %v11011 = vmul.f32 %v11004, %v11010
  %v11012 = vmul.f32 %v11005, %v11010
  %v11013 = vmul.f32 %v11006, %v11010
  %v11014 = vlaneseq
  %v11015 = vshrl.u32 %v11014, 7
  %v11016 = vsub.s32 0, %v11015
  %v11017 = vrot.slane %v10998, %v11016
  %v11018 = vadd.f32 %v11011, %v11017
  %v11019 = vadd.f32 %v11012, %v11017
  %v11020 = vadd.f32 %v11013, %v11017
  %vm11021 = vcmp.ge.f32.partialorder %v11018, 0.0
  %vm11022 = vcmp.ge.f32.partialorder %v11019, 0.0
  %vm11023 = vcmp.ge.f32.partialorder %v11020, 0.0
  %v11024 = vmul.f32 %v11018, 0.01
  %v11025 = vmul.f32 %v11019, 0.01
  %v11026 = vmul.f32 %v11020, 0.01
  %v11027 = vsel %vm11021, %v11018, %v11024
  %v11028 = vsel %vm11022, %v11019, %v11025
  %v11029 = vsel %vm11023, %v11020, %v11026
  %v11033 = vcombine.high %v11027, %v11027
  %v11035 = vunpack.c.l.s4 1983009808
  %v11036 = vunpack.c.0.s8 %v11035
  %v11037 = vlaneseq
  %v11038 = vshrl.u32 %v11037, 7
  %v11039 = vsub.s32 %v11036, %v11038
  %v11040 = vrot.slane %v11027, %v11039
  %v11042 = vunpack.c.l.s4 1983009808
  %v11043 = vunpack.c.0.s8 %v11042
  %v11044 = vlaneseq
  %v11045 = vshrl.u32 %v11044, 7
  %v11046 = vsub.s32 %v11043, %v11045
  %v11047 = vrot.slane %v11033, %v11046
  %v11048 = vcombine.high %v11040, %v11040
  %v11049 = vcombine.high %v11047, %v11047
  %v11050 = vcombine.high %v11028, %v11028
  %v11052 = vunpack.c.l.s4 1983009808
  %v11053 = vunpack.c.0.s8 %v11052
  %v11054 = vlaneseq
  %v11055 = vshrl.u32 %v11054, 7
  %v11056 = vsub.s32 %v11053, %v11055
  %v11057 = vrot.slane %v11028, %v11056
  %v11059 = vunpack.c.l.s4 1983009808
  %v11060 = vunpack.c.0.s8 %v11059
  %v11061 = vlaneseq
  %v11062 = vshrl.u32 %v11061, 7
  %v11063 = vsub.s32 %v11060, %v11062
  %v11064 = vrot.slane %v11050, %v11063
  %v11065 = vcombine.high %v11057, %v11057
  %v11066 = vcombine.high %v11064, %v11064
  %v11068 = vunpack.c.l.s4 1983009808
  %v11069 = vunpack.c.0.s8 %v11068
  %v11070 = vlaneseq
  %v11071 = vshrl.u32 %v11070, 7
  %v11072 = vsub.s32 %v11069, %v11071
  %v11073 = vrot.slane %v11029, %v11072
  %11083 = vst [vmem:[#allocation4] sm:$0x3] %v11040
  %11084 = vst [vmem:[#allocation4 + $0x2] sm:$0x3] %v11048
  %11085 = vst [vmem:[#allocation4 + $0x4] sm:$0x3] %v11047
  %11086 = vst [vmem:[#allocation4 + $0x6] sm:$0x3] %v11049
  %11087 = vst [vmem:[#allocation4 + $0x8] sm:$0x3] %v11057
  %11088 = vst [vmem:[#allocation4 + $0xa] sm:$0x3] %v11065
  %11089 = vst [vmem:[#allocation4 + $0xc] sm:$0x3] %v11064
  %11090 = vst [vmem:[#allocation4 + $0xe] sm:$0x3] %v11066
  %11091 = vst [vmem:[#allocation4 + $0x10] sm:$0x3] %v11073
  %v11092 = vld [vmem:[#allocation4] sm:$0x3]
  %v11093 = vpack.c.bf16 %v11092, %v11092
  %v11094 = vld [vmem:[%s4] sm:$0xf]
  %v11095 = vld [vmem:[%s4 + $0x4] sm:$0xf]
  %v11096 = vld [vmem:[%s4 + $0x8] sm:$0xf]
  %v11097 = vld [vmem:[%s4 + $0xc] sm:$0xf]
  %v11098 = vld [vmem:[%s4 + $0x10] sm:$0xf]
  %v11099 = vld [vmem:[%s4 + $0x14] sm:$0xf]
  %v11100 = vld [vmem:[%s4 + $0x18] sm:$0xf]
  %v11101 = vld [vmem:[%s4 + $0x1c] sm:$0xf]
  %v11102 = vld [vmem:[%s4 + $0x20] sm:$0xf]
  %v11103 = vld [vmem:[%s4 + $0x24] sm:$0xf]
  %v11104 = vld [vmem:[%s4 + $0x28] sm:$0xf]
  %v11105 = vld [vmem:[%s4 + $0x2c] sm:$0xf]
  %v11106 = vld [vmem:[%s4 + $0x30] sm:$0xf]
  %v11107 = vld [vmem:[%s4 + $0x34] sm:$0xf]
  %v11108 = vld [vmem:[%s4 + $0x38] sm:$0xf]
  %v11109 = vld [vmem:[%s4 + $0x3c] sm:$0xf]
  %s11110 = scalar_lea.vmem [#allocation4], 2
  %v11111 = vld [vmem:[%s11110] sm:$0x3]
  %v11112 = vpack.c.bf16 %v11111, %v11111
  %s11113 = scalar_lea.vmem %s4, 64
  %v11114 = vld [vmem:[%s11113] sm:$0xf]
  %v11115 = vld [vmem:[%s11113 + $0x4] sm:$0xf]
  %v11116 = vld [vmem:[%s11113 + $0x8] sm:$0xf]
  %v11117 = vld [vmem:[%s11113 + $0xc] sm:$0xf]
  %v11118 = vld [vmem:[%s11113 + $0x10] sm:$0xf]
  %v11119 = vld [vmem:[%s11113 + $0x14] sm:$0xf]
  %v11120 = vld [vmem:[%s11113 + $0x18] sm:$0xf]
  %v11121 = vld [vmem:[%s11113 + $0x1c] sm:$0xf]
  %v11122 = vld [vmem:[%s11113 + $0x20] sm:$0xf]
  %v11123 = vld [vmem:[%s11113 + $0x24] sm:$0xf]
  %v11124 = vld [vmem:[%s11113 + $0x28] sm:$0xf]
  %v11125 = vld [vmem:[%s11113 + $0x2c] sm:$0xf]
  %v11126 = vld [vmem:[%s11113 + $0x30] sm:$0xf]
  %v11127 = vld [vmem:[%s11113 + $0x34] sm:$0xf]
  %v11128 = vld [vmem:[%s11113 + $0x38] sm:$0xf]
  %v11129 = vld [vmem:[%s11113 + $0x3c] sm:$0xf]
  %v11146 = vunpack.c.l.b16 %v11114
  %v11147 = vunpack.c.l.b16 %v11115
  %v11148 = vunpack.c.l.b16 %v11116
  %v11149 = vunpack.c.l.b16 %v11117
  %v11150 = vunpack.c.l.b16 %v11118
  %v11151 = vunpack.c.l.b16 %v11119
  %v11152 = vunpack.c.l.b16 %v11120
  %v11153 = vunpack.c.l.b16 %v11121
  %v11154 = vunpack.c.l.b16 %v11122
  %v11155 = vunpack.c.l.b16 %v11123
  %v11156 = vunpack.c.l.b16 %v11124
  %v11157 = vunpack.c.l.b16 %v11125
  %v11158 = vunpack.c.l.b16 %v11126
  %v11159 = vunpack.c.l.b16 %v11127
  %v11160 = vunpack.c.l.b16 %v11128
  %v11161 = vunpack.c.l.b16 %v11129
  %v11162 = vpack.c.b16 %v11147, %v11146
  %v11163 = vpack.c.b16 %v11149, %v11148
  %v11164 = vpack.c.b16 %v11151, %v11150
  %v11165 = vpack.c.b16 %v11153, %v11152
  %v11166 = vpack.c.b16 %v11155, %v11154
  %v11167 = vpack.c.b16 %v11157, %v11156
  %v11168 = vpack.c.b16 %v11159, %v11158
  %v11169 = vpack.c.b16 %v11161, %v11160
  %11178 = vmatprep.subr.bf16.mxu0 0
  %11179 = vmatpush1.bf16.msra.mxu0 %v11162
  %11180 = vmatprep.subr.bf16.mxu0 0
  %11181 = vmatpush1.bf16.msra.mxu0 %v11163
  %11182 = vmatprep.subr.bf16.mxu0 0
  %11183 = vmatpush1.bf16.msra.mxu0 %v11164
  %11184 = vmatprep.subr.bf16.mxu0 0
  %11185 = vmatpush1.bf16.msra.mxu0 %v11165
  %11186 = vmatprep.subr.bf16.mxu0 0
  %11187 = vmatpush1.bf16.msra.mxu0 %v11166
  %11188 = vmatprep.subr.bf16.mxu0 0
  %11189 = vmatpush1.bf16.msra.mxu0 %v11167
  %11190 = vmatprep.subr.bf16.mxu0 0
  %11191 = vmatpush1.bf16.msra.mxu0 %v11168
  %11192 = vmatprep.subr.bf16.mxu0 0
  %11193 = vmatpush1.bf16.msra.mxu0 %v11169
  %11194 = vmatprep.subr.bf16.mxu0 0
  %11195 = vmatpush1.bf16.msra.mxu0 0
  %11196 = vmatprep.subr.bf16.mxu0 0
  %11197 = vmatpush1.bf16.msra.mxu0 0
  %11198 = vmatprep.subr.bf16.mxu0 0
  %11199 = vmatpush1.bf16.msra.mxu0 0
  %11200 = vmatprep.subr.bf16.mxu0 0
  %11201 = vmatpush1.bf16.msra.mxu0 0
  %11202 = vmatprep.subr.bf16.mxu0 0
  %11203 = vmatpush1.bf16.msra.mxu0 0
  %11204 = vmatprep.subr.bf16.mxu0 0
  %11205 = vmatpush1.bf16.msra.mxu0 0
  %11206 = vmatprep.subr.bf16.mxu0 0
  %11207 = vmatpush1.bf16.msra.mxu0 0
  %11208 = vmatprep.subr.bf16.mxu0 0
  %11209 = vmatpush1.bf16.msra.mxu0 0
  %11210 = vmatprep.mubr.bf16.mxu0 0
  %11211 = vmatmul.mubr.bf16.gmra.mrb[0].mxu0 %v11112
  %v11212 = vpop.f32.mrb[0].mxu0
  %v11213 = vadd.f32 0.0, %v11212
  %v11214 = vpop.f32.mrb[0].mxu0
  %v11215 = vpop.f32.mrb[0].mxu0
  %v11216 = vpop.f32.mrb[0].mxu0
  %11217 = vdwg.mxu0
  %v11234 = vunpack.c.l.b16 %v11094
  %v11235 = vunpack.c.l.b16 %v11095
  %v11236 = vunpack.c.l.b16 %v11096
  %v11237 = vunpack.c.l.b16 %v11097
  %v11238 = vunpack.c.l.b16 %v11098
  %v11239 = vunpack.c.l.b16 %v11099
  %v11240 = vunpack.c.l.b16 %v11100
  %v11241 = vunpack.c.l.b16 %v11101
  %v11242 = vunpack.c.l.b16 %v11102
  %v11243 = vunpack.c.l.b16 %v11103
  %v11244 = vunpack.c.l.b16 %v11104
  %v11245 = vunpack.c.l.b16 %v11105
  %v11246 = vunpack.c.l.b16 %v11106
  %v11247 = vunpack.c.l.b16 %v11107
  %v11248 = vunpack.c.l.b16 %v11108
  %v11249 = vunpack.c.l.b16 %v11109
  %v11250 = vpack.c.b16 %v11235, %v11234
  %v11251 = vpack.c.b16 %v11237, %v11236
  %v11252 = vpack.c.b16 %v11239, %v11238
  %v11253 = vpack.c.b16 %v11241, %v11240
  %v11254 = vpack.c.b16 %v11243, %v11242
  %v11255 = vpack.c.b16 %v11245, %v11244
  %v11256 = vpack.c.b16 %v11247, %v11246
  %v11257 = vpack.c.b16 %v11249, %v11248
  %11266 = vmatprep.subr.bf16.mxu0 0
  %11267 = vmatpush1.bf16.msra.mxu0 %v11250
  %11268 = vmatprep.subr.bf16.mxu0 0
  %11269 = vmatpush1.bf16.msra.mxu0 %v11251
  %11270 = vmatprep.subr.bf16.mxu0 0
  %11271 = vmatpush1.bf16.msra.mxu0 %v11252
  %11272 = vmatprep.subr.bf16.mxu0 0
  %11273 = vmatpush1.bf16.msra.mxu0 %v11253
  %11274 = vmatprep.subr.bf16.mxu0 0
  %11275 = vmatpush1.bf16.msra.mxu0 %v11254
  %11276 = vmatprep.subr.bf16.mxu0 0
  %11277 = vmatpush1.bf16.msra.mxu0 %v11255
  %11278 = vmatprep.subr.bf16.mxu0 0
  %11279 = vmatpush1.bf16.msra.mxu0 %v11256
  %11280 = vmatprep.subr.bf16.mxu0 0
  %11281 = vmatpush1.bf16.msra.mxu0 %v11257
  %11282 = vmatprep.subr.bf16.mxu0 0
  %11283 = vmatpush1.bf16.msra.mxu0 0
  %11284 = vmatprep.subr.bf16.mxu0 0
  %11285 = vmatpush1.bf16.msra.mxu0 0
  %11286 = vmatprep.subr.bf16.mxu0 0
  %11287 = vmatpush1.bf16.msra.mxu0 0
  %11288 = vmatprep.subr.bf16.mxu0 0
  %11289 = vmatpush1.bf16.msra.mxu0 0
  %11290 = vmatprep.subr.bf16.mxu0 0
  %11291 = vmatpush1.bf16.msra.mxu0 0
  %11292 = vmatprep.subr.bf16.mxu0 0
  %11293 = vmatpush1.bf16.msra.mxu0 0
  %11294 = vmatprep.subr.bf16.mxu0 0
  %11295 = vmatpush1.bf16.msra.mxu0 0
  %11296 = vmatprep.subr.bf16.mxu0 0
  %11297 = vmatpush1.bf16.msra.mxu0 0
  %11298 = vmatprep.mubr.bf16.mxu0 0
  %11299 = vmatmul.mubr.bf16.gmra.mrb[0].mxu0 %v11093
  %v11300 = vpop.f32.mrb[0].mxu0
  %v11301 = vadd.f32 %v11213, %v11300
  %v11302 = vpop.f32.mrb[0].mxu0
  %v11303 = vpop.f32.mrb[0].mxu0
  %v11304 = vpop.f32.mrb[0].mxu0
  %11305 = vdwg.mxu0
  %s11306 = scalar_lea.vmem [#allocation4], 4
  %v11307 = vld [vmem:[%s11306] sm:$0x3]
  %v11308 = vpack.c.bf16 %v11307, %v11307
  %s11309 = scalar_lea.vmem %s4, 128
  %v11310 = vld [vmem:[%s11309] sm:$0xf]
  %v11311 = vld [vmem:[%s11309 + $0x4] sm:$0xf]
  %v11312 = vld [vmem:[%s11309 + $0x8] sm:$0xf]
  %v11313 = vld [vmem:[%s11309 + $0xc] sm:$0xf]
  %v11314 = vld [vmem:[%s11309 + $0x10] sm:$0xf]
  %v11315 = vld [vmem:[%s11309 + $0x14] sm:$0xf]
  %v11316 = vld [vmem:[%s11309 + $0x18] sm:$0xf]
  %v11317 = vld [vmem:[%s11309 + $0x1c] sm:$0xf]
  %v11318 = vld [vmem:[%s11309 + $0x20] sm:$0xf]
  %v11319 = vld [vmem:[%s11309 + $0x24] sm:$0xf]
  %v11320 = vld [vmem:[%s11309 + $0x28] sm:$0xf]
  %v11321 = vld [vmem:[%s11309 + $0x2c] sm:$0xf]
  %v11322 = vld [vmem:[%s11309 + $0x30] sm:$0xf]
  %v11323 = vld [vmem:[%s11309 + $0x34] sm:$0xf]
  %v11324 = vld [vmem:[%s11309 + $0x38] sm:$0xf]
  %v11325 = vld [vmem:[%s11309 + $0x3c] sm:$0xf]
  %v11342 = vunpack.c.l.b16 %v11310
  %v11343 = vunpack.c.l.b16 %v11311
  %v11344 = vunpack.c.l.b16 %v11312
  %v11345 = vunpack.c.l.b16 %v11313
  %v11346 = vunpack.c.l.b16 %v11314
  %v11347 = vunpack.c.l.b16 %v11315
  %v11348 = vunpack.c.l.b16 %v11316
  %v11349 = vunpack.c.l.b16 %v11317
  %v11350 = vunpack.c.l.b16 %v11318
  %v11351 = vunpack.c.l.b16 %v11319
  %v11352 = vunpack.c.l.b16 %v11320
  %v11353 = vunpack.c.l.b16 %v11321
  %v11354 = vunpack.c.l.b16 %v11322
  %v11355 = vunpack.c.l.b16 %v11323
  %v11356 = vunpack.c.l.b16 %v11324
  %v11357 = vunpack.c.l.b16 %v11325
  %v11358 = vpack.c.b16 %v11343, %v11342
  %v11359 = vpack.c.b16 %v11345, %v11344
  %v11360 = vpack.c.b16 %v11347, %v11346
  %v11361 = vpack.c.b16 %v11349, %v11348
  %v11362 = vpack.c.b16 %v11351, %v11350
  %v11363 = vpack.c.b16 %v11353, %v11352
  %v11364 = vpack.c.b16 %v11355, %v11354
  %v11365 = vpack.c.b16 %v11357, %v11356
  %11374 = vmatprep.subr.bf16.mxu0 0
  %11375 = vmatpush1.bf16.msra.mxu0 %v11358
  %11376 = vmatprep.subr.bf16.mxu0 0
  %11377 = vmatpush1.bf16.msra.mxu0 %v11359
  %11378 = vmatprep.subr.bf16.mxu0 0
  %11379 = vmatpush1.bf16.msra.mxu0 %v11360
  %11380 = vmatprep.subr.bf16.mxu0 0
  %11381 = vmatpush1.bf16.msra.mxu0 %v11361
  %11382 = vmatprep.subr.bf16.mxu0 0
  %11383 = vmatpush1.bf16.msra.mxu0 %v11362
  %11384 = vmatprep.subr.bf16.mxu0 0
  %11385 = vmatpush1.bf16.msra.mxu0 %v11363
  %11386 = vmatprep.subr.bf16.mxu0 0
  %11387 = vmatpush1.bf16.msra.mxu0 %v11364
  %11388 = vmatprep.subr.bf16.mxu0 0
  %11389 = vmatpush1.bf16.msra.mxu0 %v11365
  %11390 = vmatprep.subr.bf16.mxu0 0
  %11391 = vmatpush1.bf16.msra.mxu0 0
  %11392 = vmatprep.subr.bf16.mxu0 0
  %11393 = vmatpush1.bf16.msra.mxu0 0
  %11394 = vmatprep.subr.bf16.mxu0 0
  %11395 = vmatpush1.bf16.msra.mxu0 0
  %11396 = vmatprep.subr.bf16.mxu0 0
  %11397 = vmatpush1.bf16.msra.mxu0 0
  %11398 = vmatprep.subr.bf16.mxu0 0
  %11399 = vmatpush1.bf16.msra.mxu0 0
  %11400 = vmatprep.subr.bf16.mxu0 0
  %11401 = vmatpush1.bf16.msra.mxu0 0
  %11402 = vmatprep.subr.bf16.mxu0 0
  %11403 = vmatpush1.bf16.msra.mxu0 0
  %11404 = vmatprep.subr.bf16.mxu0 0
  %11405 = vmatpush1.bf16.msra.mxu0 0
  %11406 = vmatprep.mubr.bf16.mxu0 0
  %11407 = vmatmul.mubr.bf16.gmra.mrb[0].mxu0 %v11308
  %v11408 = vpop.f32.mrb[0].mxu0
  %v11409 = vadd.f32 0.0, %v11408
  %v11410 = vpop.f32.mrb[0].mxu0
  %v11411 = vpop.f32.mrb[0].mxu0
  %v11412 = vpop.f32.mrb[0].mxu0
  %11413 = vdwg.mxu0
  %v11414 = vadd.f32 %v11301, %v11409
  %s11415 = scalar_lea.vmem [#allocation4], 6
  %v11416 = vld [vmem:[%s11415] sm:$0x3]
  %v11417 = vpack.c.bf16 %v11416, %v11416
  %s11418 = scalar_lea.vmem %s4, 192
  %v11419 = vld [vmem:[%s11418] sm:$0xf]
  %v11420 = vld [vmem:[%s11418 + $0x4] sm:$0xf]
  %v11421 = vld [vmem:[%s11418 + $0x8] sm:$0xf]
  %v11422 = vld [vmem:[%s11418 + $0xc] sm:$0xf]
  %v11423 = vld [vmem:[%s11418 + $0x10] sm:$0xf]
  %v11424 = vld [vmem:[%s11418 + $0x14] sm:$0xf]
  %v11425 = vld [vmem:[%s11418 + $0x18] sm:$0xf]
  %v11426 = vld [vmem:[%s11418 + $0x1c] sm:$0xf]
  %v11427 = vld [vmem:[%s11418 + $0x20] sm:$0xf]
  %v11428 = vld [vmem:[%s11418 + $0x24] sm:$0xf]
  %v11429 = vld [vmem:[%s11418 + $0x28] sm:$0xf]
  %v11430 = vld [vmem:[%s11418 + $0x2c] sm:$0xf]
  %v11431 = vld [vmem:[%s11418 + $0x30] sm:$0xf]
  %v11432 = vld [vmem:[%s11418 + $0x34] sm:$0xf]
  %v11433 = vld [vmem:[%s11418 + $0x38] sm:$0xf]
  %v11434 = vld [vmem:[%s11418 + $0x3c] sm:$0xf]
  %v11451 = vunpack.c.l.b16 %v11419
  %v11452 = vunpack.c.l.b16 %v11420
  %v11453 = vunpack.c.l.b16 %v11421
  %v11454 = vunpack.c.l.b16 %v11422
  %v11455 = vunpack.c.l.b16 %v11423
  %v11456 = vunpack.c.l.b16 %v11424
  %v11457 = vunpack.c.l.b16 %v11425
  %v11458 = vunpack.c.l.b16 %v11426
  %v11459 = vunpack.c.l.b16 %v11427
  %v11460 = vunpack.c.l.b16 %v11428
  %v11461 = vunpack.c.l.b16 %v11429
  %v11462 = vunpack.c.l.b16 %v11430
  %v11463 = vunpack.c.l.b16 %v11431
  %v11464 = vunpack.c.l.b16 %v11432
  %v11465 = vunpack.c.l.b16 %v11433
  %v11466 = vunpack.c.l.b16 %v11434
  %v11467 = vpack.c.b16 %v11452, %v11451
  %v11468 = vpack.c.b16 %v11454, %v11453
  %v11469 = vpack.c.b16 %v11456, %v11455
  %v11470 = vpack.c.b16 %v11458, %v11457
  %v11471 = vpack.c.b16 %v11460, %v11459
  %v11472 = vpack.c.b16 %v11462, %v11461
  %v11473 = vpack.c.b16 %v11464, %v11463
  %v11474 = vpack.c.b16 %v11466, %v11465
  %11483 = vmatprep.subr.bf16.mxu0 0
  %11484 = vmatpush1.bf16.msra.mxu0 %v11467
  %11485 = vmatprep.subr.bf16.mxu0 0
  %11486 = vmatpush1.bf16.msra.mxu0 %v11468
  %11487 = vmatprep.subr.bf16.mxu0 0
  %11488 = vmatpush1.bf16.msra.mxu0 %v11469
  %11489 = vmatprep.subr.bf16.mxu0 0
  %11490 = vmatpush1.bf16.msra.mxu0 %v11470
  %11491 = vmatprep.subr.bf16.mxu0 0
  %11492 = vmatpush1.bf16.msra.mxu0 %v11471
  %11493 = vmatprep.subr.bf16.mxu0 0
  %11494 = vmatpush1.bf16.msra.mxu0 %v11472
  %11495 = vmatprep.subr.bf16.mxu0 0
  %11496 = vmatpush1.bf16.msra.mxu0 %v11473
  %11497 = vmatprep.subr.bf16.mxu0 0
  %11498 = vmatpush1.bf16.msra.mxu0 %v11474
  %11499 = vmatprep.subr.bf16.mxu0 0
  %11500 = vmatpush1.bf16.msra.mxu0 0
  %11501 = vmatprep.subr.bf16.mxu0 0
  %11502 = vmatpush1.bf16.msra.mxu0 0
  %11503 = vmatprep.subr.bf16.mxu0 0
  %11504 = vmatpush1.bf16.msra.mxu0 0
  %11505 = vmatprep.subr.bf16.mxu0 0
  %11506 = vmatpush1.bf16.msra.mxu0 0
  %11507 = vmatprep.subr.bf16.mxu0 0
  %11508 = vmatpush1.bf16.msra.mxu0 0
  %11509 = vmatprep.subr.bf16.mxu0 0
  %11510 = vmatpush1.bf16.msra.mxu0 0
  %11511 = vmatprep.subr.bf16.mxu0 0
  %11512 = vmatpush1.bf16.msra.mxu0 0
  %11513 = vmatprep.subr.bf16.mxu0 0
  %11514 = vmatpush1.bf16.msra.mxu0 0
  %11515 = vmatprep.mubr.bf16.mxu0 0
  %11516 = vmatmul.mubr.bf16.gmra.mrb[0].mxu0 %v11417
  %v11517 = vpop.f32.mrb[0].mxu0
  %v11518 = vadd.f32 0.0, %v11517
  %v11519 = vpop.f32.mrb[0].mxu0
  %v11520 = vpop.f32.mrb[0].mxu0
  %v11521 = vpop.f32.mrb[0].mxu0
  %11522 = vdwg.mxu0
  %v11523 = vadd.f32 %v11414, %v11518
  %s11524 = scalar_lea.vmem [#allocation4], 8
  %v11525 = vld [vmem:[%s11524] sm:$0x3]
  %v11526 = vpack.c.bf16 %v11525, %v11525
  %s11527 = scalar_lea.vmem %s4, 256
  %v11528 = vld [vmem:[%s11527] sm:$0xf]
  %v11529 = vld [vmem:[%s11527 + $0x4] sm:$0xf]
  %v11530 = vld [vmem:[%s11527 + $0x8] sm:$0xf]
  %v11531 = vld [vmem:[%s11527 + $0xc] sm:$0xf]
  %v11532 = vld [vmem:[%s11527 + $0x10] sm:$0xf]
  %v11533 = vld [vmem:[%s11527 + $0x14] sm:$0xf]
  %v11534 = vld [vmem:[%s11527 + $0x18] sm:$0xf]
  %v11535 = vld [vmem:[%s11527 + $0x1c] sm:$0xf]
  %v11536 = vld [vmem:[%s11527 + $0x20] sm:$0xf]
  %v11537 = vld [vmem:[%s11527 + $0x24] sm:$0xf]
  %v11538 = vld [vmem:[%s11527 + $0x28] sm:$0xf]
  %v11539 = vld [vmem:[%s11527 + $0x2c] sm:$0xf]
  %v11540 = vld [vmem:[%s11527 + $0x30] sm:$0xf]
  %v11541 = vld [vmem:[%s11527 + $0x34] sm:$0xf]
  %v11542 = vld [vmem:[%s11527 + $0x38] sm:$0xf]
  %v11543 = vld [vmem:[%s11527 + $0x3c] sm:$0xf]
  %v11560 = vunpack.c.l.b16 %v11528
  %v11561 = vunpack.c.l.b16 %v11529
  %v11562 = vunpack.c.l.b16 %v11530
  %v11563 = vunpack.c.l.b16 %v11531
  %v11564 = vunpack.c.l.b16 %v11532
  %v11565 = vunpack.c.l.b16 %v11533
  %v11566 = vunpack.c.l.b16 %v11534
  %v11567 = vunpack.c.l.b16 %v11535
  %v11568 = vunpack.c.l.b16 %v11536
  %v11569 = vunpack.c.l.b16 %v11537
  %v11570 = vunpack.c.l.b16 %v11538
  %v11571 = vunpack.c.l.b16 %v11539
  %v11572 = vunpack.c.l.b16 %v11540
  %v11573 = vunpack.c.l.b16 %v11541
  %v11574 = vunpack.c.l.b16 %v11542
  %v11575 = vunpack.c.l.b16 %v11543
  %v11576 = vpack.c.b16 %v11561, %v11560
  %v11577 = vpack.c.b16 %v11563, %v11562
  %v11578 = vpack.c.b16 %v11565, %v11564
  %v11579 = vpack.c.b16 %v11567, %v11566
  %v11580 = vpack.c.b16 %v11569, %v11568
  %v11581 = vpack.c.b16 %v11571, %v11570
  %v11582 = vpack.c.b16 %v11573, %v11572
  %v11583 = vpack.c.b16 %v11575, %v11574
  %11592 = vmatprep.subr.bf16.mxu0 0
  %11593 = vmatpush1.bf16.msra.mxu0 %v11576
  %11594 = vmatprep.subr.bf16.mxu0 0
  %11595 = vmatpush1.bf16.msra.mxu0 %v11577
  %11596 = vmatprep.subr.bf16.mxu0 0
  %11597 = vmatpush1.bf16.msra.mxu0 %v11578
  %11598 = vmatprep.subr.bf16.mxu0 0
  %11599 = vmatpush1.bf16.msra.mxu0 %v11579
  %11600 = vmatprep.subr.bf16.mxu0 0
  %11601 = vmatpush1.bf16.msra.mxu0 %v11580
  %11602 = vmatprep.subr.bf16.mxu0 0
  %11603 = vmatpush1.bf16.msra.mxu0 %v11581
  %11604 = vmatprep.subr.bf16.mxu0 0
  %11605 = vmatpush1.bf16.msra.mxu0 %v11582
  %11606 = vmatprep.subr.bf16.mxu0 0
  %11607 = vmatpush1.bf16.msra.mxu0 %v11583
  %11608 = vmatprep.subr.bf16.mxu0 0
  %11609 = vmatpush1.bf16.msra.mxu0 0
  %11610 = vmatprep.subr.bf16.mxu0 0
  %11611 = vmatpush1.bf16.msra.mxu0 0
  %11612 = vmatprep.subr.bf16.mxu0 0
  %11613 = vmatpush1.bf16.msra.mxu0 0
  %11614 = vmatprep.subr.bf16.mxu0 0
  %11615 = vmatpush1.bf16.msra.mxu0 0
  %11616 = vmatprep.subr.bf16.mxu0 0
  %11617 = vmatpush1.bf16.msra.mxu0 0
  %11618 = vmatprep.subr.bf16.mxu0 0
  %11619 = vmatpush1.bf16.msra.mxu0 0
  %11620 = vmatprep.subr.bf16.mxu0 0
  %11621 = vmatpush1.bf16.msra.mxu0 0
  %11622 = vmatprep.subr.bf16.mxu0 0
  %11623 = vmatpush1.bf16.msra.mxu0 0
  %11624 = vmatprep.mubr.bf16.mxu0 0
  %11625 = vmatmul.mubr.bf16.gmra.mrb[0].mxu0 %v11526
  %v11626 = vpop.f32.mrb[0].mxu0
  %v11627 = vadd.f32 0.0, %v11626
  %v11628 = vpop.f32.mrb[0].mxu0
  %v11629 = vpop.f32.mrb[0].mxu0
  %v11630 = vpop.f32.mrb[0].mxu0
  %11631 = vdwg.mxu0
  %v11632 = vadd.f32 %v11523, %v11627
  %s11633 = scalar_lea.vmem [#allocation4], 10
  %v11634 = vld [vmem:[%s11633] sm:$0x3]
  %v11635 = vpack.c.bf16 %v11634, %v11634
  %s11636 = scalar_lea.vmem %s4, 320
  %v11637 = vld [vmem:[%s11636] sm:$0xf]
  %v11638 = vld [vmem:[%s11636 + $0x4] sm:$0xf]
  %v11639 = vld [vmem:[%s11636 + $0x8] sm:$0xf]
  %v11640 = vld [vmem:[%s11636 + $0xc] sm:$0xf]
  %v11641 = vld [vmem:[%s11636 + $0x10] sm:$0xf]
  %v11642 = vld [vmem:[%s11636 + $0x14] sm:$0xf]
  %v11643 = vld [vmem:[%s11636 + $0x18] sm:$0xf]
  %v11644 = vld [vmem:[%s11636 + $0x1c] sm:$0xf]
  %v11645 = vld [vmem:[%s11636 + $0x20] sm:$0xf]
  %v11646 = vld [vmem:[%s11636 + $0x24] sm:$0xf]
  %v11647 = vld [vmem:[%s11636 + $0x28] sm:$0xf]
  %v11648 = vld [vmem:[%s11636 + $0x2c] sm:$0xf]
  %v11649 = vld [vmem:[%s11636 + $0x30] sm:$0xf]
  %v11650 = vld [vmem:[%s11636 + $0x34] sm:$0xf]
  %v11651 = vld [vmem:[%s11636 + $0x38] sm:$0xf]
  %v11652 = vld [vmem:[%s11636 + $0x3c] sm:$0xf]
  %v11669 = vunpack.c.l.b16 %v11637
  %v11670 = vunpack.c.l.b16 %v11638
  %v11671 = vunpack.c.l.b16 %v11639
  %v11672 = vunpack.c.l.b16 %v11640
  %v11673 = vunpack.c.l.b16 %v11641
  %v11674 = vunpack.c.l.b16 %v11642
  %v11675 = vunpack.c.l.b16 %v11643
  %v11676 = vunpack.c.l.b16 %v11644
  %v11677 = vunpack.c.l.b16 %v11645
  %v11678 = vunpack.c.l.b16 %v11646
  %v11679 = vunpack.c.l.b16 %v11647
  %v11680 = vunpack.c.l.b16 %v11648
  %v11681 = vunpack.c.l.b16 %v11649
  %v11682 = vunpack.c.l.b16 %v11650
  %v11683 = vunpack.c.l.b16 %v11651
  %v11684 = vunpack.c.l.b16 %v11652
  %v11685 = vpack.c.b16 %v11670, %v11669
  %v11686 = vpack.c.b16 %v11672, %v11671
  %v11687 = vpack.c.b16 %v11674, %v11673
  %v11688 = vpack.c.b16 %v11676, %v11675
  %v11689 = vpack.c.b16 %v11678, %v11677
  %v11690 = vpack.c.b16 %v11680, %v11679
  %v11691 = vpack.c.b16 %v11682, %v11681
  %v11692 = vpack.c.b16 %v11684, %v11683
  %11701 = vmatprep.subr.bf16.mxu0 0
  %11702 = vmatpush1.bf16.msra.mxu0 %v11685
  %11703 = vmatprep.subr.bf16.mxu0 0
  %11704 = vmatpush1.bf16.msra.mxu0 %v11686
  %11705 = vmatprep.subr.bf16.mxu0 0
  %11706 = vmatpush1.bf16.msra.mxu0 %v11687
  %11707 = vmatprep.subr.bf16.mxu0 0
  %11708 = vmatpush1.bf16.msra.mxu0 %v11688
  %11709 = vmatprep.subr.bf16.mxu0 0
  %11710 = vmatpush1.bf16.msra.mxu0 %v11689
  %11711 = vmatprep.subr.bf16.mxu0 0
  %11712 = vmatpush1.bf16.msra.mxu0 %v11690
  %11713 = vmatprep.subr.bf16.mxu0 0
  %11714 = vmatpush1.bf16.msra.mxu0 %v11691
  %11715 = vmatprep.subr.bf16.mxu0 0
  %11716 = vmatpush1.bf16.msra.mxu0 %v11692
  %11717 = vmatprep.subr.bf16.mxu0 0
  %11718 = vmatpush1.bf16.msra.mxu0 0
  %11719 = vmatprep.subr.bf16.mxu0 0
  %11720 = vmatpush1.bf16.msra.mxu0 0
  %11721 = vmatprep.subr.bf16.mxu0 0
  %11722 = vmatpush1.bf16.msra.mxu0 0
  %11723 = vmatprep.subr.bf16.mxu0 0
  %11724 = vmatpush1.bf16.msra.mxu0 0
  %11725 = vmatprep.subr.bf16.mxu0 0
  %11726 = vmatpush1.bf16.msra.mxu0 0
  %11727 = vmatprep.subr.bf16.mxu0 0
  %11728 = vmatpush1.bf16.msra.mxu0 0
  %11729 = vmatprep.subr.bf16.mxu0 0
  %11730 = vmatpush1.bf16.msra.mxu0 0
  %11731 = vmatprep.subr.bf16.mxu0 0
  %11732 = vmatpush1.bf16.msra.mxu0 0
  %11733 = vmatprep.mubr.bf16.mxu0 0
  %11734 = vmatmul.mubr.bf16.gmra.mrb[0].mxu0 %v11635
  %v11735 = vpop.f32.mrb[0].mxu0
  %v11736 = vadd.f32 0.0, %v11735
  %v11737 = vpop.f32.mrb[0].mxu0
  %v11738 = vpop.f32.mrb[0].mxu0
  %v11739 = vpop.f32.mrb[0].mxu0
  %11740 = vdwg.mxu0
  %v11741 = vadd.f32 %v11632, %v11736
  %s11742 = scalar_lea.vmem [#allocation4], 12
  %v11743 = vld [vmem:[%s11742] sm:$0x3]
  %v11744 = vpack.c.bf16 %v11743, %v11743
  %s11745 = scalar_lea.vmem %s4, 384
  %v11746 = vld [vmem:[%s11745] sm:$0xf]
  %v11747 = vld [vmem:[%s11745 + $0x4] sm:$0xf]
  %v11748 = vld [vmem:[%s11745 + $0x8] sm:$0xf]
  %v11749 = vld [vmem:[%s11745 + $0xc] sm:$0xf]
  %v11750 = vld [vmem:[%s11745 + $0x10] sm:$0xf]
  %v11751 = vld [vmem:[%s11745 + $0x14] sm:$0xf]
  %v11752 = vld [vmem:[%s11745 + $0x18] sm:$0xf]
  %v11753 = vld [vmem:[%s11745 + $0x1c] sm:$0xf]
  %v11754 = vld [vmem:[%s11745 + $0x20] sm:$0xf]
  %v11755 = vld [vmem:[%s11745 + $0x24] sm:$0xf]
  %v11756 = vld [vmem:[%s11745 + $0x28] sm:$0xf]
  %v11757 = vld [vmem:[%s11745 + $0x2c] sm:$0xf]
  %v11758 = vld [vmem:[%s11745 + $0x30] sm:$0xf]
  %v11759 = vld [vmem:[%s11745 + $0x34] sm:$0xf]
  %v11760 = vld [vmem:[%s11745 + $0x38] sm:$0xf]
  %v11761 = vld [vmem:[%s11745 + $0x3c] sm:$0xf]
  %v11778 = vunpack.c.l.b16 %v11746
  %v11779 = vunpack.c.l.b16 %v11747
  %v11780 = vunpack.c.l.b16 %v11748
  %v11781 = vunpack.c.l.b16 %v11749
  %v11782 = vunpack.c.l.b16 %v11750
  %v11783 = vunpack.c.l.b16 %v11751
  %v11784 = vunpack.c.l.b16 %v11752
  %v11785 = vunpack.c.l.b16 %v11753
  %v11786 = vunpack.c.l.b16 %v11754
  %v11787 = vunpack.c.l.b16 %v11755
  %v11788 = vunpack.c.l.b16 %v11756
  %v11789 = vunpack.c.l.b16 %v11757
  %v11790 = vunpack.c.l.b16 %v11758
  %v11791 = vunpack.c.l.b16 %v11759
  %v11792 = vunpack.c.l.b16 %v11760
  %v11793 = vunpack.c.l.b16 %v11761
  %v11794 = vpack.c.b16 %v11779, %v11778
  %v11795 = vpack.c.b16 %v11781, %v11780
  %v11796 = vpack.c.b16 %v11783, %v11782
  %v11797 = vpack.c.b16 %v11785, %v11784
  %v11798 = vpack.c.b16 %v11787, %v11786
  %v11799 = vpack.c.b16 %v11789, %v11788
  %v11800 = vpack.c.b16 %v11791, %v11790
  %v11801 = vpack.c.b16 %v11793, %v11792
  %11810 = vmatprep.subr.bf16.mxu0 0
  %11811 = vmatpush1.bf16.msra.mxu0 %v11794
  %11812 = vmatprep.subr.bf16.mxu0 0
  %11813 = vmatpush1.bf16.msra.mxu0 %v11795
  %11814 = vmatprep.subr.bf16.mxu0 0
  %11815 = vmatpush1.bf16.msra.mxu0 %v11796
  %11816 = vmatprep.subr.bf16.mxu0 0
  %11817 = vmatpush1.bf16.msra.mxu0 %v11797
  %11818 = vmatprep.subr.bf16.mxu0 0
  %11819 = vmatpush1.bf16.msra.mxu0 %v11798
  %11820 = vmatprep.subr.bf16.mxu0 0
  %11821 = vmatpush1.bf16.msra.mxu0 %v11799
  %11822 = vmatprep.subr.bf16.mxu0 0
  %11823 = vmatpush1.bf16.msra.mxu0 %v11800
  %11824 = vmatprep.subr.bf16.mxu0 0
  %11825 = vmatpush1.bf16.msra.mxu0 %v11801
  %11826 = vmatprep.subr.bf16.mxu0 0
  %11827 = vmatpush1.bf16.msra.mxu0 0
  %11828 = vmatprep.subr.bf16.mxu0 0
  %11829 = vmatpush1.bf16.msra.mxu0 0
  %11830 = vmatprep.subr.bf16.mxu0 0
  %11831 = vmatpush1.bf16.msra.mxu0 0
  %11832 = vmatprep.subr.bf16.mxu0 0
  %11833 = vmatpush1.bf16.msra.mxu0 0
  %11834 = vmatprep.subr.bf16.mxu0 0
  %11835 = vmatpush1.bf16.msra.mxu0 0
  %11836 = vmatprep.subr.bf16.mxu0 0
  %11837 = vmatpush1.bf16.msra.mxu0 0
  %11838 = vmatprep.subr.bf16.mxu0 0
  %11839 = vmatpush1.bf16.msra.mxu0 0
  %11840 = vmatprep.subr.bf16.mxu0 0
  %11841 = vmatpush1.bf16.msra.mxu0 0
  %11842 = vmatprep.mubr.bf16.mxu0 0
  %11843 = vmatmul.mubr.bf16.gmra.mrb[0].mxu0 %v11744
  %v11844 = vpop.f32.mrb[0].mxu0
  %v11845 = vadd.f32 0.0, %v11844
  %v11846 = vpop.f32.mrb[0].mxu0
  %v11847 = vpop.f32.mrb[0].mxu0
  %v11848 = vpop.f32.mrb[0].mxu0
  %11849 = vdwg.mxu0
  %v11850 = vadd.f32 %v11741, %v11845
  %s11851 = scalar_lea.vmem [#allocation4], 14
  %v11852 = vld [vmem:[%s11851] sm:$0x3]
  %v11853 = vpack.c.bf16 %v11852, %v11852
  %s11854 = scalar_lea.vmem %s4, 448
  %v11855 = vld [vmem:[%s11854] sm:$0xf]
  %v11856 = vld [vmem:[%s11854 + $0x4] sm:$0xf]
  %v11857 = vld [vmem:[%s11854 + $0x8] sm:$0xf]
  %v11858 = vld [vmem:[%s11854 + $0xc] sm:$0xf]
  %v11859 = vld [vmem:[%s11854 + $0x10] sm:$0xf]
  %v11860 = vld [vmem:[%s11854 + $0x14] sm:$0xf]
  %v11861 = vld [vmem:[%s11854 + $0x18] sm:$0xf]
  %v11862 = vld [vmem:[%s11854 + $0x1c] sm:$0xf]
  %v11863 = vld [vmem:[%s11854 + $0x20] sm:$0xf]
  %v11864 = vld [vmem:[%s11854 + $0x24] sm:$0xf]
  %v11865 = vld [vmem:[%s11854 + $0x28] sm:$0xf]
  %v11866 = vld [vmem:[%s11854 + $0x2c] sm:$0xf]
  %v11867 = vld [vmem:[%s11854 + $0x30] sm:$0xf]
  %v11868 = vld [vmem:[%s11854 + $0x34] sm:$0xf]
  %v11869 = vld [vmem:[%s11854 + $0x38] sm:$0xf]
  %v11870 = vld [vmem:[%s11854 + $0x3c] sm:$0xf]
  %v11887 = vunpack.c.l.b16 %v11855
  %v11888 = vunpack.c.l.b16 %v11856
  %v11889 = vunpack.c.l.b16 %v11857
  %v11890 = vunpack.c.l.b16 %v11858
  %v11891 = vunpack.c.l.b16 %v11859
  %v11892 = vunpack.c.l.b16 %v11860
  %v11893 = vunpack.c.l.b16 %v11861
  %v11894 = vunpack.c.l.b16 %v11862
  %v11895 = vunpack.c.l.b16 %v11863
  %v11896 = vunpack.c.l.b16 %v11864
  %v11897 = vunpack.c.l.b16 %v11865
  %v11898 = vunpack.c.l.b16 %v11866
  %v11899 = vunpack.c.l.b16 %v11867
  %v11900 = vunpack.c.l.b16 %v11868
  %v11901 = vunpack.c.l.b16 %v11869
  %v11902 = vunpack.c.l.b16 %v11870
  %v11903 = vpack.c.b16 %v11888, %v11887
  %v11904 = vpack.c.b16 %v11890, %v11889
  %v11905 = vpack.c.b16 %v11892, %v11891
  %v11906 = vpack.c.b16 %v11894, %v11893
  %v11907 = vpack.c.b16 %v11896, %v11895
  %v11908 = vpack.c.b16 %v11898, %v11897
  %v11909 = vpack.c.b16 %v11900, %v11899
  %v11910 = vpack.c.b16 %v11902, %v11901
  %11919 = vmatprep.subr.bf16.mxu0 0
  %11920 = vmatpush1.bf16.msra.mxu0 %v11903
  %11921 = vmatprep.subr.bf16.mxu0 0
  %11922 = vmatpush1.bf16.msra.mxu0 %v11904
  %11923 = vmatprep.subr.bf16.mxu0 0
  %11924 = vmatpush1.bf16.msra.mxu0 %v11905
  %11925 = vmatprep.subr.bf16.mxu0 0
  %11926 = vmatpush1.bf16.msra.mxu0 %v11906
  %11927 = vmatprep.subr.bf16.mxu0 0
  %11928 = vmatpush1.bf16.msra.mxu0 %v11907
  %11929 = vmatprep.subr.bf16.mxu0 0
  %11930 = vmatpush1.bf16.msra.mxu0 %v11908
  %11931 = vmatprep.subr.bf16.mxu0 0
  %11932 = vmatpush1.bf16.msra.mxu0 %v11909
  %11933 = vmatprep.subr.bf16.mxu0 0
  %11934 = vmatpush1.bf16.msra.mxu0 %v11910
  %11935 = vmatprep.subr.bf16.mxu0 0
  %11936 = vmatpush1.bf16.msra.mxu0 0
  %11937 = vmatprep.subr.bf16.mxu0 0
  %11938 = vmatpush1.bf16.msra.mxu0 0
  %11939 = vmatprep.subr.bf16.mxu0 0
  %11940 = vmatpush1.bf16.msra.mxu0 0
  %11941 = vmatprep.subr.bf16.mxu0 0
  %11942 = vmatpush1.bf16.msra.mxu0 0
  %11943 = vmatprep.subr.bf16.mxu0 0
  %11944 = vmatpush1.bf16.msra.mxu0 0
  %11945 = vmatprep.subr.bf16.mxu0 0
  %11946 = vmatpush1.bf16.msra.mxu0 0
  %11947 = vmatprep.subr.bf16.mxu0 0
  %11948 = vmatpush1.bf16.msra.mxu0 0
  %11949 = vmatprep.subr.bf16.mxu0 0
  %11950 = vmatpush1.bf16.msra.mxu0 0
  %11951 = vmatprep.mubr.bf16.mxu0 0
  %11952 = vmatmul.mubr.bf16.gmra.mrb[0].mxu0 %v11853
  %v11953 = vpop.f32.mrb[0].mxu0
  %v11954 = vadd.f32 0.0, %v11953
  %v11955 = vpop.f32.mrb[0].mxu0
  %v11956 = vpop.f32.mrb[0].mxu0
  %v11957 = vpop.f32.mrb[0].mxu0
  %11958 = vdwg.mxu0
  %v11959 = vadd.f32 %v11850, %v11954
  %s11960 = scalar_lea.vmem [#allocation4], 16
  %v11961 = vld [vmem:[%s11960] sm:$0x3]
  %v11962 = vpack.c.bf16 %v11961, %v11961
  %s11963 = scalar_lea.vmem %s4, 512
  %v11964 = vld [vmem:[%s11963] sm:$0xf]
  %v11965 = vld [vmem:[%s11963 + $0x4] sm:$0xf]
  %v11966 = vld [vmem:[%s11963 + $0x8] sm:$0xf]
  %v11967 = vld [vmem:[%s11963 + $0xc] sm:$0xf]
  %v11968 = vld [vmem:[%s11963 + $0x10] sm:$0xf]
  %v11969 = vld [vmem:[%s11963 + $0x14] sm:$0xf]
  %v11970 = vld [vmem:[%s11963 + $0x18] sm:$0xf]
  %v11971 = vld [vmem:[%s11963 + $0x1c] sm:$0xf]
  %v11972 = vld [vmem:[%s11963 + $0x20] sm:$0xf]
  %v11973 = vld [vmem:[%s11963 + $0x24] sm:$0xf]
  %v11974 = vld [vmem:[%s11963 + $0x28] sm:$0xf]
  %v11975 = vld [vmem:[%s11963 + $0x2c] sm:$0xf]
  %v11976 = vld [vmem:[%s11963 + $0x30] sm:$0xf]
  %v11977 = vld [vmem:[%s11963 + $0x34] sm:$0xf]
  %v11978 = vld [vmem:[%s11963 + $0x38] sm:$0xf]
  %v11979 = vld [vmem:[%s11963 + $0x3c] sm:$0xf]
  %v11996 = vunpack.c.l.b16 %v11964
  %v11997 = vunpack.c.l.b16 %v11965
  %v11998 = vunpack.c.l.b16 %v11966
  %v11999 = vunpack.c.l.b16 %v11967
  %v12000 = vunpack.c.l.b16 %v11968
  %v12001 = vunpack.c.l.b16 %v11969
  %v12002 = vunpack.c.l.b16 %v11970
  %v12003 = vunpack.c.l.b16 %v11971
  %v12004 = vunpack.c.l.b16 %v11972
  %v12005 = vunpack.c.l.b16 %v11973
  %v12006 = vunpack.c.l.b16 %v11974
  %v12007 = vunpack.c.l.b16 %v11975
  %v12008 = vunpack.c.l.b16 %v11976
  %v12009 = vunpack.c.l.b16 %v11977
  %v12010 = vunpack.c.l.b16 %v11978
  %v12011 = vunpack.c.l.b16 %v11979
  %v12012 = vpack.c.b16 %v11997, %v11996
  %v12013 = vpack.c.b16 %v11999, %v11998
  %v12014 = vpack.c.b16 %v12001, %v12000
  %v12015 = vpack.c.b16 %v12003, %v12002
  %v12016 = vpack.c.b16 %v12005, %v12004
  %v12017 = vpack.c.b16 %v12007, %v12006
  %v12018 = vpack.c.b16 %v12009, %v12008
  %v12019 = vpack.c.b16 %v12011, %v12010
  %12028 = vmatprep.subr.bf16.mxu0 0
  %12029 = vmatpush1.bf16.msra.mxu0 %v12012
  %12030 = vmatprep.subr.bf16.mxu0 0
  %12031 = vmatpush1.bf16.msra.mxu0 %v12013
  %12032 = vmatprep.subr.bf16.mxu0 0
  %12033 = vmatpush1.bf16.msra.mxu0 %v12014
  %12034 = vmatprep.subr.bf16.mxu0 0
  %12035 = vmatpush1.bf16.msra.mxu0 %v12015
  %12036 = vmatprep.subr.bf16.mxu0 0
  %12037 = vmatpush1.bf16.msra.mxu0 %v12016
  %12038 = vmatprep.subr.bf16.mxu0 0
  %12039 = vmatpush1.bf16.msra.mxu0 %v12017
  %12040 = vmatprep.subr.bf16.mxu0 0
  %12041 = vmatpush1.bf16.msra.mxu0 %v12018
  %12042 = vmatprep.subr.bf16.mxu0 0
  %12043 = vmatpush1.bf16.msra.mxu0 %v12019
  %12044 = vmatprep.subr.bf16.mxu0 0
  %12045 = vmatpush1.bf16.msra.mxu0 0
  %12046 = vmatprep.subr.bf16.mxu0 0
  %12047 = vmatpush1.bf16.msra.mxu0 0
  %12048 = vmatprep.subr.bf16.mxu0 0
  %12049 = vmatpush1.bf16.msra.mxu0 0
  %12050 = vmatprep.subr.bf16.mxu0 0
  %12051 = vmatpush1.bf16.msra.mxu0 0
  %12052 = vmatprep.subr.bf16.mxu0 0
  %12053 = vmatpush1.bf16.msra.mxu0 0
  %12054 = vmatprep.subr.bf16.mxu0 0
  %12055 = vmatpush1.bf16.msra.mxu0 0
  %12056 = vmatprep.subr.bf16.mxu0 0
  %12057 = vmatpush1.bf16.msra.mxu0 0
  %12058 = vmatprep.subr.bf16.mxu0 0
  %12059 = vmatpush1.bf16.msra.mxu0 0
  %12060 = vmatprep.mubr.bf16.mxu0 0
  %12061 = vmatmul.mubr.bf16.gmra.mrb[0].mxu0 %v11962
  %v12062 = vpop.f32.mrb[0].mxu0
  %v12063 = vadd.f32 0.0, %v12062
  %v12064 = vpop.f32.mrb[0].mxu0
  %v12065 = vpop.f32.mrb[0].mxu0
  %v12066 = vpop.f32.mrb[0].mxu0
  %12067 = vdwg.mxu0
  %v12068 = vadd.f32 %v11959, %v12063
  %v12069 = vsel %vm783, %v12068, 0.0
  %v12070 = vrot.slane %v12069, 4
  %v12071 = vadd.f32 %v12069, %v12070
  %v12072 = vrot.slane %v12071, 2
  %v12073 = vadd.f32 %v12071, %v12072
  %v12074 = vrot.slane %v12073, 1
  %v12075 = vadd.f32 %v12073, %v12074
  %v12076 = vmul.f32 %v12075, 0.5
  %v12077 = vmul.f32 %v12068, %v12068
  %v12078 = vsel %vm783, %v12077, 0.0
  %v12079 = vrot.slane %v12078, 4
  %v12080 = vadd.f32 %v12078, %v12079
  %v12081 = vrot.slane %v12080, 2
  %v12082 = vadd.f32 %v12080, %v12081
  %v12083 = vrot.slane %v12082, 1
  %v12084 = vadd.f32 %v12082, %v12083
  %v12085 = vmul.f32 %v12084, 0.5
  %v12086 = vmul.f32 %v12076, %v12076
  %v12087 = vsub.f32 %v12085, %v12086
  %v12088 = vmax.f32 %v12087, 0.0
  %v12089 = vld [vmem:[%s5 + $0x3] sm:$0x1]
  %v12090 = vld [vmem:[%s6 + $0x3] sm:$0x1]
  %v12091 = vsub.f32 %v12068, %v12076
  %v12092 = vadd.f32 %v12088, 1e-05
  %v12093 = vrsqrt.pop %v12092
  %v12094 = vmul.f32 %v12091, %v12093
  %v12095 = vlaneseq
  %v12096 = vshrl.u32 %v12095, 7
  %v12097 = vsub.s32 0, %v12096
  %v12098 = vrot.slane %v12089, %v12097
  %v12099 = vmul.f32 %v12094, %v12098
  %v12100 = vlaneseq
  %v12101 = vshrl.u32 %v12100, 7
  %v12102 = vsub.s32 0, %v12101
  %v12103 = vrot.slane %v12090, %v12102
  %v12104 = vadd.f32 %v12099, %v12103
  %vm12105 = vcmp.ge.f32.partialorder %v12104, 0.0
  %v12106 = vmul.f32 %v12104, 0.01
  %v12107 = vsel %vm12105, %v12104, %v12106
  %12108 = vst [vmem:[%s7] sm:$0x3] %v12107
  // Predicated region
  $region30: #{_forward_impl.1} parent=0 // pred_check
    _
  $region31: #{_forward_impl.1} parent=0 // pred_check_branch
    %12110 = sbr.rel (0) target = $region33
  $region32: #{_forward_impl.1} parent=0 // pred_region
    _
  $region33: #{_forward_impl.1} parent=0 // pred_fallthru
    _
  // Predicated region
  $region34: #{_forward_impl.1} parent=0 // pred_check
    _
  $region35: #{_forward_impl.1} parent=0 // pred_check_branch
    %12112 = sbr.rel (0) target = $region37
  $region36: #{_forward_impl.1} parent=0 // pred_region
    _
  $region37: #{_forward_impl.1} parent=0 // pred_fallthru
    _

</llo_original>
